<compile_context>
chip_gen: v7x
topology: tpu7x:2x2x1
jax: 0.10.0
libtpu: 0.0.40
codegen_flags: <defaults>
</compile_context>

<pallas_src>
import functools

import jax
import jax.numpy as jnp
import numpy as np
from jax import lax
from jax.experimental import pallas as pl
from jax.experimental.pallas import tpu as pltpu


def _fill_value(dtype):
    # Identity element for max.  finfo/iinfo.min (not -inf): safe for bf16 and
    # for fp8 dtypes that have no inf, and extends to integer inputs.
    if jnp.issubdtype(dtype, jnp.floating):
        return jnp.finfo(dtype).min
    if jnp.issubdtype(dtype, jnp.integer):
        return jnp.iinfo(dtype).min
    raise TypeError(f"tmaxpool: unsupported dtype {dtype}")


def _validate(H, W, k, s, p):
    if k < 1 or s < 1 or p < 0:
        raise ValueError("tmaxpool: invalid kernel/stride/padding")
    if p > k // 2:
        raise ValueError("tmaxpool: padding must be <= kernel_size // 2")
    if H + 2 * p < k or W + 2 * p < k:
        raise ValueError("tmaxpool: kernel larger than padded input")


def _tap_range(d, in_size, out_size, s, p):
    """Static [lo, hi] output-index range for which window offset `d` lands
    inside the (un-padded) input.  All compile-time constants."""
    lo = max(0, -((d - p) // s))                       # ceil((p - d) / s)
    hi = min(out_size - 1, (in_size - 1 + p - d) // s)
    return lo, hi


# ----------------------------------------------------------------------------
# Kernels
# ----------------------------------------------------------------------------
def _pool_kernel_unrolled(x_ref, o_ref, *, k, s, p, H, W, ho, wo, fill):
    """Fully-unrolled spatial loop; fori_loop over one-vreg N-chunks.

    Per output vreg: <= k*k dense vld + (k*k-1) vmax + 1 dense unmasked vst.
    The accumulator is a single (align, 128) vreg that never touches VMEM
    between taps; border positions statically drop out-of-range taps, so no
    halo scratch, no fill, no masked stores.
    """
    nc = x_ref.shape[2]

    def chunk_body(ci, carry):
        for oh in range(ho):
            ih0 = oh * s - p
            for ow in range(wo):
                iw0 = ow * s - p
                acc = None
                for dh in range(k):
                    ih = ih0 + dh
                    if ih < 0 or ih >= H:
                        continue
                    for dw in range(k):
                        iw = iw0 + dw
                        if iw < 0 or iw >= W:
                            continue
                        v = x_ref[ih, iw, ci, :, :]
                        acc = v if acc is None else jnp.maximum(acc, v)
                if acc is None:          # unreachable for PyTorch-legal params
                    acc = jnp.full(o_ref.shape[3:], fill, o_ref.dtype)
                o_ref[oh, ow, ci, :, :] = acc
        return carry

    lax.fori_loop(0, nc, chunk_body, 0)


def _pool_kernel_strided(x_ref, o_ref, *, k, s, p, H, W, ho, wo, fill):
    """Per-tap strided-window fallback for large planes (bounded trace size).

    Still halo-free: each (dh, dw) tap only updates its statically-known valid
    output rectangle, read-modify-writing the output block in VMEM.
    """
    h_ranges = [_tap_range(d, H, ho, s, p) for d in range(k)]
    w_ranges = [_tap_range(d, W, wo, s, p) for d in range(k)]
    full_h = [d for d, (lo, hi) in enumerate(h_ranges) if lo == 0 and hi == ho - 1]
    full_w = [d for d, (lo, hi) in enumerate(w_ranges) if lo == 0 and hi == wo - 1]

    def window(dh, dw, oh_lo, nh, ow_lo, nw):
        ih0 = oh_lo * s + dh - p
        iw0 = ow_lo * s + dw - p
        hs = pl.ds(ih0, nh) if s == 1 else pl.ds(ih0, nh, stride=s)
        ws = pl.ds(iw0, nw) if s == 1 else pl.ds(iw0, nw, stride=s)
        return x_ref[hs, ws, :, :, :]

    init_tap = None
    if full_h and full_w:                 # a tap covering every output exists
        init_tap = (full_h[0], full_w[0])
        o_ref[...] = window(init_tap[0], init_tap[1], 0, ho, 0, wo)
    else:
        o_ref[...] = jnp.full(o_ref.shape, fill, o_ref.dtype)

    for dh in range(k):
        oh_lo, oh_hi = h_ranges[dh]
        if oh_hi < oh_lo:
            continue
        nh = oh_hi - oh_lo + 1
        for dw in range(k):
            if init_tap == (dh, dw):
                continue
            ow_lo, ow_hi = w_ranges[dw]
            if ow_hi < ow_lo:
                continue
            nw = ow_hi - ow_lo + 1
            win = window(dh, dw, oh_lo, nh, ow_lo, nw)
            cur = o_ref[pl.ds(oh_lo, nh), pl.ds(ow_lo, nw), :, :, :]
            o_ref[pl.ds(oh_lo, nh), pl.ds(ow_lo, nw), :, :, :] = \
                jnp.maximum(cur, win)


# ----------------------------------------------------------------------------
# Tiling plan + pallas_call wrapper
# ----------------------------------------------------------------------------
def _plan(H, W, ho, wo, groups, dtype):
    """Pick the N-chunk tiling: (align, nc_tile, grid, total chunks, vmem limit)."""
    itemsize = jnp.dtype(dtype).itemsize
    align = max(8, 32 // itemsize)        # sublanes/vreg: f32 8, bf16 16, 8-bit 32
    chunks = pl.cdiv(groups, align)       # number of (align, 128) vreg-chunks

    try:
        vmem_cap = int(pltpu.get_tpu_info().vmem_capacity_bytes)
    except Exception:
        vmem_cap = 64 * 2**20             # conservative: v7x per-TensorCore VMEM
    budget = (3 * vmem_cap) // 4          # ~25% headroom for compiler scratch

    in_chunk = H * W * align * 128 * itemsize          # bytes per input chunk
    out_chunk = ho * wo * align * 128 * itemsize
    per_chunk = 2 * (in_chunk + out_chunk)             # double-buffered in+out

    # ~16 MiB input blocks: per-step (~0.35us) overhead drops below ~5%.
    cap = min(budget // per_chunk, max(1, (16 * 2**20) // in_chunk))
    if cap < 1:
        # TODO(synk): spatial (H-row) tiling with a (k-1)-row halo for very
        # large planes; for now fail loudly instead of spilling/failing late.
        raise ValueError(
            f"tmaxpool: a {H}x{W} plane needs {per_chunk} bytes per N-chunk, "
            f"over the {budget}-byte VMEM budget; spatial tiling not implemented")

    nc_tile = min(cap, chunks)
    # Prefer >= 2 grid steps so dimension_semantics=("parallel",) can use both
    # TensorCores on v7x even when everything would fit in a single block.
    if chunks > 1 and pl.cdiv(chunks, nc_tile) < 2:
        nc_tile = pl.cdiv(chunks, 2)
    grid = pl.cdiv(chunks, nc_tile)
    c_total = grid * nc_tile

    need = per_chunk * nc_tile
    vmem_limit = int(min(budget, max(need + (4 * 2**20), 32 * 2**20)))
    return align, nc_tile, grid, c_total, vmem_limit


def _maxpool_pallas(xf, k, s, p, ho, wo, nc_tile, grid, vmem_limit,
                    unroll_threshold):
    """xf: (H, W, c_total, align, 128) -> (Ho, Wo, c_total, align, 128)."""
    H, W, c_total, align, lanes = xf.shape
    fill = _fill_value(xf.dtype)
    body = (_pool_kernel_unrolled if ho * wo * k * k <= unroll_threshold
            else _pool_kernel_strided)
    kernel = functools.partial(body, k=k, s=s, p=p, H=H, W=W, ho=ho, wo=wo,
                               fill=fill)
    return pl.pallas_call(
        kernel,
        out_shape=jax.ShapeDtypeStruct((ho, wo, c_total, align, lanes), xf.dtype),
        grid=(grid,),
        in_specs=[pl.BlockSpec((H, W, nc_tile, align, lanes),
                               lambda i: (0, 0, i, 0, 0))],
        out_specs=pl.BlockSpec((ho, wo, nc_tile, align, lanes),
                               lambda i: (0, 0, i, 0, 0)),
        compiler_params=pltpu.CompilerParams(
            dimension_semantics=("parallel",),   # shards N-chunks across TCs
            vmem_limit_bytes=vmem_limit,
        ),
    )(xf)


# ----------------------------------------------------------------------------
# Public entry points
# ----------------------------------------------------------------------------
def tmaxpool_nminor(xf, kernel_size, stride, padding, *, unroll_threshold=4096):
    """Pool directly in the kernel's N-minor layout:
    (H, W, G, 128) -> (Ho, Wo, G, 128).

    Use this when the surrounding graph can produce / consume this layout: it
    removes the two full HBM transpose round-trips that `tmaxpool` pays.
    """
    H, W, G, lanes = xf.shape
    if lanes != 128:
        raise ValueError("tmaxpool_nminor expects a trailing dim of 128 lanes")
    k, s, p = int(kernel_size), int(stride), int(padding)
    _validate(H, W, k, s, p)
    ho = (H + 2 * p - k) // s + 1
    wo = (W + 2 * p - k) // s + 1

    align, nc_tile, grid, c_total, vmem_limit = _plan(H, W, ho, wo, G, xf.dtype)
    g_total = c_total * align
    if g_total != G:
        xf = jnp.pad(xf, ((0, 0), (0, 0), (0, g_total - G), (0, 0)))
    xf = xf.reshape(H, W, c_total, align, 128)

    out = _maxpool_pallas(xf, k, s, p, ho, wo, nc_tile, grid, vmem_limit,
                          unroll_threshold)
    out = out.reshape(ho, wo, g_total, 128)
    return out[:, :, :G, :] if g_total != G else out


def tmaxpool(x, kernel_size, stride, padding, *, unroll_threshold=4096):
    """x: (B, T, C, H, W) -> (B, T, C, Ho, Wo), dtype preserved.

    NOTE: the transposes below are full HBM round-trips executed by XLA
    outside the kernel (~2.5x the kernel's own HBM traffic); graphs that can
    keep the N-minor layout should call `tmaxpool_nminor` directly.
    """
    B, T, C, H, W = x.shape
    k, s, p = int(kernel_size), int(stride), int(padding)
    _validate(H, W, k, s, p)
    ho = (H + 2 * p - k) // s + 1
    wo = (W + 2 * p - k) // s + 1

    n = B * T * C
    groups = pl.cdiv(n, 128)
    align, nc_tile, grid, c_total, vmem_limit = _plan(H, W, ho, wo, groups,
                                                      x.dtype)
    n_total = c_total * align * 128

    # ---- N-minor relayout (wrapper-side HBM round-trip; see docstring) ------
    xf = jnp.transpose(x.reshape(n, H, W), (1, 2, 0))            # (H, W, n)
    if n_total != n:
        xf = jnp.pad(xf, ((0, 0), (0, 0), (0, n_total - n)))     # lane padding
    xf = xf.reshape(H, W, c_total, align, 128)

    out = _maxpool_pallas(xf, k, s, p, ho, wo, nc_tile, grid, vmem_limit,
                          unroll_threshold)

    out = out.reshape(ho, wo, n_total)[:, :, :n]                 # (Ho, Wo, n)
    return jnp.transpose(out, (2, 0, 1)).reshape(B, T, C, ho, wo)


# ----------------------------------------------------------------------------
# Reference + tests
# ----------------------------------------------------------------------------
def _reference(x, kernel_size, stride, padding):
    """Pure-JAX reference (== nn.MaxPool2d applied per time step)."""
    B, T, C, H, W = x.shape
    k, s, p = int(kernel_size), int(stride), int(padding)
    xf = x.reshape(B * T * C, H, W)
    out = lax.reduce_window(
        xf,
        jnp.array(-jnp.inf, x.dtype),
        lax.max,
        window_dimensions=(1, k, k),
        window_strides=(1, s, s),
        padding=((0, 0), (p, p), (p, p)),
    )
    ho = (H + 2 * p - k) // s + 1
    wo = (W + 2 * p - k) // s + 1
    return out.reshape(B, T, C, ho, wo)


if __name__ == "__main__":
    key = jax.random.PRNGKey(0)

    def check(shape, kernel_size, stride, padding, dtype=jnp.float32, **kw):
        x = jax.random.normal(key, shape, dtype=jnp.float32).astype(dtype)
        y = jax.block_until_ready(tmaxpool(x, kernel_size, stride, padding, **kw))
        y_ref = jax.block_until_ready(_reference(x, kernel_size, stride, padding))
        assert y.shape == y_ref.shape, (y.shape, y_ref.shape)
        assert y.dtype == x.dtype, (y.dtype, x.dtype)
        np.testing.assert_allclose(np.asarray(y).astype(np.float32),
                                   np.asarray(y_ref).astype(np.float32),
                                   rtol=0, atol=0)

    # Module config from the spec: MaxPool2d(kernel_size=3, stride=2, padding=1).
    check((2, 4, 3, 16, 16), 3, 2, 1)
    # padding == 0 path.
    check((2, 4, 3, 16, 16), 2, 2, 0)
    # bf16 path (16-sublane dtype alignment).
    check((2, 4, 3, 16, 16), 3, 2, 1, dtype=jnp.bfloat16)
    # multi-step grid + N lane-padding path (2 chunks -> 2 grid steps).
    check((2, 4, 241, 8, 8), 3, 2, 1)
    # per-tap strided fallback path (forced via threshold).
    check((2, 4, 241, 8, 8), 3, 2, 1, unroll_threshold=0)

    print("KERNEL_OK")
</pallas_src>

<mosaic_0001>
module attributes {stable_mosaic.version = 11 : i64} {
  func.func @_pool_kernel_unrolled(%arg0: i32, %arg1: memref<16x16x1x8x128xf32, #tpu.memory_space<vmem>>, %arg2: memref<8x8x1x8x128xf32, #tpu.memory_space<vmem>>) attributes {dimension_semantics = [#tpu.dimension_semantics<parallel>], iteration_bounds = array<i64: 1>, scalar_prefetch = 0 : i64, scratch_operands = 0 : i64, tpu.core_type = #tpu.core_type<tc>, window_params = [{transform_indices = @transform_0, window_bounds = array<i64: 16, 16, 1, 8, 128>}, {transform_indices = @transform_1, window_bounds = array<i64: 8, 8, 1, 8, 128>}]} {
    %c0_i32 = arith.constant 0 : i32
    %c0 = arith.constant 0 : index
    %c0_0 = arith.constant 0 : index
    %0 = arith.index_cast %c0_i32 : i32 to index
    %c0_1 = arith.constant 0 : index
    %c0_2 = arith.constant 0 : index
    %1 = vector.load %arg1[%c0, %c0_0, %0, %c0_1, %c0_2] : memref<16x16x1x8x128xf32, #tpu.memory_space<vmem>>, vector<1x1x1x8x128xf32>
    %2 = vector.shape_cast %1 : vector<1x1x1x8x128xf32> to vector<8x128xf32>
    %c0_3 = arith.constant 0 : index
    %c1 = arith.constant 1 : index
    %3 = arith.index_cast %c0_i32 : i32 to index
    %c0_4 = arith.constant 0 : index
    %c0_5 = arith.constant 0 : index
    %4 = vector.load %arg1[%c0_3, %c1, %3, %c0_4, %c0_5] : memref<16x16x1x8x128xf32, #tpu.memory_space<vmem>>, vector<1x1x1x8x128xf32>
    %5 = vector.shape_cast %4 : vector<1x1x1x8x128xf32> to vector<8x128xf32>
    %6 = arith.maximumf %2, %5 : vector<8x128xf32>
    %c1_6 = arith.constant 1 : index
    %c0_7 = arith.constant 0 : index
    %7 = arith.index_cast %c0_i32 : i32 to index
    %c0_8 = arith.constant 0 : index
    %c0_9 = arith.constant 0 : index
    %8 = vector.load %arg1[%c1_6, %c0_7, %7, %c0_8, %c0_9] : memref<16x16x1x8x128xf32, #tpu.memory_space<vmem>>, vector<1x1x1x8x128xf32>
    %9 = vector.shape_cast %8 : vector<1x1x1x8x128xf32> to vector<8x128xf32>
    %10 = arith.maximumf %6, %9 : vector<8x128xf32>
    %c1_10 = arith.constant 1 : index
    %c1_11 = arith.constant 1 : index
    %11 = arith.index_cast %c0_i32 : i32 to index
    %c0_12 = arith.constant 0 : index
    %c0_13 = arith.constant 0 : index
    %12 = vector.load %arg1[%c1_10, %c1_11, %11, %c0_12, %c0_13] : memref<16x16x1x8x128xf32, #tpu.memory_space<vmem>>, vector<1x1x1x8x128xf32>
    %13 = vector.shape_cast %12 : vector<1x1x1x8x128xf32> to vector<8x128xf32>
    %14 = arith.maximumf %10, %13 : vector<8x128xf32>
    %c0_14 = arith.constant 0 : index
    %c0_15 = arith.constant 0 : index
    %15 = arith.index_cast %c0_i32 : i32 to index
    %c0_16 = arith.constant 0 : index
    %c0_17 = arith.constant 0 : index
    %16 = vector.load %arg2[%c0_14, %c0_15, %15, %c0_16, %c0_17] : memref<8x8x1x8x128xf32, #tpu.memory_space<vmem>>, vector<1x1x1x8x128xf32>
    %17 = vector.shape_cast %16 : vector<1x1x1x8x128xf32> to vector<8x128xf32>
    %18 = vector.shape_cast %14 : vector<8x128xf32> to vector<1x1x1x8x128xf32>
    tpu.vector_store %arg2[%c0_14, %c0_15, %15, %c0_16, %c0_17], %18 {strides = array<i32>} : memref<8x8x1x8x128xf32, #tpu.memory_space<vmem>>, vector<1x1x1x8x128xf32>,
    %c0_18 = arith.constant 0 : index
    %c1_19 = arith.constant 1 : index
    %19 = arith.index_cast %c0_i32 : i32 to index
    %c0_20 = arith.constant 0 : index
    %c0_21 = arith.constant 0 : index
    %20 = vector.load %arg1[%c0_18, %c1_19, %19, %c0_20, %c0_21] : memref<16x16x1x8x128xf32, #tpu.memory_space<vmem>>, vector<1x1x1x8x128xf32>
    %21 = vector.shape_cast %20 : vector<1x1x1x8x128xf32> to vector<8x128xf32>
    %c0_22 = arith.constant 0 : index
    %c2 = arith.constant 2 : index
    %22 = arith.index_cast %c0_i32 : i32 to index
    %c0_23 = arith.constant 0 : index
    %c0_24 = arith.constant 0 : index
    %23 = vector.load %arg1[%c0_22, %c2, %22, %c0_23, %c0_24] : memref<16x16x1x8x128xf32, #tpu.memory_space<vmem>>, vector<1x1x1x8x128xf32>
    %24 = vector.shape_cast %23 : vector<1x1x1x8x128xf32> to vector<8x128xf32>
    %25 = arith.maximumf %21, %24 : vector<8x128xf32>
    %c0_25 = arith.constant 0 : index
    %c3 = arith.constant 3 : index
    %26 = arith.index_cast %c0_i32 : i32 to index
    %c0_26 = arith.constant 0 : index
    %c0_27 = arith.constant 0 : index
    %27 = vector.load %arg1[%c0_25, %c3, %26, %c0_26, %c0_27] : memref<16x16x1x8x128xf32, #tpu.memory_space<vmem>>, vector<1x1x1x8x128xf32>
    %28 = vector.shape_cast %27 : vector<1x1x1x8x128xf32> to vector<8x128xf32>
    %29 = arith.maximumf %25, %28 : vector<8x128xf32>
    %c1_28 = arith.constant 1 : index
    %c1_29 = arith.constant 1 : index
    %30 = arith.index_cast %c0_i32 : i32 to index
    %c0_30 = arith.constant 0 : index
    %c0_31 = arith.constant 0 : index
    %31 = vector.load %arg1[%c1_28, %c1_29, %30, %c0_30, %c0_31] : memref<16x16x1x8x128xf32, #tpu.memory_space<vmem>>, vector<1x1x1x8x128xf32>
    %32 = vector.shape_cast %31 : vector<1x1x1x8x128xf32> to vector<8x128xf32>
    %33 = arith.maximumf %29, %32 : vector<8x128xf32>
    %c1_32 = arith.constant 1 : index
    %c2_33 = arith.constant 2 : index
    %34 = arith.index_cast %c0_i32 : i32 to index
    %c0_34 = arith.constant 0 : index
    %c0_35 = arith.constant 0 : index
    %35 = vector.load %arg1[%c1_32, %c2_33, %34, %c0_34, %c0_35] : memref<16x16x1x8x128xf32, #tpu.memory_space<vmem>>, vector<1x1x1x8x128xf32>
    %36 = vector.shape_cast %35 : vector<1x1x1x8x128xf32> to vector<8x128xf32>
    %37 = arith.maximumf %33, %36 : vector<8x128xf32>
    %c1_36 = arith.constant 1 : index
    %c3_37 = arith.constant 3 : index
    %38 = arith.index_cast %c0_i32 : i32 to index
    %c0_38 = arith.constant 0 : index
    %c0_39 = arith.constant 0 : index
    %39 = vector.load %arg1[%c1_36, %c3_37, %38, %c0_38, %c0_39] : memref<16x16x1x8x128xf32, #tpu.memory_space<vmem>>, vector<1x1x1x8x128xf32>
    %40 = vector.shape_cast %39 : vector<1x1x1x8x128xf32> to vector<8x128xf32>
    %41 = arith.maximumf %37, %40 : vector<8x128xf32>
    %c0_40 = arith.constant 0 : index
    %c1_41 = arith.constant 1 : index
    %42 = arith.index_cast %c0_i32 : i32 to index
    %c0_42 = arith.constant 0 : index
    %c0_43 = arith.constant 0 : index
    %43 = vector.load %arg2[%c0_40, %c1_41, %42, %c0_42, %c0_43] : memref<8x8x1x8x128xf32, #tpu.memory_space<vmem>>, vector<1x1x1x8x128xf32>
    %44 = vector.shape_cast %43 : vector<1x1x1x8x128xf32> to vector<8x128xf32>
    %45 = vector.shape_cast %41 : vector<8x128xf32> to vector<1x1x1x8x128xf32>
    tpu.vector_store %arg2[%c0_40, %c1_41, %42, %c0_42, %c0_43], %45 {strides = array<i32>} : memref<8x8x1x8x128xf32, #tpu.memory_space<vmem>>, vector<1x1x1x8x128xf32>,
    %c0_44 = arith.constant 0 : index
    %c3_45 = arith.constant 3 : index
    %46 = arith.index_cast %c0_i32 : i32 to index
    %c0_46 = arith.constant 0 : index
    %c0_47 = arith.constant 0 : index
    %47 = vector.load %arg1[%c0_44, %c3_45, %46, %c0_46, %c0_47] : memref<16x16x1x8x128xf32, #tpu.memory_space<vmem>>, vector<1x1x1x8x128xf32>
    %48 = vector.shape_cast %47 : vector<1x1x1x8x128xf32> to vector<8x128xf32>
    %c0_48 = arith.constant 0 : index
    %c4 = arith.constant 4 : index
    %49 = arith.index_cast %c0_i32 : i32 to index
    %c0_49 = arith.constant 0 : index
    %c0_50 = arith.constant 0 : index
    %50 = vector.load %arg1[%c0_48, %c4, %49, %c0_49, %c0_50] : memref<16x16x1x8x128xf32, #tpu.memory_space<vmem>>, vector<1x1x1x8x128xf32>
    %51 = vector.shape_cast %50 : vector<1x1x1x8x128xf32> to vector<8x128xf32>
    %52 = arith.maximumf %48, %51 : vector<8x128xf32>
    %c0_51 = arith.constant 0 : index
    %c5 = arith.constant 5 : index
    %53 = arith.index_cast %c0_i32 : i32 to index
    %c0_52 = arith.constant 0 : index
    %c0_53 = arith.constant 0 : index
    %54 = vector.load %arg1[%c0_51, %c5, %53, %c0_52, %c0_53] : memref<16x16x1x8x128xf32, #tpu.memory_space<vmem>>, vector<1x1x1x8x128xf32>
    %55 = vector.shape_cast %54 : vector<1x1x1x8x128xf32> to vector<8x128xf32>
    %56 = arith.maximumf %52, %55 : vector<8x128xf32>
    %c1_54 = arith.constant 1 : index
    %c3_55 = arith.constant 3 : index
    %57 = arith.index_cast %c0_i32 : i32 to index
    %c0_56 = arith.constant 0 : index
    %c0_57 = arith.constant 0 : index
    %58 = vector.load %arg1[%c1_54, %c3_55, %57, %c0_56, %c0_57] : memref<16x16x1x8x128xf32, #tpu.memory_space<vmem>>, vector<1x1x1x8x128xf32>
    %59 = vector.shape_cast %58 : vector<1x1x1x8x128xf32> to vector<8x128xf32>
    %60 = arith.maximumf %56, %59 : vector<8x128xf32>
    %c1_58 = arith.constant 1 : index
    %c4_59 = arith.constant 4 : index
    %61 = arith.index_cast %c0_i32 : i32 to index
    %c0_60 = arith.constant 0 : index
    %c0_61 = arith.constant 0 : index
    %62 = vector.load %arg1[%c1_58, %c4_59, %61, %c0_60, %c0_61] : memref<16x16x1x8x128xf32, #tpu.memory_space<vmem>>, vector<1x1x1x8x128xf32>
    %63 = vector.shape_cast %62 : vector<1x1x1x8x128xf32> to vector<8x128xf32>
    %64 = arith.maximumf %60, %63 : vector<8x128xf32>
    %c1_62 = arith.constant 1 : index
    %c5_63 = arith.constant 5 : index
    %65 = arith.index_cast %c0_i32 : i32 to index
    %c0_64 = arith.constant 0 : index
    %c0_65 = arith.constant 0 : index
    %66 = vector.load %arg1[%c1_62, %c5_63, %65, %c0_64, %c0_65] : memref<16x16x1x8x128xf32, #tpu.memory_space<vmem>>, vector<1x1x1x8x128xf32>
    %67 = vector.shape_cast %66 : vector<1x1x1x8x128xf32> to vector<8x128xf32>
    %68 = arith.maximumf %64, %67 : vector<8x128xf32>
    %c0_66 = arith.constant 0 : index
    %c2_67 = arith.constant 2 : index
    %69 = arith.index_cast %c0_i32 : i32 to index
    %c0_68 = arith.constant 0 : index
    %c0_69 = arith.constant 0 : index
    %70 = vector.load %arg2[%c0_66, %c2_67, %69, %c0_68, %c0_69] : memref<8x8x1x8x128xf32, #tpu.memory_space<vmem>>, vector<1x1x1x8x128xf32>
    %71 = vector.shape_cast %70 : vector<1x1x1x8x128xf32> to vector<8x128xf32>
    %72 = vector.shape_cast %68 : vector<8x128xf32> to vector<1x1x1x8x128xf32>
    tpu.vector_store %arg2[%c0_66, %c2_67, %69, %c0_68, %c0_69], %72 {strides = array<i32>} : memref<8x8x1x8x128xf32, #tpu.memory_space<vmem>>, vector<1x1x1x8x128xf32>,
    %c0_70 = arith.constant 0 : index
    %c5_71 = arith.constant 5 : index
    %73 = arith.index_cast %c0_i32 : i32 to index
    %c0_72 = arith.constant 0 : index
    %c0_73 = arith.constant 0 : index
    %74 = vector.load %arg1[%c0_70, %c5_71, %73, %c0_72, %c0_73] : memref<16x16x1x8x128xf32, #tpu.memory_space<vmem>>, vector<1x1x1x8x128xf32>
    %75 = vector.shape_cast %74 : vector<1x1x1x8x128xf32> to vector<8x128xf32>
    %c0_74 = arith.constant 0 : index
    %c6 = arith.constant 6 : index
    %76 = arith.index_cast %c0_i32 : i32 to index
    %c0_75 = arith.constant 0 : index
    %c0_76 = arith.constant 0 : index
    %77 = vector.load %arg1[%c0_74, %c6, %76, %c0_75, %c0_76] : memref<16x16x1x8x128xf32, #tpu.memory_space<vmem>>, vector<1x1x1x8x128xf32>
    %78 = vector.shape_cast %77 : vector<1x1x1x8x128xf32> to vector<8x128xf32>
    %79 = arith.maximumf %75, %78 : vector<8x128xf32>
    %c0_77 = arith.constant 0 : index
    %c7 = arith.constant 7 : index
    %80 = arith.index_cast %c0_i32 : i32 to index
    %c0_78 = arith.constant 0 : index
    %c0_79 = arith.constant 0 : index
    %81 = vector.load %arg1[%c0_77, %c7, %80, %c0_78, %c0_79] : memref<16x16x1x8x128xf32, #tpu.memory_space<vmem>>, vector<1x1x1x8x128xf32>
    %82 = vector.shape_cast %81 : vector<1x1x1x8x128xf32> to vector<8x128xf32>
    %83 = arith.maximumf %79, %82 : vector<8x128xf32>
    %c1_80 = arith.constant 1 : index
    %c5_81 = arith.constant 5 : index
    %84 = arith.index_cast %c0_i32 : i32 to index
    %c0_82 = arith.constant 0 : index
    %c0_83 = arith.constant 0 : index
    %85 = vector.load %arg1[%c1_80, %c5_81, %84, %c0_82, %c0_83] : memref<16x16x1x8x128xf32, #tpu.memory_space<vmem>>, vector<1x1x1x8x128xf32>
    %86 = vector.shape_cast %85 : vector<1x1x1x8x128xf32> to vector<8x128xf32>
    %87 = arith.maximumf %83, %86 : vector<8x128xf32>
    %c1_84 = arith.constant 1 : index
    %c6_85 = arith.constant 6 : index
    %88 = arith.index_cast %c0_i32 : i32 to index
    %c0_86 = arith.constant 0 : index
    %c0_87 = arith.constant 0 : index
    %89 = vector.load %arg1[%c1_84, %c6_85, %88, %c0_86, %c0_87] : memref<16x16x1x8x128xf32, #tpu.memory_space<vmem>>, vector<1x1x1x8x128xf32>
    %90 = vector.shape_cast %89 : vector<1x1x1x8x128xf32> to vector<8x128xf32>
    %91 = arith.maximumf %87, %90 : vector<8x128xf32>
    %c1_88 = arith.constant 1 : index
    %c7_89 = arith.constant 7 : index
    %92 = arith.index_cast %c0_i32 : i32 to index
    %c0_90 = arith.constant 0 : index
    %c0_91 = arith.constant 0 : index
    %93 = vector.load %arg1[%c1_88, %c7_89, %92, %c0_90, %c0_91] : memref<16x16x1x8x128xf32, #tpu.memory_space<vmem>>, vector<1x1x1x8x128xf32>
    %94 = vector.shape_cast %93 : vector<1x1x1x8x128xf32> to vector<8x128xf32>
    %95 = arith.maximumf %91, %94 : vector<8x128xf32>
    %c0_92 = arith.constant 0 : index
    %c3_93 = arith.constant 3 : index
    %96 = arith.index_cast %c0_i32 : i32 to index
    %c0_94 = arith.constant 0 : index
    %c0_95 = arith.constant 0 : index
    %97 = vector.load %arg2[%c0_92, %c3_93, %96, %c0_94, %c0_95] : memref<8x8x1x8x128xf32, #tpu.memory_space<vmem>>, vector<1x1x1x8x128xf32>
    %98 = vector.shape_cast %97 : vector<1x1x1x8x128xf32> to vector<8x128xf32>
    %99 = vector.shape_cast %95 : vector<8x128xf32> to vector<1x1x1x8x128xf32>
    tpu.vector_store %arg2[%c0_92, %c3_93, %96, %c0_94, %c0_95], %99 {strides = array<i32>} : memref<8x8x1x8x128xf32, #tpu.memory_space<vmem>>, vector<1x1x1x8x128xf32>,
    %c0_96 = arith.constant 0 : index
    %c7_97 = arith.constant 7 : index
    %100 = arith.index_cast %c0_i32 : i32 to index
    %c0_98 = arith.constant 0 : index
    %c0_99 = arith.constant 0 : index
    %101 = vector.load %arg1[%c0_96, %c7_97, %100, %c0_98, %c0_99] : memref<16x16x1x8x128xf32, #tpu.memory_space<vmem>>, vector<1x1x1x8x128xf32>
    %102 = vector.shape_cast %101 : vector<1x1x1x8x128xf32> to vector<8x128xf32>
    %c0_100 = arith.constant 0 : index
    %c8 = arith.constant 8 : index
    %103 = arith.index_cast %c0_i32 : i32 to index
    %c0_101 = arith.constant 0 : index
    %c0_102 = arith.constant 0 : index
    %104 = vector.load %arg1[%c0_100, %c8, %103, %c0_101, %c0_102] : memref<16x16x1x8x128xf32, #tpu.memory_space<vmem>>, vector<1x1x1x8x128xf32>
    %105 = vector.shape_cast %104 : vector<1x1x1x8x128xf32> to vector<8x128xf32>
    %106 = arith.maximumf %102, %105 : vector<8x128xf32>
    %c0_103 = arith.constant 0 : index
    %c9 = arith.constant 9 : index
    %107 = arith.index_cast %c0_i32 : i32 to index
    %c0_104 = arith.constant 0 : index
    %c0_105 = arith.constant 0 : index
    %108 = vector.load %arg1[%c0_103, %c9, %107, %c0_104, %c0_105] : memref<16x16x1x8x128xf32, #tpu.memory_space<vmem>>, vector<1x1x1x8x128xf32>
    %109 = vector.shape_cast %108 : vector<1x1x1x8x128xf32> to vector<8x128xf32>
    %110 = arith.maximumf %106, %109 : vector<8x128xf32>
    %c1_106 = arith.constant 1 : index
    %c7_107 = arith.constant 7 : index
    %111 = arith.index_cast %c0_i32 : i32 to index
    %c0_108 = arith.constant 0 : index
    %c0_109 = arith.constant 0 : index
    %112 = vector.load %arg1[%c1_106, %c7_107, %111, %c0_108, %c0_109] : memref<16x16x1x8x128xf32, #tpu.memory_space<vmem>>, vector<1x1x1x8x128xf32>
    %113 = vector.shape_cast %112 : vector<1x1x1x8x128xf32> to vector<8x128xf32>
    %114 = arith.maximumf %110, %113 : vector<8x128xf32>
    %c1_110 = arith.constant 1 : index
    %c8_111 = arith.constant 8 : index
    %115 = arith.index_cast %c0_i32 : i32 to index
    %c0_112 = arith.constant 0 : index
    %c0_113 = arith.constant 0 : index
    %116 = vector.load %arg1[%c1_110, %c8_111, %115, %c0_112, %c0_113] : memref<16x16x1x8x128xf32, #tpu.memory_space<vmem>>, vector<1x1x1x8x128xf32>
    %117 = vector.shape_cast %116 : vector<1x1x1x8x128xf32> to vector<8x128xf32>
    %118 = arith.maximumf %114, %117 : vector<8x128xf32>
    %c1_114 = arith.constant 1 : index
    %c9_115 = arith.constant 9 : index
    %119 = arith.index_cast %c0_i32 : i32 to index
    %c0_116 = arith.constant 0 : index
    %c0_117 = arith.constant 0 : index
    %120 = vector.load %arg1[%c1_114, %c9_115, %119, %c0_116, %c0_117] : memref<16x16x1x8x128xf32, #tpu.memory_space<vmem>>, vector<1x1x1x8x128xf32>
    %121 = vector.shape_cast %120 : vector<1x1x1x8x128xf32> to vector<8x128xf32>
    %122 = arith.maximumf %118, %121 : vector<8x128xf32>
    %c0_118 = arith.constant 0 : index
    %c4_119 = arith.constant 4 : index
    %123 = arith.index_cast %c0_i32 : i32 to index
    %c0_120 = arith.constant 0 : index
    %c0_121 = arith.constant 0 : index
    %124 = vector.load %arg2[%c0_118, %c4_119, %123, %c0_120, %c0_121] : memref<8x8x1x8x128xf32, #tpu.memory_space<vmem>>, vector<1x1x1x8x128xf32>
    %125 = vector.shape_cast %124 : vector<1x1x1x8x128xf32> to vector<8x128xf32>
    %126 = vector.shape_cast %122 : vector<8x128xf32> to vector<1x1x1x8x128xf32>
    tpu.vector_store %arg2[%c0_118, %c4_119, %123, %c0_120, %c0_121], %126 {strides = array<i32>} : memref<8x8x1x8x128xf32, #tpu.memory_space<vmem>>, vector<1x1x1x8x128xf32>,
    %c0_122 = arith.constant 0 : index
    %c9_123 = arith.constant 9 : index
    %127 = arith.index_cast %c0_i32 : i32 to index
    %c0_124 = arith.constant 0 : index
    %c0_125 = arith.constant 0 : index
    %128 = vector.load %arg1[%c0_122, %c9_123, %127, %c0_124, %c0_125] : memref<16x16x1x8x128xf32, #tpu.memory_space<vmem>>, vector<1x1x1x8x128xf32>
    %129 = vector.shape_cast %128 : vector<1x1x1x8x128xf32> to vector<8x128xf32>
    %c0_126 = arith.constant 0 : index
    %c10 = arith.constant 10 : index
    %130 = arith.index_cast %c0_i32 : i32 to index
    %c0_127 = arith.constant 0 : index
    %c0_128 = arith.constant 0 : index
    %131 = vector.load %arg1[%c0_126, %c10, %130, %c0_127, %c0_128] : memref<16x16x1x8x128xf32, #tpu.memory_space<vmem>>, vector<1x1x1x8x128xf32>
    %132 = vector.shape_cast %131 : vector<1x1x1x8x128xf32> to vector<8x128xf32>
    %133 = arith.maximumf %129, %132 : vector<8x128xf32>
    %c0_129 = arith.constant 0 : index
    %c11 = arith.constant 11 : index
    %134 = arith.index_cast %c0_i32 : i32 to index
    %c0_130 = arith.constant 0 : index
    %c0_131 = arith.constant 0 : index
    %135 = vector.load %arg1[%c0_129, %c11, %134, %c0_130, %c0_131] : memref<16x16x1x8x128xf32, #tpu.memory_space<vmem>>, vector<1x1x1x8x128xf32>
    %136 = vector.shape_cast %135 : vector<1x1x1x8x128xf32> to vector<8x128xf32>
    %137 = arith.maximumf %133, %136 : vector<8x128xf32>
    %c1_132 = arith.constant 1 : index
    %c9_133 = arith.constant 9 : index
    %138 = arith.index_cast %c0_i32 : i32 to index
    %c0_134 = arith.constant 0 : index
    %c0_135 = arith.constant 0 : index
    %139 = vector.load %arg1[%c1_132, %c9_133, %138, %c0_134, %c0_135] : memref<16x16x1x8x128xf32, #tpu.memory_space<vmem>>, vector<1x1x1x8x128xf32>
    %140 = vector.shape_cast %139 : vector<1x1x1x8x128xf32> to vector<8x128xf32>
    %141 = arith.maximumf %137, %140 : vector<8x128xf32>
    %c1_136 = arith.constant 1 : index
    %c10_137 = arith.constant 10 : index
    %142 = arith.index_cast %c0_i32 : i32 to index
    %c0_138 = arith.constant 0 : index
    %c0_139 = arith.constant 0 : index
    %143 = vector.load %arg1[%c1_136, %c10_137, %142, %c0_138, %c0_139] : memref<16x16x1x8x128xf32, #tpu.memory_space<vmem>>, vector<1x1x1x8x128xf32>
    %144 = vector.shape_cast %143 : vector<1x1x1x8x128xf32> to vector<8x128xf32>
    %145 = arith.maximumf %141, %144 : vector<8x128xf32>
    %c1_140 = arith.constant 1 : index
    %c11_141 = arith.constant 11 : index
    %146 = arith.index_cast %c0_i32 : i32 to index
    %c0_142 = arith.constant 0 : index
    %c0_143 = arith.constant 0 : index
    %147 = vector.load %arg1[%c1_140, %c11_141, %146, %c0_142, %c0_143] : memref<16x16x1x8x128xf32, #tpu.memory_space<vmem>>, vector<1x1x1x8x128xf32>
    %148 = vector.shape_cast %147 : vector<1x1x1x8x128xf32> to vector<8x128xf32>
    %149 = arith.maximumf %145, %148 : vector<8x128xf32>
    %c0_144 = arith.constant 0 : index
    %c5_145 = arith.constant 5 : index
    %150 = arith.index_cast %c0_i32 : i32 to index
    %c0_146 = arith.constant 0 : index
    %c0_147 = arith.constant 0 : index
    %151 = vector.load %arg2[%c0_144, %c5_145, %150, %c0_146, %c0_147] : memref<8x8x1x8x128xf32, #tpu.memory_space<vmem>>, vector<1x1x1x8x128xf32>
    %152 = vector.shape_cast %151 : vector<1x1x1x8x128xf32> to vector<8x128xf32>
    %153 = vector.shape_cast %149 : vector<8x128xf32> to vector<1x1x1x8x128xf32>
    tpu.vector_store %arg2[%c0_144, %c5_145, %150, %c0_146, %c0_147], %153 {strides = array<i32>} : memref<8x8x1x8x128xf32, #tpu.memory_space<vmem>>, vector<1x1x1x8x128xf32>,
    %c0_148 = arith.constant 0 : index
    %c11_149 = arith.constant 11 : index
    %154 = arith.index_cast %c0_i32 : i32 to index
    %c0_150 = arith.constant 0 : index
    %c0_151 = arith.constant 0 : index
    %155 = vector.load %arg1[%c0_148, %c11_149, %154, %c0_150, %c0_151] : memref<16x16x1x8x128xf32, #tpu.memory_space<vmem>>, vector<1x1x1x8x128xf32>
    %156 = vector.shape_cast %155 : vector<1x1x1x8x128xf32> to vector<8x128xf32>
    %c0_152 = arith.constant 0 : index
    %c12 = arith.constant 12 : index
    %157 = arith.index_cast %c0_i32 : i32 to index
    %c0_153 = arith.constant 0 : index
    %c0_154 = arith.constant 0 : index
    %158 = vector.load %arg1[%c0_152, %c12, %157, %c0_153, %c0_154] : memref<16x16x1x8x128xf32, #tpu.memory_space<vmem>>, vector<1x1x1x8x128xf32>
    %159 = vector.shape_cast %158 : vector<1x1x1x8x128xf32> to vector<8x128xf32>
    %160 = arith.maximumf %156, %159 : vector<8x128xf32>
    %c0_155 = arith.constant 0 : index
    %c13 = arith.constant 13 : index
    %161 = arith.index_cast %c0_i32 : i32 to index
    %c0_156 = arith.constant 0 : index
    %c0_157 = arith.constant 0 : index
    %162 = vector.load %arg1[%c0_155, %c13, %161, %c0_156, %c0_157] : memref<16x16x1x8x128xf32, #tpu.memory_space<vmem>>, vector<1x1x1x8x128xf32>
    %163 = vector.shape_cast %162 : vector<1x1x1x8x128xf32> to vector<8x128xf32>
    %164 = arith.maximumf %160, %163 : vector<8x128xf32>
    %c1_158 = arith.constant 1 : index
    %c11_159 = arith.constant 11 : index
    %165 = arith.index_cast %c0_i32 : i32 to index
    %c0_160 = arith.constant 0 : index
    %c0_161 = arith.constant 0 : index
    %166 = vector.load %arg1[%c1_158, %c11_159, %165, %c0_160, %c0_161] : memref<16x16x1x8x128xf32, #tpu.memory_space<vmem>>, vector<1x1x1x8x128xf32>
    %167 = vector.shape_cast %166 : vector<1x1x1x8x128xf32> to vector<8x128xf32>
    %168 = arith.maximumf %164, %167 : vector<8x128xf32>
    %c1_162 = arith.constant 1 : index
    %c12_163 = arith.constant 12 : index
    %169 = arith.index_cast %c0_i32 : i32 to index
    %c0_164 = arith.constant 0 : index
    %c0_165 = arith.constant 0 : index
    %170 = vector.load %arg1[%c1_162, %c12_163, %169, %c0_164, %c0_165] : memref<16x16x1x8x128xf32, #tpu.memory_space<vmem>>, vector<1x1x1x8x128xf32>
    %171 = vector.shape_cast %170 : vector<1x1x1x8x128xf32> to vector<8x128xf32>
    %172 = arith.maximumf %168, %171 : vector<8x128xf32>
    %c1_166 = arith.constant 1 : index
    %c13_167 = arith.constant 13 : index
    %173 = arith.index_cast %c0_i32 : i32 to index
    %c0_168 = arith.constant 0 : index
    %c0_169 = arith.constant 0 : index
    %174 = vector.load %arg1[%c1_166, %c13_167, %173, %c0_168, %c0_169] : memref<16x16x1x8x128xf32, #tpu.memory_space<vmem>>, vector<1x1x1x8x128xf32>
    %175 = vector.shape_cast %174 : vector<1x1x1x8x128xf32> to vector<8x128xf32>
    %176 = arith.maximumf %172, %175 : vector<8x128xf32>
    %c0_170 = arith.constant 0 : index
    %c6_171 = arith.constant 6 : index
    %177 = arith.index_cast %c0_i32 : i32 to index
    %c0_172 = arith.constant 0 : index
    %c0_173 = arith.constant 0 : index
    %178 = vector.load %arg2[%c0_170, %c6_171, %177, %c0_172, %c0_173] : memref<8x8x1x8x128xf32, #tpu.memory_space<vmem>>, vector<1x1x1x8x128xf32>
    %179 = vector.shape_cast %178 : vector<1x1x1x8x128xf32> to vector<8x128xf32>
    %180 = vector.shape_cast %176 : vector<8x128xf32> to vector<1x1x1x8x128xf32>
    tpu.vector_store %arg2[%c0_170, %c6_171, %177, %c0_172, %c0_173], %180 {strides = array<i32>} : memref<8x8x1x8x128xf32, #tpu.memory_space<vmem>>, vector<1x1x1x8x128xf32>,
    %c0_174 = arith.constant 0 : index
    %c13_175 = arith.constant 13 : index
    %181 = arith.index_cast %c0_i32 : i32 to index
    %c0_176 = arith.constant 0 : index
    %c0_177 = arith.constant 0 : index
    %182 = vector.load %arg1[%c0_174, %c13_175, %181, %c0_176, %c0_177] : memref<16x16x1x8x128xf32, #tpu.memory_space<vmem>>, vector<1x1x1x8x128xf32>
    %183 = vector.shape_cast %182 : vector<1x1x1x8x128xf32> to vector<8x128xf32>
    %c0_178 = arith.constant 0 : index
    %c14 = arith.constant 14 : index
    %184 = arith.index_cast %c0_i32 : i32 to index
    %c0_179 = arith.constant 0 : index
    %c0_180 = arith.constant 0 : index
    %185 = vector.load %arg1[%c0_178, %c14, %184, %c0_179, %c0_180] : memref<16x16x1x8x128xf32, #tpu.memory_space<vmem>>, vector<1x1x1x8x128xf32>
    %186 = vector.shape_cast %185 : vector<1x1x1x8x128xf32> to vector<8x128xf32>
    %187 = arith.maximumf %183, %186 : vector<8x128xf32>
    %c0_181 = arith.constant 0 : index
    %c15 = arith.constant 15 : index
    %188 = arith.index_cast %c0_i32 : i32 to index
    %c0_182 = arith.constant 0 : index
    %c0_183 = arith.constant 0 : index
    %189 = vector.load %arg1[%c0_181, %c15, %188, %c0_182, %c0_183] : memref<16x16x1x8x128xf32, #tpu.memory_space<vmem>>, vector<1x1x1x8x128xf32>
    %190 = vector.shape_cast %189 : vector<1x1x1x8x128xf32> to vector<8x128xf32>
    %191 = arith.maximumf %187, %190 : vector<8x128xf32>
    %c1_184 = arith.constant 1 : index
    %c13_185 = arith.constant 13 : index
    %192 = arith.index_cast %c0_i32 : i32 to index
    %c0_186 = arith.constant 0 : index
    %c0_187 = arith.constant 0 : index
    %193 = vector.load %arg1[%c1_184, %c13_185, %192, %c0_186, %c0_187] : memref<16x16x1x8x128xf32, #tpu.memory_space<vmem>>, vector<1x1x1x8x128xf32>
    %194 = vector.shape_cast %193 : vector<1x1x1x8x128xf32> to vector<8x128xf32>
    %195 = arith.maximumf %191, %194 : vector<8x128xf32>
    %c1_188 = arith.constant 1 : index
    %c14_189 = arith.constant 14 : index
    %196 = arith.index_cast %c0_i32 : i32 to index
    %c0_190 = arith.constant 0 : index
    %c0_191 = arith.constant 0 : index
    %197 = vector.load %arg1[%c1_188, %c14_189, %196, %c0_190, %c0_191] : memref<16x16x1x8x128xf32, #tpu.memory_space<vmem>>, vector<1x1x1x8x128xf32>
    %198 = vector.shape_cast %197 : vector<1x1x1x8x128xf32> to vector<8x128xf32>
    %199 = arith.maximumf %195, %198 : vector<8x128xf32>
    %c1_192 = arith.constant 1 : index
    %c15_193 = arith.constant 15 : index
    %200 = arith.index_cast %c0_i32 : i32 to index
    %c0_194 = arith.constant 0 : index
    %c0_195 = arith.constant 0 : index
    %201 = vector.load %arg1[%c1_192, %c15_193, %200, %c0_194, %c0_195] : memref<16x16x1x8x128xf32, #tpu.memory_space<vmem>>, vector<1x1x1x8x128xf32>
    %202 = vector.shape_cast %201 : vector<1x1x1x8x128xf32> to vector<8x128xf32>
    %203 = arith.maximumf %199, %202 : vector<8x128xf32>
    %c0_196 = arith.constant 0 : index
    %c7_197 = arith.constant 7 : index
    %204 = arith.index_cast %c0_i32 : i32 to index
    %c0_198 = arith.constant 0 : index
    %c0_199 = arith.constant 0 : index
    %205 = vector.load %arg2[%c0_196, %c7_197, %204, %c0_198, %c0_199] : memref<8x8x1x8x128xf32, #tpu.memory_space<vmem>>, vector<1x1x1x8x128xf32>
    %206 = vector.shape_cast %205 : vector<1x1x1x8x128xf32> to vector<8x128xf32>
    %207 = vector.shape_cast %203 : vector<8x128xf32> to vector<1x1x1x8x128xf32>
    tpu.vector_store %arg2[%c0_196, %c7_197, %204, %c0_198, %c0_199], %207 {strides = array<i32>} : memref<8x8x1x8x128xf32, #tpu.memory_space<vmem>>, vector<1x1x1x8x128xf32>,
    %c1_200 = arith.constant 1 : index
    %c0_201 = arith.constant 0 : index
    %208 = arith.index_cast %c0_i32 : i32 to index
    %c0_202 = arith.constant 0 : index
    %c0_203 = arith.constant 0 : index
    %209 = vector.load %arg1[%c1_200, %c0_201, %208, %c0_202, %c0_203] : memref<16x16x1x8x128xf32, #tpu.memory_space<vmem>>, vector<1x1x1x8x128xf32>
    %210 = vector.shape_cast %209 : vector<1x1x1x8x128xf32> to vector<8x128xf32>
    %c1_204 = arith.constant 1 : index
    %c1_205 = arith.constant 1 : index
    %211 = arith.index_cast %c0_i32 : i32 to index
    %c0_206 = arith.constant 0 : index
    %c0_207 = arith.constant 0 : index
    %212 = vector.load %arg1[%c1_204, %c1_205, %211, %c0_206, %c0_207] : memref<16x16x1x8x128xf32, #tpu.memory_space<vmem>>, vector<1x1x1x8x128xf32>
    %213 = vector.shape_cast %212 : vector<1x1x1x8x128xf32> to vector<8x128xf32>
    %214 = arith.maximumf %210, %213 : vector<8x128xf32>
    %c2_208 = arith.constant 2 : index
    %c0_209 = arith.constant 0 : index
    %215 = arith.index_cast %c0_i32 : i32 to index
    %c0_210 = arith.constant 0 : index
    %c0_211 = arith.constant 0 : index
    %216 = vector.load %arg1[%c2_208, %c0_209, %215, %c0_210, %c0_211] : memref<16x16x1x8x128xf32, #tpu.memory_space<vmem>>, vector<1x1x1x8x128xf32>
    %217 = vector.shape_cast %216 : vector<1x1x1x8x128xf32> to vector<8x128xf32>
    %218 = arith.maximumf %214, %217 : vector<8x128xf32>
    %c2_212 = arith.constant 2 : index
    %c1_213 = arith.constant 1 : index
    %219 = arith.index_cast %c0_i32 : i32 to index
    %c0_214 = arith.constant 0 : index
    %c0_215 = arith.constant 0 : index
    %220 = vector.load %arg1[%c2_212, %c1_213, %219, %c0_214, %c0_215] : memref<16x16x1x8x128xf32, #tpu.memory_space<vmem>>, vector<1x1x1x8x128xf32>
    %221 = vector.shape_cast %220 : vector<1x1x1x8x128xf32> to vector<8x128xf32>
    %222 = arith.maximumf %218, %221 : vector<8x128xf32>
    %c3_216 = arith.constant 3 : index
    %c0_217 = arith.constant 0 : index
    %223 = arith.index_cast %c0_i32 : i32 to index
    %c0_218 = arith.constant 0 : index
    %c0_219 = arith.constant 0 : index
    %224 = vector.load %arg1[%c3_216, %c0_217, %223, %c0_218, %c0_219] : memref<16x16x1x8x128xf32, #tpu.memory_space<vmem>>, vector<1x1x1x8x128xf32>
    %225 = vector.shape_cast %224 : vector<1x1x1x8x128xf32> to vector<8x128xf32>
    %226 = arith.maximumf %222, %225 : vector<8x128xf32>
    %c3_220 = arith.constant 3 : index
    %c1_221 = arith.constant 1 : index
    %227 = arith.index_cast %c0_i32 : i32 to index
    %c0_222 = arith.constant 0 : index
    %c0_223 = arith.constant 0 : index
    %228 = vector.load %arg1[%c3_220, %c1_221, %227, %c0_222, %c0_223] : memref<16x16x1x8x128xf32, #tpu.memory_space<vmem>>, vector<1x1x1x8x128xf32>
    %229 = vector.shape_cast %228 : vector<1x1x1x8x128xf32> to vector<8x128xf32>
    %230 = arith.maximumf %226, %229 : vector<8x128xf32>
    %c1_224 = arith.constant 1 : index
    %c0_225 = arith.constant 0 : index
    %231 = arith.index_cast %c0_i32 : i32 to index
    %c0_226 = arith.constant 0 : index
    %c0_227 = arith.constant 0 : index
    %232 = vector.load %arg2[%c1_224, %c0_225, %231, %c0_226, %c0_227] : memref<8x8x1x8x128xf32, #tpu.memory_space<vmem>>, vector<1x1x1x8x128xf32>
    %233 = vector.shape_cast %232 : vector<1x1x1x8x128xf32> to vector<8x128xf32>
    %234 = vector.shape_cast %230 : vector<8x128xf32> to vector<1x1x1x8x128xf32>
    tpu.vector_store %arg2[%c1_224, %c0_225, %231, %c0_226, %c0_227], %234 {strides = array<i32>} : memref<8x8x1x8x128xf32, #tpu.memory_space<vmem>>, vector<1x1x1x8x128xf32>,
    %c1_228 = arith.constant 1 : index
    %c1_229 = arith.constant 1 : index
    %235 = arith.index_cast %c0_i32 : i32 to index
    %c0_230 = arith.constant 0 : index
    %c0_231 = arith.constant 0 : index
    %236 = vector.load %arg1[%c1_228, %c1_229, %235, %c0_230, %c0_231] : memref<16x16x1x8x128xf32, #tpu.memory_space<vmem>>, vector<1x1x1x8x128xf32>
    %237 = vector.shape_cast %236 : vector<1x1x1x8x128xf32> to vector<8x128xf32>
    %c1_232 = arith.constant 1 : index
    %c2_233 = arith.constant 2 : index
    %238 = arith.index_cast %c0_i32 : i32 to index
    %c0_234 = arith.constant 0 : index
    %c0_235 = arith.constant 0 : index
    %239 = vector.load %arg1[%c1_232, %c2_233, %238, %c0_234, %c0_235] : memref<16x16x1x8x128xf32, #tpu.memory_space<vmem>>, vector<1x1x1x8x128xf32>
    %240 = vector.shape_cast %239 : vector<1x1x1x8x128xf32> to vector<8x128xf32>
    %241 = arith.maximumf %237, %240 : vector<8x128xf32>
    %c1_236 = arith.constant 1 : index
    %c3_237 = arith.constant 3 : index
    %242 = arith.index_cast %c0_i32 : i32 to index
    %c0_238 = arith.constant 0 : index
    %c0_239 = arith.constant 0 : index
    %243 = vector.load %arg1[%c1_236, %c3_237, %242, %c0_238, %c0_239] : memref<16x16x1x8x128xf32, #tpu.memory_space<vmem>>, vector<1x1x1x8x128xf32>
    %244 = vector.shape_cast %243 : vector<1x1x1x8x128xf32> to vector<8x128xf32>
    %245 = arith.maximumf %241, %244 : vector<8x128xf32>
    %c2_240 = arith.constant 2 : index
    %c1_241 = arith.constant 1 : index
    %246 = arith.index_cast %c0_i32 : i32 to index
    %c0_242 = arith.constant 0 : index
    %c0_243 = arith.constant 0 : index
    %247 = vector.load %arg1[%c2_240, %c1_241, %246, %c0_242, %c0_243] : memref<16x16x1x8x128xf32, #tpu.memory_space<vmem>>, vector<1x1x1x8x128xf32>
    %248 = vector.shape_cast %247 : vector<1x1x1x8x128xf32> to vector<8x128xf32>
    %249 = arith.maximumf %245, %248 : vector<8x128xf32>
    %c2_244 = arith.constant 2 : index
    %c2_245 = arith.constant 2 : index
    %250 = arith.index_cast %c0_i32 : i32 to index
    %c0_246 = arith.constant 0 : index
    %c0_247 = arith.constant 0 : index
    %251 = vector.load %arg1[%c2_244, %c2_245, %250, %c0_246, %c0_247] : memref<16x16x1x8x128xf32, #tpu.memory_space<vmem>>, vector<1x1x1x8x128xf32>
    %252 = vector.shape_cast %251 : vector<1x1x1x8x128xf32> to vector<8x128xf32>
    %253 = arith.maximumf %249, %252 : vector<8x128xf32>
    %c2_248 = arith.constant 2 : index
    %c3_249 = arith.constant 3 : index
    %254 = arith.index_cast %c0_i32 : i32 to index
    %c0_250 = arith.constant 0 : index
    %c0_251 = arith.constant 0 : index
    %255 = vector.load %arg1[%c2_248, %c3_249, %254, %c0_250, %c0_251] : memref<16x16x1x8x128xf32, #tpu.memory_space<vmem>>, vector<1x1x1x8x128xf32>
    %256 = vector.shape_cast %255 : vector<1x1x1x8x128xf32> to vector<8x128xf32>
    %257 = arith.maximumf %253, %256 : vector<8x128xf32>
    %c3_252 = arith.constant 3 : index
    %c1_253 = arith.constant 1 : index
    %258 = arith.index_cast %c0_i32 : i32 to index
    %c0_254 = arith.constant 0 : index
    %c0_255 = arith.constant 0 : index
    %259 = vector.load %arg1[%c3_252, %c1_253, %258, %c0_254, %c0_255] : memref<16x16x1x8x128xf32, #tpu.memory_space<vmem>>, vector<1x1x1x8x128xf32>
    %260 = vector.shape_cast %259 : vector<1x1x1x8x128xf32> to vector<8x128xf32>
    %261 = arith.maximumf %257, %260 : vector<8x128xf32>
    %c3_256 = arith.constant 3 : index
    %c2_257 = arith.constant 2 : index
    %262 = arith.index_cast %c0_i32 : i32 to index
    %c0_258 = arith.constant 0 : index
    %c0_259 = arith.constant 0 : index
    %263 = vector.load %arg1[%c3_256, %c2_257, %262, %c0_258, %c0_259] : memref<16x16x1x8x128xf32, #tpu.memory_space<vmem>>, vector<1x1x1x8x128xf32>
    %264 = vector.shape_cast %263 : vector<1x1x1x8x128xf32> to vector<8x128xf32>
    %265 = arith.maximumf %261, %264 : vector<8x128xf32>
    %c3_260 = arith.constant 3 : index
    %c3_261 = arith.constant 3 : index
    %266 = arith.index_cast %c0_i32 : i32 to index
    %c0_262 = arith.constant 0 : index
    %c0_263 = arith.constant 0 : index
    %267 = vector.load %arg1[%c3_260, %c3_261, %266, %c0_262, %c0_263] : memref<16x16x1x8x128xf32, #tpu.memory_space<vmem>>, vector<1x1x1x8x128xf32>
    %268 = vector.shape_cast %267 : vector<1x1x1x8x128xf32> to vector<8x128xf32>
    %269 = arith.maximumf %265, %268 : vector<8x128xf32>
    %c1_264 = arith.constant 1 : index
    %c1_265 = arith.constant 1 : index
    %270 = arith.index_cast %c0_i32 : i32 to index
    %c0_266 = arith.constant 0 : index
    %c0_267 = arith.constant 0 : index
    %271 = vector.load %arg2[%c1_264, %c1_265, %270, %c0_266, %c0_267] : memref<8x8x1x8x128xf32, #tpu.memory_space<vmem>>, vector<1x1x1x8x128xf32>
    %272 = vector.shape_cast %271 : vector<1x1x1x8x128xf32> to vector<8x128xf32>
    %273 = vector.shape_cast %269 : vector<8x128xf32> to vector<1x1x1x8x128xf32>
    tpu.vector_store %arg2[%c1_264, %c1_265, %270, %c0_266, %c0_267], %273 {strides = array<i32>} : memref<8x8x1x8x128xf32, #tpu.memory_space<vmem>>, vector<1x1x1x8x128xf32>,
    %c1_268 = arith.constant 1 : index
    %c3_269 = arith.constant 3 : index
    %274 = arith.index_cast %c0_i32 : i32 to index
    %c0_270 = arith.constant 0 : index
    %c0_271 = arith.constant 0 : index
    %275 = vector.load %arg1[%c1_268, %c3_269, %274, %c0_270, %c0_271] : memref<16x16x1x8x128xf32, #tpu.memory_space<vmem>>, vector<1x1x1x8x128xf32>
    %276 = vector.shape_cast %275 : vector<1x1x1x8x128xf32> to vector<8x128xf32>
    %c1_272 = arith.constant 1 : index
    %c4_273 = arith.constant 4 : index
    %277 = arith.index_cast %c0_i32 : i32 to index
    %c0_274 = arith.constant 0 : index
    %c0_275 = arith.constant 0 : index
    %278 = vector.load %arg1[%c1_272, %c4_273, %277, %c0_274, %c0_275] : memref<16x16x1x8x128xf32, #tpu.memory_space<vmem>>, vector<1x1x1x8x128xf32>
    %279 = vector.shape_cast %278 : vector<1x1x1x8x128xf32> to vector<8x128xf32>
    %280 = arith.maximumf %276, %279 : vector<8x128xf32>
    %c1_276 = arith.constant 1 : index
    %c5_277 = arith.constant 5 : index
    %281 = arith.index_cast %c0_i32 : i32 to index
    %c0_278 = arith.constant 0 : index
    %c0_279 = arith.constant 0 : index
    %282 = vector.load %arg1[%c1_276, %c5_277, %281, %c0_278, %c0_279] : memref<16x16x1x8x128xf32, #tpu.memory_space<vmem>>, vector<1x1x1x8x128xf32>
    %283 = vector.shape_cast %282 : vector<1x1x1x8x128xf32> to vector<8x128xf32>
    %284 = arith.maximumf %280, %283 : vector<8x128xf32>
    %c2_280 = arith.constant 2 : index
    %c3_281 = arith.constant 3 : index
    %285 = arith.index_cast %c0_i32 : i32 to index
    %c0_282 = arith.constant 0 : index
    %c0_283 = arith.constant 0 : index
    %286 = vector.load %arg1[%c2_280, %c3_281, %285, %c0_282, %c0_283] : memref<16x16x1x8x128xf32, #tpu.memory_space<vmem>>, vector<1x1x1x8x128xf32>
    %287 = vector.shape_cast %286 : vector<1x1x1x8x128xf32> to vector<8x128xf32>
    %288 = arith.maximumf %284, %287 : vector<8x128xf32>
    %c2_284 = arith.constant 2 : index
    %c4_285 = arith.constant 4 : index
    %289 = arith.index_cast %c0_i32 : i32 to index
    %c0_286 = arith.constant 0 : index
    %c0_287 = arith.constant 0 : index
    %290 = vector.load %arg1[%c2_284, %c4_285, %289, %c0_286, %c0_287] : memref<16x16x1x8x128xf32, #tpu.memory_space<vmem>>, vector<1x1x1x8x128xf32>
    %291 = vector.shape_cast %290 : vector<1x1x1x8x128xf32> to vector<8x128xf32>
    %292 = arith.maximumf %288, %291 : vector<8x128xf32>
    %c2_288 = arith.constant 2 : index
    %c5_289 = arith.constant 5 : index
    %293 = arith.index_cast %c0_i32 : i32 to index
    %c0_290 = arith.constant 0 : index
    %c0_291 = arith.constant 0 : index
    %294 = vector.load %arg1[%c2_288, %c5_289, %293, %c0_290, %c0_291] : memref<16x16x1x8x128xf32, #tpu.memory_space<vmem>>, vector<1x1x1x8x128xf32>
    %295 = vector.shape_cast %294 : vector<1x1x1x8x128xf32> to vector<8x128xf32>
    %296 = arith.maximumf %292, %295 : vector<8x128xf32>
    %c3_292 = arith.constant 3 : index
    %c3_293 = arith.constant 3 : index
    %297 = arith.index_cast %c0_i32 : i32 to index
    %c0_294 = arith.constant 0 : index
    %c0_295 = arith.constant 0 : index
    %298 = vector.load %arg1[%c3_292, %c3_293, %297, %c0_294, %c0_295] : memref<16x16x1x8x128xf32, #tpu.memory_space<vmem>>, vector<1x1x1x8x128xf32>
    %299 = vector.shape_cast %298 : vector<1x1x1x8x128xf32> to vector<8x128xf32>
    %300 = arith.maximumf %296, %299 : vector<8x128xf32>
    %c3_296 = arith.constant 3 : index
    %c4_297 = arith.constant 4 : index
    %301 = arith.index_cast %c0_i32 : i32 to index
    %c0_298 = arith.constant 0 : index
    %c0_299 = arith.constant 0 : index
    %302 = vector.load %arg1[%c3_296, %c4_297, %301, %c0_298, %c0_299] : memref<16x16x1x8x128xf32, #tpu.memory_space<vmem>>, vector<1x1x1x8x128xf32>
    %303 = vector.shape_cast %302 : vector<1x1x1x8x128xf32> to vector<8x128xf32>
    %304 = arith.maximumf %300, %303 : vector<8x128xf32>
    %c3_300 = arith.constant 3 : index
    %c5_301 = arith.constant 5 : index
    %305 = arith.index_cast %c0_i32 : i32 to index
    %c0_302 = arith.constant 0 : index
    %c0_303 = arith.constant 0 : index
    %306 = vector.load %arg1[%c3_300, %c5_301, %305, %c0_302, %c0_303] : memref<16x16x1x8x128xf32, #tpu.memory_space<vmem>>, vector<1x1x1x8x128xf32>
    %307 = vector.shape_cast %306 : vector<1x1x1x8x128xf32> to vector<8x128xf32>
    %308 = arith.maximumf %304, %307 : vector<8x128xf32>
    %c1_304 = arith.constant 1 : index
    %c2_305 = arith.constant 2 : index
    %309 = arith.index_cast %c0_i32 : i32 to index
    %c0_306 = arith.constant 0 : index
    %c0_307 = arith.constant 0 : index
    %310 = vector.load %arg2[%c1_304, %c2_305, %309, %c0_306, %c0_307] : memref<8x8x1x8x128xf32, #tpu.memory_space<vmem>>, vector<1x1x1x8x128xf32>
    %311 = vector.shape_cast %310 : vector<1x1x1x8x128xf32> to vector<8x128xf32>
    %312 = vector.shape_cast %308 : vector<8x128xf32> to vector<1x1x1x8x128xf32>
    tpu.vector_store %arg2[%c1_304, %c2_305, %309, %c0_306, %c0_307], %312 {strides = array<i32>} : memref<8x8x1x8x128xf32, #tpu.memory_space<vmem>>, vector<1x1x1x8x128xf32>,
    %c1_308 = arith.constant 1 : index
    %c5_309 = arith.constant 5 : index
    %313 = arith.index_cast %c0_i32 : i32 to index
    %c0_310 = arith.constant 0 : index
    %c0_311 = arith.constant 0 : index
    %314 = vector.load %arg1[%c1_308, %c5_309, %313, %c0_310, %c0_311] : memref<16x16x1x8x128xf32, #tpu.memory_space<vmem>>, vector<1x1x1x8x128xf32>
    %315 = vector.shape_cast %314 : vector<1x1x1x8x128xf32> to vector<8x128xf32>
    %c1_312 = arith.constant 1 : index
    %c6_313 = arith.constant 6 : index
    %316 = arith.index_cast %c0_i32 : i32 to index
    %c0_314 = arith.constant 0 : index
    %c0_315 = arith.constant 0 : index
    %317 = vector.load %arg1[%c1_312, %c6_313, %316, %c0_314, %c0_315] : memref<16x16x1x8x128xf32, #tpu.memory_space<vmem>>, vector<1x1x1x8x128xf32>
    %318 = vector.shape_cast %317 : vector<1x1x1x8x128xf32> to vector<8x128xf32>
    %319 = arith.maximumf %315, %318 : vector<8x128xf32>
    %c1_316 = arith.constant 1 : index
    %c7_317 = arith.constant 7 : index
    %320 = arith.index_cast %c0_i32 : i32 to index
    %c0_318 = arith.constant 0 : index
    %c0_319 = arith.constant 0 : index
    %321 = vector.load %arg1[%c1_316, %c7_317, %320, %c0_318, %c0_319] : memref<16x16x1x8x128xf32, #tpu.memory_space<vmem>>, vector<1x1x1x8x128xf32>
    %322 = vector.shape_cast %321 : vector<1x1x1x8x128xf32> to vector<8x128xf32>
    %323 = arith.maximumf %319, %322 : vector<8x128xf32>
    %c2_320 = arith.constant 2 : index
    %c5_321 = arith.constant 5 : index
    %324 = arith.index_cast %c0_i32 : i32 to index
    %c0_322 = arith.constant 0 : index
    %c0_323 = arith.constant 0 : index
    %325 = vector.load %arg1[%c2_320, %c5_321, %324, %c0_322, %c0_323] : memref<16x16x1x8x128xf32, #tpu.memory_space<vmem>>, vector<1x1x1x8x128xf32>
    %326 = vector.shape_cast %325 : vector<1x1x1x8x128xf32> to vector<8x128xf32>
    %327 = arith.maximumf %323, %326 : vector<8x128xf32>
    %c2_324 = arith.constant 2 : index
    %c6_325 = arith.constant 6 : index
    %328 = arith.index_cast %c0_i32 : i32 to index
    %c0_326 = arith.constant 0 : index
    %c0_327 = arith.constant 0 : index
    %329 = vector.load %arg1[%c2_324, %c6_325, %328, %c0_326, %c0_327] : memref<16x16x1x8x128xf32, #tpu.memory_space<vmem>>, vector<1x1x1x8x128xf32>
    %330 = vector.shape_cast %329 : vector<1x1x1x8x128xf32> to vector<8x128xf32>
    %331 = arith.maximumf %327, %330 : vector<8x128xf32>
    %c2_328 = arith.constant 2 : index
    %c7_329 = arith.constant 7 : index
    %332 = arith.index_cast %c0_i32 : i32 to index
    %c0_330 = arith.constant 0 : index
    %c0_331 = arith.constant 0 : index
    %333 = vector.load %arg1[%c2_328, %c7_329, %332, %c0_330, %c0_331] : memref<16x16x1x8x128xf32, #tpu.memory_space<vmem>>, vector<1x1x1x8x128xf32>
    %334 = vector.shape_cast %333 : vector<1x1x1x8x128xf32> to vector<8x128xf32>
    %335 = arith.maximumf %331, %334 : vector<8x128xf32>
    %c3_332 = arith.constant 3 : index
    %c5_333 = arith.constant 5 : index
    %336 = arith.index_cast %c0_i32 : i32 to index
    %c0_334 = arith.constant 0 : index
    %c0_335 = arith.constant 0 : index
    %337 = vector.load %arg1[%c3_332, %c5_333, %336, %c0_334, %c0_335] : memref<16x16x1x8x128xf32, #tpu.memory_space<vmem>>, vector<1x1x1x8x128xf32>
    %338 = vector.shape_cast %337 : vector<1x1x1x8x128xf32> to vector<8x128xf32>
    %339 = arith.maximumf %335, %338 : vector<8x128xf32>
    %c3_336 = arith.constant 3 : index
    %c6_337 = arith.constant 6 : index
    %340 = arith.index_cast %c0_i32 : i32 to index
    %c0_338 = arith.constant 0 : index
    %c0_339 = arith.constant 0 : index
    %341 = vector.load %arg1[%c3_336, %c6_337, %340, %c0_338, %c0_339] : memref<16x16x1x8x128xf32, #tpu.memory_space<vmem>>, vector<1x1x1x8x128xf32>
    %342 = vector.shape_cast %341 : vector<1x1x1x8x128xf32> to vector<8x128xf32>
    %343 = arith.maximumf %339, %342 : vector<8x128xf32>
    %c3_340 = arith.constant 3 : index
    %c7_341 = arith.constant 7 : index
    %344 = arith.index_cast %c0_i32 : i32 to index
    %c0_342 = arith.constant 0 : index
    %c0_343 = arith.constant 0 : index
    %345 = vector.load %arg1[%c3_340, %c7_341, %344, %c0_342, %c0_343] : memref<16x16x1x8x128xf32, #tpu.memory_space<vmem>>, vector<1x1x1x8x128xf32>
    %346 = vector.shape_cast %345 : vector<1x1x1x8x128xf32> to vector<8x128xf32>
    %347 = arith.maximumf %343, %346 : vector<8x128xf32>
    %c1_344 = arith.constant 1 : index
    %c3_345 = arith.constant 3 : index
    %348 = arith.index_cast %c0_i32 : i32 to index
    %c0_346 = arith.constant 0 : index
    %c0_347 = arith.constant 0 : index
    %349 = vector.load %arg2[%c1_344, %c3_345, %348, %c0_346, %c0_347] : memref<8x8x1x8x128xf32, #tpu.memory_space<vmem>>, vector<1x1x1x8x128xf32>
    %350 = vector.shape_cast %349 : vector<1x1x1x8x128xf32> to vector<8x128xf32>
    %351 = vector.shape_cast %347 : vector<8x128xf32> to vector<1x1x1x8x128xf32>
    tpu.vector_store %arg2[%c1_344, %c3_345, %348, %c0_346, %c0_347], %351 {strides = array<i32>} : memref<8x8x1x8x128xf32, #tpu.memory_space<vmem>>, vector<1x1x1x8x128xf32>,
    %c1_348 = arith.constant 1 : index
    %c7_349 = arith.constant 7 : index
    %352 = arith.index_cast %c0_i32 : i32 to index
    %c0_350 = arith.constant 0 : index
    %c0_351 = arith.constant 0 : index
    %353 = vector.load %arg1[%c1_348, %c7_349, %352, %c0_350, %c0_351] : memref<16x16x1x8x128xf32, #tpu.memory_space<vmem>>, vector<1x1x1x8x128xf32>
    %354 = vector.shape_cast %353 : vector<1x1x1x8x128xf32> to vector<8x128xf32>
    %c1_352 = arith.constant 1 : index
    %c8_353 = arith.constant 8 : index
    %355 = arith.index_cast %c0_i32 : i32 to index
    %c0_354 = arith.constant 0 : index
    %c0_355 = arith.constant 0 : index
    %356 = vector.load %arg1[%c1_352, %c8_353, %355, %c0_354, %c0_355] : memref<16x16x1x8x128xf32, #tpu.memory_space<vmem>>, vector<1x1x1x8x128xf32>
    %357 = vector.shape_cast %356 : vector<1x1x1x8x128xf32> to vector<8x128xf32>
    %358 = arith.maximumf %354, %357 : vector<8x128xf32>
    %c1_356 = arith.constant 1 : index
    %c9_357 = arith.constant 9 : index
    %359 = arith.index_cast %c0_i32 : i32 to index
    %c0_358 = arith.constant 0 : index
    %c0_359 = arith.constant 0 : index
    %360 = vector.load %arg1[%c1_356, %c9_357, %359, %c0_358, %c0_359] : memref<16x16x1x8x128xf32, #tpu.memory_space<vmem>>, vector<1x1x1x8x128xf32>
    %361 = vector.shape_cast %360 : vector<1x1x1x8x128xf32> to vector<8x128xf32>
    %362 = arith.maximumf %358, %361 : vector<8x128xf32>
    %c2_360 = arith.constant 2 : index
    %c7_361 = arith.constant 7 : index
    %363 = arith.index_cast %c0_i32 : i32 to index
    %c0_362 = arith.constant 0 : index
    %c0_363 = arith.constant 0 : index
    %364 = vector.load %arg1[%c2_360, %c7_361, %363, %c0_362, %c0_363] : memref<16x16x1x8x128xf32, #tpu.memory_space<vmem>>, vector<1x1x1x8x128xf32>
    %365 = vector.shape_cast %364 : vector<1x1x1x8x128xf32> to vector<8x128xf32>
    %366 = arith.maximumf %362, %365 : vector<8x128xf32>
    %c2_364 = arith.constant 2 : index
    %c8_365 = arith.constant 8 : index
    %367 = arith.index_cast %c0_i32 : i32 to index
    %c0_366 = arith.constant 0 : index
    %c0_367 = arith.constant 0 : index
    %368 = vector.load %arg1[%c2_364, %c8_365, %367, %c0_366, %c0_367] : memref<16x16x1x8x128xf32, #tpu.memory_space<vmem>>, vector<1x1x1x8x128xf32>
    %369 = vector.shape_cast %368 : vector<1x1x1x8x128xf32> to vector<8x128xf32>
    %370 = arith.maximumf %366, %369 : vector<8x128xf32>
    %c2_368 = arith.constant 2 : index
    %c9_369 = arith.constant 9 : index
    %371 = arith.index_cast %c0_i32 : i32 to index
    %c0_370 = arith.constant 0 : index
    %c0_371 = arith.constant 0 : index
    %372 = vector.load %arg1[%c2_368, %c9_369, %371, %c0_370, %c0_371] : memref<16x16x1x8x128xf32, #tpu.memory_space<vmem>>, vector<1x1x1x8x128xf32>
    %373 = vector.shape_cast %372 : vector<1x1x1x8x128xf32> to vector<8x128xf32>
    %374 = arith.maximumf %370, %373 : vector<8x128xf32>
    %c3_372 = arith.constant 3 : index
    %c7_373 = arith.constant 7 : index
    %375 = arith.index_cast %c0_i32 : i32 to index
    %c0_374 = arith.constant 0 : index
    %c0_375 = arith.constant 0 : index
    %376 = vector.load %arg1[%c3_372, %c7_373, %375, %c0_374, %c0_375] : memref<16x16x1x8x128xf32, #tpu.memory_space<vmem>>, vector<1x1x1x8x128xf32>
    %377 = vector.shape_cast %376 : vector<1x1x1x8x128xf32> to vector<8x128xf32>
    %378 = arith.maximumf %374, %377 : vector<8x128xf32>
    %c3_376 = arith.constant 3 : index
    %c8_377 = arith.constant 8 : index
    %379 = arith.index_cast %c0_i32 : i32 to index
    %c0_378 = arith.constant 0 : index
    %c0_379 = arith.constant 0 : index
    %380 = vector.load %arg1[%c3_376, %c8_377, %379, %c0_378, %c0_379] : memref<16x16x1x8x128xf32, #tpu.memory_space<vmem>>, vector<1x1x1x8x128xf32>
    %381 = vector.shape_cast %380 : vector<1x1x1x8x128xf32> to vector<8x128xf32>
    %382 = arith.maximumf %378, %381 : vector<8x128xf32>
    %c3_380 = arith.constant 3 : index
    %c9_381 = arith.constant 9 : index
    %383 = arith.index_cast %c0_i32 : i32 to index
    %c0_382 = arith.constant 0 : index
    %c0_383 = arith.constant 0 : index
    %384 = vector.load %arg1[%c3_380, %c9_381, %383, %c0_382, %c0_383] : memref<16x16x1x8x128xf32, #tpu.memory_space<vmem>>, vector<1x1x1x8x128xf32>
    %385 = vector.shape_cast %384 : vector<1x1x1x8x128xf32> to vector<8x128xf32>
    %386 = arith.maximumf %382, %385 : vector<8x128xf32>
    %c1_384 = arith.constant 1 : index
    %c4_385 = arith.constant 4 : index
    %387 = arith.index_cast %c0_i32 : i32 to index
    %c0_386 = arith.constant 0 : index
    %c0_387 = arith.constant 0 : index
    %388 = vector.load %arg2[%c1_384, %c4_385, %387, %c0_386, %c0_387] : memref<8x8x1x8x128xf32, #tpu.memory_space<vmem>>, vector<1x1x1x8x128xf32>
    %389 = vector.shape_cast %388 : vector<1x1x1x8x128xf32> to vector<8x128xf32>
    %390 = vector.shape_cast %386 : vector<8x128xf32> to vector<1x1x1x8x128xf32>
    tpu.vector_store %arg2[%c1_384, %c4_385, %387, %c0_386, %c0_387], %390 {strides = array<i32>} : memref<8x8x1x8x128xf32, #tpu.memory_space<vmem>>, vector<1x1x1x8x128xf32>,
    %c1_388 = arith.constant 1 : index
    %c9_389 = arith.constant 9 : index
    %391 = arith.index_cast %c0_i32 : i32 to index
    %c0_390 = arith.constant 0 : index
    %c0_391 = arith.constant 0 : index
    %392 = vector.load %arg1[%c1_388, %c9_389, %391, %c0_390, %c0_391] : memref<16x16x1x8x128xf32, #tpu.memory_space<vmem>>, vector<1x1x1x8x128xf32>
    %393 = vector.shape_cast %392 : vector<1x1x1x8x128xf32> to vector<8x128xf32>
    %c1_392 = arith.constant 1 : index
    %c10_393 = arith.constant 10 : index
    %394 = arith.index_cast %c0_i32 : i32 to index
    %c0_394 = arith.constant 0 : index
    %c0_395 = arith.constant 0 : index
    %395 = vector.load %arg1[%c1_392, %c10_393, %394, %c0_394, %c0_395] : memref<16x16x1x8x128xf32, #tpu.memory_space<vmem>>, vector<1x1x1x8x128xf32>
    %396 = vector.shape_cast %395 : vector<1x1x1x8x128xf32> to vector<8x128xf32>
    %397 = arith.maximumf %393, %396 : vector<8x128xf32>
    %c1_396 = arith.constant 1 : index
    %c11_397 = arith.constant 11 : index
    %398 = arith.index_cast %c0_i32 : i32 to index
    %c0_398 = arith.constant 0 : index
    %c0_399 = arith.constant 0 : index
    %399 = vector.load %arg1[%c1_396, %c11_397, %398, %c0_398, %c0_399] : memref<16x16x1x8x128xf32, #tpu.memory_space<vmem>>, vector<1x1x1x8x128xf32>
    %400 = vector.shape_cast %399 : vector<1x1x1x8x128xf32> to vector<8x128xf32>
    %401 = arith.maximumf %397, %400 : vector<8x128xf32>
    %c2_400 = arith.constant 2 : index
    %c9_401 = arith.constant 9 : index
    %402 = arith.index_cast %c0_i32 : i32 to index
    %c0_402 = arith.constant 0 : index
    %c0_403 = arith.constant 0 : index
    %403 = vector.load %arg1[%c2_400, %c9_401, %402, %c0_402, %c0_403] : memref<16x16x1x8x128xf32, #tpu.memory_space<vmem>>, vector<1x1x1x8x128xf32>
    %404 = vector.shape_cast %403 : vector<1x1x1x8x128xf32> to vector<8x128xf32>
    %405 = arith.maximumf %401, %404 : vector<8x128xf32>
    %c2_404 = arith.constant 2 : index
    %c10_405 = arith.constant 10 : index
    %406 = arith.index_cast %c0_i32 : i32 to index
    %c0_406 = arith.constant 0 : index
    %c0_407 = arith.constant 0 : index
    %407 = vector.load %arg1[%c2_404, %c10_405, %406, %c0_406, %c0_407] : memref<16x16x1x8x128xf32, #tpu.memory_space<vmem>>, vector<1x1x1x8x128xf32>
    %408 = vector.shape_cast %407 : vector<1x1x1x8x128xf32> to vector<8x128xf32>
    %409 = arith.maximumf %405, %408 : vector<8x128xf32>
    %c2_408 = arith.constant 2 : index
    %c11_409 = arith.constant 11 : index
    %410 = arith.index_cast %c0_i32 : i32 to index
    %c0_410 = arith.constant 0 : index
    %c0_411 = arith.constant 0 : index
    %411 = vector.load %arg1[%c2_408, %c11_409, %410, %c0_410, %c0_411] : memref<16x16x1x8x128xf32, #tpu.memory_space<vmem>>, vector<1x1x1x8x128xf32>
    %412 = vector.shape_cast %411 : vector<1x1x1x8x128xf32> to vector<8x128xf32>
    %413 = arith.maximumf %409, %412 : vector<8x128xf32>
    %c3_412 = arith.constant 3 : index
    %c9_413 = arith.constant 9 : index
    %414 = arith.index_cast %c0_i32 : i32 to index
    %c0_414 = arith.constant 0 : index
    %c0_415 = arith.constant 0 : index
    %415 = vector.load %arg1[%c3_412, %c9_413, %414, %c0_414, %c0_415] : memref<16x16x1x8x128xf32, #tpu.memory_space<vmem>>, vector<1x1x1x8x128xf32>
    %416 = vector.shape_cast %415 : vector<1x1x1x8x128xf32> to vector<8x128xf32>
    %417 = arith.maximumf %413, %416 : vector<8x128xf32>
    %c3_416 = arith.constant 3 : index
    %c10_417 = arith.constant 10 : index
    %418 = arith.index_cast %c0_i32 : i32 to index
    %c0_418 = arith.constant 0 : index
    %c0_419 = arith.constant 0 : index
    %419 = vector.load %arg1[%c3_416, %c10_417, %418, %c0_418, %c0_419] : memref<16x16x1x8x128xf32, #tpu.memory_space<vmem>>, vector<1x1x1x8x128xf32>
    %420 = vector.shape_cast %419 : vector<1x1x1x8x128xf32> to vector<8x128xf32>
    %421 = arith.maximumf %417, %420 : vector<8x128xf32>
    %c3_420 = arith.constant 3 : index
    %c11_421 = arith.constant 11 : index
    %422 = arith.index_cast %c0_i32 : i32 to index
    %c0_422 = arith.constant 0 : index
    %c0_423 = arith.constant 0 : index
    %423 = vector.load %arg1[%c3_420, %c11_421, %422, %c0_422, %c0_423] : memref<16x16x1x8x128xf32, #tpu.memory_space<vmem>>, vector<1x1x1x8x128xf32>
    %424 = vector.shape_cast %423 : vector<1x1x1x8x128xf32> to vector<8x128xf32>
    %425 = arith.maximumf %421, %424 : vector<8x128xf32>
    %c1_424 = arith.constant 1 : index
    %c5_425 = arith.constant 5 : index
    %426 = arith.index_cast %c0_i32 : i32 to index
    %c0_426 = arith.constant 0 : index
    %c0_427 = arith.constant 0 : index
    %427 = vector.load %arg2[%c1_424, %c5_425, %426, %c0_426, %c0_427] : memref<8x8x1x8x128xf32, #tpu.memory_space<vmem>>, vector<1x1x1x8x128xf32>
    %428 = vector.shape_cast %427 : vector<1x1x1x8x128xf32> to vector<8x128xf32>
    %429 = vector.shape_cast %425 : vector<8x128xf32> to vector<1x1x1x8x128xf32>
    tpu.vector_store %arg2[%c1_424, %c5_425, %426, %c0_426, %c0_427], %429 {strides = array<i32>} : memref<8x8x1x8x128xf32, #tpu.memory_space<vmem>>, vector<1x1x1x8x128xf32>,
    %c1_428 = arith.constant 1 : index
    %c11_429 = arith.constant 11 : index
    %430 = arith.index_cast %c0_i32 : i32 to index
    %c0_430 = arith.constant 0 : index
    %c0_431 = arith.constant 0 : index
    %431 = vector.load %arg1[%c1_428, %c11_429, %430, %c0_430, %c0_431] : memref<16x16x1x8x128xf32, #tpu.memory_space<vmem>>, vector<1x1x1x8x128xf32>
    %432 = vector.shape_cast %431 : vector<1x1x1x8x128xf32> to vector<8x128xf32>
    %c1_432 = arith.constant 1 : index
    %c12_433 = arith.constant 12 : index
    %433 = arith.index_cast %c0_i32 : i32 to index
    %c0_434 = arith.constant 0 : index
    %c0_435 = arith.constant 0 : index
    %434 = vector.load %arg1[%c1_432, %c12_433, %433, %c0_434, %c0_435] : memref<16x16x1x8x128xf32, #tpu.memory_space<vmem>>, vector<1x1x1x8x128xf32>
    %435 = vector.shape_cast %434 : vector<1x1x1x8x128xf32> to vector<8x128xf32>
    %436 = arith.maximumf %432, %435 : vector<8x128xf32>
    %c1_436 = arith.constant 1 : index
    %c13_437 = arith.constant 13 : index
    %437 = arith.index_cast %c0_i32 : i32 to index
    %c0_438 = arith.constant 0 : index
    %c0_439 = arith.constant 0 : index
    %438 = vector.load %arg1[%c1_436, %c13_437, %437, %c0_438, %c0_439] : memref<16x16x1x8x128xf32, #tpu.memory_space<vmem>>, vector<1x1x1x8x128xf32>
    %439 = vector.shape_cast %438 : vector<1x1x1x8x128xf32> to vector<8x128xf32>
    %440 = arith.maximumf %436, %439 : vector<8x128xf32>
    %c2_440 = arith.constant 2 : index
    %c11_441 = arith.constant 11 : index
    %441 = arith.index_cast %c0_i32 : i32 to index
    %c0_442 = arith.constant 0 : index
    %c0_443 = arith.constant 0 : index
    %442 = vector.load %arg1[%c2_440, %c11_441, %441, %c0_442, %c0_443] : memref<16x16x1x8x128xf32, #tpu.memory_space<vmem>>, vector<1x1x1x8x128xf32>
    %443 = vector.shape_cast %442 : vector<1x1x1x8x128xf32> to vector<8x128xf32>
    %444 = arith.maximumf %440, %443 : vector<8x128xf32>
    %c2_444 = arith.constant 2 : index
    %c12_445 = arith.constant 12 : index
    %445 = arith.index_cast %c0_i32 : i32 to index
    %c0_446 = arith.constant 0 : index
    %c0_447 = arith.constant 0 : index
    %446 = vector.load %arg1[%c2_444, %c12_445, %445, %c0_446, %c0_447] : memref<16x16x1x8x128xf32, #tpu.memory_space<vmem>>, vector<1x1x1x8x128xf32>
    %447 = vector.shape_cast %446 : vector<1x1x1x8x128xf32> to vector<8x128xf32>
    %448 = arith.maximumf %444, %447 : vector<8x128xf32>
    %c2_448 = arith.constant 2 : index
    %c13_449 = arith.constant 13 : index
    %449 = arith.index_cast %c0_i32 : i32 to index
    %c0_450 = arith.constant 0 : index
    %c0_451 = arith.constant 0 : index
    %450 = vector.load %arg1[%c2_448, %c13_449, %449, %c0_450, %c0_451] : memref<16x16x1x8x128xf32, #tpu.memory_space<vmem>>, vector<1x1x1x8x128xf32>
    %451 = vector.shape_cast %450 : vector<1x1x1x8x128xf32> to vector<8x128xf32>
    %452 = arith.maximumf %448, %451 : vector<8x128xf32>
    %c3_452 = arith.constant 3 : index
    %c11_453 = arith.constant 11 : index
    %453 = arith.index_cast %c0_i32 : i32 to index
    %c0_454 = arith.constant 0 : index
    %c0_455 = arith.constant 0 : index
    %454 = vector.load %arg1[%c3_452, %c11_453, %453, %c0_454, %c0_455] : memref<16x16x1x8x128xf32, #tpu.memory_space<vmem>>, vector<1x1x1x8x128xf32>
    %455 = vector.shape_cast %454 : vector<1x1x1x8x128xf32> to vector<8x128xf32>
    %456 = arith.maximumf %452, %455 : vector<8x128xf32>
    %c3_456 = arith.constant 3 : index
    %c12_457 = arith.constant 12 : index
    %457 = arith.index_cast %c0_i32 : i32 to index
    %c0_458 = arith.constant 0 : index
    %c0_459 = arith.constant 0 : index
    %458 = vector.load %arg1[%c3_456, %c12_457, %457, %c0_458, %c0_459] : memref<16x16x1x8x128xf32, #tpu.memory_space<vmem>>, vector<1x1x1x8x128xf32>
    %459 = vector.shape_cast %458 : vector<1x1x1x8x128xf32> to vector<8x128xf32>
    %460 = arith.maximumf %456, %459 : vector<8x128xf32>
    %c3_460 = arith.constant 3 : index
    %c13_461 = arith.constant 13 : index
    %461 = arith.index_cast %c0_i32 : i32 to index
    %c0_462 = arith.constant 0 : index
    %c0_463 = arith.constant 0 : index
    %462 = vector.load %arg1[%c3_460, %c13_461, %461, %c0_462, %c0_463] : memref<16x16x1x8x128xf32, #tpu.memory_space<vmem>>, vector<1x1x1x8x128xf32>
    %463 = vector.shape_cast %462 : vector<1x1x1x8x128xf32> to vector<8x128xf32>
    %464 = arith.maximumf %460, %463 : vector<8x128xf32>
    %c1_464 = arith.constant 1 : index
    %c6_465 = arith.constant 6 : index
    %465 = arith.index_cast %c0_i32 : i32 to index
    %c0_466 = arith.constant 0 : index
    %c0_467 = arith.constant 0 : index
    %466 = vector.load %arg2[%c1_464, %c6_465, %465, %c0_466, %c0_467] : memref<8x8x1x8x128xf32, #tpu.memory_space<vmem>>, vector<1x1x1x8x128xf32>
    %467 = vector.shape_cast %466 : vector<1x1x1x8x128xf32> to vector<8x128xf32>
    %468 = vector.shape_cast %464 : vector<8x128xf32> to vector<1x1x1x8x128xf32>
    tpu.vector_store %arg2[%c1_464, %c6_465, %465, %c0_466, %c0_467], %468 {strides = array<i32>} : memref<8x8x1x8x128xf32, #tpu.memory_space<vmem>>, vector<1x1x1x8x128xf32>,
    %c1_468 = arith.constant 1 : index
    %c13_469 = arith.constant 13 : index
    %469 = arith.index_cast %c0_i32 : i32 to index
    %c0_470 = arith.constant 0 : index
    %c0_471 = arith.constant 0 : index
    %470 = vector.load %arg1[%c1_468, %c13_469, %469, %c0_470, %c0_471] : memref<16x16x1x8x128xf32, #tpu.memory_space<vmem>>, vector<1x1x1x8x128xf32>
    %471 = vector.shape_cast %470 : vector<1x1x1x8x128xf32> to vector<8x128xf32>
    %c1_472 = arith.constant 1 : index
    %c14_473 = arith.constant 14 : index
    %472 = arith.index_cast %c0_i32 : i32 to index
    %c0_474 = arith.constant 0 : index
    %c0_475 = arith.constant 0 : index
    %473 = vector.load %arg1[%c1_472, %c14_473, %472, %c0_474, %c0_475] : memref<16x16x1x8x128xf32, #tpu.memory_space<vmem>>, vector<1x1x1x8x128xf32>
    %474 = vector.shape_cast %473 : vector<1x1x1x8x128xf32> to vector<8x128xf32>
    %475 = arith.maximumf %471, %474 : vector<8x128xf32>
    %c1_476 = arith.constant 1 : index
    %c15_477 = arith.constant 15 : index
    %476 = arith.index_cast %c0_i32 : i32 to index
    %c0_478 = arith.constant 0 : index
    %c0_479 = arith.constant 0 : index
    %477 = vector.load %arg1[%c1_476, %c15_477, %476, %c0_478, %c0_479] : memref<16x16x1x8x128xf32, #tpu.memory_space<vmem>>, vector<1x1x1x8x128xf32>
    %478 = vector.shape_cast %477 : vector<1x1x1x8x128xf32> to vector<8x128xf32>
    %479 = arith.maximumf %475, %478 : vector<8x128xf32>
    %c2_480 = arith.constant 2 : index
    %c13_481 = arith.constant 13 : index
    %480 = arith.index_cast %c0_i32 : i32 to index
    %c0_482 = arith.constant 0 : index
    %c0_483 = arith.constant 0 : index
    %481 = vector.load %arg1[%c2_480, %c13_481, %480, %c0_482, %c0_483] : memref<16x16x1x8x128xf32, #tpu.memory_space<vmem>>, vector<1x1x1x8x128xf32>
    %482 = vector.shape_cast %481 : vector<1x1x1x8x128xf32> to vector<8x128xf32>
    %483 = arith.maximumf %479, %482 : vector<8x128xf32>
    %c2_484 = arith.constant 2 : index
    %c14_485 = arith.constant 14 : index
    %484 = arith.index_cast %c0_i32 : i32 to index
    %c0_486 = arith.constant 0 : index
    %c0_487 = arith.constant 0 : index
    %485 = vector.load %arg1[%c2_484, %c14_485, %484, %c0_486, %c0_487] : memref<16x16x1x8x128xf32, #tpu.memory_space<vmem>>, vector<1x1x1x8x128xf32>
    %486 = vector.shape_cast %485 : vector<1x1x1x8x128xf32> to vector<8x128xf32>
    %487 = arith.maximumf %483, %486 : vector<8x128xf32>
    %c2_488 = arith.constant 2 : index
    %c15_489 = arith.constant 15 : index
    %488 = arith.index_cast %c0_i32 : i32 to index
    %c0_490 = arith.constant 0 : index
    %c0_491 = arith.constant 0 : index
    %489 = vector.load %arg1[%c2_488, %c15_489, %488, %c0_490, %c0_491] : memref<16x16x1x8x128xf32, #tpu.memory_space<vmem>>, vector<1x1x1x8x128xf32>
    %490 = vector.shape_cast %489 : vector<1x1x1x8x128xf32> to vector<8x128xf32>
    %491 = arith.maximumf %487, %490 : vector<8x128xf32>
    %c3_492 = arith.constant 3 : index
    %c13_493 = arith.constant 13 : index
    %492 = arith.index_cast %c0_i32 : i32 to index
    %c0_494 = arith.constant 0 : index
    %c0_495 = arith.constant 0 : index
    %493 = vector.load %arg1[%c3_492, %c13_493, %492, %c0_494, %c0_495] : memref<16x16x1x8x128xf32, #tpu.memory_space<vmem>>, vector<1x1x1x8x128xf32>
    %494 = vector.shape_cast %493 : vector<1x1x1x8x128xf32> to vector<8x128xf32>
    %495 = arith.maximumf %491, %494 : vector<8x128xf32>
    %c3_496 = arith.constant 3 : index
    %c14_497 = arith.constant 14 : index
    %496 = arith.index_cast %c0_i32 : i32 to index
    %c0_498 = arith.constant 0 : index
    %c0_499 = arith.constant 0 : index
    %497 = vector.load %arg1[%c3_496, %c14_497, %496, %c0_498, %c0_499] : memref<16x16x1x8x128xf32, #tpu.memory_space<vmem>>, vector<1x1x1x8x128xf32>
    %498 = vector.shape_cast %497 : vector<1x1x1x8x128xf32> to vector<8x128xf32>
    %499 = arith.maximumf %495, %498 : vector<8x128xf32>
    %c3_500 = arith.constant 3 : index
    %c15_501 = arith.constant 15 : index
    %500 = arith.index_cast %c0_i32 : i32 to index
    %c0_502 = arith.constant 0 : index
    %c0_503 = arith.constant 0 : index
    %501 = vector.load %arg1[%c3_500, %c15_501, %500, %c0_502, %c0_503] : memref<16x16x1x8x128xf32, #tpu.memory_space<vmem>>, vector<1x1x1x8x128xf32>
    %502 = vector.shape_cast %501 : vector<1x1x1x8x128xf32> to vector<8x128xf32>
    %503 = arith.maximumf %499, %502 : vector<8x128xf32>
    %c1_504 = arith.constant 1 : index
    %c7_505 = arith.constant 7 : index
    %504 = arith.index_cast %c0_i32 : i32 to index
    %c0_506 = arith.constant 0 : index
    %c0_507 = arith.constant 0 : index
    %505 = vector.load %arg2[%c1_504, %c7_505, %504, %c0_506, %c0_507] : memref<8x8x1x8x128xf32, #tpu.memory_space<vmem>>, vector<1x1x1x8x128xf32>
    %506 = vector.shape_cast %505 : vector<1x1x1x8x128xf32> to vector<8x128xf32>
    %507 = vector.shape_cast %503 : vector<8x128xf32> to vector<1x1x1x8x128xf32>
    tpu.vector_store %arg2[%c1_504, %c7_505, %504, %c0_506, %c0_507], %507 {strides = array<i32>} : memref<8x8x1x8x128xf32, #tpu.memory_space<vmem>>, vector<1x1x1x8x128xf32>,
    %c3_508 = arith.constant 3 : index
    %c0_509 = arith.constant 0 : index
    %508 = arith.index_cast %c0_i32 : i32 to index
    %c0_510 = arith.constant 0 : index
    %c0_511 = arith.constant 0 : index
    %509 = vector.load %arg1[%c3_508, %c0_509, %508, %c0_510, %c0_511] : memref<16x16x1x8x128xf32, #tpu.memory_space<vmem>>, vector<1x1x1x8x128xf32>
    %510 = vector.shape_cast %509 : vector<1x1x1x8x128xf32> to vector<8x128xf32>
    %c3_512 = arith.constant 3 : index
    %c1_513 = arith.constant 1 : index
    %511 = arith.index_cast %c0_i32 : i32 to index
    %c0_514 = arith.constant 0 : index
    %c0_515 = arith.constant 0 : index
    %512 = vector.load %arg1[%c3_512, %c1_513, %511, %c0_514, %c0_515] : memref<16x16x1x8x128xf32, #tpu.memory_space<vmem>>, vector<1x1x1x8x128xf32>
    %513 = vector.shape_cast %512 : vector<1x1x1x8x128xf32> to vector<8x128xf32>
    %514 = arith.maximumf %510, %513 : vector<8x128xf32>
    %c4_516 = arith.constant 4 : index
    %c0_517 = arith.constant 0 : index
    %515 = arith.index_cast %c0_i32 : i32 to index
    %c0_518 = arith.constant 0 : index
    %c0_519 = arith.constant 0 : index
    %516 = vector.load %arg1[%c4_516, %c0_517, %515, %c0_518, %c0_519] : memref<16x16x1x8x128xf32, #tpu.memory_space<vmem>>, vector<1x1x1x8x128xf32>
    %517 = vector.shape_cast %516 : vector<1x1x1x8x128xf32> to vector<8x128xf32>
    %518 = arith.maximumf %514, %517 : vector<8x128xf32>
    %c4_520 = arith.constant 4 : index
    %c1_521 = arith.constant 1 : index
    %519 = arith.index_cast %c0_i32 : i32 to index
    %c0_522 = arith.constant 0 : index
    %c0_523 = arith.constant 0 : index
    %520 = vector.load %arg1[%c4_520, %c1_521, %519, %c0_522, %c0_523] : memref<16x16x1x8x128xf32, #tpu.memory_space<vmem>>, vector<1x1x1x8x128xf32>
    %521 = vector.shape_cast %520 : vector<1x1x1x8x128xf32> to vector<8x128xf32>
    %522 = arith.maximumf %518, %521 : vector<8x128xf32>
    %c5_524 = arith.constant 5 : index
    %c0_525 = arith.constant 0 : index
    %523 = arith.index_cast %c0_i32 : i32 to index
    %c0_526 = arith.constant 0 : index
    %c0_527 = arith.constant 0 : index
    %524 = vector.load %arg1[%c5_524, %c0_525, %523, %c0_526, %c0_527] : memref<16x16x1x8x128xf32, #tpu.memory_space<vmem>>, vector<1x1x1x8x128xf32>
    %525 = vector.shape_cast %524 : vector<1x1x1x8x128xf32> to vector<8x128xf32>
    %526 = arith.maximumf %522, %525 : vector<8x128xf32>
    %c5_528 = arith.constant 5 : index
    %c1_529 = arith.constant 1 : index
    %527 = arith.index_cast %c0_i32 : i32 to index
    %c0_530 = arith.constant 0 : index
    %c0_531 = arith.constant 0 : index
    %528 = vector.load %arg1[%c5_528, %c1_529, %527, %c0_530, %c0_531] : memref<16x16x1x8x128xf32, #tpu.memory_space<vmem>>, vector<1x1x1x8x128xf32>
    %529 = vector.shape_cast %528 : vector<1x1x1x8x128xf32> to vector<8x128xf32>
    %530 = arith.maximumf %526, %529 : vector<8x128xf32>
    %c2_532 = arith.constant 2 : index
    %c0_533 = arith.constant 0 : index
    %531 = arith.index_cast %c0_i32 : i32 to index
    %c0_534 = arith.constant 0 : index
    %c0_535 = arith.constant 0 : index
    %532 = vector.load %arg2[%c2_532, %c0_533, %531, %c0_534, %c0_535] : memref<8x8x1x8x128xf32, #tpu.memory_space<vmem>>, vector<1x1x1x8x128xf32>
    %533 = vector.shape_cast %532 : vector<1x1x1x8x128xf32> to vector<8x128xf32>
    %534 = vector.shape_cast %530 : vector<8x128xf32> to vector<1x1x1x8x128xf32>
    tpu.vector_store %arg2[%c2_532, %c0_533, %531, %c0_534, %c0_535], %534 {strides = array<i32>} : memref<8x8x1x8x128xf32, #tpu.memory_space<vmem>>, vector<1x1x1x8x128xf32>,
    %c3_536 = arith.constant 3 : index
    %c1_537 = arith.constant 1 : index
    %535 = arith.index_cast %c0_i32 : i32 to index
    %c0_538 = arith.constant 0 : index
    %c0_539 = arith.constant 0 : index
    %536 = vector.load %arg1[%c3_536, %c1_537, %535, %c0_538, %c0_539] : memref<16x16x1x8x128xf32, #tpu.memory_space<vmem>>, vector<1x1x1x8x128xf32>
    %537 = vector.shape_cast %536 : vector<1x1x1x8x128xf32> to vector<8x128xf32>
    %c3_540 = arith.constant 3 : index
    %c2_541 = arith.constant 2 : index
    %538 = arith.index_cast %c0_i32 : i32 to index
    %c0_542 = arith.constant 0 : index
    %c0_543 = arith.constant 0 : index
    %539 = vector.load %arg1[%c3_540, %c2_541, %538, %c0_542, %c0_543] : memref<16x16x1x8x128xf32, #tpu.memory_space<vmem>>, vector<1x1x1x8x128xf32>
    %540 = vector.shape_cast %539 : vector<1x1x1x8x128xf32> to vector<8x128xf32>
    %541 = arith.maximumf %537, %540 : vector<8x128xf32>
    %c3_544 = arith.constant 3 : index
    %c3_545 = arith.constant 3 : index
    %542 = arith.index_cast %c0_i32 : i32 to index
    %c0_546 = arith.constant 0 : index
    %c0_547 = arith.constant 0 : index
    %543 = vector.load %arg1[%c3_544, %c3_545, %542, %c0_546, %c0_547] : memref<16x16x1x8x128xf32, #tpu.memory_space<vmem>>, vector<1x1x1x8x128xf32>
    %544 = vector.shape_cast %543 : vector<1x1x1x8x128xf32> to vector<8x128xf32>
    %545 = arith.maximumf %541, %544 : vector<8x128xf32>
    %c4_548 = arith.constant 4 : index
    %c1_549 = arith.constant 1 : index
    %546 = arith.index_cast %c0_i32 : i32 to index
    %c0_550 = arith.constant 0 : index
    %c0_551 = arith.constant 0 : index
    %547 = vector.load %arg1[%c4_548, %c1_549, %546, %c0_550, %c0_551] : memref<16x16x1x8x128xf32, #tpu.memory_space<vmem>>, vector<1x1x1x8x128xf32>
    %548 = vector.shape_cast %547 : vector<1x1x1x8x128xf32> to vector<8x128xf32>
    %549 = arith.maximumf %545, %548 : vector<8x128xf32>
    %c4_552 = arith.constant 4 : index
    %c2_553 = arith.constant 2 : index
    %550 = arith.index_cast %c0_i32 : i32 to index
    %c0_554 = arith.constant 0 : index
    %c0_555 = arith.constant 0 : index
    %551 = vector.load %arg1[%c4_552, %c2_553, %550, %c0_554, %c0_555] : memref<16x16x1x8x128xf32, #tpu.memory_space<vmem>>, vector<1x1x1x8x128xf32>
    %552 = vector.shape_cast %551 : vector<1x1x1x8x128xf32> to vector<8x128xf32>
    %553 = arith.maximumf %549, %552 : vector<8x128xf32>
    %c4_556 = arith.constant 4 : index
    %c3_557 = arith.constant 3 : index
    %554 = arith.index_cast %c0_i32 : i32 to index
    %c0_558 = arith.constant 0 : index
    %c0_559 = arith.constant 0 : index
    %555 = vector.load %arg1[%c4_556, %c3_557, %554, %c0_558, %c0_559] : memref<16x16x1x8x128xf32, #tpu.memory_space<vmem>>, vector<1x1x1x8x128xf32>
    %556 = vector.shape_cast %555 : vector<1x1x1x8x128xf32> to vector<8x128xf32>
    %557 = arith.maximumf %553, %556 : vector<8x128xf32>
    %c5_560 = arith.constant 5 : index
    %c1_561 = arith.constant 1 : index
    %558 = arith.index_cast %c0_i32 : i32 to index
    %c0_562 = arith.constant 0 : index
    %c0_563 = arith.constant 0 : index
    %559 = vector.load %arg1[%c5_560, %c1_561, %558, %c0_562, %c0_563] : memref<16x16x1x8x128xf32, #tpu.memory_space<vmem>>, vector<1x1x1x8x128xf32>
    %560 = vector.shape_cast %559 : vector<1x1x1x8x128xf32> to vector<8x128xf32>
    %561 = arith.maximumf %557, %560 : vector<8x128xf32>
    %c5_564 = arith.constant 5 : index
    %c2_565 = arith.constant 2 : index
    %562 = arith.index_cast %c0_i32 : i32 to index
    %c0_566 = arith.constant 0 : index
    %c0_567 = arith.constant 0 : index
    %563 = vector.load %arg1[%c5_564, %c2_565, %562, %c0_566, %c0_567] : memref<16x16x1x8x128xf32, #tpu.memory_space<vmem>>, vector<1x1x1x8x128xf32>
    %564 = vector.shape_cast %563 : vector<1x1x1x8x128xf32> to vector<8x128xf32>
    %565 = arith.maximumf %561, %564 : vector<8x128xf32>
    %c5_568 = arith.constant 5 : index
    %c3_569 = arith.constant 3 : index
    %566 = arith.index_cast %c0_i32 : i32 to index
    %c0_570 = arith.constant 0 : index
    %c0_571 = arith.constant 0 : index
    %567 = vector.load %arg1[%c5_568, %c3_569, %566, %c0_570, %c0_571] : memref<16x16x1x8x128xf32, #tpu.memory_space<vmem>>, vector<1x1x1x8x128xf32>
    %568 = vector.shape_cast %567 : vector<1x1x1x8x128xf32> to vector<8x128xf32>
    %569 = arith.maximumf %565, %568 : vector<8x128xf32>
    %c2_572 = arith.constant 2 : index
    %c1_573 = arith.constant 1 : index
    %570 = arith.index_cast %c0_i32 : i32 to index
    %c0_574 = arith.constant 0 : index
    %c0_575 = arith.constant 0 : index
    %571 = vector.load %arg2[%c2_572, %c1_573, %570, %c0_574, %c0_575] : memref<8x8x1x8x128xf32, #tpu.memory_space<vmem>>, vector<1x1x1x8x128xf32>
    %572 = vector.shape_cast %571 : vector<1x1x1x8x128xf32> to vector<8x128xf32>
    %573 = vector.shape_cast %569 : vector<8x128xf32> to vector<1x1x1x8x128xf32>
    tpu.vector_store %arg2[%c2_572, %c1_573, %570, %c0_574, %c0_575], %573 {strides = array<i32>} : memref<8x8x1x8x128xf32, #tpu.memory_space<vmem>>, vector<1x1x1x8x128xf32>,
    %c3_576 = arith.constant 3 : index
    %c3_577 = arith.constant 3 : index
    %574 = arith.index_cast %c0_i32 : i32 to index
    %c0_578 = arith.constant 0 : index
    %c0_579 = arith.constant 0 : index
    %575 = vector.load %arg1[%c3_576, %c3_577, %574, %c0_578, %c0_579] : memref<16x16x1x8x128xf32, #tpu.memory_space<vmem>>, vector<1x1x1x8x128xf32>
    %576 = vector.shape_cast %575 : vector<1x1x1x8x128xf32> to vector<8x128xf32>
    %c3_580 = arith.constant 3 : index
    %c4_581 = arith.constant 4 : index
    %577 = arith.index_cast %c0_i32 : i32 to index
    %c0_582 = arith.constant 0 : index
    %c0_583 = arith.constant 0 : index
    %578 = vector.load %arg1[%c3_580, %c4_581, %577, %c0_582, %c0_583] : memref<16x16x1x8x128xf32, #tpu.memory_space<vmem>>, vector<1x1x1x8x128xf32>
    %579 = vector.shape_cast %578 : vector<1x1x1x8x128xf32> to vector<8x128xf32>
    %580 = arith.maximumf %576, %579 : vector<8x128xf32>
    %c3_584 = arith.constant 3 : index
    %c5_585 = arith.constant 5 : index
    %581 = arith.index_cast %c0_i32 : i32 to index
    %c0_586 = arith.constant 0 : index
    %c0_587 = arith.constant 0 : index
    %582 = vector.load %arg1[%c3_584, %c5_585, %581, %c0_586, %c0_587] : memref<16x16x1x8x128xf32, #tpu.memory_space<vmem>>, vector<1x1x1x8x128xf32>
    %583 = vector.shape_cast %582 : vector<1x1x1x8x128xf32> to vector<8x128xf32>
    %584 = arith.maximumf %580, %583 : vector<8x128xf32>
    %c4_588 = arith.constant 4 : index
    %c3_589 = arith.constant 3 : index
    %585 = arith.index_cast %c0_i32 : i32 to index
    %c0_590 = arith.constant 0 : index
    %c0_591 = arith.constant 0 : index
    %586 = vector.load %arg1[%c4_588, %c3_589, %585, %c0_590, %c0_591] : memref<16x16x1x8x128xf32, #tpu.memory_space<vmem>>, vector<1x1x1x8x128xf32>
    %587 = vector.shape_cast %586 : vector<1x1x1x8x128xf32> to vector<8x128xf32>
    %588 = arith.maximumf %584, %587 : vector<8x128xf32>
    %c4_592 = arith.constant 4 : index
    %c4_593 = arith.constant 4 : index
    %589 = arith.index_cast %c0_i32 : i32 to index
    %c0_594 = arith.constant 0 : index
    %c0_595 = arith.constant 0 : index
    %590 = vector.load %arg1[%c4_592, %c4_593, %589, %c0_594, %c0_595] : memref<16x16x1x8x128xf32, #tpu.memory_space<vmem>>, vector<1x1x1x8x128xf32>
    %591 = vector.shape_cast %590 : vector<1x1x1x8x128xf32> to vector<8x128xf32>
    %592 = arith.maximumf %588, %591 : vector<8x128xf32>
    %c4_596 = arith.constant 4 : index
    %c5_597 = arith.constant 5 : index
    %593 = arith.index_cast %c0_i32 : i32 to index
    %c0_598 = arith.constant 0 : index
    %c0_599 = arith.constant 0 : index
    %594 = vector.load %arg1[%c4_596, %c5_597, %593, %c0_598, %c0_599] : memref<16x16x1x8x128xf32, #tpu.memory_space<vmem>>, vector<1x1x1x8x128xf32>
    %595 = vector.shape_cast %594 : vector<1x1x1x8x128xf32> to vector<8x128xf32>
    %596 = arith.maximumf %592, %595 : vector<8x128xf32>
    %c5_600 = arith.constant 5 : index
    %c3_601 = arith.constant 3 : index
    %597 = arith.index_cast %c0_i32 : i32 to index
    %c0_602 = arith.constant 0 : index
    %c0_603 = arith.constant 0 : index
    %598 = vector.load %arg1[%c5_600, %c3_601, %597, %c0_602, %c0_603] : memref<16x16x1x8x128xf32, #tpu.memory_space<vmem>>, vector<1x1x1x8x128xf32>
    %599 = vector.shape_cast %598 : vector<1x1x1x8x128xf32> to vector<8x128xf32>
    %600 = arith.maximumf %596, %599 : vector<8x128xf32>
    %c5_604 = arith.constant 5 : index
    %c4_605 = arith.constant 4 : index
    %601 = arith.index_cast %c0_i32 : i32 to index
    %c0_606 = arith.constant 0 : index
    %c0_607 = arith.constant 0 : index
    %602 = vector.load %arg1[%c5_604, %c4_605, %601, %c0_606, %c0_607] : memref<16x16x1x8x128xf32, #tpu.memory_space<vmem>>, vector<1x1x1x8x128xf32>
    %603 = vector.shape_cast %602 : vector<1x1x1x8x128xf32> to vector<8x128xf32>
    %604 = arith.maximumf %600, %603 : vector<8x128xf32>
    %c5_608 = arith.constant 5 : index
    %c5_609 = arith.constant 5 : index
    %605 = arith.index_cast %c0_i32 : i32 to index
    %c0_610 = arith.constant 0 : index
    %c0_611 = arith.constant 0 : index
    %606 = vector.load %arg1[%c5_608, %c5_609, %605, %c0_610, %c0_611] : memref<16x16x1x8x128xf32, #tpu.memory_space<vmem>>, vector<1x1x1x8x128xf32>
    %607 = vector.shape_cast %606 : vector<1x1x1x8x128xf32> to vector<8x128xf32>
    %608 = arith.maximumf %604, %607 : vector<8x128xf32>
    %c2_612 = arith.constant 2 : index
    %c2_613 = arith.constant 2 : index
    %609 = arith.index_cast %c0_i32 : i32 to index
    %c0_614 = arith.constant 0 : index
    %c0_615 = arith.constant 0 : index
    %610 = vector.load %arg2[%c2_612, %c2_613, %609, %c0_614, %c0_615] : memref<8x8x1x8x128xf32, #tpu.memory_space<vmem>>, vector<1x1x1x8x128xf32>
    %611 = vector.shape_cast %610 : vector<1x1x1x8x128xf32> to vector<8x128xf32>
    %612 = vector.shape_cast %608 : vector<8x128xf32> to vector<1x1x1x8x128xf32>
    tpu.vector_store %arg2[%c2_612, %c2_613, %609, %c0_614, %c0_615], %612 {strides = array<i32>} : memref<8x8x1x8x128xf32, #tpu.memory_space<vmem>>, vector<1x1x1x8x128xf32>,
    %c3_616 = arith.constant 3 : index
    %c5_617 = arith.constant 5 : index
    %613 = arith.index_cast %c0_i32 : i32 to index
    %c0_618 = arith.constant 0 : index
    %c0_619 = arith.constant 0 : index
    %614 = vector.load %arg1[%c3_616, %c5_617, %613, %c0_618, %c0_619] : memref<16x16x1x8x128xf32, #tpu.memory_space<vmem>>, vector<1x1x1x8x128xf32>
    %615 = vector.shape_cast %614 : vector<1x1x1x8x128xf32> to vector<8x128xf32>
    %c3_620 = arith.constant 3 : index
    %c6_621 = arith.constant 6 : index
    %616 = arith.index_cast %c0_i32 : i32 to index
    %c0_622 = arith.constant 0 : index
    %c0_623 = arith.constant 0 : index
    %617 = vector.load %arg1[%c3_620, %c6_621, %616, %c0_622, %c0_623] : memref<16x16x1x8x128xf32, #tpu.memory_space<vmem>>, vector<1x1x1x8x128xf32>
    %618 = vector.shape_cast %617 : vector<1x1x1x8x128xf32> to vector<8x128xf32>
    %619 = arith.maximumf %615, %618 : vector<8x128xf32>
    %c3_624 = arith.constant 3 : index
    %c7_625 = arith.constant 7 : index
    %620 = arith.index_cast %c0_i32 : i32 to index
    %c0_626 = arith.constant 0 : index
    %c0_627 = arith.constant 0 : index
    %621 = vector.load %arg1[%c3_624, %c7_625, %620, %c0_626, %c0_627] : memref<16x16x1x8x128xf32, #tpu.memory_space<vmem>>, vector<1x1x1x8x128xf32>
    %622 = vector.shape_cast %621 : vector<1x1x1x8x128xf32> to vector<8x128xf32>
    %623 = arith.maximumf %619, %622 : vector<8x128xf32>
    %c4_628 = arith.constant 4 : index
    %c5_629 = arith.constant 5 : index
    %624 = arith.index_cast %c0_i32 : i32 to index
    %c0_630 = arith.constant 0 : index
    %c0_631 = arith.constant 0 : index
    %625 = vector.load %arg1[%c4_628, %c5_629, %624, %c0_630, %c0_631] : memref<16x16x1x8x128xf32, #tpu.memory_space<vmem>>, vector<1x1x1x8x128xf32>
    %626 = vector.shape_cast %625 : vector<1x1x1x8x128xf32> to vector<8x128xf32>
    %627 = arith.maximumf %623, %626 : vector<8x128xf32>
    %c4_632 = arith.constant 4 : index
    %c6_633 = arith.constant 6 : index
    %628 = arith.index_cast %c0_i32 : i32 to index
    %c0_634 = arith.constant 0 : index
    %c0_635 = arith.constant 0 : index
    %629 = vector.load %arg1[%c4_632, %c6_633, %628, %c0_634, %c0_635] : memref<16x16x1x8x128xf32, #tpu.memory_space<vmem>>, vector<1x1x1x8x128xf32>
    %630 = vector.shape_cast %629 : vector<1x1x1x8x128xf32> to vector<8x128xf32>
    %631 = arith.maximumf %627, %630 : vector<8x128xf32>
    %c4_636 = arith.constant 4 : index
    %c7_637 = arith.constant 7 : index
    %632 = arith.index_cast %c0_i32 : i32 to index
    %c0_638 = arith.constant 0 : index
    %c0_639 = arith.constant 0 : index
    %633 = vector.load %arg1[%c4_636, %c7_637, %632, %c0_638, %c0_639] : memref<16x16x1x8x128xf32, #tpu.memory_space<vmem>>, vector<1x1x1x8x128xf32>
    %634 = vector.shape_cast %633 : vector<1x1x1x8x128xf32> to vector<8x128xf32>
    %635 = arith.maximumf %631, %634 : vector<8x128xf32>
    %c5_640 = arith.constant 5 : index
    %c5_641 = arith.constant 5 : index
    %636 = arith.index_cast %c0_i32 : i32 to index
    %c0_642 = arith.constant 0 : index
    %c0_643 = arith.constant 0 : index
    %637 = vector.load %arg1[%c5_640, %c5_641, %636, %c0_642, %c0_643] : memref<16x16x1x8x128xf32, #tpu.memory_space<vmem>>, vector<1x1x1x8x128xf32>
    %638 = vector.shape_cast %637 : vector<1x1x1x8x128xf32> to vector<8x128xf32>
    %639 = arith.maximumf %635, %638 : vector<8x128xf32>
    %c5_644 = arith.constant 5 : index
    %c6_645 = arith.constant 6 : index
    %640 = arith.index_cast %c0_i32 : i32 to index
    %c0_646 = arith.constant 0 : index
    %c0_647 = arith.constant 0 : index
    %641 = vector.load %arg1[%c5_644, %c6_645, %640, %c0_646, %c0_647] : memref<16x16x1x8x128xf32, #tpu.memory_space<vmem>>, vector<1x1x1x8x128xf32>
    %642 = vector.shape_cast %641 : vector<1x1x1x8x128xf32> to vector<8x128xf32>
    %643 = arith.maximumf %639, %642 : vector<8x128xf32>
    %c5_648 = arith.constant 5 : index
    %c7_649 = arith.constant 7 : index
    %644 = arith.index_cast %c0_i32 : i32 to index
    %c0_650 = arith.constant 0 : index
    %c0_651 = arith.constant 0 : index
    %645 = vector.load %arg1[%c5_648, %c7_649, %644, %c0_650, %c0_651] : memref<16x16x1x8x128xf32, #tpu.memory_space<vmem>>, vector<1x1x1x8x128xf32>
    %646 = vector.shape_cast %645 : vector<1x1x1x8x128xf32> to vector<8x128xf32>
    %647 = arith.maximumf %643, %646 : vector<8x128xf32>
    %c2_652 = arith.constant 2 : index
    %c3_653 = arith.constant 3 : index
    %648 = arith.index_cast %c0_i32 : i32 to index
    %c0_654 = arith.constant 0 : index
    %c0_655 = arith.constant 0 : index
    %649 = vector.load %arg2[%c2_652, %c3_653, %648, %c0_654, %c0_655] : memref<8x8x1x8x128xf32, #tpu.memory_space<vmem>>, vector<1x1x1x8x128xf32>
    %650 = vector.shape_cast %649 : vector<1x1x1x8x128xf32> to vector<8x128xf32>
    %651 = vector.shape_cast %647 : vector<8x128xf32> to vector<1x1x1x8x128xf32>
    tpu.vector_store %arg2[%c2_652, %c3_653, %648, %c0_654, %c0_655], %651 {strides = array<i32>} : memref<8x8x1x8x128xf32, #tpu.memory_space<vmem>>, vector<1x1x1x8x128xf32>,
    %c3_656 = arith.constant 3 : index
    %c7_657 = arith.constant 7 : index
    %652 = arith.index_cast %c0_i32 : i32 to index
    %c0_658 = arith.constant 0 : index
    %c0_659 = arith.constant 0 : index
    %653 = vector.load %arg1[%c3_656, %c7_657, %652, %c0_658, %c0_659] : memref<16x16x1x8x128xf32, #tpu.memory_space<vmem>>, vector<1x1x1x8x128xf32>
    %654 = vector.shape_cast %653 : vector<1x1x1x8x128xf32> to vector<8x128xf32>
    %c3_660 = arith.constant 3 : index
    %c8_661 = arith.constant 8 : index
    %655 = arith.index_cast %c0_i32 : i32 to index
    %c0_662 = arith.constant 0 : index
    %c0_663 = arith.constant 0 : index
    %656 = vector.load %arg1[%c3_660, %c8_661, %655, %c0_662, %c0_663] : memref<16x16x1x8x128xf32, #tpu.memory_space<vmem>>, vector<1x1x1x8x128xf32>
    %657 = vector.shape_cast %656 : vector<1x1x1x8x128xf32> to vector<8x128xf32>
    %658 = arith.maximumf %654, %657 : vector<8x128xf32>
    %c3_664 = arith.constant 3 : index
    %c9_665 = arith.constant 9 : index
    %659 = arith.index_cast %c0_i32 : i32 to index
    %c0_666 = arith.constant 0 : index
    %c0_667 = arith.constant 0 : index
    %660 = vector.load %arg1[%c3_664, %c9_665, %659, %c0_666, %c0_667] : memref<16x16x1x8x128xf32, #tpu.memory_space<vmem>>, vector<1x1x1x8x128xf32>
    %661 = vector.shape_cast %660 : vector<1x1x1x8x128xf32> to vector<8x128xf32>
    %662 = arith.maximumf %658, %661 : vector<8x128xf32>
    %c4_668 = arith.constant 4 : index
    %c7_669 = arith.constant 7 : index
    %663 = arith.index_cast %c0_i32 : i32 to index
    %c0_670 = arith.constant 0 : index
    %c0_671 = arith.constant 0 : index
    %664 = vector.load %arg1[%c4_668, %c7_669, %663, %c0_670, %c0_671] : memref<16x16x1x8x128xf32, #tpu.memory_space<vmem>>, vector<1x1x1x8x128xf32>
    %665 = vector.shape_cast %664 : vector<1x1x1x8x128xf32> to vector<8x128xf32>
    %666 = arith.maximumf %662, %665 : vector<8x128xf32>
    %c4_672 = arith.constant 4 : index
    %c8_673 = arith.constant 8 : index
    %667 = arith.index_cast %c0_i32 : i32 to index
    %c0_674 = arith.constant 0 : index
    %c0_675 = arith.constant 0 : index
    %668 = vector.load %arg1[%c4_672, %c8_673, %667, %c0_674, %c0_675] : memref<16x16x1x8x128xf32, #tpu.memory_space<vmem>>, vector<1x1x1x8x128xf32>
    %669 = vector.shape_cast %668 : vector<1x1x1x8x128xf32> to vector<8x128xf32>
    %670 = arith.maximumf %666, %669 : vector<8x128xf32>
    %c4_676 = arith.constant 4 : index
    %c9_677 = arith.constant 9 : index
    %671 = arith.index_cast %c0_i32 : i32 to index
    %c0_678 = arith.constant 0 : index
    %c0_679 = arith.constant 0 : index
    %672 = vector.load %arg1[%c4_676, %c9_677, %671, %c0_678, %c0_679] : memref<16x16x1x8x128xf32, #tpu.memory_space<vmem>>, vector<1x1x1x8x128xf32>
    %673 = vector.shape_cast %672 : vector<1x1x1x8x128xf32> to vector<8x128xf32>
    %674 = arith.maximumf %670, %673 : vector<8x128xf32>
    %c5_680 = arith.constant 5 : index
    %c7_681 = arith.constant 7 : index
    %675 = arith.index_cast %c0_i32 : i32 to index
    %c0_682 = arith.constant 0 : index
    %c0_683 = arith.constant 0 : index
    %676 = vector.load %arg1[%c5_680, %c7_681, %675, %c0_682, %c0_683] : memref<16x16x1x8x128xf32, #tpu.memory_space<vmem>>, vector<1x1x1x8x128xf32>
    %677 = vector.shape_cast %676 : vector<1x1x1x8x128xf32> to vector<8x128xf32>
    %678 = arith.maximumf %674, %677 : vector<8x128xf32>
    %c5_684 = arith.constant 5 : index
    %c8_685 = arith.constant 8 : index
    %679 = arith.index_cast %c0_i32 : i32 to index
    %c0_686 = arith.constant 0 : index
    %c0_687 = arith.constant 0 : index
    %680 = vector.load %arg1[%c5_684, %c8_685, %679, %c0_686, %c0_687] : memref<16x16x1x8x128xf32, #tpu.memory_space<vmem>>, vector<1x1x1x8x128xf32>
    %681 = vector.shape_cast %680 : vector<1x1x1x8x128xf32> to vector<8x128xf32>
    %682 = arith.maximumf %678, %681 : vector<8x128xf32>
    %c5_688 = arith.constant 5 : index
    %c9_689 = arith.constant 9 : index
    %683 = arith.index_cast %c0_i32 : i32 to index
    %c0_690 = arith.constant 0 : index
    %c0_691 = arith.constant 0 : index
    %684 = vector.load %arg1[%c5_688, %c9_689, %683, %c0_690, %c0_691] : memref<16x16x1x8x128xf32, #tpu.memory_space<vmem>>, vector<1x1x1x8x128xf32>
    %685 = vector.shape_cast %684 : vector<1x1x1x8x128xf32> to vector<8x128xf32>
    %686 = arith.maximumf %682, %685 : vector<8x128xf32>
    %c2_692 = arith.constant 2 : index
    %c4_693 = arith.constant 4 : index
    %687 = arith.index_cast %c0_i32 : i32 to index
    %c0_694 = arith.constant 0 : index
    %c0_695 = arith.constant 0 : index
    %688 = vector.load %arg2[%c2_692, %c4_693, %687, %c0_694, %c0_695] : memref<8x8x1x8x128xf32, #tpu.memory_space<vmem>>, vector<1x1x1x8x128xf32>
    %689 = vector.shape_cast %688 : vector<1x1x1x8x128xf32> to vector<8x128xf32>
    %690 = vector.shape_cast %686 : vector<8x128xf32> to vector<1x1x1x8x128xf32>
    tpu.vector_store %arg2[%c2_692, %c4_693, %687, %c0_694, %c0_695], %690 {strides = array<i32>} : memref<8x8x1x8x128xf32, #tpu.memory_space<vmem>>, vector<1x1x1x8x128xf32>,
    %c3_696 = arith.constant 3 : index
    %c9_697 = arith.constant 9 : index
    %691 = arith.index_cast %c0_i32 : i32 to index
    %c0_698 = arith.constant 0 : index
    %c0_699 = arith.constant 0 : index
    %692 = vector.load %arg1[%c3_696, %c9_697, %691, %c0_698, %c0_699] : memref<16x16x1x8x128xf32, #tpu.memory_space<vmem>>, vector<1x1x1x8x128xf32>
    %693 = vector.shape_cast %692 : vector<1x1x1x8x128xf32> to vector<8x128xf32>
    %c3_700 = arith.constant 3 : index
    %c10_701 = arith.constant 10 : index
    %694 = arith.index_cast %c0_i32 : i32 to index
    %c0_702 = arith.constant 0 : index
    %c0_703 = arith.constant 0 : index
    %695 = vector.load %arg1[%c3_700, %c10_701, %694, %c0_702, %c0_703] : memref<16x16x1x8x128xf32, #tpu.memory_space<vmem>>, vector<1x1x1x8x128xf32>
    %696 = vector.shape_cast %695 : vector<1x1x1x8x128xf32> to vector<8x128xf32>
    %697 = arith.maximumf %693, %696 : vector<8x128xf32>
    %c3_704 = arith.constant 3 : index
    %c11_705 = arith.constant 11 : index
    %698 = arith.index_cast %c0_i32 : i32 to index
    %c0_706 = arith.constant 0 : index
    %c0_707 = arith.constant 0 : index
    %699 = vector.load %arg1[%c3_704, %c11_705, %698, %c0_706, %c0_707] : memref<16x16x1x8x128xf32, #tpu.memory_space<vmem>>, vector<1x1x1x8x128xf32>
    %700 = vector.shape_cast %699 : vector<1x1x1x8x128xf32> to vector<8x128xf32>
    %701 = arith.maximumf %697, %700 : vector<8x128xf32>
    %c4_708 = arith.constant 4 : index
    %c9_709 = arith.constant 9 : index
    %702 = arith.index_cast %c0_i32 : i32 to index
    %c0_710 = arith.constant 0 : index
    %c0_711 = arith.constant 0 : index
    %703 = vector.load %arg1[%c4_708, %c9_709, %702, %c0_710, %c0_711] : memref<16x16x1x8x128xf32, #tpu.memory_space<vmem>>, vector<1x1x1x8x128xf32>
    %704 = vector.shape_cast %703 : vector<1x1x1x8x128xf32> to vector<8x128xf32>
    %705 = arith.maximumf %701, %704 : vector<8x128xf32>
    %c4_712 = arith.constant 4 : index
    %c10_713 = arith.constant 10 : index
    %706 = arith.index_cast %c0_i32 : i32 to index
    %c0_714 = arith.constant 0 : index
    %c0_715 = arith.constant 0 : index
    %707 = vector.load %arg1[%c4_712, %c10_713, %706, %c0_714, %c0_715] : memref<16x16x1x8x128xf32, #tpu.memory_space<vmem>>, vector<1x1x1x8x128xf32>
    %708 = vector.shape_cast %707 : vector<1x1x1x8x128xf32> to vector<8x128xf32>
    %709 = arith.maximumf %705, %708 : vector<8x128xf32>
    %c4_716 = arith.constant 4 : index
    %c11_717 = arith.constant 11 : index
    %710 = arith.index_cast %c0_i32 : i32 to index
    %c0_718 = arith.constant 0 : index
    %c0_719 = arith.constant 0 : index
    %711 = vector.load %arg1[%c4_716, %c11_717, %710, %c0_718, %c0_719] : memref<16x16x1x8x128xf32, #tpu.memory_space<vmem>>, vector<1x1x1x8x128xf32>
    %712 = vector.shape_cast %711 : vector<1x1x1x8x128xf32> to vector<8x128xf32>
    %713 = arith.maximumf %709, %712 : vector<8x128xf32>
    %c5_720 = arith.constant 5 : index
    %c9_721 = arith.constant 9 : index
    %714 = arith.index_cast %c0_i32 : i32 to index
    %c0_722 = arith.constant 0 : index
    %c0_723 = arith.constant 0 : index
    %715 = vector.load %arg1[%c5_720, %c9_721, %714, %c0_722, %c0_723] : memref<16x16x1x8x128xf32, #tpu.memory_space<vmem>>, vector<1x1x1x8x128xf32>
    %716 = vector.shape_cast %715 : vector<1x1x1x8x128xf32> to vector<8x128xf32>
    %717 = arith.maximumf %713, %716 : vector<8x128xf32>
    %c5_724 = arith.constant 5 : index
    %c10_725 = arith.constant 10 : index
    %718 = arith.index_cast %c0_i32 : i32 to index
    %c0_726 = arith.constant 0 : index
    %c0_727 = arith.constant 0 : index
    %719 = vector.load %arg1[%c5_724, %c10_725, %718, %c0_726, %c0_727] : memref<16x16x1x8x128xf32, #tpu.memory_space<vmem>>, vector<1x1x1x8x128xf32>
    %720 = vector.shape_cast %719 : vector<1x1x1x8x128xf32> to vector<8x128xf32>
    %721 = arith.maximumf %717, %720 : vector<8x128xf32>
    %c5_728 = arith.constant 5 : index
    %c11_729 = arith.constant 11 : index
    %722 = arith.index_cast %c0_i32 : i32 to index
    %c0_730 = arith.constant 0 : index
    %c0_731 = arith.constant 0 : index
    %723 = vector.load %arg1[%c5_728, %c11_729, %722, %c0_730, %c0_731] : memref<16x16x1x8x128xf32, #tpu.memory_space<vmem>>, vector<1x1x1x8x128xf32>
    %724 = vector.shape_cast %723 : vector<1x1x1x8x128xf32> to vector<8x128xf32>
    %725 = arith.maximumf %721, %724 : vector<8x128xf32>
    %c2_732 = arith.constant 2 : index
    %c5_733 = arith.constant 5 : index
    %726 = arith.index_cast %c0_i32 : i32 to index
    %c0_734 = arith.constant 0 : index
    %c0_735 = arith.constant 0 : index
    %727 = vector.load %arg2[%c2_732, %c5_733, %726, %c0_734, %c0_735] : memref<8x8x1x8x128xf32, #tpu.memory_space<vmem>>, vector<1x1x1x8x128xf32>
    %728 = vector.shape_cast %727 : vector<1x1x1x8x128xf32> to vector<8x128xf32>
    %729 = vector.shape_cast %725 : vector<8x128xf32> to vector<1x1x1x8x128xf32>
    tpu.vector_store %arg2[%c2_732, %c5_733, %726, %c0_734, %c0_735], %729 {strides = array<i32>} : memref<8x8x1x8x128xf32, #tpu.memory_space<vmem>>, vector<1x1x1x8x128xf32>,
    %c3_736 = arith.constant 3 : index
    %c11_737 = arith.constant 11 : index
    %730 = arith.index_cast %c0_i32 : i32 to index
    %c0_738 = arith.constant 0 : index
    %c0_739 = arith.constant 0 : index
    %731 = vector.load %arg1[%c3_736, %c11_737, %730, %c0_738, %c0_739] : memref<16x16x1x8x128xf32, #tpu.memory_space<vmem>>, vector<1x1x1x8x128xf32>
    %732 = vector.shape_cast %731 : vector<1x1x1x8x128xf32> to vector<8x128xf32>
    %c3_740 = arith.constant 3 : index
    %c12_741 = arith.constant 12 : index
    %733 = arith.index_cast %c0_i32 : i32 to index
    %c0_742 = arith.constant 0 : index
    %c0_743 = arith.constant 0 : index
    %734 = vector.load %arg1[%c3_740, %c12_741, %733, %c0_742, %c0_743] : memref<16x16x1x8x128xf32, #tpu.memory_space<vmem>>, vector<1x1x1x8x128xf32>
    %735 = vector.shape_cast %734 : vector<1x1x1x8x128xf32> to vector<8x128xf32>
    %736 = arith.maximumf %732, %735 : vector<8x128xf32>
    %c3_744 = arith.constant 3 : index
    %c13_745 = arith.constant 13 : index
    %737 = arith.index_cast %c0_i32 : i32 to index
    %c0_746 = arith.constant 0 : index
    %c0_747 = arith.constant 0 : index
    %738 = vector.load %arg1[%c3_744, %c13_745, %737, %c0_746, %c0_747] : memref<16x16x1x8x128xf32, #tpu.memory_space<vmem>>, vector<1x1x1x8x128xf32>
    %739 = vector.shape_cast %738 : vector<1x1x1x8x128xf32> to vector<8x128xf32>
    %740 = arith.maximumf %736, %739 : vector<8x128xf32>
    %c4_748 = arith.constant 4 : index
    %c11_749 = arith.constant 11 : index
    %741 = arith.index_cast %c0_i32 : i32 to index
    %c0_750 = arith.constant 0 : index
    %c0_751 = arith.constant 0 : index
    %742 = vector.load %arg1[%c4_748, %c11_749, %741, %c0_750, %c0_751] : memref<16x16x1x8x128xf32, #tpu.memory_space<vmem>>, vector<1x1x1x8x128xf32>
    %743 = vector.shape_cast %742 : vector<1x1x1x8x128xf32> to vector<8x128xf32>
    %744 = arith.maximumf %740, %743 : vector<8x128xf32>
    %c4_752 = arith.constant 4 : index
    %c12_753 = arith.constant 12 : index
    %745 = arith.index_cast %c0_i32 : i32 to index
    %c0_754 = arith.constant 0 : index
    %c0_755 = arith.constant 0 : index
    %746 = vector.load %arg1[%c4_752, %c12_753, %745, %c0_754, %c0_755] : memref<16x16x1x8x128xf32, #tpu.memory_space<vmem>>, vector<1x1x1x8x128xf32>
    %747 = vector.shape_cast %746 : vector<1x1x1x8x128xf32> to vector<8x128xf32>
    %748 = arith.maximumf %744, %747 : vector<8x128xf32>
    %c4_756 = arith.constant 4 : index
    %c13_757 = arith.constant 13 : index
    %749 = arith.index_cast %c0_i32 : i32 to index
    %c0_758 = arith.constant 0 : index
    %c0_759 = arith.constant 0 : index
    %750 = vector.load %arg1[%c4_756, %c13_757, %749, %c0_758, %c0_759] : memref<16x16x1x8x128xf32, #tpu.memory_space<vmem>>, vector<1x1x1x8x128xf32>
    %751 = vector.shape_cast %750 : vector<1x1x1x8x128xf32> to vector<8x128xf32>
    %752 = arith.maximumf %748, %751 : vector<8x128xf32>
    %c5_760 = arith.constant 5 : index
    %c11_761 = arith.constant 11 : index
    %753 = arith.index_cast %c0_i32 : i32 to index
    %c0_762 = arith.constant 0 : index
    %c0_763 = arith.constant 0 : index
    %754 = vector.load %arg1[%c5_760, %c11_761, %753, %c0_762, %c0_763] : memref<16x16x1x8x128xf32, #tpu.memory_space<vmem>>, vector<1x1x1x8x128xf32>
    %755 = vector.shape_cast %754 : vector<1x1x1x8x128xf32> to vector<8x128xf32>
    %756 = arith.maximumf %752, %755 : vector<8x128xf32>
    %c5_764 = arith.constant 5 : index
    %c12_765 = arith.constant 12 : index
    %757 = arith.index_cast %c0_i32 : i32 to index
    %c0_766 = arith.constant 0 : index
    %c0_767 = arith.constant 0 : index
    %758 = vector.load %arg1[%c5_764, %c12_765, %757, %c0_766, %c0_767] : memref<16x16x1x8x128xf32, #tpu.memory_space<vmem>>, vector<1x1x1x8x128xf32>
    %759 = vector.shape_cast %758 : vector<1x1x1x8x128xf32> to vector<8x128xf32>
    %760 = arith.maximumf %756, %759 : vector<8x128xf32>
    %c5_768 = arith.constant 5 : index
    %c13_769 = arith.constant 13 : index
    %761 = arith.index_cast %c0_i32 : i32 to index
    %c0_770 = arith.constant 0 : index
    %c0_771 = arith.constant 0 : index
    %762 = vector.load %arg1[%c5_768, %c13_769, %761, %c0_770, %c0_771] : memref<16x16x1x8x128xf32, #tpu.memory_space<vmem>>, vector<1x1x1x8x128xf32>
    %763 = vector.shape_cast %762 : vector<1x1x1x8x128xf32> to vector<8x128xf32>
    %764 = arith.maximumf %760, %763 : vector<8x128xf32>
    %c2_772 = arith.constant 2 : index
    %c6_773 = arith.constant 6 : index
    %765 = arith.index_cast %c0_i32 : i32 to index
    %c0_774 = arith.constant 0 : index
    %c0_775 = arith.constant 0 : index
    %766 = vector.load %arg2[%c2_772, %c6_773, %765, %c0_774, %c0_775] : memref<8x8x1x8x128xf32, #tpu.memory_space<vmem>>, vector<1x1x1x8x128xf32>
    %767 = vector.shape_cast %766 : vector<1x1x1x8x128xf32> to vector<8x128xf32>
    %768 = vector.shape_cast %764 : vector<8x128xf32> to vector<1x1x1x8x128xf32>
    tpu.vector_store %arg2[%c2_772, %c6_773, %765, %c0_774, %c0_775], %768 {strides = array<i32>} : memref<8x8x1x8x128xf32, #tpu.memory_space<vmem>>, vector<1x1x1x8x128xf32>,
    %c3_776 = arith.constant 3 : index
    %c13_777 = arith.constant 13 : index
    %769 = arith.index_cast %c0_i32 : i32 to index
    %c0_778 = arith.constant 0 : index
    %c0_779 = arith.constant 0 : index
    %770 = vector.load %arg1[%c3_776, %c13_777, %769, %c0_778, %c0_779] : memref<16x16x1x8x128xf32, #tpu.memory_space<vmem>>, vector<1x1x1x8x128xf32>
    %771 = vector.shape_cast %770 : vector<1x1x1x8x128xf32> to vector<8x128xf32>
    %c3_780 = arith.constant 3 : index
    %c14_781 = arith.constant 14 : index
    %772 = arith.index_cast %c0_i32 : i32 to index
    %c0_782 = arith.constant 0 : index
    %c0_783 = arith.constant 0 : index
    %773 = vector.load %arg1[%c3_780, %c14_781, %772, %c0_782, %c0_783] : memref<16x16x1x8x128xf32, #tpu.memory_space<vmem>>, vector<1x1x1x8x128xf32>
    %774 = vector.shape_cast %773 : vector<1x1x1x8x128xf32> to vector<8x128xf32>
    %775 = arith.maximumf %771, %774 : vector<8x128xf32>
    %c3_784 = arith.constant 3 : index
    %c15_785 = arith.constant 15 : index
    %776 = arith.index_cast %c0_i32 : i32 to index
    %c0_786 = arith.constant 0 : index
    %c0_787 = arith.constant 0 : index
    %777 = vector.load %arg1[%c3_784, %c15_785, %776, %c0_786, %c0_787] : memref<16x16x1x8x128xf32, #tpu.memory_space<vmem>>, vector<1x1x1x8x128xf32>
    %778 = vector.shape_cast %777 : vector<1x1x1x8x128xf32> to vector<8x128xf32>
    %779 = arith.maximumf %775, %778 : vector<8x128xf32>
    %c4_788 = arith.constant 4 : index
    %c13_789 = arith.constant 13 : index
    %780 = arith.index_cast %c0_i32 : i32 to index
    %c0_790 = arith.constant 0 : index
    %c0_791 = arith.constant 0 : index
    %781 = vector.load %arg1[%c4_788, %c13_789, %780, %c0_790, %c0_791] : memref<16x16x1x8x128xf32, #tpu.memory_space<vmem>>, vector<1x1x1x8x128xf32>
    %782 = vector.shape_cast %781 : vector<1x1x1x8x128xf32> to vector<8x128xf32>
    %783 = arith.maximumf %779, %782 : vector<8x128xf32>
    %c4_792 = arith.constant 4 : index
    %c14_793 = arith.constant 14 : index
    %784 = arith.index_cast %c0_i32 : i32 to index
    %c0_794 = arith.constant 0 : index
    %c0_795 = arith.constant 0 : index
    %785 = vector.load %arg1[%c4_792, %c14_793, %784, %c0_794, %c0_795] : memref<16x16x1x8x128xf32, #tpu.memory_space<vmem>>, vector<1x1x1x8x128xf32>
    %786 = vector.shape_cast %785 : vector<1x1x1x8x128xf32> to vector<8x128xf32>
    %787 = arith.maximumf %783, %786 : vector<8x128xf32>
    %c4_796 = arith.constant 4 : index
    %c15_797 = arith.constant 15 : index
    %788 = arith.index_cast %c0_i32 : i32 to index
    %c0_798 = arith.constant 0 : index
    %c0_799 = arith.constant 0 : index
    %789 = vector.load %arg1[%c4_796, %c15_797, %788, %c0_798, %c0_799] : memref<16x16x1x8x128xf32, #tpu.memory_space<vmem>>, vector<1x1x1x8x128xf32>
    %790 = vector.shape_cast %789 : vector<1x1x1x8x128xf32> to vector<8x128xf32>
    %791 = arith.maximumf %787, %790 : vector<8x128xf32>
    %c5_800 = arith.constant 5 : index
    %c13_801 = arith.constant 13 : index
    %792 = arith.index_cast %c0_i32 : i32 to index
    %c0_802 = arith.constant 0 : index
    %c0_803 = arith.constant 0 : index
    %793 = vector.load %arg1[%c5_800, %c13_801, %792, %c0_802, %c0_803] : memref<16x16x1x8x128xf32, #tpu.memory_space<vmem>>, vector<1x1x1x8x128xf32>
    %794 = vector.shape_cast %793 : vector<1x1x1x8x128xf32> to vector<8x128xf32>
    %795 = arith.maximumf %791, %794 : vector<8x128xf32>
    %c5_804 = arith.constant 5 : index
    %c14_805 = arith.constant 14 : index
    %796 = arith.index_cast %c0_i32 : i32 to index
    %c0_806 = arith.constant 0 : index
    %c0_807 = arith.constant 0 : index
    %797 = vector.load %arg1[%c5_804, %c14_805, %796, %c0_806, %c0_807] : memref<16x16x1x8x128xf32, #tpu.memory_space<vmem>>, vector<1x1x1x8x128xf32>
    %798 = vector.shape_cast %797 : vector<1x1x1x8x128xf32> to vector<8x128xf32>
    %799 = arith.maximumf %795, %798 : vector<8x128xf32>
    %c5_808 = arith.constant 5 : index
    %c15_809 = arith.constant 15 : index
    %800 = arith.index_cast %c0_i32 : i32 to index
    %c0_810 = arith.constant 0 : index
    %c0_811 = arith.constant 0 : index
    %801 = vector.load %arg1[%c5_808, %c15_809, %800, %c0_810, %c0_811] : memref<16x16x1x8x128xf32, #tpu.memory_space<vmem>>, vector<1x1x1x8x128xf32>
    %802 = vector.shape_cast %801 : vector<1x1x1x8x128xf32> to vector<8x128xf32>
    %803 = arith.maximumf %799, %802 : vector<8x128xf32>
    %c2_812 = arith.constant 2 : index
    %c7_813 = arith.constant 7 : index
    %804 = arith.index_cast %c0_i32 : i32 to index
    %c0_814 = arith.constant 0 : index
    %c0_815 = arith.constant 0 : index
    %805 = vector.load %arg2[%c2_812, %c7_813, %804, %c0_814, %c0_815] : memref<8x8x1x8x128xf32, #tpu.memory_space<vmem>>, vector<1x1x1x8x128xf32>
    %806 = vector.shape_cast %805 : vector<1x1x1x8x128xf32> to vector<8x128xf32>
    %807 = vector.shape_cast %803 : vector<8x128xf32> to vector<1x1x1x8x128xf32>
    tpu.vector_store %arg2[%c2_812, %c7_813, %804, %c0_814, %c0_815], %807 {strides = array<i32>} : memref<8x8x1x8x128xf32, #tpu.memory_space<vmem>>, vector<1x1x1x8x128xf32>,
    %c5_816 = arith.constant 5 : index
    %c0_817 = arith.constant 0 : index
    %808 = arith.index_cast %c0_i32 : i32 to index
    %c0_818 = arith.constant 0 : index
    %c0_819 = arith.constant 0 : index
    %809 = vector.load %arg1[%c5_816, %c0_817, %808, %c0_818, %c0_819] : memref<16x16x1x8x128xf32, #tpu.memory_space<vmem>>, vector<1x1x1x8x128xf32>
    %810 = vector.shape_cast %809 : vector<1x1x1x8x128xf32> to vector<8x128xf32>
    %c5_820 = arith.constant 5 : index
    %c1_821 = arith.constant 1 : index
    %811 = arith.index_cast %c0_i32 : i32 to index
    %c0_822 = arith.constant 0 : index
    %c0_823 = arith.constant 0 : index
    %812 = vector.load %arg1[%c5_820, %c1_821, %811, %c0_822, %c0_823] : memref<16x16x1x8x128xf32, #tpu.memory_space<vmem>>, vector<1x1x1x8x128xf32>
    %813 = vector.shape_cast %812 : vector<1x1x1x8x128xf32> to vector<8x128xf32>
    %814 = arith.maximumf %810, %813 : vector<8x128xf32>
    %c6_824 = arith.constant 6 : index
    %c0_825 = arith.constant 0 : index
    %815 = arith.index_cast %c0_i32 : i32 to index
    %c0_826 = arith.constant 0 : index
    %c0_827 = arith.constant 0 : index
    %816 = vector.load %arg1[%c6_824, %c0_825, %815, %c0_826, %c0_827] : memref<16x16x1x8x128xf32, #tpu.memory_space<vmem>>, vector<1x1x1x8x128xf32>
    %817 = vector.shape_cast %816 : vector<1x1x1x8x128xf32> to vector<8x128xf32>
    %818 = arith.maximumf %814, %817 : vector<8x128xf32>
    %c6_828 = arith.constant 6 : index
    %c1_829 = arith.constant 1 : index
    %819 = arith.index_cast %c0_i32 : i32 to index
    %c0_830 = arith.constant 0 : index
    %c0_831 = arith.constant 0 : index
    %820 = vector.load %arg1[%c6_828, %c1_829, %819, %c0_830, %c0_831] : memref<16x16x1x8x128xf32, #tpu.memory_space<vmem>>, vector<1x1x1x8x128xf32>
    %821 = vector.shape_cast %820 : vector<1x1x1x8x128xf32> to vector<8x128xf32>
    %822 = arith.maximumf %818, %821 : vector<8x128xf32>
    %c7_832 = arith.constant 7 : index
    %c0_833 = arith.constant 0 : index
    %823 = arith.index_cast %c0_i32 : i32 to index
    %c0_834 = arith.constant 0 : index
    %c0_835 = arith.constant 0 : index
    %824 = vector.load %arg1[%c7_832, %c0_833, %823, %c0_834, %c0_835] : memref<16x16x1x8x128xf32, #tpu.memory_space<vmem>>, vector<1x1x1x8x128xf32>
    %825 = vector.shape_cast %824 : vector<1x1x1x8x128xf32> to vector<8x128xf32>
    %826 = arith.maximumf %822, %825 : vector<8x128xf32>
    %c7_836 = arith.constant 7 : index
    %c1_837 = arith.constant 1 : index
    %827 = arith.index_cast %c0_i32 : i32 to index
    %c0_838 = arith.constant 0 : index
    %c0_839 = arith.constant 0 : index
    %828 = vector.load %arg1[%c7_836, %c1_837, %827, %c0_838, %c0_839] : memref<16x16x1x8x128xf32, #tpu.memory_space<vmem>>, vector<1x1x1x8x128xf32>
    %829 = vector.shape_cast %828 : vector<1x1x1x8x128xf32> to vector<8x128xf32>
    %830 = arith.maximumf %826, %829 : vector<8x128xf32>
    %c3_840 = arith.constant 3 : index
    %c0_841 = arith.constant 0 : index
    %831 = arith.index_cast %c0_i32 : i32 to index
    %c0_842 = arith.constant 0 : index
    %c0_843 = arith.constant 0 : index
    %832 = vector.load %arg2[%c3_840, %c0_841, %831, %c0_842, %c0_843] : memref<8x8x1x8x128xf32, #tpu.memory_space<vmem>>, vector<1x1x1x8x128xf32>
    %833 = vector.shape_cast %832 : vector<1x1x1x8x128xf32> to vector<8x128xf32>
    %834 = vector.shape_cast %830 : vector<8x128xf32> to vector<1x1x1x8x128xf32>
    tpu.vector_store %arg2[%c3_840, %c0_841, %831, %c0_842, %c0_843], %834 {strides = array<i32>} : memref<8x8x1x8x128xf32, #tpu.memory_space<vmem>>, vector<1x1x1x8x128xf32>,
    %c5_844 = arith.constant 5 : index
    %c1_845 = arith.constant 1 : index
    %835 = arith.index_cast %c0_i32 : i32 to index
    %c0_846 = arith.constant 0 : index
    %c0_847 = arith.constant 0 : index
    %836 = vector.load %arg1[%c5_844, %c1_845, %835, %c0_846, %c0_847] : memref<16x16x1x8x128xf32, #tpu.memory_space<vmem>>, vector<1x1x1x8x128xf32>
    %837 = vector.shape_cast %836 : vector<1x1x1x8x128xf32> to vector<8x128xf32>
    %c5_848 = arith.constant 5 : index
    %c2_849 = arith.constant 2 : index
    %838 = arith.index_cast %c0_i32 : i32 to index
    %c0_850 = arith.constant 0 : index
    %c0_851 = arith.constant 0 : index
    %839 = vector.load %arg1[%c5_848, %c2_849, %838, %c0_850, %c0_851] : memref<16x16x1x8x128xf32, #tpu.memory_space<vmem>>, vector<1x1x1x8x128xf32>
    %840 = vector.shape_cast %839 : vector<1x1x1x8x128xf32> to vector<8x128xf32>
    %841 = arith.maximumf %837, %840 : vector<8x128xf32>
    %c5_852 = arith.constant 5 : index
    %c3_853 = arith.constant 3 : index
    %842 = arith.index_cast %c0_i32 : i32 to index
    %c0_854 = arith.constant 0 : index
    %c0_855 = arith.constant 0 : index
    %843 = vector.load %arg1[%c5_852, %c3_853, %842, %c0_854, %c0_855] : memref<16x16x1x8x128xf32, #tpu.memory_space<vmem>>, vector<1x1x1x8x128xf32>
    %844 = vector.shape_cast %843 : vector<1x1x1x8x128xf32> to vector<8x128xf32>
    %845 = arith.maximumf %841, %844 : vector<8x128xf32>
    %c6_856 = arith.constant 6 : index
    %c1_857 = arith.constant 1 : index
    %846 = arith.index_cast %c0_i32 : i32 to index
    %c0_858 = arith.constant 0 : index
    %c0_859 = arith.constant 0 : index
    %847 = vector.load %arg1[%c6_856, %c1_857, %846, %c0_858, %c0_859] : memref<16x16x1x8x128xf32, #tpu.memory_space<vmem>>, vector<1x1x1x8x128xf32>
    %848 = vector.shape_cast %847 : vector<1x1x1x8x128xf32> to vector<8x128xf32>
    %849 = arith.maximumf %845, %848 : vector<8x128xf32>
    %c6_860 = arith.constant 6 : index
    %c2_861 = arith.constant 2 : index
    %850 = arith.index_cast %c0_i32 : i32 to index
    %c0_862 = arith.constant 0 : index
    %c0_863 = arith.constant 0 : index
    %851 = vector.load %arg1[%c6_860, %c2_861, %850, %c0_862, %c0_863] : memref<16x16x1x8x128xf32, #tpu.memory_space<vmem>>, vector<1x1x1x8x128xf32>
    %852 = vector.shape_cast %851 : vector<1x1x1x8x128xf32> to vector<8x128xf32>
    %853 = arith.maximumf %849, %852 : vector<8x128xf32>
    %c6_864 = arith.constant 6 : index
    %c3_865 = arith.constant 3 : index
    %854 = arith.index_cast %c0_i32 : i32 to index
    %c0_866 = arith.constant 0 : index
    %c0_867 = arith.constant 0 : index
    %855 = vector.load %arg1[%c6_864, %c3_865, %854, %c0_866, %c0_867] : memref<16x16x1x8x128xf32, #tpu.memory_space<vmem>>, vector<1x1x1x8x128xf32>
    %856 = vector.shape_cast %855 : vector<1x1x1x8x128xf32> to vector<8x128xf32>
    %857 = arith.maximumf %853, %856 : vector<8x128xf32>
    %c7_868 = arith.constant 7 : index
    %c1_869 = arith.constant 1 : index
    %858 = arith.index_cast %c0_i32 : i32 to index
    %c0_870 = arith.constant 0 : index
    %c0_871 = arith.constant 0 : index
    %859 = vector.load %arg1[%c7_868, %c1_869, %858, %c0_870, %c0_871] : memref<16x16x1x8x128xf32, #tpu.memory_space<vmem>>, vector<1x1x1x8x128xf32>
    %860 = vector.shape_cast %859 : vector<1x1x1x8x128xf32> to vector<8x128xf32>
    %861 = arith.maximumf %857, %860 : vector<8x128xf32>
    %c7_872 = arith.constant 7 : index
    %c2_873 = arith.constant 2 : index
    %862 = arith.index_cast %c0_i32 : i32 to index
    %c0_874 = arith.constant 0 : index
    %c0_875 = arith.constant 0 : index
    %863 = vector.load %arg1[%c7_872, %c2_873, %862, %c0_874, %c0_875] : memref<16x16x1x8x128xf32, #tpu.memory_space<vmem>>, vector<1x1x1x8x128xf32>
    %864 = vector.shape_cast %863 : vector<1x1x1x8x128xf32> to vector<8x128xf32>
    %865 = arith.maximumf %861, %864 : vector<8x128xf32>
    %c7_876 = arith.constant 7 : index
    %c3_877 = arith.constant 3 : index
    %866 = arith.index_cast %c0_i32 : i32 to index
    %c0_878 = arith.constant 0 : index
    %c0_879 = arith.constant 0 : index
    %867 = vector.load %arg1[%c7_876, %c3_877, %866, %c0_878, %c0_879] : memref<16x16x1x8x128xf32, #tpu.memory_space<vmem>>, vector<1x1x1x8x128xf32>
    %868 = vector.shape_cast %867 : vector<1x1x1x8x128xf32> to vector<8x128xf32>
    %869 = arith.maximumf %865, %868 : vector<8x128xf32>
    %c3_880 = arith.constant 3 : index
    %c1_881 = arith.constant 1 : index
    %870 = arith.index_cast %c0_i32 : i32 to index
    %c0_882 = arith.constant 0 : index
    %c0_883 = arith.constant 0 : index
    %871 = vector.load %arg2[%c3_880, %c1_881, %870, %c0_882, %c0_883] : memref<8x8x1x8x128xf32, #tpu.memory_space<vmem>>, vector<1x1x1x8x128xf32>
    %872 = vector.shape_cast %871 : vector<1x1x1x8x128xf32> to vector<8x128xf32>
    %873 = vector.shape_cast %869 : vector<8x128xf32> to vector<1x1x1x8x128xf32>
    tpu.vector_store %arg2[%c3_880, %c1_881, %870, %c0_882, %c0_883], %873 {strides = array<i32>} : memref<8x8x1x8x128xf32, #tpu.memory_space<vmem>>, vector<1x1x1x8x128xf32>,
    %c5_884 = arith.constant 5 : index
    %c3_885 = arith.constant 3 : index
    %874 = arith.index_cast %c0_i32 : i32 to index
    %c0_886 = arith.constant 0 : index
    %c0_887 = arith.constant 0 : index
    %875 = vector.load %arg1[%c5_884, %c3_885, %874, %c0_886, %c0_887] : memref<16x16x1x8x128xf32, #tpu.memory_space<vmem>>, vector<1x1x1x8x128xf32>
    %876 = vector.shape_cast %875 : vector<1x1x1x8x128xf32> to vector<8x128xf32>
    %c5_888 = arith.constant 5 : index
    %c4_889 = arith.constant 4 : index
    %877 = arith.index_cast %c0_i32 : i32 to index
    %c0_890 = arith.constant 0 : index
    %c0_891 = arith.constant 0 : index
    %878 = vector.load %arg1[%c5_888, %c4_889, %877, %c0_890, %c0_891] : memref<16x16x1x8x128xf32, #tpu.memory_space<vmem>>, vector<1x1x1x8x128xf32>
    %879 = vector.shape_cast %878 : vector<1x1x1x8x128xf32> to vector<8x128xf32>
    %880 = arith.maximumf %876, %879 : vector<8x128xf32>
    %c5_892 = arith.constant 5 : index
    %c5_893 = arith.constant 5 : index
    %881 = arith.index_cast %c0_i32 : i32 to index
    %c0_894 = arith.constant 0 : index
    %c0_895 = arith.constant 0 : index
    %882 = vector.load %arg1[%c5_892, %c5_893, %881, %c0_894, %c0_895] : memref<16x16x1x8x128xf32, #tpu.memory_space<vmem>>, vector<1x1x1x8x128xf32>
    %883 = vector.shape_cast %882 : vector<1x1x1x8x128xf32> to vector<8x128xf32>
    %884 = arith.maximumf %880, %883 : vector<8x128xf32>
    %c6_896 = arith.constant 6 : index
    %c3_897 = arith.constant 3 : index
    %885 = arith.index_cast %c0_i32 : i32 to index
    %c0_898 = arith.constant 0 : index
    %c0_899 = arith.constant 0 : index
    %886 = vector.load %arg1[%c6_896, %c3_897, %885, %c0_898, %c0_899] : memref<16x16x1x8x128xf32, #tpu.memory_space<vmem>>, vector<1x1x1x8x128xf32>
    %887 = vector.shape_cast %886 : vector<1x1x1x8x128xf32> to vector<8x128xf32>
    %888 = arith.maximumf %884, %887 : vector<8x128xf32>
    %c6_900 = arith.constant 6 : index
    %c4_901 = arith.constant 4 : index
    %889 = arith.index_cast %c0_i32 : i32 to index
    %c0_902 = arith.constant 0 : index
    %c0_903 = arith.constant 0 : index
    %890 = vector.load %arg1[%c6_900, %c4_901, %889, %c0_902, %c0_903] : memref<16x16x1x8x128xf32, #tpu.memory_space<vmem>>, vector<1x1x1x8x128xf32>
    %891 = vector.shape_cast %890 : vector<1x1x1x8x128xf32> to vector<8x128xf32>
    %892 = arith.maximumf %888, %891 : vector<8x128xf32>
    %c6_904 = arith.constant 6 : index
    %c5_905 = arith.constant 5 : index
    %893 = arith.index_cast %c0_i32 : i32 to index
    %c0_906 = arith.constant 0 : index
    %c0_907 = arith.constant 0 : index
    %894 = vector.load %arg1[%c6_904, %c5_905, %893, %c0_906, %c0_907] : memref<16x16x1x8x128xf32, #tpu.memory_space<vmem>>, vector<1x1x1x8x128xf32>
    %895 = vector.shape_cast %894 : vector<1x1x1x8x128xf32> to vector<8x128xf32>
    %896 = arith.maximumf %892, %895 : vector<8x128xf32>
    %c7_908 = arith.constant 7 : index
    %c3_909 = arith.constant 3 : index
    %897 = arith.index_cast %c0_i32 : i32 to index
    %c0_910 = arith.constant 0 : index
    %c0_911 = arith.constant 0 : index
    %898 = vector.load %arg1[%c7_908, %c3_909, %897, %c0_910, %c0_911] : memref<16x16x1x8x128xf32, #tpu.memory_space<vmem>>, vector<1x1x1x8x128xf32>
    %899 = vector.shape_cast %898 : vector<1x1x1x8x128xf32> to vector<8x128xf32>
    %900 = arith.maximumf %896, %899 : vector<8x128xf32>
    %c7_912 = arith.constant 7 : index
    %c4_913 = arith.constant 4 : index
    %901 = arith.index_cast %c0_i32 : i32 to index
    %c0_914 = arith.constant 0 : index
    %c0_915 = arith.constant 0 : index
    %902 = vector.load %arg1[%c7_912, %c4_913, %901, %c0_914, %c0_915] : memref<16x16x1x8x128xf32, #tpu.memory_space<vmem>>, vector<1x1x1x8x128xf32>
    %903 = vector.shape_cast %902 : vector<1x1x1x8x128xf32> to vector<8x128xf32>
    %904 = arith.maximumf %900, %903 : vector<8x128xf32>
    %c7_916 = arith.constant 7 : index
    %c5_917 = arith.constant 5 : index
    %905 = arith.index_cast %c0_i32 : i32 to index
    %c0_918 = arith.constant 0 : index
    %c0_919 = arith.constant 0 : index
    %906 = vector.load %arg1[%c7_916, %c5_917, %905, %c0_918, %c0_919] : memref<16x16x1x8x128xf32, #tpu.memory_space<vmem>>, vector<1x1x1x8x128xf32>
    %907 = vector.shape_cast %906 : vector<1x1x1x8x128xf32> to vector<8x128xf32>
    %908 = arith.maximumf %904, %907 : vector<8x128xf32>
    %c3_920 = arith.constant 3 : index
    %c2_921 = arith.constant 2 : index
    %909 = arith.index_cast %c0_i32 : i32 to index
    %c0_922 = arith.constant 0 : index
    %c0_923 = arith.constant 0 : index
    %910 = vector.load %arg2[%c3_920, %c2_921, %909, %c0_922, %c0_923] : memref<8x8x1x8x128xf32, #tpu.memory_space<vmem>>, vector<1x1x1x8x128xf32>
    %911 = vector.shape_cast %910 : vector<1x1x1x8x128xf32> to vector<8x128xf32>
    %912 = vector.shape_cast %908 : vector<8x128xf32> to vector<1x1x1x8x128xf32>
    tpu.vector_store %arg2[%c3_920, %c2_921, %909, %c0_922, %c0_923], %912 {strides = array<i32>} : memref<8x8x1x8x128xf32, #tpu.memory_space<vmem>>, vector<1x1x1x8x128xf32>,
    %c5_924 = arith.constant 5 : index
    %c5_925 = arith.constant 5 : index
    %913 = arith.index_cast %c0_i32 : i32 to index
    %c0_926 = arith.constant 0 : index
    %c0_927 = arith.constant 0 : index
    %914 = vector.load %arg1[%c5_924, %c5_925, %913, %c0_926, %c0_927] : memref<16x16x1x8x128xf32, #tpu.memory_space<vmem>>, vector<1x1x1x8x128xf32>
    %915 = vector.shape_cast %914 : vector<1x1x1x8x128xf32> to vector<8x128xf32>
    %c5_928 = arith.constant 5 : index
    %c6_929 = arith.constant 6 : index
    %916 = arith.index_cast %c0_i32 : i32 to index
    %c0_930 = arith.constant 0 : index
    %c0_931 = arith.constant 0 : index
    %917 = vector.load %arg1[%c5_928, %c6_929, %916, %c0_930, %c0_931] : memref<16x16x1x8x128xf32, #tpu.memory_space<vmem>>, vector<1x1x1x8x128xf32>
    %918 = vector.shape_cast %917 : vector<1x1x1x8x128xf32> to vector<8x128xf32>
    %919 = arith.maximumf %915, %918 : vector<8x128xf32>
    %c5_932 = arith.constant 5 : index
    %c7_933 = arith.constant 7 : index
    %920 = arith.index_cast %c0_i32 : i32 to index
    %c0_934 = arith.constant 0 : index
    %c0_935 = arith.constant 0 : index
    %921 = vector.load %arg1[%c5_932, %c7_933, %920, %c0_934, %c0_935] : memref<16x16x1x8x128xf32, #tpu.memory_space<vmem>>, vector<1x1x1x8x128xf32>
    %922 = vector.shape_cast %921 : vector<1x1x1x8x128xf32> to vector<8x128xf32>
    %923 = arith.maximumf %919, %922 : vector<8x128xf32>
    %c6_936 = arith.constant 6 : index
    %c5_937 = arith.constant 5 : index
    %924 = arith.index_cast %c0_i32 : i32 to index
    %c0_938 = arith.constant 0 : index
    %c0_939 = arith.constant 0 : index
    %925 = vector.load %arg1[%c6_936, %c5_937, %924, %c0_938, %c0_939] : memref<16x16x1x8x128xf32, #tpu.memory_space<vmem>>, vector<1x1x1x8x128xf32>
    %926 = vector.shape_cast %925 : vector<1x1x1x8x128xf32> to vector<8x128xf32>
    %927 = arith.maximumf %923, %926 : vector<8x128xf32>
    %c6_940 = arith.constant 6 : index
    %c6_941 = arith.constant 6 : index
    %928 = arith.index_cast %c0_i32 : i32 to index
    %c0_942 = arith.constant 0 : index
    %c0_943 = arith.constant 0 : index
    %929 = vector.load %arg1[%c6_940, %c6_941, %928, %c0_942, %c0_943] : memref<16x16x1x8x128xf32, #tpu.memory_space<vmem>>, vector<1x1x1x8x128xf32>
    %930 = vector.shape_cast %929 : vector<1x1x1x8x128xf32> to vector<8x128xf32>
    %931 = arith.maximumf %927, %930 : vector<8x128xf32>
    %c6_944 = arith.constant 6 : index
    %c7_945 = arith.constant 7 : index
    %932 = arith.index_cast %c0_i32 : i32 to index
    %c0_946 = arith.constant 0 : index
    %c0_947 = arith.constant 0 : index
    %933 = vector.load %arg1[%c6_944, %c7_945, %932, %c0_946, %c0_947] : memref<16x16x1x8x128xf32, #tpu.memory_space<vmem>>, vector<1x1x1x8x128xf32>
    %934 = vector.shape_cast %933 : vector<1x1x1x8x128xf32> to vector<8x128xf32>
    %935 = arith.maximumf %931, %934 : vector<8x128xf32>
    %c7_948 = arith.constant 7 : index
    %c5_949 = arith.constant 5 : index
    %936 = arith.index_cast %c0_i32 : i32 to index
    %c0_950 = arith.constant 0 : index
    %c0_951 = arith.constant 0 : index
    %937 = vector.load %arg1[%c7_948, %c5_949, %936, %c0_950, %c0_951] : memref<16x16x1x8x128xf32, #tpu.memory_space<vmem>>, vector<1x1x1x8x128xf32>
    %938 = vector.shape_cast %937 : vector<1x1x1x8x128xf32> to vector<8x128xf32>
    %939 = arith.maximumf %935, %938 : vector<8x128xf32>
    %c7_952 = arith.constant 7 : index
    %c6_953 = arith.constant 6 : index
    %940 = arith.index_cast %c0_i32 : i32 to index
    %c0_954 = arith.constant 0 : index
    %c0_955 = arith.constant 0 : index
    %941 = vector.load %arg1[%c7_952, %c6_953, %940, %c0_954, %c0_955] : memref<16x16x1x8x128xf32, #tpu.memory_space<vmem>>, vector<1x1x1x8x128xf32>
    %942 = vector.shape_cast %941 : vector<1x1x1x8x128xf32> to vector<8x128xf32>
    %943 = arith.maximumf %939, %942 : vector<8x128xf32>
    %c7_956 = arith.constant 7 : index
    %c7_957 = arith.constant 7 : index
    %944 = arith.index_cast %c0_i32 : i32 to index
    %c0_958 = arith.constant 0 : index
    %c0_959 = arith.constant 0 : index
    %945 = vector.load %arg1[%c7_956, %c7_957, %944, %c0_958, %c0_959] : memref<16x16x1x8x128xf32, #tpu.memory_space<vmem>>, vector<1x1x1x8x128xf32>
    %946 = vector.shape_cast %945 : vector<1x1x1x8x128xf32> to vector<8x128xf32>
    %947 = arith.maximumf %943, %946 : vector<8x128xf32>
    %c3_960 = arith.constant 3 : index
    %c3_961 = arith.constant 3 : index
    %948 = arith.index_cast %c0_i32 : i32 to index
    %c0_962 = arith.constant 0 : index
    %c0_963 = arith.constant 0 : index
    %949 = vector.load %arg2[%c3_960, %c3_961, %948, %c0_962, %c0_963] : memref<8x8x1x8x128xf32, #tpu.memory_space<vmem>>, vector<1x1x1x8x128xf32>
    %950 = vector.shape_cast %949 : vector<1x1x1x8x128xf32> to vector<8x128xf32>
    %951 = vector.shape_cast %947 : vector<8x128xf32> to vector<1x1x1x8x128xf32>
    tpu.vector_store %arg2[%c3_960, %c3_961, %948, %c0_962, %c0_963], %951 {strides = array<i32>} : memref<8x8x1x8x128xf32, #tpu.memory_space<vmem>>, vector<1x1x1x8x128xf32>,
    %c5_964 = arith.constant 5 : index
    %c7_965 = arith.constant 7 : index
    %952 = arith.index_cast %c0_i32 : i32 to index
    %c0_966 = arith.constant 0 : index
    %c0_967 = arith.constant 0 : index
    %953 = vector.load %arg1[%c5_964, %c7_965, %952, %c0_966, %c0_967] : memref<16x16x1x8x128xf32, #tpu.memory_space<vmem>>, vector<1x1x1x8x128xf32>
    %954 = vector.shape_cast %953 : vector<1x1x1x8x128xf32> to vector<8x128xf32>
    %c5_968 = arith.constant 5 : index
    %c8_969 = arith.constant 8 : index
    %955 = arith.index_cast %c0_i32 : i32 to index
    %c0_970 = arith.constant 0 : index
    %c0_971 = arith.constant 0 : index
    %956 = vector.load %arg1[%c5_968, %c8_969, %955, %c0_970, %c0_971] : memref<16x16x1x8x128xf32, #tpu.memory_space<vmem>>, vector<1x1x1x8x128xf32>
    %957 = vector.shape_cast %956 : vector<1x1x1x8x128xf32> to vector<8x128xf32>
    %958 = arith.maximumf %954, %957 : vector<8x128xf32>
    %c5_972 = arith.constant 5 : index
    %c9_973 = arith.constant 9 : index
    %959 = arith.index_cast %c0_i32 : i32 to index
    %c0_974 = arith.constant 0 : index
    %c0_975 = arith.constant 0 : index
    %960 = vector.load %arg1[%c5_972, %c9_973, %959, %c0_974, %c0_975] : memref<16x16x1x8x128xf32, #tpu.memory_space<vmem>>, vector<1x1x1x8x128xf32>
    %961 = vector.shape_cast %960 : vector<1x1x1x8x128xf32> to vector<8x128xf32>
    %962 = arith.maximumf %958, %961 : vector<8x128xf32>
    %c6_976 = arith.constant 6 : index
    %c7_977 = arith.constant 7 : index
    %963 = arith.index_cast %c0_i32 : i32 to index
    %c0_978 = arith.constant 0 : index
    %c0_979 = arith.constant 0 : index
    %964 = vector.load %arg1[%c6_976, %c7_977, %963, %c0_978, %c0_979] : memref<16x16x1x8x128xf32, #tpu.memory_space<vmem>>, vector<1x1x1x8x128xf32>
    %965 = vector.shape_cast %964 : vector<1x1x1x8x128xf32> to vector<8x128xf32>
    %966 = arith.maximumf %962, %965 : vector<8x128xf32>
    %c6_980 = arith.constant 6 : index
    %c8_981 = arith.constant 8 : index
    %967 = arith.index_cast %c0_i32 : i32 to index
    %c0_982 = arith.constant 0 : index
    %c0_983 = arith.constant 0 : index
    %968 = vector.load %arg1[%c6_980, %c8_981, %967, %c0_982, %c0_983] : memref<16x16x1x8x128xf32, #tpu.memory_space<vmem>>, vector<1x1x1x8x128xf32>
    %969 = vector.shape_cast %968 : vector<1x1x1x8x128xf32> to vector<8x128xf32>
    %970 = arith.maximumf %966, %969 : vector<8x128xf32>
    %c6_984 = arith.constant 6 : index
    %c9_985 = arith.constant 9 : index
    %971 = arith.index_cast %c0_i32 : i32 to index
    %c0_986 = arith.constant 0 : index
    %c0_987 = arith.constant 0 : index
    %972 = vector.load %arg1[%c6_984, %c9_985, %971, %c0_986, %c0_987] : memref<16x16x1x8x128xf32, #tpu.memory_space<vmem>>, vector<1x1x1x8x128xf32>
    %973 = vector.shape_cast %972 : vector<1x1x1x8x128xf32> to vector<8x128xf32>
    %974 = arith.maximumf %970, %973 : vector<8x128xf32>
    %c7_988 = arith.constant 7 : index
    %c7_989 = arith.constant 7 : index
    %975 = arith.index_cast %c0_i32 : i32 to index
    %c0_990 = arith.constant 0 : index
    %c0_991 = arith.constant 0 : index
    %976 = vector.load %arg1[%c7_988, %c7_989, %975, %c0_990, %c0_991] : memref<16x16x1x8x128xf32, #tpu.memory_space<vmem>>, vector<1x1x1x8x128xf32>
    %977 = vector.shape_cast %976 : vector<1x1x1x8x128xf32> to vector<8x128xf32>
    %978 = arith.maximumf %974, %977 : vector<8x128xf32>
    %c7_992 = arith.constant 7 : index
    %c8_993 = arith.constant 8 : index
    %979 = arith.index_cast %c0_i32 : i32 to index
    %c0_994 = arith.constant 0 : index
    %c0_995 = arith.constant 0 : index
    %980 = vector.load %arg1[%c7_992, %c8_993, %979, %c0_994, %c0_995] : memref<16x16x1x8x128xf32, #tpu.memory_space<vmem>>, vector<1x1x1x8x128xf32>
    %981 = vector.shape_cast %980 : vector<1x1x1x8x128xf32> to vector<8x128xf32>
    %982 = arith.maximumf %978, %981 : vector<8x128xf32>
    %c7_996 = arith.constant 7 : index
    %c9_997 = arith.constant 9 : index
    %983 = arith.index_cast %c0_i32 : i32 to index
    %c0_998 = arith.constant 0 : index
    %c0_999 = arith.constant 0 : index
    %984 = vector.load %arg1[%c7_996, %c9_997, %983, %c0_998, %c0_999] : memref<16x16x1x8x128xf32, #tpu.memory_space<vmem>>, vector<1x1x1x8x128xf32>
    %985 = vector.shape_cast %984 : vector<1x1x1x8x128xf32> to vector<8x128xf32>
    %986 = arith.maximumf %982, %985 : vector<8x128xf32>
    %c3_1000 = arith.constant 3 : index
    %c4_1001 = arith.constant 4 : index
    %987 = arith.index_cast %c0_i32 : i32 to index
    %c0_1002 = arith.constant 0 : index
    %c0_1003 = arith.constant 0 : index
    %988 = vector.load %arg2[%c3_1000, %c4_1001, %987, %c0_1002, %c0_1003] : memref<8x8x1x8x128xf32, #tpu.memory_space<vmem>>, vector<1x1x1x8x128xf32>
    %989 = vector.shape_cast %988 : vector<1x1x1x8x128xf32> to vector<8x128xf32>
    %990 = vector.shape_cast %986 : vector<8x128xf32> to vector<1x1x1x8x128xf32>
    tpu.vector_store %arg2[%c3_1000, %c4_1001, %987, %c0_1002, %c0_1003], %990 {strides = array<i32>} : memref<8x8x1x8x128xf32, #tpu.memory_space<vmem>>, vector<1x1x1x8x128xf32>,
    %c5_1004 = arith.constant 5 : index
    %c9_1005 = arith.constant 9 : index
    %991 = arith.index_cast %c0_i32 : i32 to index
    %c0_1006 = arith.constant 0 : index
    %c0_1007 = arith.constant 0 : index
    %992 = vector.load %arg1[%c5_1004, %c9_1005, %991, %c0_1006, %c0_1007] : memref<16x16x1x8x128xf32, #tpu.memory_space<vmem>>, vector<1x1x1x8x128xf32>
    %993 = vector.shape_cast %992 : vector<1x1x1x8x128xf32> to vector<8x128xf32>
    %c5_1008 = arith.constant 5 : index
    %c10_1009 = arith.constant 10 : index
    %994 = arith.index_cast %c0_i32 : i32 to index
    %c0_1010 = arith.constant 0 : index
    %c0_1011 = arith.constant 0 : index
    %995 = vector.load %arg1[%c5_1008, %c10_1009, %994, %c0_1010, %c0_1011] : memref<16x16x1x8x128xf32, #tpu.memory_space<vmem>>, vector<1x1x1x8x128xf32>
    %996 = vector.shape_cast %995 : vector<1x1x1x8x128xf32> to vector<8x128xf32>
    %997 = arith.maximumf %993, %996 : vector<8x128xf32>
    %c5_1012 = arith.constant 5 : index
    %c11_1013 = arith.constant 11 : index
    %998 = arith.index_cast %c0_i32 : i32 to index
    %c0_1014 = arith.constant 0 : index
    %c0_1015 = arith.constant 0 : index
    %999 = vector.load %arg1[%c5_1012, %c11_1013, %998, %c0_1014, %c0_1015] : memref<16x16x1x8x128xf32, #tpu.memory_space<vmem>>, vector<1x1x1x8x128xf32>
    %1000 = vector.shape_cast %999 : vector<1x1x1x8x128xf32> to vector<8x128xf32>
    %1001 = arith.maximumf %997, %1000 : vector<8x128xf32>
    %c6_1016 = arith.constant 6 : index
    %c9_1017 = arith.constant 9 : index
    %1002 = arith.index_cast %c0_i32 : i32 to index
    %c0_1018 = arith.constant 0 : index
    %c0_1019 = arith.constant 0 : index
    %1003 = vector.load %arg1[%c6_1016, %c9_1017, %1002, %c0_1018, %c0_1019] : memref<16x16x1x8x128xf32, #tpu.memory_space<vmem>>, vector<1x1x1x8x128xf32>
    %1004 = vector.shape_cast %1003 : vector<1x1x1x8x128xf32> to vector<8x128xf32>
    %1005 = arith.maximumf %1001, %1004 : vector<8x128xf32>
    %c6_1020 = arith.constant 6 : index
    %c10_1021 = arith.constant 10 : index
    %1006 = arith.index_cast %c0_i32 : i32 to index
    %c0_1022 = arith.constant 0 : index
    %c0_1023 = arith.constant 0 : index
    %1007 = vector.load %arg1[%c6_1020, %c10_1021, %1006, %c0_1022, %c0_1023] : memref<16x16x1x8x128xf32, #tpu.memory_space<vmem>>, vector<1x1x1x8x128xf32>
    %1008 = vector.shape_cast %1007 : vector<1x1x1x8x128xf32> to vector<8x128xf32>
    %1009 = arith.maximumf %1005, %1008 : vector<8x128xf32>
    %c6_1024 = arith.constant 6 : index
    %c11_1025 = arith.constant 11 : index
    %1010 = arith.index_cast %c0_i32 : i32 to index
    %c0_1026 = arith.constant 0 : index
    %c0_1027 = arith.constant 0 : index
    %1011 = vector.load %arg1[%c6_1024, %c11_1025, %1010, %c0_1026, %c0_1027] : memref<16x16x1x8x128xf32, #tpu.memory_space<vmem>>, vector<1x1x1x8x128xf32>
    %1012 = vector.shape_cast %1011 : vector<1x1x1x8x128xf32> to vector<8x128xf32>
    %1013 = arith.maximumf %1009, %1012 : vector<8x128xf32>
    %c7_1028 = arith.constant 7 : index
    %c9_1029 = arith.constant 9 : index
    %1014 = arith.index_cast %c0_i32 : i32 to index
    %c0_1030 = arith.constant 0 : index
    %c0_1031 = arith.constant 0 : index
    %1015 = vector.load %arg1[%c7_1028, %c9_1029, %1014, %c0_1030, %c0_1031] : memref<16x16x1x8x128xf32, #tpu.memory_space<vmem>>, vector<1x1x1x8x128xf32>
    %1016 = vector.shape_cast %1015 : vector<1x1x1x8x128xf32> to vector<8x128xf32>
    %1017 = arith.maximumf %1013, %1016 : vector<8x128xf32>
    %c7_1032 = arith.constant 7 : index
    %c10_1033 = arith.constant 10 : index
    %1018 = arith.index_cast %c0_i32 : i32 to index
    %c0_1034 = arith.constant 0 : index
    %c0_1035 = arith.constant 0 : index
    %1019 = vector.load %arg1[%c7_1032, %c10_1033, %1018, %c0_1034, %c0_1035] : memref<16x16x1x8x128xf32, #tpu.memory_space<vmem>>, vector<1x1x1x8x128xf32>
    %1020 = vector.shape_cast %1019 : vector<1x1x1x8x128xf32> to vector<8x128xf32>
    %1021 = arith.maximumf %1017, %1020 : vector<8x128xf32>
    %c7_1036 = arith.constant 7 : index
    %c11_1037 = arith.constant 11 : index
    %1022 = arith.index_cast %c0_i32 : i32 to index
    %c0_1038 = arith.constant 0 : index
    %c0_1039 = arith.constant 0 : index
    %1023 = vector.load %arg1[%c7_1036, %c11_1037, %1022, %c0_1038, %c0_1039] : memref<16x16x1x8x128xf32, #tpu.memory_space<vmem>>, vector<1x1x1x8x128xf32>
    %1024 = vector.shape_cast %1023 : vector<1x1x1x8x128xf32> to vector<8x128xf32>
    %1025 = arith.maximumf %1021, %1024 : vector<8x128xf32>
    %c3_1040 = arith.constant 3 : index
    %c5_1041 = arith.constant 5 : index
    %1026 = arith.index_cast %c0_i32 : i32 to index
    %c0_1042 = arith.constant 0 : index
    %c0_1043 = arith.constant 0 : index
    %1027 = vector.load %arg2[%c3_1040, %c5_1041, %1026, %c0_1042, %c0_1043] : memref<8x8x1x8x128xf32, #tpu.memory_space<vmem>>, vector<1x1x1x8x128xf32>
    %1028 = vector.shape_cast %1027 : vector<1x1x1x8x128xf32> to vector<8x128xf32>
    %1029 = vector.shape_cast %1025 : vector<8x128xf32> to vector<1x1x1x8x128xf32>
    tpu.vector_store %arg2[%c3_1040, %c5_1041, %1026, %c0_1042, %c0_1043], %1029 {strides = array<i32>} : memref<8x8x1x8x128xf32, #tpu.memory_space<vmem>>, vector<1x1x1x8x128xf32>,
    %c5_1044 = arith.constant 5 : index
    %c11_1045 = arith.constant 11 : index
    %1030 = arith.index_cast %c0_i32 : i32 to index
    %c0_1046 = arith.constant 0 : index
    %c0_1047 = arith.constant 0 : index
    %1031 = vector.load %arg1[%c5_1044, %c11_1045, %1030, %c0_1046, %c0_1047] : memref<16x16x1x8x128xf32, #tpu.memory_space<vmem>>, vector<1x1x1x8x128xf32>
    %1032 = vector.shape_cast %1031 : vector<1x1x1x8x128xf32> to vector<8x128xf32>
    %c5_1048 = arith.constant 5 : index
    %c12_1049 = arith.constant 12 : index
    %1033 = arith.index_cast %c0_i32 : i32 to index
    %c0_1050 = arith.constant 0 : index
    %c0_1051 = arith.constant 0 : index
    %1034 = vector.load %arg1[%c5_1048, %c12_1049, %1033, %c0_1050, %c0_1051] : memref<16x16x1x8x128xf32, #tpu.memory_space<vmem>>, vector<1x1x1x8x128xf32>
    %1035 = vector.shape_cast %1034 : vector<1x1x1x8x128xf32> to vector<8x128xf32>
    %1036 = arith.maximumf %1032, %1035 : vector<8x128xf32>
    %c5_1052 = arith.constant 5 : index
    %c13_1053 = arith.constant 13 : index
    %1037 = arith.index_cast %c0_i32 : i32 to index
    %c0_1054 = arith.constant 0 : index
    %c0_1055 = arith.constant 0 : index
    %1038 = vector.load %arg1[%c5_1052, %c13_1053, %1037, %c0_1054, %c0_1055] : memref<16x16x1x8x128xf32, #tpu.memory_space<vmem>>, vector<1x1x1x8x128xf32>
    %1039 = vector.shape_cast %1038 : vector<1x1x1x8x128xf32> to vector<8x128xf32>
    %1040 = arith.maximumf %1036, %1039 : vector<8x128xf32>
    %c6_1056 = arith.constant 6 : index
    %c11_1057 = arith.constant 11 : index
    %1041 = arith.index_cast %c0_i32 : i32 to index
    %c0_1058 = arith.constant 0 : index
    %c0_1059 = arith.constant 0 : index
    %1042 = vector.load %arg1[%c6_1056, %c11_1057, %1041, %c0_1058, %c0_1059] : memref<16x16x1x8x128xf32, #tpu.memory_space<vmem>>, vector<1x1x1x8x128xf32>
    %1043 = vector.shape_cast %1042 : vector<1x1x1x8x128xf32> to vector<8x128xf32>
    %1044 = arith.maximumf %1040, %1043 : vector<8x128xf32>
    %c6_1060 = arith.constant 6 : index
    %c12_1061 = arith.constant 12 : index
    %1045 = arith.index_cast %c0_i32 : i32 to index
    %c0_1062 = arith.constant 0 : index
    %c0_1063 = arith.constant 0 : index
    %1046 = vector.load %arg1[%c6_1060, %c12_1061, %1045, %c0_1062, %c0_1063] : memref<16x16x1x8x128xf32, #tpu.memory_space<vmem>>, vector<1x1x1x8x128xf32>
    %1047 = vector.shape_cast %1046 : vector<1x1x1x8x128xf32> to vector<8x128xf32>
    %1048 = arith.maximumf %1044, %1047 : vector<8x128xf32>
    %c6_1064 = arith.constant 6 : index
    %c13_1065 = arith.constant 13 : index
    %1049 = arith.index_cast %c0_i32 : i32 to index
    %c0_1066 = arith.constant 0 : index
    %c0_1067 = arith.constant 0 : index
    %1050 = vector.load %arg1[%c6_1064, %c13_1065, %1049, %c0_1066, %c0_1067] : memref<16x16x1x8x128xf32, #tpu.memory_space<vmem>>, vector<1x1x1x8x128xf32>
    %1051 = vector.shape_cast %1050 : vector<1x1x1x8x128xf32> to vector<8x128xf32>
    %1052 = arith.maximumf %1048, %1051 : vector<8x128xf32>
    %c7_1068 = arith.constant 7 : index
    %c11_1069 = arith.constant 11 : index
    %1053 = arith.index_cast %c0_i32 : i32 to index
    %c0_1070 = arith.constant 0 : index
    %c0_1071 = arith.constant 0 : index
    %1054 = vector.load %arg1[%c7_1068, %c11_1069, %1053, %c0_1070, %c0_1071] : memref<16x16x1x8x128xf32, #tpu.memory_space<vmem>>, vector<1x1x1x8x128xf32>
    %1055 = vector.shape_cast %1054 : vector<1x1x1x8x128xf32> to vector<8x128xf32>
    %1056 = arith.maximumf %1052, %1055 : vector<8x128xf32>
    %c7_1072 = arith.constant 7 : index
    %c12_1073 = arith.constant 12 : index
    %1057 = arith.index_cast %c0_i32 : i32 to index
    %c0_1074 = arith.constant 0 : index
    %c0_1075 = arith.constant 0 : index
    %1058 = vector.load %arg1[%c7_1072, %c12_1073, %1057, %c0_1074, %c0_1075] : memref<16x16x1x8x128xf32, #tpu.memory_space<vmem>>, vector<1x1x1x8x128xf32>
    %1059 = vector.shape_cast %1058 : vector<1x1x1x8x128xf32> to vector<8x128xf32>
    %1060 = arith.maximumf %1056, %1059 : vector<8x128xf32>
    %c7_1076 = arith.constant 7 : index
    %c13_1077 = arith.constant 13 : index
    %1061 = arith.index_cast %c0_i32 : i32 to index
    %c0_1078 = arith.constant 0 : index
    %c0_1079 = arith.constant 0 : index
    %1062 = vector.load %arg1[%c7_1076, %c13_1077, %1061, %c0_1078, %c0_1079] : memref<16x16x1x8x128xf32, #tpu.memory_space<vmem>>, vector<1x1x1x8x128xf32>
    %1063 = vector.shape_cast %1062 : vector<1x1x1x8x128xf32> to vector<8x128xf32>
    %1064 = arith.maximumf %1060, %1063 : vector<8x128xf32>
    %c3_1080 = arith.constant 3 : index
    %c6_1081 = arith.constant 6 : index
    %1065 = arith.index_cast %c0_i32 : i32 to index
    %c0_1082 = arith.constant 0 : index
    %c0_1083 = arith.constant 0 : index
    %1066 = vector.load %arg2[%c3_1080, %c6_1081, %1065, %c0_1082, %c0_1083] : memref<8x8x1x8x128xf32, #tpu.memory_space<vmem>>, vector<1x1x1x8x128xf32>
    %1067 = vector.shape_cast %1066 : vector<1x1x1x8x128xf32> to vector<8x128xf32>
    %1068 = vector.shape_cast %1064 : vector<8x128xf32> to vector<1x1x1x8x128xf32>
    tpu.vector_store %arg2[%c3_1080, %c6_1081, %1065, %c0_1082, %c0_1083], %1068 {strides = array<i32>} : memref<8x8x1x8x128xf32, #tpu.memory_space<vmem>>, vector<1x1x1x8x128xf32>,
    %c5_1084 = arith.constant 5 : index
    %c13_1085 = arith.constant 13 : index
    %1069 = arith.index_cast %c0_i32 : i32 to index
    %c0_1086 = arith.constant 0 : index
    %c0_1087 = arith.constant 0 : index
    %1070 = vector.load %arg1[%c5_1084, %c13_1085, %1069, %c0_1086, %c0_1087] : memref<16x16x1x8x128xf32, #tpu.memory_space<vmem>>, vector<1x1x1x8x128xf32>
    %1071 = vector.shape_cast %1070 : vector<1x1x1x8x128xf32> to vector<8x128xf32>
    %c5_1088 = arith.constant 5 : index
    %c14_1089 = arith.constant 14 : index
    %1072 = arith.index_cast %c0_i32 : i32 to index
    %c0_1090 = arith.constant 0 : index
    %c0_1091 = arith.constant 0 : index
    %1073 = vector.load %arg1[%c5_1088, %c14_1089, %1072, %c0_1090, %c0_1091] : memref<16x16x1x8x128xf32, #tpu.memory_space<vmem>>, vector<1x1x1x8x128xf32>
    %1074 = vector.shape_cast %1073 : vector<1x1x1x8x128xf32> to vector<8x128xf32>
    %1075 = arith.maximumf %1071, %1074 : vector<8x128xf32>
    %c5_1092 = arith.constant 5 : index
    %c15_1093 = arith.constant 15 : index
    %1076 = arith.index_cast %c0_i32 : i32 to index
    %c0_1094 = arith.constant 0 : index
    %c0_1095 = arith.constant 0 : index
    %1077 = vector.load %arg1[%c5_1092, %c15_1093, %1076, %c0_1094, %c0_1095] : memref<16x16x1x8x128xf32, #tpu.memory_space<vmem>>, vector<1x1x1x8x128xf32>
    %1078 = vector.shape_cast %1077 : vector<1x1x1x8x128xf32> to vector<8x128xf32>
    %1079 = arith.maximumf %1075, %1078 : vector<8x128xf32>
    %c6_1096 = arith.constant 6 : index
    %c13_1097 = arith.constant 13 : index
    %1080 = arith.index_cast %c0_i32 : i32 to index
    %c0_1098 = arith.constant 0 : index
    %c0_1099 = arith.constant 0 : index
    %1081 = vector.load %arg1[%c6_1096, %c13_1097, %1080, %c0_1098, %c0_1099] : memref<16x16x1x8x128xf32, #tpu.memory_space<vmem>>, vector<1x1x1x8x128xf32>
    %1082 = vector.shape_cast %1081 : vector<1x1x1x8x128xf32> to vector<8x128xf32>
    %1083 = arith.maximumf %1079, %1082 : vector<8x128xf32>
    %c6_1100 = arith.constant 6 : index
    %c14_1101 = arith.constant 14 : index
    %1084 = arith.index_cast %c0_i32 : i32 to index
    %c0_1102 = arith.constant 0 : index
    %c0_1103 = arith.constant 0 : index
    %1085 = vector.load %arg1[%c6_1100, %c14_1101, %1084, %c0_1102, %c0_1103] : memref<16x16x1x8x128xf32, #tpu.memory_space<vmem>>, vector<1x1x1x8x128xf32>
    %1086 = vector.shape_cast %1085 : vector<1x1x1x8x128xf32> to vector<8x128xf32>
    %1087 = arith.maximumf %1083, %1086 : vector<8x128xf32>
    %c6_1104 = arith.constant 6 : index
    %c15_1105 = arith.constant 15 : index
    %1088 = arith.index_cast %c0_i32 : i32 to index
    %c0_1106 = arith.constant 0 : index
    %c0_1107 = arith.constant 0 : index
    %1089 = vector.load %arg1[%c6_1104, %c15_1105, %1088, %c0_1106, %c0_1107] : memref<16x16x1x8x128xf32, #tpu.memory_space<vmem>>, vector<1x1x1x8x128xf32>
    %1090 = vector.shape_cast %1089 : vector<1x1x1x8x128xf32> to vector<8x128xf32>
    %1091 = arith.maximumf %1087, %1090 : vector<8x128xf32>
    %c7_1108 = arith.constant 7 : index
    %c13_1109 = arith.constant 13 : index
    %1092 = arith.index_cast %c0_i32 : i32 to index
    %c0_1110 = arith.constant 0 : index
    %c0_1111 = arith.constant 0 : index
    %1093 = vector.load %arg1[%c7_1108, %c13_1109, %1092, %c0_1110, %c0_1111] : memref<16x16x1x8x128xf32, #tpu.memory_space<vmem>>, vector<1x1x1x8x128xf32>
    %1094 = vector.shape_cast %1093 : vector<1x1x1x8x128xf32> to vector<8x128xf32>
    %1095 = arith.maximumf %1091, %1094 : vector<8x128xf32>
    %c7_1112 = arith.constant 7 : index
    %c14_1113 = arith.constant 14 : index
    %1096 = arith.index_cast %c0_i32 : i32 to index
    %c0_1114 = arith.constant 0 : index
    %c0_1115 = arith.constant 0 : index
    %1097 = vector.load %arg1[%c7_1112, %c14_1113, %1096, %c0_1114, %c0_1115] : memref<16x16x1x8x128xf32, #tpu.memory_space<vmem>>, vector<1x1x1x8x128xf32>
    %1098 = vector.shape_cast %1097 : vector<1x1x1x8x128xf32> to vector<8x128xf32>
    %1099 = arith.maximumf %1095, %1098 : vector<8x128xf32>
    %c7_1116 = arith.constant 7 : index
    %c15_1117 = arith.constant 15 : index
    %1100 = arith.index_cast %c0_i32 : i32 to index
    %c0_1118 = arith.constant 0 : index
    %c0_1119 = arith.constant 0 : index
    %1101 = vector.load %arg1[%c7_1116, %c15_1117, %1100, %c0_1118, %c0_1119] : memref<16x16x1x8x128xf32, #tpu.memory_space<vmem>>, vector<1x1x1x8x128xf32>
    %1102 = vector.shape_cast %1101 : vector<1x1x1x8x128xf32> to vector<8x128xf32>
    %1103 = arith.maximumf %1099, %1102 : vector<8x128xf32>
    %c3_1120 = arith.constant 3 : index
    %c7_1121 = arith.constant 7 : index
    %1104 = arith.index_cast %c0_i32 : i32 to index
    %c0_1122 = arith.constant 0 : index
    %c0_1123 = arith.constant 0 : index
    %1105 = vector.load %arg2[%c3_1120, %c7_1121, %1104, %c0_1122, %c0_1123] : memref<8x8x1x8x128xf32, #tpu.memory_space<vmem>>, vector<1x1x1x8x128xf32>
    %1106 = vector.shape_cast %1105 : vector<1x1x1x8x128xf32> to vector<8x128xf32>
    %1107 = vector.shape_cast %1103 : vector<8x128xf32> to vector<1x1x1x8x128xf32>
    tpu.vector_store %arg2[%c3_1120, %c7_1121, %1104, %c0_1122, %c0_1123], %1107 {strides = array<i32>} : memref<8x8x1x8x128xf32, #tpu.memory_space<vmem>>, vector<1x1x1x8x128xf32>,
    %c7_1124 = arith.constant 7 : index
    %c0_1125 = arith.constant 0 : index
    %1108 = arith.index_cast %c0_i32 : i32 to index
    %c0_1126 = arith.constant 0 : index
    %c0_1127 = arith.constant 0 : index
    %1109 = vector.load %arg1[%c7_1124, %c0_1125, %1108, %c0_1126, %c0_1127] : memref<16x16x1x8x128xf32, #tpu.memory_space<vmem>>, vector<1x1x1x8x128xf32>
    %1110 = vector.shape_cast %1109 : vector<1x1x1x8x128xf32> to vector<8x128xf32>
    %c7_1128 = arith.constant 7 : index
    %c1_1129 = arith.constant 1 : index
    %1111 = arith.index_cast %c0_i32 : i32 to index
    %c0_1130 = arith.constant 0 : index
    %c0_1131 = arith.constant 0 : index
    %1112 = vector.load %arg1[%c7_1128, %c1_1129, %1111, %c0_1130, %c0_1131] : memref<16x16x1x8x128xf32, #tpu.memory_space<vmem>>, vector<1x1x1x8x128xf32>
    %1113 = vector.shape_cast %1112 : vector<1x1x1x8x128xf32> to vector<8x128xf32>
    %1114 = arith.maximumf %1110, %1113 : vector<8x128xf32>
    %c8_1132 = arith.constant 8 : index
    %c0_1133 = arith.constant 0 : index
    %1115 = arith.index_cast %c0_i32 : i32 to index
    %c0_1134 = arith.constant 0 : index
    %c0_1135 = arith.constant 0 : index
    %1116 = vector.load %arg1[%c8_1132, %c0_1133, %1115, %c0_1134, %c0_1135] : memref<16x16x1x8x128xf32, #tpu.memory_space<vmem>>, vector<1x1x1x8x128xf32>
    %1117 = vector.shape_cast %1116 : vector<1x1x1x8x128xf32> to vector<8x128xf32>
    %1118 = arith.maximumf %1114, %1117 : vector<8x128xf32>
    %c8_1136 = arith.constant 8 : index
    %c1_1137 = arith.constant 1 : index
    %1119 = arith.index_cast %c0_i32 : i32 to index
    %c0_1138 = arith.constant 0 : index
    %c0_1139 = arith.constant 0 : index
    %1120 = vector.load %arg1[%c8_1136, %c1_1137, %1119, %c0_1138, %c0_1139] : memref<16x16x1x8x128xf32, #tpu.memory_space<vmem>>, vector<1x1x1x8x128xf32>
    %1121 = vector.shape_cast %1120 : vector<1x1x1x8x128xf32> to vector<8x128xf32>
    %1122 = arith.maximumf %1118, %1121 : vector<8x128xf32>
    %c9_1140 = arith.constant 9 : index
    %c0_1141 = arith.constant 0 : index
    %1123 = arith.index_cast %c0_i32 : i32 to index
    %c0_1142 = arith.constant 0 : index
    %c0_1143 = arith.constant 0 : index
    %1124 = vector.load %arg1[%c9_1140, %c0_1141, %1123, %c0_1142, %c0_1143] : memref<16x16x1x8x128xf32, #tpu.memory_space<vmem>>, vector<1x1x1x8x128xf32>
    %1125 = vector.shape_cast %1124 : vector<1x1x1x8x128xf32> to vector<8x128xf32>
    %1126 = arith.maximumf %1122, %1125 : vector<8x128xf32>
    %c9_1144 = arith.constant 9 : index
    %c1_1145 = arith.constant 1 : index
    %1127 = arith.index_cast %c0_i32 : i32 to index
    %c0_1146 = arith.constant 0 : index
    %c0_1147 = arith.constant 0 : index
    %1128 = vector.load %arg1[%c9_1144, %c1_1145, %1127, %c0_1146, %c0_1147] : memref<16x16x1x8x128xf32, #tpu.memory_space<vmem>>, vector<1x1x1x8x128xf32>
    %1129 = vector.shape_cast %1128 : vector<1x1x1x8x128xf32> to vector<8x128xf32>
    %1130 = arith.maximumf %1126, %1129 : vector<8x128xf32>
    %c4_1148 = arith.constant 4 : index
    %c0_1149 = arith.constant 0 : index
    %1131 = arith.index_cast %c0_i32 : i32 to index
    %c0_1150 = arith.constant 0 : index
    %c0_1151 = arith.constant 0 : index
    %1132 = vector.load %arg2[%c4_1148, %c0_1149, %1131, %c0_1150, %c0_1151] : memref<8x8x1x8x128xf32, #tpu.memory_space<vmem>>, vector<1x1x1x8x128xf32>
    %1133 = vector.shape_cast %1132 : vector<1x1x1x8x128xf32> to vector<8x128xf32>
    %1134 = vector.shape_cast %1130 : vector<8x128xf32> to vector<1x1x1x8x128xf32>
    tpu.vector_store %arg2[%c4_1148, %c0_1149, %1131, %c0_1150, %c0_1151], %1134 {strides = array<i32>} : memref<8x8x1x8x128xf32, #tpu.memory_space<vmem>>, vector<1x1x1x8x128xf32>,
    %c7_1152 = arith.constant 7 : index
    %c1_1153 = arith.constant 1 : index
    %1135 = arith.index_cast %c0_i32 : i32 to index
    %c0_1154 = arith.constant 0 : index
    %c0_1155 = arith.constant 0 : index
    %1136 = vector.load %arg1[%c7_1152, %c1_1153, %1135, %c0_1154, %c0_1155] : memref<16x16x1x8x128xf32, #tpu.memory_space<vmem>>, vector<1x1x1x8x128xf32>
    %1137 = vector.shape_cast %1136 : vector<1x1x1x8x128xf32> to vector<8x128xf32>
    %c7_1156 = arith.constant 7 : index
    %c2_1157 = arith.constant 2 : index
    %1138 = arith.index_cast %c0_i32 : i32 to index
    %c0_1158 = arith.constant 0 : index
    %c0_1159 = arith.constant 0 : index
    %1139 = vector.load %arg1[%c7_1156, %c2_1157, %1138, %c0_1158, %c0_1159] : memref<16x16x1x8x128xf32, #tpu.memory_space<vmem>>, vector<1x1x1x8x128xf32>
    %1140 = vector.shape_cast %1139 : vector<1x1x1x8x128xf32> to vector<8x128xf32>
    %1141 = arith.maximumf %1137, %1140 : vector<8x128xf32>
    %c7_1160 = arith.constant 7 : index
    %c3_1161 = arith.constant 3 : index
    %1142 = arith.index_cast %c0_i32 : i32 to index
    %c0_1162 = arith.constant 0 : index
    %c0_1163 = arith.constant 0 : index
    %1143 = vector.load %arg1[%c7_1160, %c3_1161, %1142, %c0_1162, %c0_1163] : memref<16x16x1x8x128xf32, #tpu.memory_space<vmem>>, vector<1x1x1x8x128xf32>
    %1144 = vector.shape_cast %1143 : vector<1x1x1x8x128xf32> to vector<8x128xf32>
    %1145 = arith.maximumf %1141, %1144 : vector<8x128xf32>
    %c8_1164 = arith.constant 8 : index
    %c1_1165 = arith.constant 1 : index
    %1146 = arith.index_cast %c0_i32 : i32 to index
    %c0_1166 = arith.constant 0 : index
    %c0_1167 = arith.constant 0 : index
    %1147 = vector.load %arg1[%c8_1164, %c1_1165, %1146, %c0_1166, %c0_1167] : memref<16x16x1x8x128xf32, #tpu.memory_space<vmem>>, vector<1x1x1x8x128xf32>
    %1148 = vector.shape_cast %1147 : vector<1x1x1x8x128xf32> to vector<8x128xf32>
    %1149 = arith.maximumf %1145, %1148 : vector<8x128xf32>
    %c8_1168 = arith.constant 8 : index
    %c2_1169 = arith.constant 2 : index
    %1150 = arith.index_cast %c0_i32 : i32 to index
    %c0_1170 = arith.constant 0 : index
    %c0_1171 = arith.constant 0 : index
    %1151 = vector.load %arg1[%c8_1168, %c2_1169, %1150, %c0_1170, %c0_1171] : memref<16x16x1x8x128xf32, #tpu.memory_space<vmem>>, vector<1x1x1x8x128xf32>
    %1152 = vector.shape_cast %1151 : vector<1x1x1x8x128xf32> to vector<8x128xf32>
    %1153 = arith.maximumf %1149, %1152 : vector<8x128xf32>
    %c8_1172 = arith.constant 8 : index
    %c3_1173 = arith.constant 3 : index
    %1154 = arith.index_cast %c0_i32 : i32 to index
    %c0_1174 = arith.constant 0 : index
    %c0_1175 = arith.constant 0 : index
    %1155 = vector.load %arg1[%c8_1172, %c3_1173, %1154, %c0_1174, %c0_1175] : memref<16x16x1x8x128xf32, #tpu.memory_space<vmem>>, vector<1x1x1x8x128xf32>
    %1156 = vector.shape_cast %1155 : vector<1x1x1x8x128xf32> to vector<8x128xf32>
    %1157 = arith.maximumf %1153, %1156 : vector<8x128xf32>
    %c9_1176 = arith.constant 9 : index
    %c1_1177 = arith.constant 1 : index
    %1158 = arith.index_cast %c0_i32 : i32 to index
    %c0_1178 = arith.constant 0 : index
    %c0_1179 = arith.constant 0 : index
    %1159 = vector.load %arg1[%c9_1176, %c1_1177, %1158, %c0_1178, %c0_1179] : memref<16x16x1x8x128xf32, #tpu.memory_space<vmem>>, vector<1x1x1x8x128xf32>
    %1160 = vector.shape_cast %1159 : vector<1x1x1x8x128xf32> to vector<8x128xf32>
    %1161 = arith.maximumf %1157, %1160 : vector<8x128xf32>
    %c9_1180 = arith.constant 9 : index
    %c2_1181 = arith.constant 2 : index
    %1162 = arith.index_cast %c0_i32 : i32 to index
    %c0_1182 = arith.constant 0 : index
    %c0_1183 = arith.constant 0 : index
    %1163 = vector.load %arg1[%c9_1180, %c2_1181, %1162, %c0_1182, %c0_1183] : memref<16x16x1x8x128xf32, #tpu.memory_space<vmem>>, vector<1x1x1x8x128xf32>
    %1164 = vector.shape_cast %1163 : vector<1x1x1x8x128xf32> to vector<8x128xf32>
    %1165 = arith.maximumf %1161, %1164 : vector<8x128xf32>
    %c9_1184 = arith.constant 9 : index
    %c3_1185 = arith.constant 3 : index
    %1166 = arith.index_cast %c0_i32 : i32 to index
    %c0_1186 = arith.constant 0 : index
    %c0_1187 = arith.constant 0 : index
    %1167 = vector.load %arg1[%c9_1184, %c3_1185, %1166, %c0_1186, %c0_1187] : memref<16x16x1x8x128xf32, #tpu.memory_space<vmem>>, vector<1x1x1x8x128xf32>
    %1168 = vector.shape_cast %1167 : vector<1x1x1x8x128xf32> to vector<8x128xf32>
    %1169 = arith.maximumf %1165, %1168 : vector<8x128xf32>
    %c4_1188 = arith.constant 4 : index
    %c1_1189 = arith.constant 1 : index
    %1170 = arith.index_cast %c0_i32 : i32 to index
    %c0_1190 = arith.constant 0 : index
    %c0_1191 = arith.constant 0 : index
    %1171 = vector.load %arg2[%c4_1188, %c1_1189, %1170, %c0_1190, %c0_1191] : memref<8x8x1x8x128xf32, #tpu.memory_space<vmem>>, vector<1x1x1x8x128xf32>
    %1172 = vector.shape_cast %1171 : vector<1x1x1x8x128xf32> to vector<8x128xf32>
    %1173 = vector.shape_cast %1169 : vector<8x128xf32> to vector<1x1x1x8x128xf32>
    tpu.vector_store %arg2[%c4_1188, %c1_1189, %1170, %c0_1190, %c0_1191], %1173 {strides = array<i32>} : memref<8x8x1x8x128xf32, #tpu.memory_space<vmem>>, vector<1x1x1x8x128xf32>,
    %c7_1192 = arith.constant 7 : index
    %c3_1193 = arith.constant 3 : index
    %1174 = arith.index_cast %c0_i32 : i32 to index
    %c0_1194 = arith.constant 0 : index
    %c0_1195 = arith.constant 0 : index
    %1175 = vector.load %arg1[%c7_1192, %c3_1193, %1174, %c0_1194, %c0_1195] : memref<16x16x1x8x128xf32, #tpu.memory_space<vmem>>, vector<1x1x1x8x128xf32>
    %1176 = vector.shape_cast %1175 : vector<1x1x1x8x128xf32> to vector<8x128xf32>
    %c7_1196 = arith.constant 7 : index
    %c4_1197 = arith.constant 4 : index
    %1177 = arith.index_cast %c0_i32 : i32 to index
    %c0_1198 = arith.constant 0 : index
    %c0_1199 = arith.constant 0 : index
    %1178 = vector.load %arg1[%c7_1196, %c4_1197, %1177, %c0_1198, %c0_1199] : memref<16x16x1x8x128xf32, #tpu.memory_space<vmem>>, vector<1x1x1x8x128xf32>
    %1179 = vector.shape_cast %1178 : vector<1x1x1x8x128xf32> to vector<8x128xf32>
    %1180 = arith.maximumf %1176, %1179 : vector<8x128xf32>
    %c7_1200 = arith.constant 7 : index
    %c5_1201 = arith.constant 5 : index
    %1181 = arith.index_cast %c0_i32 : i32 to index
    %c0_1202 = arith.constant 0 : index
    %c0_1203 = arith.constant 0 : index
    %1182 = vector.load %arg1[%c7_1200, %c5_1201, %1181, %c0_1202, %c0_1203] : memref<16x16x1x8x128xf32, #tpu.memory_space<vmem>>, vector<1x1x1x8x128xf32>
    %1183 = vector.shape_cast %1182 : vector<1x1x1x8x128xf32> to vector<8x128xf32>
    %1184 = arith.maximumf %1180, %1183 : vector<8x128xf32>
    %c8_1204 = arith.constant 8 : index
    %c3_1205 = arith.constant 3 : index
    %1185 = arith.index_cast %c0_i32 : i32 to index
    %c0_1206 = arith.constant 0 : index
    %c0_1207 = arith.constant 0 : index
    %1186 = vector.load %arg1[%c8_1204, %c3_1205, %1185, %c0_1206, %c0_1207] : memref<16x16x1x8x128xf32, #tpu.memory_space<vmem>>, vector<1x1x1x8x128xf32>
    %1187 = vector.shape_cast %1186 : vector<1x1x1x8x128xf32> to vector<8x128xf32>
    %1188 = arith.maximumf %1184, %1187 : vector<8x128xf32>
    %c8_1208 = arith.constant 8 : index
    %c4_1209 = arith.constant 4 : index
    %1189 = arith.index_cast %c0_i32 : i32 to index
    %c0_1210 = arith.constant 0 : index
    %c0_1211 = arith.constant 0 : index
    %1190 = vector.load %arg1[%c8_1208, %c4_1209, %1189, %c0_1210, %c0_1211] : memref<16x16x1x8x128xf32, #tpu.memory_space<vmem>>, vector<1x1x1x8x128xf32>
    %1191 = vector.shape_cast %1190 : vector<1x1x1x8x128xf32> to vector<8x128xf32>
    %1192 = arith.maximumf %1188, %1191 : vector<8x128xf32>
    %c8_1212 = arith.constant 8 : index
    %c5_1213 = arith.constant 5 : index
    %1193 = arith.index_cast %c0_i32 : i32 to index
    %c0_1214 = arith.constant 0 : index
    %c0_1215 = arith.constant 0 : index
    %1194 = vector.load %arg1[%c8_1212, %c5_1213, %1193, %c0_1214, %c0_1215] : memref<16x16x1x8x128xf32, #tpu.memory_space<vmem>>, vector<1x1x1x8x128xf32>
    %1195 = vector.shape_cast %1194 : vector<1x1x1x8x128xf32> to vector<8x128xf32>
    %1196 = arith.maximumf %1192, %1195 : vector<8x128xf32>
    %c9_1216 = arith.constant 9 : index
    %c3_1217 = arith.constant 3 : index
    %1197 = arith.index_cast %c0_i32 : i32 to index
    %c0_1218 = arith.constant 0 : index
    %c0_1219 = arith.constant 0 : index
    %1198 = vector.load %arg1[%c9_1216, %c3_1217, %1197, %c0_1218, %c0_1219] : memref<16x16x1x8x128xf32, #tpu.memory_space<vmem>>, vector<1x1x1x8x128xf32>
    %1199 = vector.shape_cast %1198 : vector<1x1x1x8x128xf32> to vector<8x128xf32>
    %1200 = arith.maximumf %1196, %1199 : vector<8x128xf32>
    %c9_1220 = arith.constant 9 : index
    %c4_1221 = arith.constant 4 : index
    %1201 = arith.index_cast %c0_i32 : i32 to index
    %c0_1222 = arith.constant 0 : index
    %c0_1223 = arith.constant 0 : index
    %1202 = vector.load %arg1[%c9_1220, %c4_1221, %1201, %c0_1222, %c0_1223] : memref<16x16x1x8x128xf32, #tpu.memory_space<vmem>>, vector<1x1x1x8x128xf32>
    %1203 = vector.shape_cast %1202 : vector<1x1x1x8x128xf32> to vector<8x128xf32>
    %1204 = arith.maximumf %1200, %1203 : vector<8x128xf32>
    %c9_1224 = arith.constant 9 : index
    %c5_1225 = arith.constant 5 : index
    %1205 = arith.index_cast %c0_i32 : i32 to index
    %c0_1226 = arith.constant 0 : index
    %c0_1227 = arith.constant 0 : index
    %1206 = vector.load %arg1[%c9_1224, %c5_1225, %1205, %c0_1226, %c0_1227] : memref<16x16x1x8x128xf32, #tpu.memory_space<vmem>>, vector<1x1x1x8x128xf32>
    %1207 = vector.shape_cast %1206 : vector<1x1x1x8x128xf32> to vector<8x128xf32>
    %1208 = arith.maximumf %1204, %1207 : vector<8x128xf32>
    %c4_1228 = arith.constant 4 : index
    %c2_1229 = arith.constant 2 : index
    %1209 = arith.index_cast %c0_i32 : i32 to index
    %c0_1230 = arith.constant 0 : index
    %c0_1231 = arith.constant 0 : index
    %1210 = vector.load %arg2[%c4_1228, %c2_1229, %1209, %c0_1230, %c0_1231] : memref<8x8x1x8x128xf32, #tpu.memory_space<vmem>>, vector<1x1x1x8x128xf32>
    %1211 = vector.shape_cast %1210 : vector<1x1x1x8x128xf32> to vector<8x128xf32>
    %1212 = vector.shape_cast %1208 : vector<8x128xf32> to vector<1x1x1x8x128xf32>
    tpu.vector_store %arg2[%c4_1228, %c2_1229, %1209, %c0_1230, %c0_1231], %1212 {strides = array<i32>} : memref<8x8x1x8x128xf32, #tpu.memory_space<vmem>>, vector<1x1x1x8x128xf32>,
    %c7_1232 = arith.constant 7 : index
    %c5_1233 = arith.constant 5 : index
    %1213 = arith.index_cast %c0_i32 : i32 to index
    %c0_1234 = arith.constant 0 : index
    %c0_1235 = arith.constant 0 : index
    %1214 = vector.load %arg1[%c7_1232, %c5_1233, %1213, %c0_1234, %c0_1235] : memref<16x16x1x8x128xf32, #tpu.memory_space<vmem>>, vector<1x1x1x8x128xf32>
    %1215 = vector.shape_cast %1214 : vector<1x1x1x8x128xf32> to vector<8x128xf32>
    %c7_1236 = arith.constant 7 : index
    %c6_1237 = arith.constant 6 : index
    %1216 = arith.index_cast %c0_i32 : i32 to index
    %c0_1238 = arith.constant 0 : index
    %c0_1239 = arith.constant 0 : index
    %1217 = vector.load %arg1[%c7_1236, %c6_1237, %1216, %c0_1238, %c0_1239] : memref<16x16x1x8x128xf32, #tpu.memory_space<vmem>>, vector<1x1x1x8x128xf32>
    %1218 = vector.shape_cast %1217 : vector<1x1x1x8x128xf32> to vector<8x128xf32>
    %1219 = arith.maximumf %1215, %1218 : vector<8x128xf32>
    %c7_1240 = arith.constant 7 : index
    %c7_1241 = arith.constant 7 : index
    %1220 = arith.index_cast %c0_i32 : i32 to index
    %c0_1242 = arith.constant 0 : index
    %c0_1243 = arith.constant 0 : index
    %1221 = vector.load %arg1[%c7_1240, %c7_1241, %1220, %c0_1242, %c0_1243] : memref<16x16x1x8x128xf32, #tpu.memory_space<vmem>>, vector<1x1x1x8x128xf32>
    %1222 = vector.shape_cast %1221 : vector<1x1x1x8x128xf32> to vector<8x128xf32>
    %1223 = arith.maximumf %1219, %1222 : vector<8x128xf32>
    %c8_1244 = arith.constant 8 : index
    %c5_1245 = arith.constant 5 : index
    %1224 = arith.index_cast %c0_i32 : i32 to index
    %c0_1246 = arith.constant 0 : index
    %c0_1247 = arith.constant 0 : index
    %1225 = vector.load %arg1[%c8_1244, %c5_1245, %1224, %c0_1246, %c0_1247] : memref<16x16x1x8x128xf32, #tpu.memory_space<vmem>>, vector<1x1x1x8x128xf32>
    %1226 = vector.shape_cast %1225 : vector<1x1x1x8x128xf32> to vector<8x128xf32>
    %1227 = arith.maximumf %1223, %1226 : vector<8x128xf32>
    %c8_1248 = arith.constant 8 : index
    %c6_1249 = arith.constant 6 : index
    %1228 = arith.index_cast %c0_i32 : i32 to index
    %c0_1250 = arith.constant 0 : index
    %c0_1251 = arith.constant 0 : index
    %1229 = vector.load %arg1[%c8_1248, %c6_1249, %1228, %c0_1250, %c0_1251] : memref<16x16x1x8x128xf32, #tpu.memory_space<vmem>>, vector<1x1x1x8x128xf32>
    %1230 = vector.shape_cast %1229 : vector<1x1x1x8x128xf32> to vector<8x128xf32>
    %1231 = arith.maximumf %1227, %1230 : vector<8x128xf32>
    %c8_1252 = arith.constant 8 : index
    %c7_1253 = arith.constant 7 : index
    %1232 = arith.index_cast %c0_i32 : i32 to index
    %c0_1254 = arith.constant 0 : index
    %c0_1255 = arith.constant 0 : index
    %1233 = vector.load %arg1[%c8_1252, %c7_1253, %1232, %c0_1254, %c0_1255] : memref<16x16x1x8x128xf32, #tpu.memory_space<vmem>>, vector<1x1x1x8x128xf32>
    %1234 = vector.shape_cast %1233 : vector<1x1x1x8x128xf32> to vector<8x128xf32>
    %1235 = arith.maximumf %1231, %1234 : vector<8x128xf32>
    %c9_1256 = arith.constant 9 : index
    %c5_1257 = arith.constant 5 : index
    %1236 = arith.index_cast %c0_i32 : i32 to index
    %c0_1258 = arith.constant 0 : index
    %c0_1259 = arith.constant 0 : index
    %1237 = vector.load %arg1[%c9_1256, %c5_1257, %1236, %c0_1258, %c0_1259] : memref<16x16x1x8x128xf32, #tpu.memory_space<vmem>>, vector<1x1x1x8x128xf32>
    %1238 = vector.shape_cast %1237 : vector<1x1x1x8x128xf32> to vector<8x128xf32>
    %1239 = arith.maximumf %1235, %1238 : vector<8x128xf32>
    %c9_1260 = arith.constant 9 : index
    %c6_1261 = arith.constant 6 : index
    %1240 = arith.index_cast %c0_i32 : i32 to index
    %c0_1262 = arith.constant 0 : index
    %c0_1263 = arith.constant 0 : index
    %1241 = vector.load %arg1[%c9_1260, %c6_1261, %1240, %c0_1262, %c0_1263] : memref<16x16x1x8x128xf32, #tpu.memory_space<vmem>>, vector<1x1x1x8x128xf32>
    %1242 = vector.shape_cast %1241 : vector<1x1x1x8x128xf32> to vector<8x128xf32>
    %1243 = arith.maximumf %1239, %1242 : vector<8x128xf32>
    %c9_1264 = arith.constant 9 : index
    %c7_1265 = arith.constant 7 : index
    %1244 = arith.index_cast %c0_i32 : i32 to index
    %c0_1266 = arith.constant 0 : index
    %c0_1267 = arith.constant 0 : index
    %1245 = vector.load %arg1[%c9_1264, %c7_1265, %1244, %c0_1266, %c0_1267] : memref<16x16x1x8x128xf32, #tpu.memory_space<vmem>>, vector<1x1x1x8x128xf32>
    %1246 = vector.shape_cast %1245 : vector<1x1x1x8x128xf32> to vector<8x128xf32>
    %1247 = arith.maximumf %1243, %1246 : vector<8x128xf32>
    %c4_1268 = arith.constant 4 : index
    %c3_1269 = arith.constant 3 : index
    %1248 = arith.index_cast %c0_i32 : i32 to index
    %c0_1270 = arith.constant 0 : index
    %c0_1271 = arith.constant 0 : index
    %1249 = vector.load %arg2[%c4_1268, %c3_1269, %1248, %c0_1270, %c0_1271] : memref<8x8x1x8x128xf32, #tpu.memory_space<vmem>>, vector<1x1x1x8x128xf32>
    %1250 = vector.shape_cast %1249 : vector<1x1x1x8x128xf32> to vector<8x128xf32>
    %1251 = vector.shape_cast %1247 : vector<8x128xf32> to vector<1x1x1x8x128xf32>
    tpu.vector_store %arg2[%c4_1268, %c3_1269, %1248, %c0_1270, %c0_1271], %1251 {strides = array<i32>} : memref<8x8x1x8x128xf32, #tpu.memory_space<vmem>>, vector<1x1x1x8x128xf32>,
    %c7_1272 = arith.constant 7 : index
    %c7_1273 = arith.constant 7 : index
    %1252 = arith.index_cast %c0_i32 : i32 to index
    %c0_1274 = arith.constant 0 : index
    %c0_1275 = arith.constant 0 : index
    %1253 = vector.load %arg1[%c7_1272, %c7_1273, %1252, %c0_1274, %c0_1275] : memref<16x16x1x8x128xf32, #tpu.memory_space<vmem>>, vector<1x1x1x8x128xf32>
    %1254 = vector.shape_cast %1253 : vector<1x1x1x8x128xf32> to vector<8x128xf32>
    %c7_1276 = arith.constant 7 : index
    %c8_1277 = arith.constant 8 : index
    %1255 = arith.index_cast %c0_i32 : i32 to index
    %c0_1278 = arith.constant 0 : index
    %c0_1279 = arith.constant 0 : index
    %1256 = vector.load %arg1[%c7_1276, %c8_1277, %1255, %c0_1278, %c0_1279] : memref<16x16x1x8x128xf32, #tpu.memory_space<vmem>>, vector<1x1x1x8x128xf32>
    %1257 = vector.shape_cast %1256 : vector<1x1x1x8x128xf32> to vector<8x128xf32>
    %1258 = arith.maximumf %1254, %1257 : vector<8x128xf32>
    %c7_1280 = arith.constant 7 : index
    %c9_1281 = arith.constant 9 : index
    %1259 = arith.index_cast %c0_i32 : i32 to index
    %c0_1282 = arith.constant 0 : index
    %c0_1283 = arith.constant 0 : index
    %1260 = vector.load %arg1[%c7_1280, %c9_1281, %1259, %c0_1282, %c0_1283] : memref<16x16x1x8x128xf32, #tpu.memory_space<vmem>>, vector<1x1x1x8x128xf32>
    %1261 = vector.shape_cast %1260 : vector<1x1x1x8x128xf32> to vector<8x128xf32>
    %1262 = arith.maximumf %1258, %1261 : vector<8x128xf32>
    %c8_1284 = arith.constant 8 : index
    %c7_1285 = arith.constant 7 : index
    %1263 = arith.index_cast %c0_i32 : i32 to index
    %c0_1286 = arith.constant 0 : index
    %c0_1287 = arith.constant 0 : index
    %1264 = vector.load %arg1[%c8_1284, %c7_1285, %1263, %c0_1286, %c0_1287] : memref<16x16x1x8x128xf32, #tpu.memory_space<vmem>>, vector<1x1x1x8x128xf32>
    %1265 = vector.shape_cast %1264 : vector<1x1x1x8x128xf32> to vector<8x128xf32>
    %1266 = arith.maximumf %1262, %1265 : vector<8x128xf32>
    %c8_1288 = arith.constant 8 : index
    %c8_1289 = arith.constant 8 : index
    %1267 = arith.index_cast %c0_i32 : i32 to index
    %c0_1290 = arith.constant 0 : index
    %c0_1291 = arith.constant 0 : index
    %1268 = vector.load %arg1[%c8_1288, %c8_1289, %1267, %c0_1290, %c0_1291] : memref<16x16x1x8x128xf32, #tpu.memory_space<vmem>>, vector<1x1x1x8x128xf32>
    %1269 = vector.shape_cast %1268 : vector<1x1x1x8x128xf32> to vector<8x128xf32>
    %1270 = arith.maximumf %1266, %1269 : vector<8x128xf32>
    %c8_1292 = arith.constant 8 : index
    %c9_1293 = arith.constant 9 : index
    %1271 = arith.index_cast %c0_i32 : i32 to index
    %c0_1294 = arith.constant 0 : index
    %c0_1295 = arith.constant 0 : index
    %1272 = vector.load %arg1[%c8_1292, %c9_1293, %1271, %c0_1294, %c0_1295] : memref<16x16x1x8x128xf32, #tpu.memory_space<vmem>>, vector<1x1x1x8x128xf32>
    %1273 = vector.shape_cast %1272 : vector<1x1x1x8x128xf32> to vector<8x128xf32>
    %1274 = arith.maximumf %1270, %1273 : vector<8x128xf32>
    %c9_1296 = arith.constant 9 : index
    %c7_1297 = arith.constant 7 : index
    %1275 = arith.index_cast %c0_i32 : i32 to index
    %c0_1298 = arith.constant 0 : index
    %c0_1299 = arith.constant 0 : index
    %1276 = vector.load %arg1[%c9_1296, %c7_1297, %1275, %c0_1298, %c0_1299] : memref<16x16x1x8x128xf32, #tpu.memory_space<vmem>>, vector<1x1x1x8x128xf32>
    %1277 = vector.shape_cast %1276 : vector<1x1x1x8x128xf32> to vector<8x128xf32>
    %1278 = arith.maximumf %1274, %1277 : vector<8x128xf32>
    %c9_1300 = arith.constant 9 : index
    %c8_1301 = arith.constant 8 : index
    %1279 = arith.index_cast %c0_i32 : i32 to index
    %c0_1302 = arith.constant 0 : index
    %c0_1303 = arith.constant 0 : index
    %1280 = vector.load %arg1[%c9_1300, %c8_1301, %1279, %c0_1302, %c0_1303] : memref<16x16x1x8x128xf32, #tpu.memory_space<vmem>>, vector<1x1x1x8x128xf32>
    %1281 = vector.shape_cast %1280 : vector<1x1x1x8x128xf32> to vector<8x128xf32>
    %1282 = arith.maximumf %1278, %1281 : vector<8x128xf32>
    %c9_1304 = arith.constant 9 : index
    %c9_1305 = arith.constant 9 : index
    %1283 = arith.index_cast %c0_i32 : i32 to index
    %c0_1306 = arith.constant 0 : index
    %c0_1307 = arith.constant 0 : index
    %1284 = vector.load %arg1[%c9_1304, %c9_1305, %1283, %c0_1306, %c0_1307] : memref<16x16x1x8x128xf32, #tpu.memory_space<vmem>>, vector<1x1x1x8x128xf32>
    %1285 = vector.shape_cast %1284 : vector<1x1x1x8x128xf32> to vector<8x128xf32>
    %1286 = arith.maximumf %1282, %1285 : vector<8x128xf32>
    %c4_1308 = arith.constant 4 : index
    %c4_1309 = arith.constant 4 : index
    %1287 = arith.index_cast %c0_i32 : i32 to index
    %c0_1310 = arith.constant 0 : index
    %c0_1311 = arith.constant 0 : index
    %1288 = vector.load %arg2[%c4_1308, %c4_1309, %1287, %c0_1310, %c0_1311] : memref<8x8x1x8x128xf32, #tpu.memory_space<vmem>>, vector<1x1x1x8x128xf32>
    %1289 = vector.shape_cast %1288 : vector<1x1x1x8x128xf32> to vector<8x128xf32>
    %1290 = vector.shape_cast %1286 : vector<8x128xf32> to vector<1x1x1x8x128xf32>
    tpu.vector_store %arg2[%c4_1308, %c4_1309, %1287, %c0_1310, %c0_1311], %1290 {strides = array<i32>} : memref<8x8x1x8x128xf32, #tpu.memory_space<vmem>>, vector<1x1x1x8x128xf32>,
    %c7_1312 = arith.constant 7 : index
    %c9_1313 = arith.constant 9 : index
    %1291 = arith.index_cast %c0_i32 : i32 to index
    %c0_1314 = arith.constant 0 : index
    %c0_1315 = arith.constant 0 : index
    %1292 = vector.load %arg1[%c7_1312, %c9_1313, %1291, %c0_1314, %c0_1315] : memref<16x16x1x8x128xf32, #tpu.memory_space<vmem>>, vector<1x1x1x8x128xf32>
    %1293 = vector.shape_cast %1292 : vector<1x1x1x8x128xf32> to vector<8x128xf32>
    %c7_1316 = arith.constant 7 : index
    %c10_1317 = arith.constant 10 : index
    %1294 = arith.index_cast %c0_i32 : i32 to index
    %c0_1318 = arith.constant 0 : index
    %c0_1319 = arith.constant 0 : index
    %1295 = vector.load %arg1[%c7_1316, %c10_1317, %1294, %c0_1318, %c0_1319] : memref<16x16x1x8x128xf32, #tpu.memory_space<vmem>>, vector<1x1x1x8x128xf32>
    %1296 = vector.shape_cast %1295 : vector<1x1x1x8x128xf32> to vector<8x128xf32>
    %1297 = arith.maximumf %1293, %1296 : vector<8x128xf32>
    %c7_1320 = arith.constant 7 : index
    %c11_1321 = arith.constant 11 : index
    %1298 = arith.index_cast %c0_i32 : i32 to index
    %c0_1322 = arith.constant 0 : index
    %c0_1323 = arith.constant 0 : index
    %1299 = vector.load %arg1[%c7_1320, %c11_1321, %1298, %c0_1322, %c0_1323] : memref<16x16x1x8x128xf32, #tpu.memory_space<vmem>>, vector<1x1x1x8x128xf32>
    %1300 = vector.shape_cast %1299 : vector<1x1x1x8x128xf32> to vector<8x128xf32>
    %1301 = arith.maximumf %1297, %1300 : vector<8x128xf32>
    %c8_1324 = arith.constant 8 : index
    %c9_1325 = arith.constant 9 : index
    %1302 = arith.index_cast %c0_i32 : i32 to index
    %c0_1326 = arith.constant 0 : index
    %c0_1327 = arith.constant 0 : index
    %1303 = vector.load %arg1[%c8_1324, %c9_1325, %1302, %c0_1326, %c0_1327] : memref<16x16x1x8x128xf32, #tpu.memory_space<vmem>>, vector<1x1x1x8x128xf32>
    %1304 = vector.shape_cast %1303 : vector<1x1x1x8x128xf32> to vector<8x128xf32>
    %1305 = arith.maximumf %1301, %1304 : vector<8x128xf32>
    %c8_1328 = arith.constant 8 : index
    %c10_1329 = arith.constant 10 : index
    %1306 = arith.index_cast %c0_i32 : i32 to index
    %c0_1330 = arith.constant 0 : index
    %c0_1331 = arith.constant 0 : index
    %1307 = vector.load %arg1[%c8_1328, %c10_1329, %1306, %c0_1330, %c0_1331] : memref<16x16x1x8x128xf32, #tpu.memory_space<vmem>>, vector<1x1x1x8x128xf32>
    %1308 = vector.shape_cast %1307 : vector<1x1x1x8x128xf32> to vector<8x128xf32>
    %1309 = arith.maximumf %1305, %1308 : vector<8x128xf32>
    %c8_1332 = arith.constant 8 : index
    %c11_1333 = arith.constant 11 : index
    %1310 = arith.index_cast %c0_i32 : i32 to index
    %c0_1334 = arith.constant 0 : index
    %c0_1335 = arith.constant 0 : index
    %1311 = vector.load %arg1[%c8_1332, %c11_1333, %1310, %c0_1334, %c0_1335] : memref<16x16x1x8x128xf32, #tpu.memory_space<vmem>>, vector<1x1x1x8x128xf32>
    %1312 = vector.shape_cast %1311 : vector<1x1x1x8x128xf32> to vector<8x128xf32>
    %1313 = arith.maximumf %1309, %1312 : vector<8x128xf32>
    %c9_1336 = arith.constant 9 : index
    %c9_1337 = arith.constant 9 : index
    %1314 = arith.index_cast %c0_i32 : i32 to index
    %c0_1338 = arith.constant 0 : index
    %c0_1339 = arith.constant 0 : index
    %1315 = vector.load %arg1[%c9_1336, %c9_1337, %1314, %c0_1338, %c0_1339] : memref<16x16x1x8x128xf32, #tpu.memory_space<vmem>>, vector<1x1x1x8x128xf32>
    %1316 = vector.shape_cast %1315 : vector<1x1x1x8x128xf32> to vector<8x128xf32>
    %1317 = arith.maximumf %1313, %1316 : vector<8x128xf32>
    %c9_1340 = arith.constant 9 : index
    %c10_1341 = arith.constant 10 : index
    %1318 = arith.index_cast %c0_i32 : i32 to index
    %c0_1342 = arith.constant 0 : index
    %c0_1343 = arith.constant 0 : index
    %1319 = vector.load %arg1[%c9_1340, %c10_1341, %1318, %c0_1342, %c0_1343] : memref<16x16x1x8x128xf32, #tpu.memory_space<vmem>>, vector<1x1x1x8x128xf32>
    %1320 = vector.shape_cast %1319 : vector<1x1x1x8x128xf32> to vector<8x128xf32>
    %1321 = arith.maximumf %1317, %1320 : vector<8x128xf32>
    %c9_1344 = arith.constant 9 : index
    %c11_1345 = arith.constant 11 : index
    %1322 = arith.index_cast %c0_i32 : i32 to index
    %c0_1346 = arith.constant 0 : index
    %c0_1347 = arith.constant 0 : index
    %1323 = vector.load %arg1[%c9_1344, %c11_1345, %1322, %c0_1346, %c0_1347] : memref<16x16x1x8x128xf32, #tpu.memory_space<vmem>>, vector<1x1x1x8x128xf32>
    %1324 = vector.shape_cast %1323 : vector<1x1x1x8x128xf32> to vector<8x128xf32>
    %1325 = arith.maximumf %1321, %1324 : vector<8x128xf32>
    %c4_1348 = arith.constant 4 : index
    %c5_1349 = arith.constant 5 : index
    %1326 = arith.index_cast %c0_i32 : i32 to index
    %c0_1350 = arith.constant 0 : index
    %c0_1351 = arith.constant 0 : index
    %1327 = vector.load %arg2[%c4_1348, %c5_1349, %1326, %c0_1350, %c0_1351] : memref<8x8x1x8x128xf32, #tpu.memory_space<vmem>>, vector<1x1x1x8x128xf32>
    %1328 = vector.shape_cast %1327 : vector<1x1x1x8x128xf32> to vector<8x128xf32>
    %1329 = vector.shape_cast %1325 : vector<8x128xf32> to vector<1x1x1x8x128xf32>
    tpu.vector_store %arg2[%c4_1348, %c5_1349, %1326, %c0_1350, %c0_1351], %1329 {strides = array<i32>} : memref<8x8x1x8x128xf32, #tpu.memory_space<vmem>>, vector<1x1x1x8x128xf32>,
    %c7_1352 = arith.constant 7 : index
    %c11_1353 = arith.constant 11 : index
    %1330 = arith.index_cast %c0_i32 : i32 to index
    %c0_1354 = arith.constant 0 : index
    %c0_1355 = arith.constant 0 : index
    %1331 = vector.load %arg1[%c7_1352, %c11_1353, %1330, %c0_1354, %c0_1355] : memref<16x16x1x8x128xf32, #tpu.memory_space<vmem>>, vector<1x1x1x8x128xf32>
    %1332 = vector.shape_cast %1331 : vector<1x1x1x8x128xf32> to vector<8x128xf32>
    %c7_1356 = arith.constant 7 : index
    %c12_1357 = arith.constant 12 : index
    %1333 = arith.index_cast %c0_i32 : i32 to index
    %c0_1358 = arith.constant 0 : index
    %c0_1359 = arith.constant 0 : index
    %1334 = vector.load %arg1[%c7_1356, %c12_1357, %1333, %c0_1358, %c0_1359] : memref<16x16x1x8x128xf32, #tpu.memory_space<vmem>>, vector<1x1x1x8x128xf32>
    %1335 = vector.shape_cast %1334 : vector<1x1x1x8x128xf32> to vector<8x128xf32>
    %1336 = arith.maximumf %1332, %1335 : vector<8x128xf32>
    %c7_1360 = arith.constant 7 : index
    %c13_1361 = arith.constant 13 : index
    %1337 = arith.index_cast %c0_i32 : i32 to index
    %c0_1362 = arith.constant 0 : index
    %c0_1363 = arith.constant 0 : index
    %1338 = vector.load %arg1[%c7_1360, %c13_1361, %1337, %c0_1362, %c0_1363] : memref<16x16x1x8x128xf32, #tpu.memory_space<vmem>>, vector<1x1x1x8x128xf32>
    %1339 = vector.shape_cast %1338 : vector<1x1x1x8x128xf32> to vector<8x128xf32>
    %1340 = arith.maximumf %1336, %1339 : vector<8x128xf32>
    %c8_1364 = arith.constant 8 : index
    %c11_1365 = arith.constant 11 : index
    %1341 = arith.index_cast %c0_i32 : i32 to index
    %c0_1366 = arith.constant 0 : index
    %c0_1367 = arith.constant 0 : index
    %1342 = vector.load %arg1[%c8_1364, %c11_1365, %1341, %c0_1366, %c0_1367] : memref<16x16x1x8x128xf32, #tpu.memory_space<vmem>>, vector<1x1x1x8x128xf32>
    %1343 = vector.shape_cast %1342 : vector<1x1x1x8x128xf32> to vector<8x128xf32>
    %1344 = arith.maximumf %1340, %1343 : vector<8x128xf32>
    %c8_1368 = arith.constant 8 : index
    %c12_1369 = arith.constant 12 : index
    %1345 = arith.index_cast %c0_i32 : i32 to index
    %c0_1370 = arith.constant 0 : index
    %c0_1371 = arith.constant 0 : index
    %1346 = vector.load %arg1[%c8_1368, %c12_1369, %1345, %c0_1370, %c0_1371] : memref<16x16x1x8x128xf32, #tpu.memory_space<vmem>>, vector<1x1x1x8x128xf32>
    %1347 = vector.shape_cast %1346 : vector<1x1x1x8x128xf32> to vector<8x128xf32>
    %1348 = arith.maximumf %1344, %1347 : vector<8x128xf32>
    %c8_1372 = arith.constant 8 : index
    %c13_1373 = arith.constant 13 : index
    %1349 = arith.index_cast %c0_i32 : i32 to index
    %c0_1374 = arith.constant 0 : index
    %c0_1375 = arith.constant 0 : index
    %1350 = vector.load %arg1[%c8_1372, %c13_1373, %1349, %c0_1374, %c0_1375] : memref<16x16x1x8x128xf32, #tpu.memory_space<vmem>>, vector<1x1x1x8x128xf32>
    %1351 = vector.shape_cast %1350 : vector<1x1x1x8x128xf32> to vector<8x128xf32>
    %1352 = arith.maximumf %1348, %1351 : vector<8x128xf32>
    %c9_1376 = arith.constant 9 : index
    %c11_1377 = arith.constant 11 : index
    %1353 = arith.index_cast %c0_i32 : i32 to index
    %c0_1378 = arith.constant 0 : index
    %c0_1379 = arith.constant 0 : index
    %1354 = vector.load %arg1[%c9_1376, %c11_1377, %1353, %c0_1378, %c0_1379] : memref<16x16x1x8x128xf32, #tpu.memory_space<vmem>>, vector<1x1x1x8x128xf32>
    %1355 = vector.shape_cast %1354 : vector<1x1x1x8x128xf32> to vector<8x128xf32>
    %1356 = arith.maximumf %1352, %1355 : vector<8x128xf32>
    %c9_1380 = arith.constant 9 : index
    %c12_1381 = arith.constant 12 : index
    %1357 = arith.index_cast %c0_i32 : i32 to index
    %c0_1382 = arith.constant 0 : index
    %c0_1383 = arith.constant 0 : index
    %1358 = vector.load %arg1[%c9_1380, %c12_1381, %1357, %c0_1382, %c0_1383] : memref<16x16x1x8x128xf32, #tpu.memory_space<vmem>>, vector<1x1x1x8x128xf32>
    %1359 = vector.shape_cast %1358 : vector<1x1x1x8x128xf32> to vector<8x128xf32>
    %1360 = arith.maximumf %1356, %1359 : vector<8x128xf32>
    %c9_1384 = arith.constant 9 : index
    %c13_1385 = arith.constant 13 : index
    %1361 = arith.index_cast %c0_i32 : i32 to index
    %c0_1386 = arith.constant 0 : index
    %c0_1387 = arith.constant 0 : index
    %1362 = vector.load %arg1[%c9_1384, %c13_1385, %1361, %c0_1386, %c0_1387] : memref<16x16x1x8x128xf32, #tpu.memory_space<vmem>>, vector<1x1x1x8x128xf32>
    %1363 = vector.shape_cast %1362 : vector<1x1x1x8x128xf32> to vector<8x128xf32>
    %1364 = arith.maximumf %1360, %1363 : vector<8x128xf32>
    %c4_1388 = arith.constant 4 : index
    %c6_1389 = arith.constant 6 : index
    %1365 = arith.index_cast %c0_i32 : i32 to index
    %c0_1390 = arith.constant 0 : index
    %c0_1391 = arith.constant 0 : index
    %1366 = vector.load %arg2[%c4_1388, %c6_1389, %1365, %c0_1390, %c0_1391] : memref<8x8x1x8x128xf32, #tpu.memory_space<vmem>>, vector<1x1x1x8x128xf32>
    %1367 = vector.shape_cast %1366 : vector<1x1x1x8x128xf32> to vector<8x128xf32>
    %1368 = vector.shape_cast %1364 : vector<8x128xf32> to vector<1x1x1x8x128xf32>
    tpu.vector_store %arg2[%c4_1388, %c6_1389, %1365, %c0_1390, %c0_1391], %1368 {strides = array<i32>} : memref<8x8x1x8x128xf32, #tpu.memory_space<vmem>>, vector<1x1x1x8x128xf32>,
    %c7_1392 = arith.constant 7 : index
    %c13_1393 = arith.constant 13 : index
    %1369 = arith.index_cast %c0_i32 : i32 to index
    %c0_1394 = arith.constant 0 : index
    %c0_1395 = arith.constant 0 : index
    %1370 = vector.load %arg1[%c7_1392, %c13_1393, %1369, %c0_1394, %c0_1395] : memref<16x16x1x8x128xf32, #tpu.memory_space<vmem>>, vector<1x1x1x8x128xf32>
    %1371 = vector.shape_cast %1370 : vector<1x1x1x8x128xf32> to vector<8x128xf32>
    %c7_1396 = arith.constant 7 : index
    %c14_1397 = arith.constant 14 : index
    %1372 = arith.index_cast %c0_i32 : i32 to index
    %c0_1398 = arith.constant 0 : index
    %c0_1399 = arith.constant 0 : index
    %1373 = vector.load %arg1[%c7_1396, %c14_1397, %1372, %c0_1398, %c0_1399] : memref<16x16x1x8x128xf32, #tpu.memory_space<vmem>>, vector<1x1x1x8x128xf32>
    %1374 = vector.shape_cast %1373 : vector<1x1x1x8x128xf32> to vector<8x128xf32>
    %1375 = arith.maximumf %1371, %1374 : vector<8x128xf32>
    %c7_1400 = arith.constant 7 : index
    %c15_1401 = arith.constant 15 : index
    %1376 = arith.index_cast %c0_i32 : i32 to index
    %c0_1402 = arith.constant 0 : index
    %c0_1403 = arith.constant 0 : index
    %1377 = vector.load %arg1[%c7_1400, %c15_1401, %1376, %c0_1402, %c0_1403] : memref<16x16x1x8x128xf32, #tpu.memory_space<vmem>>, vector<1x1x1x8x128xf32>
    %1378 = vector.shape_cast %1377 : vector<1x1x1x8x128xf32> to vector<8x128xf32>
    %1379 = arith.maximumf %1375, %1378 : vector<8x128xf32>
    %c8_1404 = arith.constant 8 : index
    %c13_1405 = arith.constant 13 : index
    %1380 = arith.index_cast %c0_i32 : i32 to index
    %c0_1406 = arith.constant 0 : index
    %c0_1407 = arith.constant 0 : index
    %1381 = vector.load %arg1[%c8_1404, %c13_1405, %1380, %c0_1406, %c0_1407] : memref<16x16x1x8x128xf32, #tpu.memory_space<vmem>>, vector<1x1x1x8x128xf32>
    %1382 = vector.shape_cast %1381 : vector<1x1x1x8x128xf32> to vector<8x128xf32>
    %1383 = arith.maximumf %1379, %1382 : vector<8x128xf32>
    %c8_1408 = arith.constant 8 : index
    %c14_1409 = arith.constant 14 : index
    %1384 = arith.index_cast %c0_i32 : i32 to index
    %c0_1410 = arith.constant 0 : index
    %c0_1411 = arith.constant 0 : index
    %1385 = vector.load %arg1[%c8_1408, %c14_1409, %1384, %c0_1410, %c0_1411] : memref<16x16x1x8x128xf32, #tpu.memory_space<vmem>>, vector<1x1x1x8x128xf32>
    %1386 = vector.shape_cast %1385 : vector<1x1x1x8x128xf32> to vector<8x128xf32>
    %1387 = arith.maximumf %1383, %1386 : vector<8x128xf32>
    %c8_1412 = arith.constant 8 : index
    %c15_1413 = arith.constant 15 : index
    %1388 = arith.index_cast %c0_i32 : i32 to index
    %c0_1414 = arith.constant 0 : index
    %c0_1415 = arith.constant 0 : index
    %1389 = vector.load %arg1[%c8_1412, %c15_1413, %1388, %c0_1414, %c0_1415] : memref<16x16x1x8x128xf32, #tpu.memory_space<vmem>>, vector<1x1x1x8x128xf32>
    %1390 = vector.shape_cast %1389 : vector<1x1x1x8x128xf32> to vector<8x128xf32>
    %1391 = arith.maximumf %1387, %1390 : vector<8x128xf32>
    %c9_1416 = arith.constant 9 : index
    %c13_1417 = arith.constant 13 : index
    %1392 = arith.index_cast %c0_i32 : i32 to index
    %c0_1418 = arith.constant 0 : index
    %c0_1419 = arith.constant 0 : index
    %1393 = vector.load %arg1[%c9_1416, %c13_1417, %1392, %c0_1418, %c0_1419] : memref<16x16x1x8x128xf32, #tpu.memory_space<vmem>>, vector<1x1x1x8x128xf32>
    %1394 = vector.shape_cast %1393 : vector<1x1x1x8x128xf32> to vector<8x128xf32>
    %1395 = arith.maximumf %1391, %1394 : vector<8x128xf32>
    %c9_1420 = arith.constant 9 : index
    %c14_1421 = arith.constant 14 : index
    %1396 = arith.index_cast %c0_i32 : i32 to index
    %c0_1422 = arith.constant 0 : index
    %c0_1423 = arith.constant 0 : index
    %1397 = vector.load %arg1[%c9_1420, %c14_1421, %1396, %c0_1422, %c0_1423] : memref<16x16x1x8x128xf32, #tpu.memory_space<vmem>>, vector<1x1x1x8x128xf32>
    %1398 = vector.shape_cast %1397 : vector<1x1x1x8x128xf32> to vector<8x128xf32>
    %1399 = arith.maximumf %1395, %1398 : vector<8x128xf32>
    %c9_1424 = arith.constant 9 : index
    %c15_1425 = arith.constant 15 : index
    %1400 = arith.index_cast %c0_i32 : i32 to index
    %c0_1426 = arith.constant 0 : index
    %c0_1427 = arith.constant 0 : index
    %1401 = vector.load %arg1[%c9_1424, %c15_1425, %1400, %c0_1426, %c0_1427] : memref<16x16x1x8x128xf32, #tpu.memory_space<vmem>>, vector<1x1x1x8x128xf32>
    %1402 = vector.shape_cast %1401 : vector<1x1x1x8x128xf32> to vector<8x128xf32>
    %1403 = arith.maximumf %1399, %1402 : vector<8x128xf32>
    %c4_1428 = arith.constant 4 : index
    %c7_1429 = arith.constant 7 : index
    %1404 = arith.index_cast %c0_i32 : i32 to index
    %c0_1430 = arith.constant 0 : index
    %c0_1431 = arith.constant 0 : index
    %1405 = vector.load %arg2[%c4_1428, %c7_1429, %1404, %c0_1430, %c0_1431] : memref<8x8x1x8x128xf32, #tpu.memory_space<vmem>>, vector<1x1x1x8x128xf32>
    %1406 = vector.shape_cast %1405 : vector<1x1x1x8x128xf32> to vector<8x128xf32>
    %1407 = vector.shape_cast %1403 : vector<8x128xf32> to vector<1x1x1x8x128xf32>
    tpu.vector_store %arg2[%c4_1428, %c7_1429, %1404, %c0_1430, %c0_1431], %1407 {strides = array<i32>} : memref<8x8x1x8x128xf32, #tpu.memory_space<vmem>>, vector<1x1x1x8x128xf32>,
    %c9_1432 = arith.constant 9 : index
    %c0_1433 = arith.constant 0 : index
    %1408 = arith.index_cast %c0_i32 : i32 to index
    %c0_1434 = arith.constant 0 : index
    %c0_1435 = arith.constant 0 : index
    %1409 = vector.load %arg1[%c9_1432, %c0_1433, %1408, %c0_1434, %c0_1435] : memref<16x16x1x8x128xf32, #tpu.memory_space<vmem>>, vector<1x1x1x8x128xf32>
    %1410 = vector.shape_cast %1409 : vector<1x1x1x8x128xf32> to vector<8x128xf32>
    %c9_1436 = arith.constant 9 : index
    %c1_1437 = arith.constant 1 : index
    %1411 = arith.index_cast %c0_i32 : i32 to index
    %c0_1438 = arith.constant 0 : index
    %c0_1439 = arith.constant 0 : index
    %1412 = vector.load %arg1[%c9_1436, %c1_1437, %1411, %c0_1438, %c0_1439] : memref<16x16x1x8x128xf32, #tpu.memory_space<vmem>>, vector<1x1x1x8x128xf32>
    %1413 = vector.shape_cast %1412 : vector<1x1x1x8x128xf32> to vector<8x128xf32>
    %1414 = arith.maximumf %1410, %1413 : vector<8x128xf32>
    %c10_1440 = arith.constant 10 : index
    %c0_1441 = arith.constant 0 : index
    %1415 = arith.index_cast %c0_i32 : i32 to index
    %c0_1442 = arith.constant 0 : index
    %c0_1443 = arith.constant 0 : index
    %1416 = vector.load %arg1[%c10_1440, %c0_1441, %1415, %c0_1442, %c0_1443] : memref<16x16x1x8x128xf32, #tpu.memory_space<vmem>>, vector<1x1x1x8x128xf32>
    %1417 = vector.shape_cast %1416 : vector<1x1x1x8x128xf32> to vector<8x128xf32>
    %1418 = arith.maximumf %1414, %1417 : vector<8x128xf32>
    %c10_1444 = arith.constant 10 : index
    %c1_1445 = arith.constant 1 : index
    %1419 = arith.index_cast %c0_i32 : i32 to index
    %c0_1446 = arith.constant 0 : index
    %c0_1447 = arith.constant 0 : index
    %1420 = vector.load %arg1[%c10_1444, %c1_1445, %1419, %c0_1446, %c0_1447] : memref<16x16x1x8x128xf32, #tpu.memory_space<vmem>>, vector<1x1x1x8x128xf32>
    %1421 = vector.shape_cast %1420 : vector<1x1x1x8x128xf32> to vector<8x128xf32>
    %1422 = arith.maximumf %1418, %1421 : vector<8x128xf32>
    %c11_1448 = arith.constant 11 : index
    %c0_1449 = arith.constant 0 : index
    %1423 = arith.index_cast %c0_i32 : i32 to index
    %c0_1450 = arith.constant 0 : index
    %c0_1451 = arith.constant 0 : index
    %1424 = vector.load %arg1[%c11_1448, %c0_1449, %1423, %c0_1450, %c0_1451] : memref<16x16x1x8x128xf32, #tpu.memory_space<vmem>>, vector<1x1x1x8x128xf32>
    %1425 = vector.shape_cast %1424 : vector<1x1x1x8x128xf32> to vector<8x128xf32>
    %1426 = arith.maximumf %1422, %1425 : vector<8x128xf32>
    %c11_1452 = arith.constant 11 : index
    %c1_1453 = arith.constant 1 : index
    %1427 = arith.index_cast %c0_i32 : i32 to index
    %c0_1454 = arith.constant 0 : index
    %c0_1455 = arith.constant 0 : index
    %1428 = vector.load %arg1[%c11_1452, %c1_1453, %1427, %c0_1454, %c0_1455] : memref<16x16x1x8x128xf32, #tpu.memory_space<vmem>>, vector<1x1x1x8x128xf32>
    %1429 = vector.shape_cast %1428 : vector<1x1x1x8x128xf32> to vector<8x128xf32>
    %1430 = arith.maximumf %1426, %1429 : vector<8x128xf32>
    %c5_1456 = arith.constant 5 : index
    %c0_1457 = arith.constant 0 : index
    %1431 = arith.index_cast %c0_i32 : i32 to index
    %c0_1458 = arith.constant 0 : index
    %c0_1459 = arith.constant 0 : index
    %1432 = vector.load %arg2[%c5_1456, %c0_1457, %1431, %c0_1458, %c0_1459] : memref<8x8x1x8x128xf32, #tpu.memory_space<vmem>>, vector<1x1x1x8x128xf32>
    %1433 = vector.shape_cast %1432 : vector<1x1x1x8x128xf32> to vector<8x128xf32>
    %1434 = vector.shape_cast %1430 : vector<8x128xf32> to vector<1x1x1x8x128xf32>
    tpu.vector_store %arg2[%c5_1456, %c0_1457, %1431, %c0_1458, %c0_1459], %1434 {strides = array<i32>} : memref<8x8x1x8x128xf32, #tpu.memory_space<vmem>>, vector<1x1x1x8x128xf32>,
    %c9_1460 = arith.constant 9 : index
    %c1_1461 = arith.constant 1 : index
    %1435 = arith.index_cast %c0_i32 : i32 to index
    %c0_1462 = arith.constant 0 : index
    %c0_1463 = arith.constant 0 : index
    %1436 = vector.load %arg1[%c9_1460, %c1_1461, %1435, %c0_1462, %c0_1463] : memref<16x16x1x8x128xf32, #tpu.memory_space<vmem>>, vector<1x1x1x8x128xf32>
    %1437 = vector.shape_cast %1436 : vector<1x1x1x8x128xf32> to vector<8x128xf32>
    %c9_1464 = arith.constant 9 : index
    %c2_1465 = arith.constant 2 : index
    %1438 = arith.index_cast %c0_i32 : i32 to index
    %c0_1466 = arith.constant 0 : index
    %c0_1467 = arith.constant 0 : index
    %1439 = vector.load %arg1[%c9_1464, %c2_1465, %1438, %c0_1466, %c0_1467] : memref<16x16x1x8x128xf32, #tpu.memory_space<vmem>>, vector<1x1x1x8x128xf32>
    %1440 = vector.shape_cast %1439 : vector<1x1x1x8x128xf32> to vector<8x128xf32>
    %1441 = arith.maximumf %1437, %1440 : vector<8x128xf32>
    %c9_1468 = arith.constant 9 : index
    %c3_1469 = arith.constant 3 : index
    %1442 = arith.index_cast %c0_i32 : i32 to index
    %c0_1470 = arith.constant 0 : index
    %c0_1471 = arith.constant 0 : index
    %1443 = vector.load %arg1[%c9_1468, %c3_1469, %1442, %c0_1470, %c0_1471] : memref<16x16x1x8x128xf32, #tpu.memory_space<vmem>>, vector<1x1x1x8x128xf32>
    %1444 = vector.shape_cast %1443 : vector<1x1x1x8x128xf32> to vector<8x128xf32>
    %1445 = arith.maximumf %1441, %1444 : vector<8x128xf32>
    %c10_1472 = arith.constant 10 : index
    %c1_1473 = arith.constant 1 : index
    %1446 = arith.index_cast %c0_i32 : i32 to index
    %c0_1474 = arith.constant 0 : index
    %c0_1475 = arith.constant 0 : index
    %1447 = vector.load %arg1[%c10_1472, %c1_1473, %1446, %c0_1474, %c0_1475] : memref<16x16x1x8x128xf32, #tpu.memory_space<vmem>>, vector<1x1x1x8x128xf32>
    %1448 = vector.shape_cast %1447 : vector<1x1x1x8x128xf32> to vector<8x128xf32>
    %1449 = arith.maximumf %1445, %1448 : vector<8x128xf32>
    %c10_1476 = arith.constant 10 : index
    %c2_1477 = arith.constant 2 : index
    %1450 = arith.index_cast %c0_i32 : i32 to index
    %c0_1478 = arith.constant 0 : index
    %c0_1479 = arith.constant 0 : index
    %1451 = vector.load %arg1[%c10_1476, %c2_1477, %1450, %c0_1478, %c0_1479] : memref<16x16x1x8x128xf32, #tpu.memory_space<vmem>>, vector<1x1x1x8x128xf32>
    %1452 = vector.shape_cast %1451 : vector<1x1x1x8x128xf32> to vector<8x128xf32>
    %1453 = arith.maximumf %1449, %1452 : vector<8x128xf32>
    %c10_1480 = arith.constant 10 : index
    %c3_1481 = arith.constant 3 : index
    %1454 = arith.index_cast %c0_i32 : i32 to index
    %c0_1482 = arith.constant 0 : index
    %c0_1483 = arith.constant 0 : index
    %1455 = vector.load %arg1[%c10_1480, %c3_1481, %1454, %c0_1482, %c0_1483] : memref<16x16x1x8x128xf32, #tpu.memory_space<vmem>>, vector<1x1x1x8x128xf32>
    %1456 = vector.shape_cast %1455 : vector<1x1x1x8x128xf32> to vector<8x128xf32>
    %1457 = arith.maximumf %1453, %1456 : vector<8x128xf32>
    %c11_1484 = arith.constant 11 : index
    %c1_1485 = arith.constant 1 : index
    %1458 = arith.index_cast %c0_i32 : i32 to index
    %c0_1486 = arith.constant 0 : index
    %c0_1487 = arith.constant 0 : index
    %1459 = vector.load %arg1[%c11_1484, %c1_1485, %1458, %c0_1486, %c0_1487] : memref<16x16x1x8x128xf32, #tpu.memory_space<vmem>>, vector<1x1x1x8x128xf32>
    %1460 = vector.shape_cast %1459 : vector<1x1x1x8x128xf32> to vector<8x128xf32>
    %1461 = arith.maximumf %1457, %1460 : vector<8x128xf32>
    %c11_1488 = arith.constant 11 : index
    %c2_1489 = arith.constant 2 : index
    %1462 = arith.index_cast %c0_i32 : i32 to index
    %c0_1490 = arith.constant 0 : index
    %c0_1491 = arith.constant 0 : index
    %1463 = vector.load %arg1[%c11_1488, %c2_1489, %1462, %c0_1490, %c0_1491] : memref<16x16x1x8x128xf32, #tpu.memory_space<vmem>>, vector<1x1x1x8x128xf32>
    %1464 = vector.shape_cast %1463 : vector<1x1x1x8x128xf32> to vector<8x128xf32>
    %1465 = arith.maximumf %1461, %1464 : vector<8x128xf32>
    %c11_1492 = arith.constant 11 : index
    %c3_1493 = arith.constant 3 : index
    %1466 = arith.index_cast %c0_i32 : i32 to index
    %c0_1494 = arith.constant 0 : index
    %c0_1495 = arith.constant 0 : index
    %1467 = vector.load %arg1[%c11_1492, %c3_1493, %1466, %c0_1494, %c0_1495] : memref<16x16x1x8x128xf32, #tpu.memory_space<vmem>>, vector<1x1x1x8x128xf32>
    %1468 = vector.shape_cast %1467 : vector<1x1x1x8x128xf32> to vector<8x128xf32>
    %1469 = arith.maximumf %1465, %1468 : vector<8x128xf32>
    %c5_1496 = arith.constant 5 : index
    %c1_1497 = arith.constant 1 : index
    %1470 = arith.index_cast %c0_i32 : i32 to index
    %c0_1498 = arith.constant 0 : index
    %c0_1499 = arith.constant 0 : index
    %1471 = vector.load %arg2[%c5_1496, %c1_1497, %1470, %c0_1498, %c0_1499] : memref<8x8x1x8x128xf32, #tpu.memory_space<vmem>>, vector<1x1x1x8x128xf32>
    %1472 = vector.shape_cast %1471 : vector<1x1x1x8x128xf32> to vector<8x128xf32>
    %1473 = vector.shape_cast %1469 : vector<8x128xf32> to vector<1x1x1x8x128xf32>
    tpu.vector_store %arg2[%c5_1496, %c1_1497, %1470, %c0_1498, %c0_1499], %1473 {strides = array<i32>} : memref<8x8x1x8x128xf32, #tpu.memory_space<vmem>>, vector<1x1x1x8x128xf32>,
    %c9_1500 = arith.constant 9 : index
    %c3_1501 = arith.constant 3 : index
    %1474 = arith.index_cast %c0_i32 : i32 to index
    %c0_1502 = arith.constant 0 : index
    %c0_1503 = arith.constant 0 : index
    %1475 = vector.load %arg1[%c9_1500, %c3_1501, %1474, %c0_1502, %c0_1503] : memref<16x16x1x8x128xf32, #tpu.memory_space<vmem>>, vector<1x1x1x8x128xf32>
    %1476 = vector.shape_cast %1475 : vector<1x1x1x8x128xf32> to vector<8x128xf32>
    %c9_1504 = arith.constant 9 : index
    %c4_1505 = arith.constant 4 : index
    %1477 = arith.index_cast %c0_i32 : i32 to index
    %c0_1506 = arith.constant 0 : index
    %c0_1507 = arith.constant 0 : index
    %1478 = vector.load %arg1[%c9_1504, %c4_1505, %1477, %c0_1506, %c0_1507] : memref<16x16x1x8x128xf32, #tpu.memory_space<vmem>>, vector<1x1x1x8x128xf32>
    %1479 = vector.shape_cast %1478 : vector<1x1x1x8x128xf32> to vector<8x128xf32>
    %1480 = arith.maximumf %1476, %1479 : vector<8x128xf32>
    %c9_1508 = arith.constant 9 : index
    %c5_1509 = arith.constant 5 : index
    %1481 = arith.index_cast %c0_i32 : i32 to index
    %c0_1510 = arith.constant 0 : index
    %c0_1511 = arith.constant 0 : index
    %1482 = vector.load %arg1[%c9_1508, %c5_1509, %1481, %c0_1510, %c0_1511] : memref<16x16x1x8x128xf32, #tpu.memory_space<vmem>>, vector<1x1x1x8x128xf32>
    %1483 = vector.shape_cast %1482 : vector<1x1x1x8x128xf32> to vector<8x128xf32>
    %1484 = arith.maximumf %1480, %1483 : vector<8x128xf32>
    %c10_1512 = arith.constant 10 : index
    %c3_1513 = arith.constant 3 : index
    %1485 = arith.index_cast %c0_i32 : i32 to index
    %c0_1514 = arith.constant 0 : index
    %c0_1515 = arith.constant 0 : index
    %1486 = vector.load %arg1[%c10_1512, %c3_1513, %1485, %c0_1514, %c0_1515] : memref<16x16x1x8x128xf32, #tpu.memory_space<vmem>>, vector<1x1x1x8x128xf32>
    %1487 = vector.shape_cast %1486 : vector<1x1x1x8x128xf32> to vector<8x128xf32>
    %1488 = arith.maximumf %1484, %1487 : vector<8x128xf32>
    %c10_1516 = arith.constant 10 : index
    %c4_1517 = arith.constant 4 : index
    %1489 = arith.index_cast %c0_i32 : i32 to index
    %c0_1518 = arith.constant 0 : index
    %c0_1519 = arith.constant 0 : index
    %1490 = vector.load %arg1[%c10_1516, %c4_1517, %1489, %c0_1518, %c0_1519] : memref<16x16x1x8x128xf32, #tpu.memory_space<vmem>>, vector<1x1x1x8x128xf32>
    %1491 = vector.shape_cast %1490 : vector<1x1x1x8x128xf32> to vector<8x128xf32>
    %1492 = arith.maximumf %1488, %1491 : vector<8x128xf32>
    %c10_1520 = arith.constant 10 : index
    %c5_1521 = arith.constant 5 : index
    %1493 = arith.index_cast %c0_i32 : i32 to index
    %c0_1522 = arith.constant 0 : index
    %c0_1523 = arith.constant 0 : index
    %1494 = vector.load %arg1[%c10_1520, %c5_1521, %1493, %c0_1522, %c0_1523] : memref<16x16x1x8x128xf32, #tpu.memory_space<vmem>>, vector<1x1x1x8x128xf32>
    %1495 = vector.shape_cast %1494 : vector<1x1x1x8x128xf32> to vector<8x128xf32>
    %1496 = arith.maximumf %1492, %1495 : vector<8x128xf32>
    %c11_1524 = arith.constant 11 : index
    %c3_1525 = arith.constant 3 : index
    %1497 = arith.index_cast %c0_i32 : i32 to index
    %c0_1526 = arith.constant 0 : index
    %c0_1527 = arith.constant 0 : index
    %1498 = vector.load %arg1[%c11_1524, %c3_1525, %1497, %c0_1526, %c0_1527] : memref<16x16x1x8x128xf32, #tpu.memory_space<vmem>>, vector<1x1x1x8x128xf32>
    %1499 = vector.shape_cast %1498 : vector<1x1x1x8x128xf32> to vector<8x128xf32>
    %1500 = arith.maximumf %1496, %1499 : vector<8x128xf32>
    %c11_1528 = arith.constant 11 : index
    %c4_1529 = arith.constant 4 : index
    %1501 = arith.index_cast %c0_i32 : i32 to index
    %c0_1530 = arith.constant 0 : index
    %c0_1531 = arith.constant 0 : index
    %1502 = vector.load %arg1[%c11_1528, %c4_1529, %1501, %c0_1530, %c0_1531] : memref<16x16x1x8x128xf32, #tpu.memory_space<vmem>>, vector<1x1x1x8x128xf32>
    %1503 = vector.shape_cast %1502 : vector<1x1x1x8x128xf32> to vector<8x128xf32>
    %1504 = arith.maximumf %1500, %1503 : vector<8x128xf32>
    %c11_1532 = arith.constant 11 : index
    %c5_1533 = arith.constant 5 : index
    %1505 = arith.index_cast %c0_i32 : i32 to index
    %c0_1534 = arith.constant 0 : index
    %c0_1535 = arith.constant 0 : index
    %1506 = vector.load %arg1[%c11_1532, %c5_1533, %1505, %c0_1534, %c0_1535] : memref<16x16x1x8x128xf32, #tpu.memory_space<vmem>>, vector<1x1x1x8x128xf32>
    %1507 = vector.shape_cast %1506 : vector<1x1x1x8x128xf32> to vector<8x128xf32>
    %1508 = arith.maximumf %1504, %1507 : vector<8x128xf32>
    %c5_1536 = arith.constant 5 : index
    %c2_1537 = arith.constant 2 : index
    %1509 = arith.index_cast %c0_i32 : i32 to index
    %c0_1538 = arith.constant 0 : index
    %c0_1539 = arith.constant 0 : index
    %1510 = vector.load %arg2[%c5_1536, %c2_1537, %1509, %c0_1538, %c0_1539] : memref<8x8x1x8x128xf32, #tpu.memory_space<vmem>>, vector<1x1x1x8x128xf32>
    %1511 = vector.shape_cast %1510 : vector<1x1x1x8x128xf32> to vector<8x128xf32>
    %1512 = vector.shape_cast %1508 : vector<8x128xf32> to vector<1x1x1x8x128xf32>
    tpu.vector_store %arg2[%c5_1536, %c2_1537, %1509, %c0_1538, %c0_1539], %1512 {strides = array<i32>} : memref<8x8x1x8x128xf32, #tpu.memory_space<vmem>>, vector<1x1x1x8x128xf32>,
    %c9_1540 = arith.constant 9 : index
    %c5_1541 = arith.constant 5 : index
    %1513 = arith.index_cast %c0_i32 : i32 to index
    %c0_1542 = arith.constant 0 : index
    %c0_1543 = arith.constant 0 : index
    %1514 = vector.load %arg1[%c9_1540, %c5_1541, %1513, %c0_1542, %c0_1543] : memref<16x16x1x8x128xf32, #tpu.memory_space<vmem>>, vector<1x1x1x8x128xf32>
    %1515 = vector.shape_cast %1514 : vector<1x1x1x8x128xf32> to vector<8x128xf32>
    %c9_1544 = arith.constant 9 : index
    %c6_1545 = arith.constant 6 : index
    %1516 = arith.index_cast %c0_i32 : i32 to index
    %c0_1546 = arith.constant 0 : index
    %c0_1547 = arith.constant 0 : index
    %1517 = vector.load %arg1[%c9_1544, %c6_1545, %1516, %c0_1546, %c0_1547] : memref<16x16x1x8x128xf32, #tpu.memory_space<vmem>>, vector<1x1x1x8x128xf32>
    %1518 = vector.shape_cast %1517 : vector<1x1x1x8x128xf32> to vector<8x128xf32>
    %1519 = arith.maximumf %1515, %1518 : vector<8x128xf32>
    %c9_1548 = arith.constant 9 : index
    %c7_1549 = arith.constant 7 : index
    %1520 = arith.index_cast %c0_i32 : i32 to index
    %c0_1550 = arith.constant 0 : index
    %c0_1551 = arith.constant 0 : index
    %1521 = vector.load %arg1[%c9_1548, %c7_1549, %1520, %c0_1550, %c0_1551] : memref<16x16x1x8x128xf32, #tpu.memory_space<vmem>>, vector<1x1x1x8x128xf32>
    %1522 = vector.shape_cast %1521 : vector<1x1x1x8x128xf32> to vector<8x128xf32>
    %1523 = arith.maximumf %1519, %1522 : vector<8x128xf32>
    %c10_1552 = arith.constant 10 : index
    %c5_1553 = arith.constant 5 : index
    %1524 = arith.index_cast %c0_i32 : i32 to index
    %c0_1554 = arith.constant 0 : index
    %c0_1555 = arith.constant 0 : index
    %1525 = vector.load %arg1[%c10_1552, %c5_1553, %1524, %c0_1554, %c0_1555] : memref<16x16x1x8x128xf32, #tpu.memory_space<vmem>>, vector<1x1x1x8x128xf32>
    %1526 = vector.shape_cast %1525 : vector<1x1x1x8x128xf32> to vector<8x128xf32>
    %1527 = arith.maximumf %1523, %1526 : vector<8x128xf32>
    %c10_1556 = arith.constant 10 : index
    %c6_1557 = arith.constant 6 : index
    %1528 = arith.index_cast %c0_i32 : i32 to index
    %c0_1558 = arith.constant 0 : index
    %c0_1559 = arith.constant 0 : index
    %1529 = vector.load %arg1[%c10_1556, %c6_1557, %1528, %c0_1558, %c0_1559] : memref<16x16x1x8x128xf32, #tpu.memory_space<vmem>>, vector<1x1x1x8x128xf32>
    %1530 = vector.shape_cast %1529 : vector<1x1x1x8x128xf32> to vector<8x128xf32>
    %1531 = arith.maximumf %1527, %1530 : vector<8x128xf32>
    %c10_1560 = arith.constant 10 : index
    %c7_1561 = arith.constant 7 : index
    %1532 = arith.index_cast %c0_i32 : i32 to index
    %c0_1562 = arith.constant 0 : index
    %c0_1563 = arith.constant 0 : index
    %1533 = vector.load %arg1[%c10_1560, %c7_1561, %1532, %c0_1562, %c0_1563] : memref<16x16x1x8x128xf32, #tpu.memory_space<vmem>>, vector<1x1x1x8x128xf32>
    %1534 = vector.shape_cast %1533 : vector<1x1x1x8x128xf32> to vector<8x128xf32>
    %1535 = arith.maximumf %1531, %1534 : vector<8x128xf32>
    %c11_1564 = arith.constant 11 : index
    %c5_1565 = arith.constant 5 : index
    %1536 = arith.index_cast %c0_i32 : i32 to index
    %c0_1566 = arith.constant 0 : index
    %c0_1567 = arith.constant 0 : index
    %1537 = vector.load %arg1[%c11_1564, %c5_1565, %1536, %c0_1566, %c0_1567] : memref<16x16x1x8x128xf32, #tpu.memory_space<vmem>>, vector<1x1x1x8x128xf32>
    %1538 = vector.shape_cast %1537 : vector<1x1x1x8x128xf32> to vector<8x128xf32>
    %1539 = arith.maximumf %1535, %1538 : vector<8x128xf32>
    %c11_1568 = arith.constant 11 : index
    %c6_1569 = arith.constant 6 : index
    %1540 = arith.index_cast %c0_i32 : i32 to index
    %c0_1570 = arith.constant 0 : index
    %c0_1571 = arith.constant 0 : index
    %1541 = vector.load %arg1[%c11_1568, %c6_1569, %1540, %c0_1570, %c0_1571] : memref<16x16x1x8x128xf32, #tpu.memory_space<vmem>>, vector<1x1x1x8x128xf32>
    %1542 = vector.shape_cast %1541 : vector<1x1x1x8x128xf32> to vector<8x128xf32>
    %1543 = arith.maximumf %1539, %1542 : vector<8x128xf32>
    %c11_1572 = arith.constant 11 : index
    %c7_1573 = arith.constant 7 : index
    %1544 = arith.index_cast %c0_i32 : i32 to index
    %c0_1574 = arith.constant 0 : index
    %c0_1575 = arith.constant 0 : index
    %1545 = vector.load %arg1[%c11_1572, %c7_1573, %1544, %c0_1574, %c0_1575] : memref<16x16x1x8x128xf32, #tpu.memory_space<vmem>>, vector<1x1x1x8x128xf32>
    %1546 = vector.shape_cast %1545 : vector<1x1x1x8x128xf32> to vector<8x128xf32>
    %1547 = arith.maximumf %1543, %1546 : vector<8x128xf32>
    %c5_1576 = arith.constant 5 : index
    %c3_1577 = arith.constant 3 : index
    %1548 = arith.index_cast %c0_i32 : i32 to index
    %c0_1578 = arith.constant 0 : index
    %c0_1579 = arith.constant 0 : index
    %1549 = vector.load %arg2[%c5_1576, %c3_1577, %1548, %c0_1578, %c0_1579] : memref<8x8x1x8x128xf32, #tpu.memory_space<vmem>>, vector<1x1x1x8x128xf32>
    %1550 = vector.shape_cast %1549 : vector<1x1x1x8x128xf32> to vector<8x128xf32>
    %1551 = vector.shape_cast %1547 : vector<8x128xf32> to vector<1x1x1x8x128xf32>
    tpu.vector_store %arg2[%c5_1576, %c3_1577, %1548, %c0_1578, %c0_1579], %1551 {strides = array<i32>} : memref<8x8x1x8x128xf32, #tpu.memory_space<vmem>>, vector<1x1x1x8x128xf32>,
    %c9_1580 = arith.constant 9 : index
    %c7_1581 = arith.constant 7 : index
    %1552 = arith.index_cast %c0_i32 : i32 to index
    %c0_1582 = arith.constant 0 : index
    %c0_1583 = arith.constant 0 : index
    %1553 = vector.load %arg1[%c9_1580, %c7_1581, %1552, %c0_1582, %c0_1583] : memref<16x16x1x8x128xf32, #tpu.memory_space<vmem>>, vector<1x1x1x8x128xf32>
    %1554 = vector.shape_cast %1553 : vector<1x1x1x8x128xf32> to vector<8x128xf32>
    %c9_1584 = arith.constant 9 : index
    %c8_1585 = arith.constant 8 : index
    %1555 = arith.index_cast %c0_i32 : i32 to index
    %c0_1586 = arith.constant 0 : index
    %c0_1587 = arith.constant 0 : index
    %1556 = vector.load %arg1[%c9_1584, %c8_1585, %1555, %c0_1586, %c0_1587] : memref<16x16x1x8x128xf32, #tpu.memory_space<vmem>>, vector<1x1x1x8x128xf32>
    %1557 = vector.shape_cast %1556 : vector<1x1x1x8x128xf32> to vector<8x128xf32>
    %1558 = arith.maximumf %1554, %1557 : vector<8x128xf32>
    %c9_1588 = arith.constant 9 : index
    %c9_1589 = arith.constant 9 : index
    %1559 = arith.index_cast %c0_i32 : i32 to index
    %c0_1590 = arith.constant 0 : index
    %c0_1591 = arith.constant 0 : index
    %1560 = vector.load %arg1[%c9_1588, %c9_1589, %1559, %c0_1590, %c0_1591] : memref<16x16x1x8x128xf32, #tpu.memory_space<vmem>>, vector<1x1x1x8x128xf32>
    %1561 = vector.shape_cast %1560 : vector<1x1x1x8x128xf32> to vector<8x128xf32>
    %1562 = arith.maximumf %1558, %1561 : vector<8x128xf32>
    %c10_1592 = arith.constant 10 : index
    %c7_1593 = arith.constant 7 : index
    %1563 = arith.index_cast %c0_i32 : i32 to index
    %c0_1594 = arith.constant 0 : index
    %c0_1595 = arith.constant 0 : index
    %1564 = vector.load %arg1[%c10_1592, %c7_1593, %1563, %c0_1594, %c0_1595] : memref<16x16x1x8x128xf32, #tpu.memory_space<vmem>>, vector<1x1x1x8x128xf32>
    %1565 = vector.shape_cast %1564 : vector<1x1x1x8x128xf32> to vector<8x128xf32>
    %1566 = arith.maximumf %1562, %1565 : vector<8x128xf32>
    %c10_1596 = arith.constant 10 : index
    %c8_1597 = arith.constant 8 : index
    %1567 = arith.index_cast %c0_i32 : i32 to index
    %c0_1598 = arith.constant 0 : index
    %c0_1599 = arith.constant 0 : index
    %1568 = vector.load %arg1[%c10_1596, %c8_1597, %1567, %c0_1598, %c0_1599] : memref<16x16x1x8x128xf32, #tpu.memory_space<vmem>>, vector<1x1x1x8x128xf32>
    %1569 = vector.shape_cast %1568 : vector<1x1x1x8x128xf32> to vector<8x128xf32>
    %1570 = arith.maximumf %1566, %1569 : vector<8x128xf32>
    %c10_1600 = arith.constant 10 : index
    %c9_1601 = arith.constant 9 : index
    %1571 = arith.index_cast %c0_i32 : i32 to index
    %c0_1602 = arith.constant 0 : index
    %c0_1603 = arith.constant 0 : index
    %1572 = vector.load %arg1[%c10_1600, %c9_1601, %1571, %c0_1602, %c0_1603] : memref<16x16x1x8x128xf32, #tpu.memory_space<vmem>>, vector<1x1x1x8x128xf32>
    %1573 = vector.shape_cast %1572 : vector<1x1x1x8x128xf32> to vector<8x128xf32>
    %1574 = arith.maximumf %1570, %1573 : vector<8x128xf32>
    %c11_1604 = arith.constant 11 : index
    %c7_1605 = arith.constant 7 : index
    %1575 = arith.index_cast %c0_i32 : i32 to index
    %c0_1606 = arith.constant 0 : index
    %c0_1607 = arith.constant 0 : index
    %1576 = vector.load %arg1[%c11_1604, %c7_1605, %1575, %c0_1606, %c0_1607] : memref<16x16x1x8x128xf32, #tpu.memory_space<vmem>>, vector<1x1x1x8x128xf32>
    %1577 = vector.shape_cast %1576 : vector<1x1x1x8x128xf32> to vector<8x128xf32>
    %1578 = arith.maximumf %1574, %1577 : vector<8x128xf32>
    %c11_1608 = arith.constant 11 : index
    %c8_1609 = arith.constant 8 : index
    %1579 = arith.index_cast %c0_i32 : i32 to index
    %c0_1610 = arith.constant 0 : index
    %c0_1611 = arith.constant 0 : index
    %1580 = vector.load %arg1[%c11_1608, %c8_1609, %1579, %c0_1610, %c0_1611] : memref<16x16x1x8x128xf32, #tpu.memory_space<vmem>>, vector<1x1x1x8x128xf32>
    %1581 = vector.shape_cast %1580 : vector<1x1x1x8x128xf32> to vector<8x128xf32>
    %1582 = arith.maximumf %1578, %1581 : vector<8x128xf32>
    %c11_1612 = arith.constant 11 : index
    %c9_1613 = arith.constant 9 : index
    %1583 = arith.index_cast %c0_i32 : i32 to index
    %c0_1614 = arith.constant 0 : index
    %c0_1615 = arith.constant 0 : index
    %1584 = vector.load %arg1[%c11_1612, %c9_1613, %1583, %c0_1614, %c0_1615] : memref<16x16x1x8x128xf32, #tpu.memory_space<vmem>>, vector<1x1x1x8x128xf32>
    %1585 = vector.shape_cast %1584 : vector<1x1x1x8x128xf32> to vector<8x128xf32>
    %1586 = arith.maximumf %1582, %1585 : vector<8x128xf32>
    %c5_1616 = arith.constant 5 : index
    %c4_1617 = arith.constant 4 : index
    %1587 = arith.index_cast %c0_i32 : i32 to index
    %c0_1618 = arith.constant 0 : index
    %c0_1619 = arith.constant 0 : index
    %1588 = vector.load %arg2[%c5_1616, %c4_1617, %1587, %c0_1618, %c0_1619] : memref<8x8x1x8x128xf32, #tpu.memory_space<vmem>>, vector<1x1x1x8x128xf32>
    %1589 = vector.shape_cast %1588 : vector<1x1x1x8x128xf32> to vector<8x128xf32>
    %1590 = vector.shape_cast %1586 : vector<8x128xf32> to vector<1x1x1x8x128xf32>
    tpu.vector_store %arg2[%c5_1616, %c4_1617, %1587, %c0_1618, %c0_1619], %1590 {strides = array<i32>} : memref<8x8x1x8x128xf32, #tpu.memory_space<vmem>>, vector<1x1x1x8x128xf32>,
    %c9_1620 = arith.constant 9 : index
    %c9_1621 = arith.constant 9 : index
    %1591 = arith.index_cast %c0_i32 : i32 to index
    %c0_1622 = arith.constant 0 : index
    %c0_1623 = arith.constant 0 : index
    %1592 = vector.load %arg1[%c9_1620, %c9_1621, %1591, %c0_1622, %c0_1623] : memref<16x16x1x8x128xf32, #tpu.memory_space<vmem>>, vector<1x1x1x8x128xf32>
    %1593 = vector.shape_cast %1592 : vector<1x1x1x8x128xf32> to vector<8x128xf32>
    %c9_1624 = arith.constant 9 : index
    %c10_1625 = arith.constant 10 : index
    %1594 = arith.index_cast %c0_i32 : i32 to index
    %c0_1626 = arith.constant 0 : index
    %c0_1627 = arith.constant 0 : index
    %1595 = vector.load %arg1[%c9_1624, %c10_1625, %1594, %c0_1626, %c0_1627] : memref<16x16x1x8x128xf32, #tpu.memory_space<vmem>>, vector<1x1x1x8x128xf32>
    %1596 = vector.shape_cast %1595 : vector<1x1x1x8x128xf32> to vector<8x128xf32>
    %1597 = arith.maximumf %1593, %1596 : vector<8x128xf32>
    %c9_1628 = arith.constant 9 : index
    %c11_1629 = arith.constant 11 : index
    %1598 = arith.index_cast %c0_i32 : i32 to index
    %c0_1630 = arith.constant 0 : index
    %c0_1631 = arith.constant 0 : index
    %1599 = vector.load %arg1[%c9_1628, %c11_1629, %1598, %c0_1630, %c0_1631] : memref<16x16x1x8x128xf32, #tpu.memory_space<vmem>>, vector<1x1x1x8x128xf32>
    %1600 = vector.shape_cast %1599 : vector<1x1x1x8x128xf32> to vector<8x128xf32>
    %1601 = arith.maximumf %1597, %1600 : vector<8x128xf32>
    %c10_1632 = arith.constant 10 : index
    %c9_1633 = arith.constant 9 : index
    %1602 = arith.index_cast %c0_i32 : i32 to index
    %c0_1634 = arith.constant 0 : index
    %c0_1635 = arith.constant 0 : index
    %1603 = vector.load %arg1[%c10_1632, %c9_1633, %1602, %c0_1634, %c0_1635] : memref<16x16x1x8x128xf32, #tpu.memory_space<vmem>>, vector<1x1x1x8x128xf32>
    %1604 = vector.shape_cast %1603 : vector<1x1x1x8x128xf32> to vector<8x128xf32>
    %1605 = arith.maximumf %1601, %1604 : vector<8x128xf32>
    %c10_1636 = arith.constant 10 : index
    %c10_1637 = arith.constant 10 : index
    %1606 = arith.index_cast %c0_i32 : i32 to index
    %c0_1638 = arith.constant 0 : index
    %c0_1639 = arith.constant 0 : index
    %1607 = vector.load %arg1[%c10_1636, %c10_1637, %1606, %c0_1638, %c0_1639] : memref<16x16x1x8x128xf32, #tpu.memory_space<vmem>>, vector<1x1x1x8x128xf32>
    %1608 = vector.shape_cast %1607 : vector<1x1x1x8x128xf32> to vector<8x128xf32>
    %1609 = arith.maximumf %1605, %1608 : vector<8x128xf32>
    %c10_1640 = arith.constant 10 : index
    %c11_1641 = arith.constant 11 : index
    %1610 = arith.index_cast %c0_i32 : i32 to index
    %c0_1642 = arith.constant 0 : index
    %c0_1643 = arith.constant 0 : index
    %1611 = vector.load %arg1[%c10_1640, %c11_1641, %1610, %c0_1642, %c0_1643] : memref<16x16x1x8x128xf32, #tpu.memory_space<vmem>>, vector<1x1x1x8x128xf32>
    %1612 = vector.shape_cast %1611 : vector<1x1x1x8x128xf32> to vector<8x128xf32>
    %1613 = arith.maximumf %1609, %1612 : vector<8x128xf32>
    %c11_1644 = arith.constant 11 : index
    %c9_1645 = arith.constant 9 : index
    %1614 = arith.index_cast %c0_i32 : i32 to index
    %c0_1646 = arith.constant 0 : index
    %c0_1647 = arith.constant 0 : index
    %1615 = vector.load %arg1[%c11_1644, %c9_1645, %1614, %c0_1646, %c0_1647] : memref<16x16x1x8x128xf32, #tpu.memory_space<vmem>>, vector<1x1x1x8x128xf32>
    %1616 = vector.shape_cast %1615 : vector<1x1x1x8x128xf32> to vector<8x128xf32>
    %1617 = arith.maximumf %1613, %1616 : vector<8x128xf32>
    %c11_1648 = arith.constant 11 : index
    %c10_1649 = arith.constant 10 : index
    %1618 = arith.index_cast %c0_i32 : i32 to index
    %c0_1650 = arith.constant 0 : index
    %c0_1651 = arith.constant 0 : index
    %1619 = vector.load %arg1[%c11_1648, %c10_1649, %1618, %c0_1650, %c0_1651] : memref<16x16x1x8x128xf32, #tpu.memory_space<vmem>>, vector<1x1x1x8x128xf32>
    %1620 = vector.shape_cast %1619 : vector<1x1x1x8x128xf32> to vector<8x128xf32>
    %1621 = arith.maximumf %1617, %1620 : vector<8x128xf32>
    %c11_1652 = arith.constant 11 : index
    %c11_1653 = arith.constant 11 : index
    %1622 = arith.index_cast %c0_i32 : i32 to index
    %c0_1654 = arith.constant 0 : index
    %c0_1655 = arith.constant 0 : index
    %1623 = vector.load %arg1[%c11_1652, %c11_1653, %1622, %c0_1654, %c0_1655] : memref<16x16x1x8x128xf32, #tpu.memory_space<vmem>>, vector<1x1x1x8x128xf32>
    %1624 = vector.shape_cast %1623 : vector<1x1x1x8x128xf32> to vector<8x128xf32>
    %1625 = arith.maximumf %1621, %1624 : vector<8x128xf32>
    %c5_1656 = arith.constant 5 : index
    %c5_1657 = arith.constant 5 : index
    %1626 = arith.index_cast %c0_i32 : i32 to index
    %c0_1658 = arith.constant 0 : index
    %c0_1659 = arith.constant 0 : index
    %1627 = vector.load %arg2[%c5_1656, %c5_1657, %1626, %c0_1658, %c0_1659] : memref<8x8x1x8x128xf32, #tpu.memory_space<vmem>>, vector<1x1x1x8x128xf32>
    %1628 = vector.shape_cast %1627 : vector<1x1x1x8x128xf32> to vector<8x128xf32>
    %1629 = vector.shape_cast %1625 : vector<8x128xf32> to vector<1x1x1x8x128xf32>
    tpu.vector_store %arg2[%c5_1656, %c5_1657, %1626, %c0_1658, %c0_1659], %1629 {strides = array<i32>} : memref<8x8x1x8x128xf32, #tpu.memory_space<vmem>>, vector<1x1x1x8x128xf32>,
    %c9_1660 = arith.constant 9 : index
    %c11_1661 = arith.constant 11 : index
    %1630 = arith.index_cast %c0_i32 : i32 to index
    %c0_1662 = arith.constant 0 : index
    %c0_1663 = arith.constant 0 : index
    %1631 = vector.load %arg1[%c9_1660, %c11_1661, %1630, %c0_1662, %c0_1663] : memref<16x16x1x8x128xf32, #tpu.memory_space<vmem>>, vector<1x1x1x8x128xf32>
    %1632 = vector.shape_cast %1631 : vector<1x1x1x8x128xf32> to vector<8x128xf32>
    %c9_1664 = arith.constant 9 : index
    %c12_1665 = arith.constant 12 : index
    %1633 = arith.index_cast %c0_i32 : i32 to index
    %c0_1666 = arith.constant 0 : index
    %c0_1667 = arith.constant 0 : index
    %1634 = vector.load %arg1[%c9_1664, %c12_1665, %1633, %c0_1666, %c0_1667] : memref<16x16x1x8x128xf32, #tpu.memory_space<vmem>>, vector<1x1x1x8x128xf32>
    %1635 = vector.shape_cast %1634 : vector<1x1x1x8x128xf32> to vector<8x128xf32>
    %1636 = arith.maximumf %1632, %1635 : vector<8x128xf32>
    %c9_1668 = arith.constant 9 : index
    %c13_1669 = arith.constant 13 : index
    %1637 = arith.index_cast %c0_i32 : i32 to index
    %c0_1670 = arith.constant 0 : index
    %c0_1671 = arith.constant 0 : index
    %1638 = vector.load %arg1[%c9_1668, %c13_1669, %1637, %c0_1670, %c0_1671] : memref<16x16x1x8x128xf32, #tpu.memory_space<vmem>>, vector<1x1x1x8x128xf32>
    %1639 = vector.shape_cast %1638 : vector<1x1x1x8x128xf32> to vector<8x128xf32>
    %1640 = arith.maximumf %1636, %1639 : vector<8x128xf32>
    %c10_1672 = arith.constant 10 : index
    %c11_1673 = arith.constant 11 : index
    %1641 = arith.index_cast %c0_i32 : i32 to index
    %c0_1674 = arith.constant 0 : index
    %c0_1675 = arith.constant 0 : index
    %1642 = vector.load %arg1[%c10_1672, %c11_1673, %1641, %c0_1674, %c0_1675] : memref<16x16x1x8x128xf32, #tpu.memory_space<vmem>>, vector<1x1x1x8x128xf32>
    %1643 = vector.shape_cast %1642 : vector<1x1x1x8x128xf32> to vector<8x128xf32>
    %1644 = arith.maximumf %1640, %1643 : vector<8x128xf32>
    %c10_1676 = arith.constant 10 : index
    %c12_1677 = arith.constant 12 : index
    %1645 = arith.index_cast %c0_i32 : i32 to index
    %c0_1678 = arith.constant 0 : index
    %c0_1679 = arith.constant 0 : index
    %1646 = vector.load %arg1[%c10_1676, %c12_1677, %1645, %c0_1678, %c0_1679] : memref<16x16x1x8x128xf32, #tpu.memory_space<vmem>>, vector<1x1x1x8x128xf32>
    %1647 = vector.shape_cast %1646 : vector<1x1x1x8x128xf32> to vector<8x128xf32>
    %1648 = arith.maximumf %1644, %1647 : vector<8x128xf32>
    %c10_1680 = arith.constant 10 : index
    %c13_1681 = arith.constant 13 : index
    %1649 = arith.index_cast %c0_i32 : i32 to index
    %c0_1682 = arith.constant 0 : index
    %c0_1683 = arith.constant 0 : index
    %1650 = vector.load %arg1[%c10_1680, %c13_1681, %1649, %c0_1682, %c0_1683] : memref<16x16x1x8x128xf32, #tpu.memory_space<vmem>>, vector<1x1x1x8x128xf32>
    %1651 = vector.shape_cast %1650 : vector<1x1x1x8x128xf32> to vector<8x128xf32>
    %1652 = arith.maximumf %1648, %1651 : vector<8x128xf32>
    %c11_1684 = arith.constant 11 : index
    %c11_1685 = arith.constant 11 : index
    %1653 = arith.index_cast %c0_i32 : i32 to index
    %c0_1686 = arith.constant 0 : index
    %c0_1687 = arith.constant 0 : index
    %1654 = vector.load %arg1[%c11_1684, %c11_1685, %1653, %c0_1686, %c0_1687] : memref<16x16x1x8x128xf32, #tpu.memory_space<vmem>>, vector<1x1x1x8x128xf32>
    %1655 = vector.shape_cast %1654 : vector<1x1x1x8x128xf32> to vector<8x128xf32>
    %1656 = arith.maximumf %1652, %1655 : vector<8x128xf32>
    %c11_1688 = arith.constant 11 : index
    %c12_1689 = arith.constant 12 : index
    %1657 = arith.index_cast %c0_i32 : i32 to index
    %c0_1690 = arith.constant 0 : index
    %c0_1691 = arith.constant 0 : index
    %1658 = vector.load %arg1[%c11_1688, %c12_1689, %1657, %c0_1690, %c0_1691] : memref<16x16x1x8x128xf32, #tpu.memory_space<vmem>>, vector<1x1x1x8x128xf32>
    %1659 = vector.shape_cast %1658 : vector<1x1x1x8x128xf32> to vector<8x128xf32>
    %1660 = arith.maximumf %1656, %1659 : vector<8x128xf32>
    %c11_1692 = arith.constant 11 : index
    %c13_1693 = arith.constant 13 : index
    %1661 = arith.index_cast %c0_i32 : i32 to index
    %c0_1694 = arith.constant 0 : index
    %c0_1695 = arith.constant 0 : index
    %1662 = vector.load %arg1[%c11_1692, %c13_1693, %1661, %c0_1694, %c0_1695] : memref<16x16x1x8x128xf32, #tpu.memory_space<vmem>>, vector<1x1x1x8x128xf32>
    %1663 = vector.shape_cast %1662 : vector<1x1x1x8x128xf32> to vector<8x128xf32>
    %1664 = arith.maximumf %1660, %1663 : vector<8x128xf32>
    %c5_1696 = arith.constant 5 : index
    %c6_1697 = arith.constant 6 : index
    %1665 = arith.index_cast %c0_i32 : i32 to index
    %c0_1698 = arith.constant 0 : index
    %c0_1699 = arith.constant 0 : index
    %1666 = vector.load %arg2[%c5_1696, %c6_1697, %1665, %c0_1698, %c0_1699] : memref<8x8x1x8x128xf32, #tpu.memory_space<vmem>>, vector<1x1x1x8x128xf32>
    %1667 = vector.shape_cast %1666 : vector<1x1x1x8x128xf32> to vector<8x128xf32>
    %1668 = vector.shape_cast %1664 : vector<8x128xf32> to vector<1x1x1x8x128xf32>
    tpu.vector_store %arg2[%c5_1696, %c6_1697, %1665, %c0_1698, %c0_1699], %1668 {strides = array<i32>} : memref<8x8x1x8x128xf32, #tpu.memory_space<vmem>>, vector<1x1x1x8x128xf32>,
    %c9_1700 = arith.constant 9 : index
    %c13_1701 = arith.constant 13 : index
    %1669 = arith.index_cast %c0_i32 : i32 to index
    %c0_1702 = arith.constant 0 : index
    %c0_1703 = arith.constant 0 : index
    %1670 = vector.load %arg1[%c9_1700, %c13_1701, %1669, %c0_1702, %c0_1703] : memref<16x16x1x8x128xf32, #tpu.memory_space<vmem>>, vector<1x1x1x8x128xf32>
    %1671 = vector.shape_cast %1670 : vector<1x1x1x8x128xf32> to vector<8x128xf32>
    %c9_1704 = arith.constant 9 : index
    %c14_1705 = arith.constant 14 : index
    %1672 = arith.index_cast %c0_i32 : i32 to index
    %c0_1706 = arith.constant 0 : index
    %c0_1707 = arith.constant 0 : index
    %1673 = vector.load %arg1[%c9_1704, %c14_1705, %1672, %c0_1706, %c0_1707] : memref<16x16x1x8x128xf32, #tpu.memory_space<vmem>>, vector<1x1x1x8x128xf32>
    %1674 = vector.shape_cast %1673 : vector<1x1x1x8x128xf32> to vector<8x128xf32>
    %1675 = arith.maximumf %1671, %1674 : vector<8x128xf32>
    %c9_1708 = arith.constant 9 : index
    %c15_1709 = arith.constant 15 : index
    %1676 = arith.index_cast %c0_i32 : i32 to index
    %c0_1710 = arith.constant 0 : index
    %c0_1711 = arith.constant 0 : index
    %1677 = vector.load %arg1[%c9_1708, %c15_1709, %1676, %c0_1710, %c0_1711] : memref<16x16x1x8x128xf32, #tpu.memory_space<vmem>>, vector<1x1x1x8x128xf32>
    %1678 = vector.shape_cast %1677 : vector<1x1x1x8x128xf32> to vector<8x128xf32>
    %1679 = arith.maximumf %1675, %1678 : vector<8x128xf32>
    %c10_1712 = arith.constant 10 : index
    %c13_1713 = arith.constant 13 : index
    %1680 = arith.index_cast %c0_i32 : i32 to index
    %c0_1714 = arith.constant 0 : index
    %c0_1715 = arith.constant 0 : index
    %1681 = vector.load %arg1[%c10_1712, %c13_1713, %1680, %c0_1714, %c0_1715] : memref<16x16x1x8x128xf32, #tpu.memory_space<vmem>>, vector<1x1x1x8x128xf32>
    %1682 = vector.shape_cast %1681 : vector<1x1x1x8x128xf32> to vector<8x128xf32>
    %1683 = arith.maximumf %1679, %1682 : vector<8x128xf32>
    %c10_1716 = arith.constant 10 : index
    %c14_1717 = arith.constant 14 : index
    %1684 = arith.index_cast %c0_i32 : i32 to index
    %c0_1718 = arith.constant 0 : index
    %c0_1719 = arith.constant 0 : index
    %1685 = vector.load %arg1[%c10_1716, %c14_1717, %1684, %c0_1718, %c0_1719] : memref<16x16x1x8x128xf32, #tpu.memory_space<vmem>>, vector<1x1x1x8x128xf32>
    %1686 = vector.shape_cast %1685 : vector<1x1x1x8x128xf32> to vector<8x128xf32>
    %1687 = arith.maximumf %1683, %1686 : vector<8x128xf32>
    %c10_1720 = arith.constant 10 : index
    %c15_1721 = arith.constant 15 : index
    %1688 = arith.index_cast %c0_i32 : i32 to index
    %c0_1722 = arith.constant 0 : index
    %c0_1723 = arith.constant 0 : index
    %1689 = vector.load %arg1[%c10_1720, %c15_1721, %1688, %c0_1722, %c0_1723] : memref<16x16x1x8x128xf32, #tpu.memory_space<vmem>>, vector<1x1x1x8x128xf32>
    %1690 = vector.shape_cast %1689 : vector<1x1x1x8x128xf32> to vector<8x128xf32>
    %1691 = arith.maximumf %1687, %1690 : vector<8x128xf32>
    %c11_1724 = arith.constant 11 : index
    %c13_1725 = arith.constant 13 : index
    %1692 = arith.index_cast %c0_i32 : i32 to index
    %c0_1726 = arith.constant 0 : index
    %c0_1727 = arith.constant 0 : index
    %1693 = vector.load %arg1[%c11_1724, %c13_1725, %1692, %c0_1726, %c0_1727] : memref<16x16x1x8x128xf32, #tpu.memory_space<vmem>>, vector<1x1x1x8x128xf32>
    %1694 = vector.shape_cast %1693 : vector<1x1x1x8x128xf32> to vector<8x128xf32>
    %1695 = arith.maximumf %1691, %1694 : vector<8x128xf32>
    %c11_1728 = arith.constant 11 : index
    %c14_1729 = arith.constant 14 : index
    %1696 = arith.index_cast %c0_i32 : i32 to index
    %c0_1730 = arith.constant 0 : index
    %c0_1731 = arith.constant 0 : index
    %1697 = vector.load %arg1[%c11_1728, %c14_1729, %1696, %c0_1730, %c0_1731] : memref<16x16x1x8x128xf32, #tpu.memory_space<vmem>>, vector<1x1x1x8x128xf32>
    %1698 = vector.shape_cast %1697 : vector<1x1x1x8x128xf32> to vector<8x128xf32>
    %1699 = arith.maximumf %1695, %1698 : vector<8x128xf32>
    %c11_1732 = arith.constant 11 : index
    %c15_1733 = arith.constant 15 : index
    %1700 = arith.index_cast %c0_i32 : i32 to index
    %c0_1734 = arith.constant 0 : index
    %c0_1735 = arith.constant 0 : index
    %1701 = vector.load %arg1[%c11_1732, %c15_1733, %1700, %c0_1734, %c0_1735] : memref<16x16x1x8x128xf32, #tpu.memory_space<vmem>>, vector<1x1x1x8x128xf32>
    %1702 = vector.shape_cast %1701 : vector<1x1x1x8x128xf32> to vector<8x128xf32>
    %1703 = arith.maximumf %1699, %1702 : vector<8x128xf32>
    %c5_1736 = arith.constant 5 : index
    %c7_1737 = arith.constant 7 : index
    %1704 = arith.index_cast %c0_i32 : i32 to index
    %c0_1738 = arith.constant 0 : index
    %c0_1739 = arith.constant 0 : index
    %1705 = vector.load %arg2[%c5_1736, %c7_1737, %1704, %c0_1738, %c0_1739] : memref<8x8x1x8x128xf32, #tpu.memory_space<vmem>>, vector<1x1x1x8x128xf32>
    %1706 = vector.shape_cast %1705 : vector<1x1x1x8x128xf32> to vector<8x128xf32>
    %1707 = vector.shape_cast %1703 : vector<8x128xf32> to vector<1x1x1x8x128xf32>
    tpu.vector_store %arg2[%c5_1736, %c7_1737, %1704, %c0_1738, %c0_1739], %1707 {strides = array<i32>} : memref<8x8x1x8x128xf32, #tpu.memory_space<vmem>>, vector<1x1x1x8x128xf32>,
    %c11_1740 = arith.constant 11 : index
    %c0_1741 = arith.constant 0 : index
    %1708 = arith.index_cast %c0_i32 : i32 to index
    %c0_1742 = arith.constant 0 : index
    %c0_1743 = arith.constant 0 : index
    %1709 = vector.load %arg1[%c11_1740, %c0_1741, %1708, %c0_1742, %c0_1743] : memref<16x16x1x8x128xf32, #tpu.memory_space<vmem>>, vector<1x1x1x8x128xf32>
    %1710 = vector.shape_cast %1709 : vector<1x1x1x8x128xf32> to vector<8x128xf32>
    %c11_1744 = arith.constant 11 : index
    %c1_1745 = arith.constant 1 : index
    %1711 = arith.index_cast %c0_i32 : i32 to index
    %c0_1746 = arith.constant 0 : index
    %c0_1747 = arith.constant 0 : index
    %1712 = vector.load %arg1[%c11_1744, %c1_1745, %1711, %c0_1746, %c0_1747] : memref<16x16x1x8x128xf32, #tpu.memory_space<vmem>>, vector<1x1x1x8x128xf32>
    %1713 = vector.shape_cast %1712 : vector<1x1x1x8x128xf32> to vector<8x128xf32>
    %1714 = arith.maximumf %1710, %1713 : vector<8x128xf32>
    %c12_1748 = arith.constant 12 : index
    %c0_1749 = arith.constant 0 : index
    %1715 = arith.index_cast %c0_i32 : i32 to index
    %c0_1750 = arith.constant 0 : index
    %c0_1751 = arith.constant 0 : index
    %1716 = vector.load %arg1[%c12_1748, %c0_1749, %1715, %c0_1750, %c0_1751] : memref<16x16x1x8x128xf32, #tpu.memory_space<vmem>>, vector<1x1x1x8x128xf32>
    %1717 = vector.shape_cast %1716 : vector<1x1x1x8x128xf32> to vector<8x128xf32>
    %1718 = arith.maximumf %1714, %1717 : vector<8x128xf32>
    %c12_1752 = arith.constant 12 : index
    %c1_1753 = arith.constant 1 : index
    %1719 = arith.index_cast %c0_i32 : i32 to index
    %c0_1754 = arith.constant 0 : index
    %c0_1755 = arith.constant 0 : index
    %1720 = vector.load %arg1[%c12_1752, %c1_1753, %1719, %c0_1754, %c0_1755] : memref<16x16x1x8x128xf32, #tpu.memory_space<vmem>>, vector<1x1x1x8x128xf32>
    %1721 = vector.shape_cast %1720 : vector<1x1x1x8x128xf32> to vector<8x128xf32>
    %1722 = arith.maximumf %1718, %1721 : vector<8x128xf32>
    %c13_1756 = arith.constant 13 : index
    %c0_1757 = arith.constant 0 : index
    %1723 = arith.index_cast %c0_i32 : i32 to index
    %c0_1758 = arith.constant 0 : index
    %c0_1759 = arith.constant 0 : index
    %1724 = vector.load %arg1[%c13_1756, %c0_1757, %1723, %c0_1758, %c0_1759] : memref<16x16x1x8x128xf32, #tpu.memory_space<vmem>>, vector<1x1x1x8x128xf32>
    %1725 = vector.shape_cast %1724 : vector<1x1x1x8x128xf32> to vector<8x128xf32>
    %1726 = arith.maximumf %1722, %1725 : vector<8x128xf32>
    %c13_1760 = arith.constant 13 : index
    %c1_1761 = arith.constant 1 : index
    %1727 = arith.index_cast %c0_i32 : i32 to index
    %c0_1762 = arith.constant 0 : index
    %c0_1763 = arith.constant 0 : index
    %1728 = vector.load %arg1[%c13_1760, %c1_1761, %1727, %c0_1762, %c0_1763] : memref<16x16x1x8x128xf32, #tpu.memory_space<vmem>>, vector<1x1x1x8x128xf32>
    %1729 = vector.shape_cast %1728 : vector<1x1x1x8x128xf32> to vector<8x128xf32>
    %1730 = arith.maximumf %1726, %1729 : vector<8x128xf32>
    %c6_1764 = arith.constant 6 : index
    %c0_1765 = arith.constant 0 : index
    %1731 = arith.index_cast %c0_i32 : i32 to index
    %c0_1766 = arith.constant 0 : index
    %c0_1767 = arith.constant 0 : index
    %1732 = vector.load %arg2[%c6_1764, %c0_1765, %1731, %c0_1766, %c0_1767] : memref<8x8x1x8x128xf32, #tpu.memory_space<vmem>>, vector<1x1x1x8x128xf32>
    %1733 = vector.shape_cast %1732 : vector<1x1x1x8x128xf32> to vector<8x128xf32>
    %1734 = vector.shape_cast %1730 : vector<8x128xf32> to vector<1x1x1x8x128xf32>
    tpu.vector_store %arg2[%c6_1764, %c0_1765, %1731, %c0_1766, %c0_1767], %1734 {strides = array<i32>} : memref<8x8x1x8x128xf32, #tpu.memory_space<vmem>>, vector<1x1x1x8x128xf32>,
    %c11_1768 = arith.constant 11 : index
    %c1_1769 = arith.constant 1 : index
    %1735 = arith.index_cast %c0_i32 : i32 to index
    %c0_1770 = arith.constant 0 : index
    %c0_1771 = arith.constant 0 : index
    %1736 = vector.load %arg1[%c11_1768, %c1_1769, %1735, %c0_1770, %c0_1771] : memref<16x16x1x8x128xf32, #tpu.memory_space<vmem>>, vector<1x1x1x8x128xf32>
    %1737 = vector.shape_cast %1736 : vector<1x1x1x8x128xf32> to vector<8x128xf32>
    %c11_1772 = arith.constant 11 : index
    %c2_1773 = arith.constant 2 : index
    %1738 = arith.index_cast %c0_i32 : i32 to index
    %c0_1774 = arith.constant 0 : index
    %c0_1775 = arith.constant 0 : index
    %1739 = vector.load %arg1[%c11_1772, %c2_1773, %1738, %c0_1774, %c0_1775] : memref<16x16x1x8x128xf32, #tpu.memory_space<vmem>>, vector<1x1x1x8x128xf32>
    %1740 = vector.shape_cast %1739 : vector<1x1x1x8x128xf32> to vector<8x128xf32>
    %1741 = arith.maximumf %1737, %1740 : vector<8x128xf32>
    %c11_1776 = arith.constant 11 : index
    %c3_1777 = arith.constant 3 : index
    %1742 = arith.index_cast %c0_i32 : i32 to index
    %c0_1778 = arith.constant 0 : index
    %c0_1779 = arith.constant 0 : index
    %1743 = vector.load %arg1[%c11_1776, %c3_1777, %1742, %c0_1778, %c0_1779] : memref<16x16x1x8x128xf32, #tpu.memory_space<vmem>>, vector<1x1x1x8x128xf32>
    %1744 = vector.shape_cast %1743 : vector<1x1x1x8x128xf32> to vector<8x128xf32>
    %1745 = arith.maximumf %1741, %1744 : vector<8x128xf32>
    %c12_1780 = arith.constant 12 : index
    %c1_1781 = arith.constant 1 : index
    %1746 = arith.index_cast %c0_i32 : i32 to index
    %c0_1782 = arith.constant 0 : index
    %c0_1783 = arith.constant 0 : index
    %1747 = vector.load %arg1[%c12_1780, %c1_1781, %1746, %c0_1782, %c0_1783] : memref<16x16x1x8x128xf32, #tpu.memory_space<vmem>>, vector<1x1x1x8x128xf32>
    %1748 = vector.shape_cast %1747 : vector<1x1x1x8x128xf32> to vector<8x128xf32>
    %1749 = arith.maximumf %1745, %1748 : vector<8x128xf32>
    %c12_1784 = arith.constant 12 : index
    %c2_1785 = arith.constant 2 : index
    %1750 = arith.index_cast %c0_i32 : i32 to index
    %c0_1786 = arith.constant 0 : index
    %c0_1787 = arith.constant 0 : index
    %1751 = vector.load %arg1[%c12_1784, %c2_1785, %1750, %c0_1786, %c0_1787] : memref<16x16x1x8x128xf32, #tpu.memory_space<vmem>>, vector<1x1x1x8x128xf32>
    %1752 = vector.shape_cast %1751 : vector<1x1x1x8x128xf32> to vector<8x128xf32>
    %1753 = arith.maximumf %1749, %1752 : vector<8x128xf32>
    %c12_1788 = arith.constant 12 : index
    %c3_1789 = arith.constant 3 : index
    %1754 = arith.index_cast %c0_i32 : i32 to index
    %c0_1790 = arith.constant 0 : index
    %c0_1791 = arith.constant 0 : index
    %1755 = vector.load %arg1[%c12_1788, %c3_1789, %1754, %c0_1790, %c0_1791] : memref<16x16x1x8x128xf32, #tpu.memory_space<vmem>>, vector<1x1x1x8x128xf32>
    %1756 = vector.shape_cast %1755 : vector<1x1x1x8x128xf32> to vector<8x128xf32>
    %1757 = arith.maximumf %1753, %1756 : vector<8x128xf32>
    %c13_1792 = arith.constant 13 : index
    %c1_1793 = arith.constant 1 : index
    %1758 = arith.index_cast %c0_i32 : i32 to index
    %c0_1794 = arith.constant 0 : index
    %c0_1795 = arith.constant 0 : index
    %1759 = vector.load %arg1[%c13_1792, %c1_1793, %1758, %c0_1794, %c0_1795] : memref<16x16x1x8x128xf32, #tpu.memory_space<vmem>>, vector<1x1x1x8x128xf32>
    %1760 = vector.shape_cast %1759 : vector<1x1x1x8x128xf32> to vector<8x128xf32>
    %1761 = arith.maximumf %1757, %1760 : vector<8x128xf32>
    %c13_1796 = arith.constant 13 : index
    %c2_1797 = arith.constant 2 : index
    %1762 = arith.index_cast %c0_i32 : i32 to index
    %c0_1798 = arith.constant 0 : index
    %c0_1799 = arith.constant 0 : index
    %1763 = vector.load %arg1[%c13_1796, %c2_1797, %1762, %c0_1798, %c0_1799] : memref<16x16x1x8x128xf32, #tpu.memory_space<vmem>>, vector<1x1x1x8x128xf32>
    %1764 = vector.shape_cast %1763 : vector<1x1x1x8x128xf32> to vector<8x128xf32>
    %1765 = arith.maximumf %1761, %1764 : vector<8x128xf32>
    %c13_1800 = arith.constant 13 : index
    %c3_1801 = arith.constant 3 : index
    %1766 = arith.index_cast %c0_i32 : i32 to index
    %c0_1802 = arith.constant 0 : index
    %c0_1803 = arith.constant 0 : index
    %1767 = vector.load %arg1[%c13_1800, %c3_1801, %1766, %c0_1802, %c0_1803] : memref<16x16x1x8x128xf32, #tpu.memory_space<vmem>>, vector<1x1x1x8x128xf32>
    %1768 = vector.shape_cast %1767 : vector<1x1x1x8x128xf32> to vector<8x128xf32>
    %1769 = arith.maximumf %1765, %1768 : vector<8x128xf32>
    %c6_1804 = arith.constant 6 : index
    %c1_1805 = arith.constant 1 : index
    %1770 = arith.index_cast %c0_i32 : i32 to index
    %c0_1806 = arith.constant 0 : index
    %c0_1807 = arith.constant 0 : index
    %1771 = vector.load %arg2[%c6_1804, %c1_1805, %1770, %c0_1806, %c0_1807] : memref<8x8x1x8x128xf32, #tpu.memory_space<vmem>>, vector<1x1x1x8x128xf32>
    %1772 = vector.shape_cast %1771 : vector<1x1x1x8x128xf32> to vector<8x128xf32>
    %1773 = vector.shape_cast %1769 : vector<8x128xf32> to vector<1x1x1x8x128xf32>
    tpu.vector_store %arg2[%c6_1804, %c1_1805, %1770, %c0_1806, %c0_1807], %1773 {strides = array<i32>} : memref<8x8x1x8x128xf32, #tpu.memory_space<vmem>>, vector<1x1x1x8x128xf32>,
    %c11_1808 = arith.constant 11 : index
    %c3_1809 = arith.constant 3 : index
    %1774 = arith.index_cast %c0_i32 : i32 to index
    %c0_1810 = arith.constant 0 : index
    %c0_1811 = arith.constant 0 : index
    %1775 = vector.load %arg1[%c11_1808, %c3_1809, %1774, %c0_1810, %c0_1811] : memref<16x16x1x8x128xf32, #tpu.memory_space<vmem>>, vector<1x1x1x8x128xf32>
    %1776 = vector.shape_cast %1775 : vector<1x1x1x8x128xf32> to vector<8x128xf32>
    %c11_1812 = arith.constant 11 : index
    %c4_1813 = arith.constant 4 : index
    %1777 = arith.index_cast %c0_i32 : i32 to index
    %c0_1814 = arith.constant 0 : index
    %c0_1815 = arith.constant 0 : index
    %1778 = vector.load %arg1[%c11_1812, %c4_1813, %1777, %c0_1814, %c0_1815] : memref<16x16x1x8x128xf32, #tpu.memory_space<vmem>>, vector<1x1x1x8x128xf32>
    %1779 = vector.shape_cast %1778 : vector<1x1x1x8x128xf32> to vector<8x128xf32>
    %1780 = arith.maximumf %1776, %1779 : vector<8x128xf32>
    %c11_1816 = arith.constant 11 : index
    %c5_1817 = arith.constant 5 : index
    %1781 = arith.index_cast %c0_i32 : i32 to index
    %c0_1818 = arith.constant 0 : index
    %c0_1819 = arith.constant 0 : index
    %1782 = vector.load %arg1[%c11_1816, %c5_1817, %1781, %c0_1818, %c0_1819] : memref<16x16x1x8x128xf32, #tpu.memory_space<vmem>>, vector<1x1x1x8x128xf32>
    %1783 = vector.shape_cast %1782 : vector<1x1x1x8x128xf32> to vector<8x128xf32>
    %1784 = arith.maximumf %1780, %1783 : vector<8x128xf32>
    %c12_1820 = arith.constant 12 : index
    %c3_1821 = arith.constant 3 : index
    %1785 = arith.index_cast %c0_i32 : i32 to index
    %c0_1822 = arith.constant 0 : index
    %c0_1823 = arith.constant 0 : index
    %1786 = vector.load %arg1[%c12_1820, %c3_1821, %1785, %c0_1822, %c0_1823] : memref<16x16x1x8x128xf32, #tpu.memory_space<vmem>>, vector<1x1x1x8x128xf32>
    %1787 = vector.shape_cast %1786 : vector<1x1x1x8x128xf32> to vector<8x128xf32>
    %1788 = arith.maximumf %1784, %1787 : vector<8x128xf32>
    %c12_1824 = arith.constant 12 : index
    %c4_1825 = arith.constant 4 : index
    %1789 = arith.index_cast %c0_i32 : i32 to index
    %c0_1826 = arith.constant 0 : index
    %c0_1827 = arith.constant 0 : index
    %1790 = vector.load %arg1[%c12_1824, %c4_1825, %1789, %c0_1826, %c0_1827] : memref<16x16x1x8x128xf32, #tpu.memory_space<vmem>>, vector<1x1x1x8x128xf32>
    %1791 = vector.shape_cast %1790 : vector<1x1x1x8x128xf32> to vector<8x128xf32>
    %1792 = arith.maximumf %1788, %1791 : vector<8x128xf32>
    %c12_1828 = arith.constant 12 : index
    %c5_1829 = arith.constant 5 : index
    %1793 = arith.index_cast %c0_i32 : i32 to index
    %c0_1830 = arith.constant 0 : index
    %c0_1831 = arith.constant 0 : index
    %1794 = vector.load %arg1[%c12_1828, %c5_1829, %1793, %c0_1830, %c0_1831] : memref<16x16x1x8x128xf32, #tpu.memory_space<vmem>>, vector<1x1x1x8x128xf32>
    %1795 = vector.shape_cast %1794 : vector<1x1x1x8x128xf32> to vector<8x128xf32>
    %1796 = arith.maximumf %1792, %1795 : vector<8x128xf32>
    %c13_1832 = arith.constant 13 : index
    %c3_1833 = arith.constant 3 : index
    %1797 = arith.index_cast %c0_i32 : i32 to index
    %c0_1834 = arith.constant 0 : index
    %c0_1835 = arith.constant 0 : index
    %1798 = vector.load %arg1[%c13_1832, %c3_1833, %1797, %c0_1834, %c0_1835] : memref<16x16x1x8x128xf32, #tpu.memory_space<vmem>>, vector<1x1x1x8x128xf32>
    %1799 = vector.shape_cast %1798 : vector<1x1x1x8x128xf32> to vector<8x128xf32>
    %1800 = arith.maximumf %1796, %1799 : vector<8x128xf32>
    %c13_1836 = arith.constant 13 : index
    %c4_1837 = arith.constant 4 : index
    %1801 = arith.index_cast %c0_i32 : i32 to index
    %c0_1838 = arith.constant 0 : index
    %c0_1839 = arith.constant 0 : index
    %1802 = vector.load %arg1[%c13_1836, %c4_1837, %1801, %c0_1838, %c0_1839] : memref<16x16x1x8x128xf32, #tpu.memory_space<vmem>>, vector<1x1x1x8x128xf32>
    %1803 = vector.shape_cast %1802 : vector<1x1x1x8x128xf32> to vector<8x128xf32>
    %1804 = arith.maximumf %1800, %1803 : vector<8x128xf32>
    %c13_1840 = arith.constant 13 : index
    %c5_1841 = arith.constant 5 : index
    %1805 = arith.index_cast %c0_i32 : i32 to index
    %c0_1842 = arith.constant 0 : index
    %c0_1843 = arith.constant 0 : index
    %1806 = vector.load %arg1[%c13_1840, %c5_1841, %1805, %c0_1842, %c0_1843] : memref<16x16x1x8x128xf32, #tpu.memory_space<vmem>>, vector<1x1x1x8x128xf32>
    %1807 = vector.shape_cast %1806 : vector<1x1x1x8x128xf32> to vector<8x128xf32>
    %1808 = arith.maximumf %1804, %1807 : vector<8x128xf32>
    %c6_1844 = arith.constant 6 : index
    %c2_1845 = arith.constant 2 : index
    %1809 = arith.index_cast %c0_i32 : i32 to index
    %c0_1846 = arith.constant 0 : index
    %c0_1847 = arith.constant 0 : index
    %1810 = vector.load %arg2[%c6_1844, %c2_1845, %1809, %c0_1846, %c0_1847] : memref<8x8x1x8x128xf32, #tpu.memory_space<vmem>>, vector<1x1x1x8x128xf32>
    %1811 = vector.shape_cast %1810 : vector<1x1x1x8x128xf32> to vector<8x128xf32>
    %1812 = vector.shape_cast %1808 : vector<8x128xf32> to vector<1x1x1x8x128xf32>
    tpu.vector_store %arg2[%c6_1844, %c2_1845, %1809, %c0_1846, %c0_1847], %1812 {strides = array<i32>} : memref<8x8x1x8x128xf32, #tpu.memory_space<vmem>>, vector<1x1x1x8x128xf32>,
    %c11_1848 = arith.constant 11 : index
    %c5_1849 = arith.constant 5 : index
    %1813 = arith.index_cast %c0_i32 : i32 to index
    %c0_1850 = arith.constant 0 : index
    %c0_1851 = arith.constant 0 : index
    %1814 = vector.load %arg1[%c11_1848, %c5_1849, %1813, %c0_1850, %c0_1851] : memref<16x16x1x8x128xf32, #tpu.memory_space<vmem>>, vector<1x1x1x8x128xf32>
    %1815 = vector.shape_cast %1814 : vector<1x1x1x8x128xf32> to vector<8x128xf32>
    %c11_1852 = arith.constant 11 : index
    %c6_1853 = arith.constant 6 : index
    %1816 = arith.index_cast %c0_i32 : i32 to index
    %c0_1854 = arith.constant 0 : index
    %c0_1855 = arith.constant 0 : index
    %1817 = vector.load %arg1[%c11_1852, %c6_1853, %1816, %c0_1854, %c0_1855] : memref<16x16x1x8x128xf32, #tpu.memory_space<vmem>>, vector<1x1x1x8x128xf32>
    %1818 = vector.shape_cast %1817 : vector<1x1x1x8x128xf32> to vector<8x128xf32>
    %1819 = arith.maximumf %1815, %1818 : vector<8x128xf32>
    %c11_1856 = arith.constant 11 : index
    %c7_1857 = arith.constant 7 : index
    %1820 = arith.index_cast %c0_i32 : i32 to index
    %c0_1858 = arith.constant 0 : index
    %c0_1859 = arith.constant 0 : index
    %1821 = vector.load %arg1[%c11_1856, %c7_1857, %1820, %c0_1858, %c0_1859] : memref<16x16x1x8x128xf32, #tpu.memory_space<vmem>>, vector<1x1x1x8x128xf32>
    %1822 = vector.shape_cast %1821 : vector<1x1x1x8x128xf32> to vector<8x128xf32>
    %1823 = arith.maximumf %1819, %1822 : vector<8x128xf32>
    %c12_1860 = arith.constant 12 : index
    %c5_1861 = arith.constant 5 : index
    %1824 = arith.index_cast %c0_i32 : i32 to index
    %c0_1862 = arith.constant 0 : index
    %c0_1863 = arith.constant 0 : index
    %1825 = vector.load %arg1[%c12_1860, %c5_1861, %1824, %c0_1862, %c0_1863] : memref<16x16x1x8x128xf32, #tpu.memory_space<vmem>>, vector<1x1x1x8x128xf32>
    %1826 = vector.shape_cast %1825 : vector<1x1x1x8x128xf32> to vector<8x128xf32>
    %1827 = arith.maximumf %1823, %1826 : vector<8x128xf32>
    %c12_1864 = arith.constant 12 : index
    %c6_1865 = arith.constant 6 : index
    %1828 = arith.index_cast %c0_i32 : i32 to index
    %c0_1866 = arith.constant 0 : index
    %c0_1867 = arith.constant 0 : index
    %1829 = vector.load %arg1[%c12_1864, %c6_1865, %1828, %c0_1866, %c0_1867] : memref<16x16x1x8x128xf32, #tpu.memory_space<vmem>>, vector<1x1x1x8x128xf32>
    %1830 = vector.shape_cast %1829 : vector<1x1x1x8x128xf32> to vector<8x128xf32>
    %1831 = arith.maximumf %1827, %1830 : vector<8x128xf32>
    %c12_1868 = arith.constant 12 : index
    %c7_1869 = arith.constant 7 : index
    %1832 = arith.index_cast %c0_i32 : i32 to index
    %c0_1870 = arith.constant 0 : index
    %c0_1871 = arith.constant 0 : index
    %1833 = vector.load %arg1[%c12_1868, %c7_1869, %1832, %c0_1870, %c0_1871] : memref<16x16x1x8x128xf32, #tpu.memory_space<vmem>>, vector<1x1x1x8x128xf32>
    %1834 = vector.shape_cast %1833 : vector<1x1x1x8x128xf32> to vector<8x128xf32>
    %1835 = arith.maximumf %1831, %1834 : vector<8x128xf32>
    %c13_1872 = arith.constant 13 : index
    %c5_1873 = arith.constant 5 : index
    %1836 = arith.index_cast %c0_i32 : i32 to index
    %c0_1874 = arith.constant 0 : index
    %c0_1875 = arith.constant 0 : index
    %1837 = vector.load %arg1[%c13_1872, %c5_1873, %1836, %c0_1874, %c0_1875] : memref<16x16x1x8x128xf32, #tpu.memory_space<vmem>>, vector<1x1x1x8x128xf32>
    %1838 = vector.shape_cast %1837 : vector<1x1x1x8x128xf32> to vector<8x128xf32>
    %1839 = arith.maximumf %1835, %1838 : vector<8x128xf32>
    %c13_1876 = arith.constant 13 : index
    %c6_1877 = arith.constant 6 : index
    %1840 = arith.index_cast %c0_i32 : i32 to index
    %c0_1878 = arith.constant 0 : index
    %c0_1879 = arith.constant 0 : index
    %1841 = vector.load %arg1[%c13_1876, %c6_1877, %1840, %c0_1878, %c0_1879] : memref<16x16x1x8x128xf32, #tpu.memory_space<vmem>>, vector<1x1x1x8x128xf32>
    %1842 = vector.shape_cast %1841 : vector<1x1x1x8x128xf32> to vector<8x128xf32>
    %1843 = arith.maximumf %1839, %1842 : vector<8x128xf32>
    %c13_1880 = arith.constant 13 : index
    %c7_1881 = arith.constant 7 : index
    %1844 = arith.index_cast %c0_i32 : i32 to index
    %c0_1882 = arith.constant 0 : index
    %c0_1883 = arith.constant 0 : index
    %1845 = vector.load %arg1[%c13_1880, %c7_1881, %1844, %c0_1882, %c0_1883] : memref<16x16x1x8x128xf32, #tpu.memory_space<vmem>>, vector<1x1x1x8x128xf32>
    %1846 = vector.shape_cast %1845 : vector<1x1x1x8x128xf32> to vector<8x128xf32>
    %1847 = arith.maximumf %1843, %1846 : vector<8x128xf32>
    %c6_1884 = arith.constant 6 : index
    %c3_1885 = arith.constant 3 : index
    %1848 = arith.index_cast %c0_i32 : i32 to index
    %c0_1886 = arith.constant 0 : index
    %c0_1887 = arith.constant 0 : index
    %1849 = vector.load %arg2[%c6_1884, %c3_1885, %1848, %c0_1886, %c0_1887] : memref<8x8x1x8x128xf32, #tpu.memory_space<vmem>>, vector<1x1x1x8x128xf32>
    %1850 = vector.shape_cast %1849 : vector<1x1x1x8x128xf32> to vector<8x128xf32>
    %1851 = vector.shape_cast %1847 : vector<8x128xf32> to vector<1x1x1x8x128xf32>
    tpu.vector_store %arg2[%c6_1884, %c3_1885, %1848, %c0_1886, %c0_1887], %1851 {strides = array<i32>} : memref<8x8x1x8x128xf32, #tpu.memory_space<vmem>>, vector<1x1x1x8x128xf32>,
    %c11_1888 = arith.constant 11 : index
    %c7_1889 = arith.constant 7 : index
    %1852 = arith.index_cast %c0_i32 : i32 to index
    %c0_1890 = arith.constant 0 : index
    %c0_1891 = arith.constant 0 : index
    %1853 = vector.load %arg1[%c11_1888, %c7_1889, %1852, %c0_1890, %c0_1891] : memref<16x16x1x8x128xf32, #tpu.memory_space<vmem>>, vector<1x1x1x8x128xf32>
    %1854 = vector.shape_cast %1853 : vector<1x1x1x8x128xf32> to vector<8x128xf32>
    %c11_1892 = arith.constant 11 : index
    %c8_1893 = arith.constant 8 : index
    %1855 = arith.index_cast %c0_i32 : i32 to index
    %c0_1894 = arith.constant 0 : index
    %c0_1895 = arith.constant 0 : index
    %1856 = vector.load %arg1[%c11_1892, %c8_1893, %1855, %c0_1894, %c0_1895] : memref<16x16x1x8x128xf32, #tpu.memory_space<vmem>>, vector<1x1x1x8x128xf32>
    %1857 = vector.shape_cast %1856 : vector<1x1x1x8x128xf32> to vector<8x128xf32>
    %1858 = arith.maximumf %1854, %1857 : vector<8x128xf32>
    %c11_1896 = arith.constant 11 : index
    %c9_1897 = arith.constant 9 : index
    %1859 = arith.index_cast %c0_i32 : i32 to index
    %c0_1898 = arith.constant 0 : index
    %c0_1899 = arith.constant 0 : index
    %1860 = vector.load %arg1[%c11_1896, %c9_1897, %1859, %c0_1898, %c0_1899] : memref<16x16x1x8x128xf32, #tpu.memory_space<vmem>>, vector<1x1x1x8x128xf32>
    %1861 = vector.shape_cast %1860 : vector<1x1x1x8x128xf32> to vector<8x128xf32>
    %1862 = arith.maximumf %1858, %1861 : vector<8x128xf32>
    %c12_1900 = arith.constant 12 : index
    %c7_1901 = arith.constant 7 : index
    %1863 = arith.index_cast %c0_i32 : i32 to index
    %c0_1902 = arith.constant 0 : index
    %c0_1903 = arith.constant 0 : index
    %1864 = vector.load %arg1[%c12_1900, %c7_1901, %1863, %c0_1902, %c0_1903] : memref<16x16x1x8x128xf32, #tpu.memory_space<vmem>>, vector<1x1x1x8x128xf32>
    %1865 = vector.shape_cast %1864 : vector<1x1x1x8x128xf32> to vector<8x128xf32>
    %1866 = arith.maximumf %1862, %1865 : vector<8x128xf32>
    %c12_1904 = arith.constant 12 : index
    %c8_1905 = arith.constant 8 : index
    %1867 = arith.index_cast %c0_i32 : i32 to index
    %c0_1906 = arith.constant 0 : index
    %c0_1907 = arith.constant 0 : index
    %1868 = vector.load %arg1[%c12_1904, %c8_1905, %1867, %c0_1906, %c0_1907] : memref<16x16x1x8x128xf32, #tpu.memory_space<vmem>>, vector<1x1x1x8x128xf32>
    %1869 = vector.shape_cast %1868 : vector<1x1x1x8x128xf32> to vector<8x128xf32>
    %1870 = arith.maximumf %1866, %1869 : vector<8x128xf32>
    %c12_1908 = arith.constant 12 : index
    %c9_1909 = arith.constant 9 : index
    %1871 = arith.index_cast %c0_i32 : i32 to index
    %c0_1910 = arith.constant 0 : index
    %c0_1911 = arith.constant 0 : index
    %1872 = vector.load %arg1[%c12_1908, %c9_1909, %1871, %c0_1910, %c0_1911] : memref<16x16x1x8x128xf32, #tpu.memory_space<vmem>>, vector<1x1x1x8x128xf32>
    %1873 = vector.shape_cast %1872 : vector<1x1x1x8x128xf32> to vector<8x128xf32>
    %1874 = arith.maximumf %1870, %1873 : vector<8x128xf32>
    %c13_1912 = arith.constant 13 : index
    %c7_1913 = arith.constant 7 : index
    %1875 = arith.index_cast %c0_i32 : i32 to index
    %c0_1914 = arith.constant 0 : index
    %c0_1915 = arith.constant 0 : index
    %1876 = vector.load %arg1[%c13_1912, %c7_1913, %1875, %c0_1914, %c0_1915] : memref<16x16x1x8x128xf32, #tpu.memory_space<vmem>>, vector<1x1x1x8x128xf32>
    %1877 = vector.shape_cast %1876 : vector<1x1x1x8x128xf32> to vector<8x128xf32>
    %1878 = arith.maximumf %1874, %1877 : vector<8x128xf32>
    %c13_1916 = arith.constant 13 : index
    %c8_1917 = arith.constant 8 : index
    %1879 = arith.index_cast %c0_i32 : i32 to index
    %c0_1918 = arith.constant 0 : index
    %c0_1919 = arith.constant 0 : index
    %1880 = vector.load %arg1[%c13_1916, %c8_1917, %1879, %c0_1918, %c0_1919] : memref<16x16x1x8x128xf32, #tpu.memory_space<vmem>>, vector<1x1x1x8x128xf32>
    %1881 = vector.shape_cast %1880 : vector<1x1x1x8x128xf32> to vector<8x128xf32>
    %1882 = arith.maximumf %1878, %1881 : vector<8x128xf32>
    %c13_1920 = arith.constant 13 : index
    %c9_1921 = arith.constant 9 : index
    %1883 = arith.index_cast %c0_i32 : i32 to index
    %c0_1922 = arith.constant 0 : index
    %c0_1923 = arith.constant 0 : index
    %1884 = vector.load %arg1[%c13_1920, %c9_1921, %1883, %c0_1922, %c0_1923] : memref<16x16x1x8x128xf32, #tpu.memory_space<vmem>>, vector<1x1x1x8x128xf32>
    %1885 = vector.shape_cast %1884 : vector<1x1x1x8x128xf32> to vector<8x128xf32>
    %1886 = arith.maximumf %1882, %1885 : vector<8x128xf32>
    %c6_1924 = arith.constant 6 : index
    %c4_1925 = arith.constant 4 : index
    %1887 = arith.index_cast %c0_i32 : i32 to index
    %c0_1926 = arith.constant 0 : index
    %c0_1927 = arith.constant 0 : index
    %1888 = vector.load %arg2[%c6_1924, %c4_1925, %1887, %c0_1926, %c0_1927] : memref<8x8x1x8x128xf32, #tpu.memory_space<vmem>>, vector<1x1x1x8x128xf32>
    %1889 = vector.shape_cast %1888 : vector<1x1x1x8x128xf32> to vector<8x128xf32>
    %1890 = vector.shape_cast %1886 : vector<8x128xf32> to vector<1x1x1x8x128xf32>
    tpu.vector_store %arg2[%c6_1924, %c4_1925, %1887, %c0_1926, %c0_1927], %1890 {strides = array<i32>} : memref<8x8x1x8x128xf32, #tpu.memory_space<vmem>>, vector<1x1x1x8x128xf32>,
    %c11_1928 = arith.constant 11 : index
    %c9_1929 = arith.constant 9 : index
    %1891 = arith.index_cast %c0_i32 : i32 to index
    %c0_1930 = arith.constant 0 : index
    %c0_1931 = arith.constant 0 : index
    %1892 = vector.load %arg1[%c11_1928, %c9_1929, %1891, %c0_1930, %c0_1931] : memref<16x16x1x8x128xf32, #tpu.memory_space<vmem>>, vector<1x1x1x8x128xf32>
    %1893 = vector.shape_cast %1892 : vector<1x1x1x8x128xf32> to vector<8x128xf32>
    %c11_1932 = arith.constant 11 : index
    %c10_1933 = arith.constant 10 : index
    %1894 = arith.index_cast %c0_i32 : i32 to index
    %c0_1934 = arith.constant 0 : index
    %c0_1935 = arith.constant 0 : index
    %1895 = vector.load %arg1[%c11_1932, %c10_1933, %1894, %c0_1934, %c0_1935] : memref<16x16x1x8x128xf32, #tpu.memory_space<vmem>>, vector<1x1x1x8x128xf32>
    %1896 = vector.shape_cast %1895 : vector<1x1x1x8x128xf32> to vector<8x128xf32>
    %1897 = arith.maximumf %1893, %1896 : vector<8x128xf32>
    %c11_1936 = arith.constant 11 : index
    %c11_1937 = arith.constant 11 : index
    %1898 = arith.index_cast %c0_i32 : i32 to index
    %c0_1938 = arith.constant 0 : index
    %c0_1939 = arith.constant 0 : index
    %1899 = vector.load %arg1[%c11_1936, %c11_1937, %1898, %c0_1938, %c0_1939] : memref<16x16x1x8x128xf32, #tpu.memory_space<vmem>>, vector<1x1x1x8x128xf32>
    %1900 = vector.shape_cast %1899 : vector<1x1x1x8x128xf32> to vector<8x128xf32>
    %1901 = arith.maximumf %1897, %1900 : vector<8x128xf32>
    %c12_1940 = arith.constant 12 : index
    %c9_1941 = arith.constant 9 : index
    %1902 = arith.index_cast %c0_i32 : i32 to index
    %c0_1942 = arith.constant 0 : index
    %c0_1943 = arith.constant 0 : index
    %1903 = vector.load %arg1[%c12_1940, %c9_1941, %1902, %c0_1942, %c0_1943] : memref<16x16x1x8x128xf32, #tpu.memory_space<vmem>>, vector<1x1x1x8x128xf32>
    %1904 = vector.shape_cast %1903 : vector<1x1x1x8x128xf32> to vector<8x128xf32>
    %1905 = arith.maximumf %1901, %1904 : vector<8x128xf32>
    %c12_1944 = arith.constant 12 : index
    %c10_1945 = arith.constant 10 : index
    %1906 = arith.index_cast %c0_i32 : i32 to index
    %c0_1946 = arith.constant 0 : index
    %c0_1947 = arith.constant 0 : index
    %1907 = vector.load %arg1[%c12_1944, %c10_1945, %1906, %c0_1946, %c0_1947] : memref<16x16x1x8x128xf32, #tpu.memory_space<vmem>>, vector<1x1x1x8x128xf32>
    %1908 = vector.shape_cast %1907 : vector<1x1x1x8x128xf32> to vector<8x128xf32>
    %1909 = arith.maximumf %1905, %1908 : vector<8x128xf32>
    %c12_1948 = arith.constant 12 : index
    %c11_1949 = arith.constant 11 : index
    %1910 = arith.index_cast %c0_i32 : i32 to index
    %c0_1950 = arith.constant 0 : index
    %c0_1951 = arith.constant 0 : index
    %1911 = vector.load %arg1[%c12_1948, %c11_1949, %1910, %c0_1950, %c0_1951] : memref<16x16x1x8x128xf32, #tpu.memory_space<vmem>>, vector<1x1x1x8x128xf32>
    %1912 = vector.shape_cast %1911 : vector<1x1x1x8x128xf32> to vector<8x128xf32>
    %1913 = arith.maximumf %1909, %1912 : vector<8x128xf32>
    %c13_1952 = arith.constant 13 : index
    %c9_1953 = arith.constant 9 : index
    %1914 = arith.index_cast %c0_i32 : i32 to index
    %c0_1954 = arith.constant 0 : index
    %c0_1955 = arith.constant 0 : index
    %1915 = vector.load %arg1[%c13_1952, %c9_1953, %1914, %c0_1954, %c0_1955] : memref<16x16x1x8x128xf32, #tpu.memory_space<vmem>>, vector<1x1x1x8x128xf32>
    %1916 = vector.shape_cast %1915 : vector<1x1x1x8x128xf32> to vector<8x128xf32>
    %1917 = arith.maximumf %1913, %1916 : vector<8x128xf32>
    %c13_1956 = arith.constant 13 : index
    %c10_1957 = arith.constant 10 : index
    %1918 = arith.index_cast %c0_i32 : i32 to index
    %c0_1958 = arith.constant 0 : index
    %c0_1959 = arith.constant 0 : index
    %1919 = vector.load %arg1[%c13_1956, %c10_1957, %1918, %c0_1958, %c0_1959] : memref<16x16x1x8x128xf32, #tpu.memory_space<vmem>>, vector<1x1x1x8x128xf32>
    %1920 = vector.shape_cast %1919 : vector<1x1x1x8x128xf32> to vector<8x128xf32>
    %1921 = arith.maximumf %1917, %1920 : vector<8x128xf32>
    %c13_1960 = arith.constant 13 : index
    %c11_1961 = arith.constant 11 : index
    %1922 = arith.index_cast %c0_i32 : i32 to index
    %c0_1962 = arith.constant 0 : index
    %c0_1963 = arith.constant 0 : index
    %1923 = vector.load %arg1[%c13_1960, %c11_1961, %1922, %c0_1962, %c0_1963] : memref<16x16x1x8x128xf32, #tpu.memory_space<vmem>>, vector<1x1x1x8x128xf32>
    %1924 = vector.shape_cast %1923 : vector<1x1x1x8x128xf32> to vector<8x128xf32>
    %1925 = arith.maximumf %1921, %1924 : vector<8x128xf32>
    %c6_1964 = arith.constant 6 : index
    %c5_1965 = arith.constant 5 : index
    %1926 = arith.index_cast %c0_i32 : i32 to index
    %c0_1966 = arith.constant 0 : index
    %c0_1967 = arith.constant 0 : index
    %1927 = vector.load %arg2[%c6_1964, %c5_1965, %1926, %c0_1966, %c0_1967] : memref<8x8x1x8x128xf32, #tpu.memory_space<vmem>>, vector<1x1x1x8x128xf32>
    %1928 = vector.shape_cast %1927 : vector<1x1x1x8x128xf32> to vector<8x128xf32>
    %1929 = vector.shape_cast %1925 : vector<8x128xf32> to vector<1x1x1x8x128xf32>
    tpu.vector_store %arg2[%c6_1964, %c5_1965, %1926, %c0_1966, %c0_1967], %1929 {strides = array<i32>} : memref<8x8x1x8x128xf32, #tpu.memory_space<vmem>>, vector<1x1x1x8x128xf32>,
    %c11_1968 = arith.constant 11 : index
    %c11_1969 = arith.constant 11 : index
    %1930 = arith.index_cast %c0_i32 : i32 to index
    %c0_1970 = arith.constant 0 : index
    %c0_1971 = arith.constant 0 : index
    %1931 = vector.load %arg1[%c11_1968, %c11_1969, %1930, %c0_1970, %c0_1971] : memref<16x16x1x8x128xf32, #tpu.memory_space<vmem>>, vector<1x1x1x8x128xf32>
    %1932 = vector.shape_cast %1931 : vector<1x1x1x8x128xf32> to vector<8x128xf32>
    %c11_1972 = arith.constant 11 : index
    %c12_1973 = arith.constant 12 : index
    %1933 = arith.index_cast %c0_i32 : i32 to index
    %c0_1974 = arith.constant 0 : index
    %c0_1975 = arith.constant 0 : index
    %1934 = vector.load %arg1[%c11_1972, %c12_1973, %1933, %c0_1974, %c0_1975] : memref<16x16x1x8x128xf32, #tpu.memory_space<vmem>>, vector<1x1x1x8x128xf32>
    %1935 = vector.shape_cast %1934 : vector<1x1x1x8x128xf32> to vector<8x128xf32>
    %1936 = arith.maximumf %1932, %1935 : vector<8x128xf32>
    %c11_1976 = arith.constant 11 : index
    %c13_1977 = arith.constant 13 : index
    %1937 = arith.index_cast %c0_i32 : i32 to index
    %c0_1978 = arith.constant 0 : index
    %c0_1979 = arith.constant 0 : index
    %1938 = vector.load %arg1[%c11_1976, %c13_1977, %1937, %c0_1978, %c0_1979] : memref<16x16x1x8x128xf32, #tpu.memory_space<vmem>>, vector<1x1x1x8x128xf32>
    %1939 = vector.shape_cast %1938 : vector<1x1x1x8x128xf32> to vector<8x128xf32>
    %1940 = arith.maximumf %1936, %1939 : vector<8x128xf32>
    %c12_1980 = arith.constant 12 : index
    %c11_1981 = arith.constant 11 : index
    %1941 = arith.index_cast %c0_i32 : i32 to index
    %c0_1982 = arith.constant 0 : index
    %c0_1983 = arith.constant 0 : index
    %1942 = vector.load %arg1[%c12_1980, %c11_1981, %1941, %c0_1982, %c0_1983] : memref<16x16x1x8x128xf32, #tpu.memory_space<vmem>>, vector<1x1x1x8x128xf32>
    %1943 = vector.shape_cast %1942 : vector<1x1x1x8x128xf32> to vector<8x128xf32>
    %1944 = arith.maximumf %1940, %1943 : vector<8x128xf32>
    %c12_1984 = arith.constant 12 : index
    %c12_1985 = arith.constant 12 : index
    %1945 = arith.index_cast %c0_i32 : i32 to index
    %c0_1986 = arith.constant 0 : index
    %c0_1987 = arith.constant 0 : index
    %1946 = vector.load %arg1[%c12_1984, %c12_1985, %1945, %c0_1986, %c0_1987] : memref<16x16x1x8x128xf32, #tpu.memory_space<vmem>>, vector<1x1x1x8x128xf32>
    %1947 = vector.shape_cast %1946 : vector<1x1x1x8x128xf32> to vector<8x128xf32>
    %1948 = arith.maximumf %1944, %1947 : vector<8x128xf32>
    %c12_1988 = arith.constant 12 : index
    %c13_1989 = arith.constant 13 : index
    %1949 = arith.index_cast %c0_i32 : i32 to index
    %c0_1990 = arith.constant 0 : index
    %c0_1991 = arith.constant 0 : index
    %1950 = vector.load %arg1[%c12_1988, %c13_1989, %1949, %c0_1990, %c0_1991] : memref<16x16x1x8x128xf32, #tpu.memory_space<vmem>>, vector<1x1x1x8x128xf32>
    %1951 = vector.shape_cast %1950 : vector<1x1x1x8x128xf32> to vector<8x128xf32>
    %1952 = arith.maximumf %1948, %1951 : vector<8x128xf32>
    %c13_1992 = arith.constant 13 : index
    %c11_1993 = arith.constant 11 : index
    %1953 = arith.index_cast %c0_i32 : i32 to index
    %c0_1994 = arith.constant 0 : index
    %c0_1995 = arith.constant 0 : index
    %1954 = vector.load %arg1[%c13_1992, %c11_1993, %1953, %c0_1994, %c0_1995] : memref<16x16x1x8x128xf32, #tpu.memory_space<vmem>>, vector<1x1x1x8x128xf32>
    %1955 = vector.shape_cast %1954 : vector<1x1x1x8x128xf32> to vector<8x128xf32>
    %1956 = arith.maximumf %1952, %1955 : vector<8x128xf32>
    %c13_1996 = arith.constant 13 : index
    %c12_1997 = arith.constant 12 : index
    %1957 = arith.index_cast %c0_i32 : i32 to index
    %c0_1998 = arith.constant 0 : index
    %c0_1999 = arith.constant 0 : index
    %1958 = vector.load %arg1[%c13_1996, %c12_1997, %1957, %c0_1998, %c0_1999] : memref<16x16x1x8x128xf32, #tpu.memory_space<vmem>>, vector<1x1x1x8x128xf32>
    %1959 = vector.shape_cast %1958 : vector<1x1x1x8x128xf32> to vector<8x128xf32>
    %1960 = arith.maximumf %1956, %1959 : vector<8x128xf32>
    %c13_2000 = arith.constant 13 : index
    %c13_2001 = arith.constant 13 : index
    %1961 = arith.index_cast %c0_i32 : i32 to index
    %c0_2002 = arith.constant 0 : index
    %c0_2003 = arith.constant 0 : index
    %1962 = vector.load %arg1[%c13_2000, %c13_2001, %1961, %c0_2002, %c0_2003] : memref<16x16x1x8x128xf32, #tpu.memory_space<vmem>>, vector<1x1x1x8x128xf32>
    %1963 = vector.shape_cast %1962 : vector<1x1x1x8x128xf32> to vector<8x128xf32>
    %1964 = arith.maximumf %1960, %1963 : vector<8x128xf32>
    %c6_2004 = arith.constant 6 : index
    %c6_2005 = arith.constant 6 : index
    %1965 = arith.index_cast %c0_i32 : i32 to index
    %c0_2006 = arith.constant 0 : index
    %c0_2007 = arith.constant 0 : index
    %1966 = vector.load %arg2[%c6_2004, %c6_2005, %1965, %c0_2006, %c0_2007] : memref<8x8x1x8x128xf32, #tpu.memory_space<vmem>>, vector<1x1x1x8x128xf32>
    %1967 = vector.shape_cast %1966 : vector<1x1x1x8x128xf32> to vector<8x128xf32>
    %1968 = vector.shape_cast %1964 : vector<8x128xf32> to vector<1x1x1x8x128xf32>
    tpu.vector_store %arg2[%c6_2004, %c6_2005, %1965, %c0_2006, %c0_2007], %1968 {strides = array<i32>} : memref<8x8x1x8x128xf32, #tpu.memory_space<vmem>>, vector<1x1x1x8x128xf32>,
    %c11_2008 = arith.constant 11 : index
    %c13_2009 = arith.constant 13 : index
    %1969 = arith.index_cast %c0_i32 : i32 to index
    %c0_2010 = arith.constant 0 : index
    %c0_2011 = arith.constant 0 : index
    %1970 = vector.load %arg1[%c11_2008, %c13_2009, %1969, %c0_2010, %c0_2011] : memref<16x16x1x8x128xf32, #tpu.memory_space<vmem>>, vector<1x1x1x8x128xf32>
    %1971 = vector.shape_cast %1970 : vector<1x1x1x8x128xf32> to vector<8x128xf32>
    %c11_2012 = arith.constant 11 : index
    %c14_2013 = arith.constant 14 : index
    %1972 = arith.index_cast %c0_i32 : i32 to index
    %c0_2014 = arith.constant 0 : index
    %c0_2015 = arith.constant 0 : index
    %1973 = vector.load %arg1[%c11_2012, %c14_2013, %1972, %c0_2014, %c0_2015] : memref<16x16x1x8x128xf32, #tpu.memory_space<vmem>>, vector<1x1x1x8x128xf32>
    %1974 = vector.shape_cast %1973 : vector<1x1x1x8x128xf32> to vector<8x128xf32>
    %1975 = arith.maximumf %1971, %1974 : vector<8x128xf32>
    %c11_2016 = arith.constant 11 : index
    %c15_2017 = arith.constant 15 : index
    %1976 = arith.index_cast %c0_i32 : i32 to index
    %c0_2018 = arith.constant 0 : index
    %c0_2019 = arith.constant 0 : index
    %1977 = vector.load %arg1[%c11_2016, %c15_2017, %1976, %c0_2018, %c0_2019] : memref<16x16x1x8x128xf32, #tpu.memory_space<vmem>>, vector<1x1x1x8x128xf32>
    %1978 = vector.shape_cast %1977 : vector<1x1x1x8x128xf32> to vector<8x128xf32>
    %1979 = arith.maximumf %1975, %1978 : vector<8x128xf32>
    %c12_2020 = arith.constant 12 : index
    %c13_2021 = arith.constant 13 : index
    %1980 = arith.index_cast %c0_i32 : i32 to index
    %c0_2022 = arith.constant 0 : index
    %c0_2023 = arith.constant 0 : index
    %1981 = vector.load %arg1[%c12_2020, %c13_2021, %1980, %c0_2022, %c0_2023] : memref<16x16x1x8x128xf32, #tpu.memory_space<vmem>>, vector<1x1x1x8x128xf32>
    %1982 = vector.shape_cast %1981 : vector<1x1x1x8x128xf32> to vector<8x128xf32>
    %1983 = arith.maximumf %1979, %1982 : vector<8x128xf32>
    %c12_2024 = arith.constant 12 : index
    %c14_2025 = arith.constant 14 : index
    %1984 = arith.index_cast %c0_i32 : i32 to index
    %c0_2026 = arith.constant 0 : index
    %c0_2027 = arith.constant 0 : index
    %1985 = vector.load %arg1[%c12_2024, %c14_2025, %1984, %c0_2026, %c0_2027] : memref<16x16x1x8x128xf32, #tpu.memory_space<vmem>>, vector<1x1x1x8x128xf32>
    %1986 = vector.shape_cast %1985 : vector<1x1x1x8x128xf32> to vector<8x128xf32>
    %1987 = arith.maximumf %1983, %1986 : vector<8x128xf32>
    %c12_2028 = arith.constant 12 : index
    %c15_2029 = arith.constant 15 : index
    %1988 = arith.index_cast %c0_i32 : i32 to index
    %c0_2030 = arith.constant 0 : index
    %c0_2031 = arith.constant 0 : index
    %1989 = vector.load %arg1[%c12_2028, %c15_2029, %1988, %c0_2030, %c0_2031] : memref<16x16x1x8x128xf32, #tpu.memory_space<vmem>>, vector<1x1x1x8x128xf32>
    %1990 = vector.shape_cast %1989 : vector<1x1x1x8x128xf32> to vector<8x128xf32>
    %1991 = arith.maximumf %1987, %1990 : vector<8x128xf32>
    %c13_2032 = arith.constant 13 : index
    %c13_2033 = arith.constant 13 : index
    %1992 = arith.index_cast %c0_i32 : i32 to index
    %c0_2034 = arith.constant 0 : index
    %c0_2035 = arith.constant 0 : index
    %1993 = vector.load %arg1[%c13_2032, %c13_2033, %1992, %c0_2034, %c0_2035] : memref<16x16x1x8x128xf32, #tpu.memory_space<vmem>>, vector<1x1x1x8x128xf32>
    %1994 = vector.shape_cast %1993 : vector<1x1x1x8x128xf32> to vector<8x128xf32>
    %1995 = arith.maximumf %1991, %1994 : vector<8x128xf32>
    %c13_2036 = arith.constant 13 : index
    %c14_2037 = arith.constant 14 : index
    %1996 = arith.index_cast %c0_i32 : i32 to index
    %c0_2038 = arith.constant 0 : index
    %c0_2039 = arith.constant 0 : index
    %1997 = vector.load %arg1[%c13_2036, %c14_2037, %1996, %c0_2038, %c0_2039] : memref<16x16x1x8x128xf32, #tpu.memory_space<vmem>>, vector<1x1x1x8x128xf32>
    %1998 = vector.shape_cast %1997 : vector<1x1x1x8x128xf32> to vector<8x128xf32>
    %1999 = arith.maximumf %1995, %1998 : vector<8x128xf32>
    %c13_2040 = arith.constant 13 : index
    %c15_2041 = arith.constant 15 : index
    %2000 = arith.index_cast %c0_i32 : i32 to index
    %c0_2042 = arith.constant 0 : index
    %c0_2043 = arith.constant 0 : index
    %2001 = vector.load %arg1[%c13_2040, %c15_2041, %2000, %c0_2042, %c0_2043] : memref<16x16x1x8x128xf32, #tpu.memory_space<vmem>>, vector<1x1x1x8x128xf32>
    %2002 = vector.shape_cast %2001 : vector<1x1x1x8x128xf32> to vector<8x128xf32>
    %2003 = arith.maximumf %1999, %2002 : vector<8x128xf32>
    %c6_2044 = arith.constant 6 : index
    %c7_2045 = arith.constant 7 : index
    %2004 = arith.index_cast %c0_i32 : i32 to index
    %c0_2046 = arith.constant 0 : index
    %c0_2047 = arith.constant 0 : index
    %2005 = vector.load %arg2[%c6_2044, %c7_2045, %2004, %c0_2046, %c0_2047] : memref<8x8x1x8x128xf32, #tpu.memory_space<vmem>>, vector<1x1x1x8x128xf32>
    %2006 = vector.shape_cast %2005 : vector<1x1x1x8x128xf32> to vector<8x128xf32>
    %2007 = vector.shape_cast %2003 : vector<8x128xf32> to vector<1x1x1x8x128xf32>
    tpu.vector_store %arg2[%c6_2044, %c7_2045, %2004, %c0_2046, %c0_2047], %2007 {strides = array<i32>} : memref<8x8x1x8x128xf32, #tpu.memory_space<vmem>>, vector<1x1x1x8x128xf32>,
    %c13_2048 = arith.constant 13 : index
    %c0_2049 = arith.constant 0 : index
    %2008 = arith.index_cast %c0_i32 : i32 to index
    %c0_2050 = arith.constant 0 : index
    %c0_2051 = arith.constant 0 : index
    %2009 = vector.load %arg1[%c13_2048, %c0_2049, %2008, %c0_2050, %c0_2051] : memref<16x16x1x8x128xf32, #tpu.memory_space<vmem>>, vector<1x1x1x8x128xf32>
    %2010 = vector.shape_cast %2009 : vector<1x1x1x8x128xf32> to vector<8x128xf32>
    %c13_2052 = arith.constant 13 : index
    %c1_2053 = arith.constant 1 : index
    %2011 = arith.index_cast %c0_i32 : i32 to index
    %c0_2054 = arith.constant 0 : index
    %c0_2055 = arith.constant 0 : index
    %2012 = vector.load %arg1[%c13_2052, %c1_2053, %2011, %c0_2054, %c0_2055] : memref<16x16x1x8x128xf32, #tpu.memory_space<vmem>>, vector<1x1x1x8x128xf32>
    %2013 = vector.shape_cast %2012 : vector<1x1x1x8x128xf32> to vector<8x128xf32>
    %2014 = arith.maximumf %2010, %2013 : vector<8x128xf32>
    %c14_2056 = arith.constant 14 : index
    %c0_2057 = arith.constant 0 : index
    %2015 = arith.index_cast %c0_i32 : i32 to index
    %c0_2058 = arith.constant 0 : index
    %c0_2059 = arith.constant 0 : index
    %2016 = vector.load %arg1[%c14_2056, %c0_2057, %2015, %c0_2058, %c0_2059] : memref<16x16x1x8x128xf32, #tpu.memory_space<vmem>>, vector<1x1x1x8x128xf32>
    %2017 = vector.shape_cast %2016 : vector<1x1x1x8x128xf32> to vector<8x128xf32>
    %2018 = arith.maximumf %2014, %2017 : vector<8x128xf32>
    %c14_2060 = arith.constant 14 : index
    %c1_2061 = arith.constant 1 : index
    %2019 = arith.index_cast %c0_i32 : i32 to index
    %c0_2062 = arith.constant 0 : index
    %c0_2063 = arith.constant 0 : index
    %2020 = vector.load %arg1[%c14_2060, %c1_2061, %2019, %c0_2062, %c0_2063] : memref<16x16x1x8x128xf32, #tpu.memory_space<vmem>>, vector<1x1x1x8x128xf32>
    %2021 = vector.shape_cast %2020 : vector<1x1x1x8x128xf32> to vector<8x128xf32>
    %2022 = arith.maximumf %2018, %2021 : vector<8x128xf32>
    %c15_2064 = arith.constant 15 : index
    %c0_2065 = arith.constant 0 : index
    %2023 = arith.index_cast %c0_i32 : i32 to index
    %c0_2066 = arith.constant 0 : index
    %c0_2067 = arith.constant 0 : index
    %2024 = vector.load %arg1[%c15_2064, %c0_2065, %2023, %c0_2066, %c0_2067] : memref<16x16x1x8x128xf32, #tpu.memory_space<vmem>>, vector<1x1x1x8x128xf32>
    %2025 = vector.shape_cast %2024 : vector<1x1x1x8x128xf32> to vector<8x128xf32>
    %2026 = arith.maximumf %2022, %2025 : vector<8x128xf32>
    %c15_2068 = arith.constant 15 : index
    %c1_2069 = arith.constant 1 : index
    %2027 = arith.index_cast %c0_i32 : i32 to index
    %c0_2070 = arith.constant 0 : index
    %c0_2071 = arith.constant 0 : index
    %2028 = vector.load %arg1[%c15_2068, %c1_2069, %2027, %c0_2070, %c0_2071] : memref<16x16x1x8x128xf32, #tpu.memory_space<vmem>>, vector<1x1x1x8x128xf32>
    %2029 = vector.shape_cast %2028 : vector<1x1x1x8x128xf32> to vector<8x128xf32>
    %2030 = arith.maximumf %2026, %2029 : vector<8x128xf32>
    %c7_2072 = arith.constant 7 : index
    %c0_2073 = arith.constant 0 : index
    %2031 = arith.index_cast %c0_i32 : i32 to index
    %c0_2074 = arith.constant 0 : index
    %c0_2075 = arith.constant 0 : index
    %2032 = vector.load %arg2[%c7_2072, %c0_2073, %2031, %c0_2074, %c0_2075] : memref<8x8x1x8x128xf32, #tpu.memory_space<vmem>>, vector<1x1x1x8x128xf32>
    %2033 = vector.shape_cast %2032 : vector<1x1x1x8x128xf32> to vector<8x128xf32>
    %2034 = vector.shape_cast %2030 : vector<8x128xf32> to vector<1x1x1x8x128xf32>
    tpu.vector_store %arg2[%c7_2072, %c0_2073, %2031, %c0_2074, %c0_2075], %2034 {strides = array<i32>} : memref<8x8x1x8x128xf32, #tpu.memory_space<vmem>>, vector<1x1x1x8x128xf32>,
    %c13_2076 = arith.constant 13 : index
    %c1_2077 = arith.constant 1 : index
    %2035 = arith.index_cast %c0_i32 : i32 to index
    %c0_2078 = arith.constant 0 : index
    %c0_2079 = arith.constant 0 : index
    %2036 = vector.load %arg1[%c13_2076, %c1_2077, %2035, %c0_2078, %c0_2079] : memref<16x16x1x8x128xf32, #tpu.memory_space<vmem>>, vector<1x1x1x8x128xf32>
    %2037 = vector.shape_cast %2036 : vector<1x1x1x8x128xf32> to vector<8x128xf32>
    %c13_2080 = arith.constant 13 : index
    %c2_2081 = arith.constant 2 : index
    %2038 = arith.index_cast %c0_i32 : i32 to index
    %c0_2082 = arith.constant 0 : index
    %c0_2083 = arith.constant 0 : index
    %2039 = vector.load %arg1[%c13_2080, %c2_2081, %2038, %c0_2082, %c0_2083] : memref<16x16x1x8x128xf32, #tpu.memory_space<vmem>>, vector<1x1x1x8x128xf32>
    %2040 = vector.shape_cast %2039 : vector<1x1x1x8x128xf32> to vector<8x128xf32>
    %2041 = arith.maximumf %2037, %2040 : vector<8x128xf32>
    %c13_2084 = arith.constant 13 : index
    %c3_2085 = arith.constant 3 : index
    %2042 = arith.index_cast %c0_i32 : i32 to index
    %c0_2086 = arith.constant 0 : index
    %c0_2087 = arith.constant 0 : index
    %2043 = vector.load %arg1[%c13_2084, %c3_2085, %2042, %c0_2086, %c0_2087] : memref<16x16x1x8x128xf32, #tpu.memory_space<vmem>>, vector<1x1x1x8x128xf32>
    %2044 = vector.shape_cast %2043 : vector<1x1x1x8x128xf32> to vector<8x128xf32>
    %2045 = arith.maximumf %2041, %2044 : vector<8x128xf32>
    %c14_2088 = arith.constant 14 : index
    %c1_2089 = arith.constant 1 : index
    %2046 = arith.index_cast %c0_i32 : i32 to index
    %c0_2090 = arith.constant 0 : index
    %c0_2091 = arith.constant 0 : index
    %2047 = vector.load %arg1[%c14_2088, %c1_2089, %2046, %c0_2090, %c0_2091] : memref<16x16x1x8x128xf32, #tpu.memory_space<vmem>>, vector<1x1x1x8x128xf32>
    %2048 = vector.shape_cast %2047 : vector<1x1x1x8x128xf32> to vector<8x128xf32>
    %2049 = arith.maximumf %2045, %2048 : vector<8x128xf32>
    %c14_2092 = arith.constant 14 : index
    %c2_2093 = arith.constant 2 : index
    %2050 = arith.index_cast %c0_i32 : i32 to index
    %c0_2094 = arith.constant 0 : index
    %c0_2095 = arith.constant 0 : index
    %2051 = vector.load %arg1[%c14_2092, %c2_2093, %2050, %c0_2094, %c0_2095] : memref<16x16x1x8x128xf32, #tpu.memory_space<vmem>>, vector<1x1x1x8x128xf32>
    %2052 = vector.shape_cast %2051 : vector<1x1x1x8x128xf32> to vector<8x128xf32>
    %2053 = arith.maximumf %2049, %2052 : vector<8x128xf32>
    %c14_2096 = arith.constant 14 : index
    %c3_2097 = arith.constant 3 : index
    %2054 = arith.index_cast %c0_i32 : i32 to index
    %c0_2098 = arith.constant 0 : index
    %c0_2099 = arith.constant 0 : index
    %2055 = vector.load %arg1[%c14_2096, %c3_2097, %2054, %c0_2098, %c0_2099] : memref<16x16x1x8x128xf32, #tpu.memory_space<vmem>>, vector<1x1x1x8x128xf32>
    %2056 = vector.shape_cast %2055 : vector<1x1x1x8x128xf32> to vector<8x128xf32>
    %2057 = arith.maximumf %2053, %2056 : vector<8x128xf32>
    %c15_2100 = arith.constant 15 : index
    %c1_2101 = arith.constant 1 : index
    %2058 = arith.index_cast %c0_i32 : i32 to index
    %c0_2102 = arith.constant 0 : index
    %c0_2103 = arith.constant 0 : index
    %2059 = vector.load %arg1[%c15_2100, %c1_2101, %2058, %c0_2102, %c0_2103] : memref<16x16x1x8x128xf32, #tpu.memory_space<vmem>>, vector<1x1x1x8x128xf32>
    %2060 = vector.shape_cast %2059 : vector<1x1x1x8x128xf32> to vector<8x128xf32>
    %2061 = arith.maximumf %2057, %2060 : vector<8x128xf32>
    %c15_2104 = arith.constant 15 : index
    %c2_2105 = arith.constant 2 : index
    %2062 = arith.index_cast %c0_i32 : i32 to index
    %c0_2106 = arith.constant 0 : index
    %c0_2107 = arith.constant 0 : index
    %2063 = vector.load %arg1[%c15_2104, %c2_2105, %2062, %c0_2106, %c0_2107] : memref<16x16x1x8x128xf32, #tpu.memory_space<vmem>>, vector<1x1x1x8x128xf32>
    %2064 = vector.shape_cast %2063 : vector<1x1x1x8x128xf32> to vector<8x128xf32>
    %2065 = arith.maximumf %2061, %2064 : vector<8x128xf32>
    %c15_2108 = arith.constant 15 : index
    %c3_2109 = arith.constant 3 : index
    %2066 = arith.index_cast %c0_i32 : i32 to index
    %c0_2110 = arith.constant 0 : index
    %c0_2111 = arith.constant 0 : index
    %2067 = vector.load %arg1[%c15_2108, %c3_2109, %2066, %c0_2110, %c0_2111] : memref<16x16x1x8x128xf32, #tpu.memory_space<vmem>>, vector<1x1x1x8x128xf32>
    %2068 = vector.shape_cast %2067 : vector<1x1x1x8x128xf32> to vector<8x128xf32>
    %2069 = arith.maximumf %2065, %2068 : vector<8x128xf32>
    %c7_2112 = arith.constant 7 : index
    %c1_2113 = arith.constant 1 : index
    %2070 = arith.index_cast %c0_i32 : i32 to index
    %c0_2114 = arith.constant 0 : index
    %c0_2115 = arith.constant 0 : index
    %2071 = vector.load %arg2[%c7_2112, %c1_2113, %2070, %c0_2114, %c0_2115] : memref<8x8x1x8x128xf32, #tpu.memory_space<vmem>>, vector<1x1x1x8x128xf32>
    %2072 = vector.shape_cast %2071 : vector<1x1x1x8x128xf32> to vector<8x128xf32>
    %2073 = vector.shape_cast %2069 : vector<8x128xf32> to vector<1x1x1x8x128xf32>
    tpu.vector_store %arg2[%c7_2112, %c1_2113, %2070, %c0_2114, %c0_2115], %2073 {strides = array<i32>} : memref<8x8x1x8x128xf32, #tpu.memory_space<vmem>>, vector<1x1x1x8x128xf32>,
    %c13_2116 = arith.constant 13 : index
    %c3_2117 = arith.constant 3 : index
    %2074 = arith.index_cast %c0_i32 : i32 to index
    %c0_2118 = arith.constant 0 : index
    %c0_2119 = arith.constant 0 : index
    %2075 = vector.load %arg1[%c13_2116, %c3_2117, %2074, %c0_2118, %c0_2119] : memref<16x16x1x8x128xf32, #tpu.memory_space<vmem>>, vector<1x1x1x8x128xf32>
    %2076 = vector.shape_cast %2075 : vector<1x1x1x8x128xf32> to vector<8x128xf32>
    %c13_2120 = arith.constant 13 : index
    %c4_2121 = arith.constant 4 : index
    %2077 = arith.index_cast %c0_i32 : i32 to index
    %c0_2122 = arith.constant 0 : index
    %c0_2123 = arith.constant 0 : index
    %2078 = vector.load %arg1[%c13_2120, %c4_2121, %2077, %c0_2122, %c0_2123] : memref<16x16x1x8x128xf32, #tpu.memory_space<vmem>>, vector<1x1x1x8x128xf32>
    %2079 = vector.shape_cast %2078 : vector<1x1x1x8x128xf32> to vector<8x128xf32>
    %2080 = arith.maximumf %2076, %2079 : vector<8x128xf32>
    %c13_2124 = arith.constant 13 : index
    %c5_2125 = arith.constant 5 : index
    %2081 = arith.index_cast %c0_i32 : i32 to index
    %c0_2126 = arith.constant 0 : index
    %c0_2127 = arith.constant 0 : index
    %2082 = vector.load %arg1[%c13_2124, %c5_2125, %2081, %c0_2126, %c0_2127] : memref<16x16x1x8x128xf32, #tpu.memory_space<vmem>>, vector<1x1x1x8x128xf32>
    %2083 = vector.shape_cast %2082 : vector<1x1x1x8x128xf32> to vector<8x128xf32>
    %2084 = arith.maximumf %2080, %2083 : vector<8x128xf32>
    %c14_2128 = arith.constant 14 : index
    %c3_2129 = arith.constant 3 : index
    %2085 = arith.index_cast %c0_i32 : i32 to index
    %c0_2130 = arith.constant 0 : index
    %c0_2131 = arith.constant 0 : index
    %2086 = vector.load %arg1[%c14_2128, %c3_2129, %2085, %c0_2130, %c0_2131] : memref<16x16x1x8x128xf32, #tpu.memory_space<vmem>>, vector<1x1x1x8x128xf32>
    %2087 = vector.shape_cast %2086 : vector<1x1x1x8x128xf32> to vector<8x128xf32>
    %2088 = arith.maximumf %2084, %2087 : vector<8x128xf32>
    %c14_2132 = arith.constant 14 : index
    %c4_2133 = arith.constant 4 : index
    %2089 = arith.index_cast %c0_i32 : i32 to index
    %c0_2134 = arith.constant 0 : index
    %c0_2135 = arith.constant 0 : index
    %2090 = vector.load %arg1[%c14_2132, %c4_2133, %2089, %c0_2134, %c0_2135] : memref<16x16x1x8x128xf32, #tpu.memory_space<vmem>>, vector<1x1x1x8x128xf32>
    %2091 = vector.shape_cast %2090 : vector<1x1x1x8x128xf32> to vector<8x128xf32>
    %2092 = arith.maximumf %2088, %2091 : vector<8x128xf32>
    %c14_2136 = arith.constant 14 : index
    %c5_2137 = arith.constant 5 : index
    %2093 = arith.index_cast %c0_i32 : i32 to index
    %c0_2138 = arith.constant 0 : index
    %c0_2139 = arith.constant 0 : index
    %2094 = vector.load %arg1[%c14_2136, %c5_2137, %2093, %c0_2138, %c0_2139] : memref<16x16x1x8x128xf32, #tpu.memory_space<vmem>>, vector<1x1x1x8x128xf32>
    %2095 = vector.shape_cast %2094 : vector<1x1x1x8x128xf32> to vector<8x128xf32>
    %2096 = arith.maximumf %2092, %2095 : vector<8x128xf32>
    %c15_2140 = arith.constant 15 : index
    %c3_2141 = arith.constant 3 : index
    %2097 = arith.index_cast %c0_i32 : i32 to index
    %c0_2142 = arith.constant 0 : index
    %c0_2143 = arith.constant 0 : index
    %2098 = vector.load %arg1[%c15_2140, %c3_2141, %2097, %c0_2142, %c0_2143] : memref<16x16x1x8x128xf32, #tpu.memory_space<vmem>>, vector<1x1x1x8x128xf32>
    %2099 = vector.shape_cast %2098 : vector<1x1x1x8x128xf32> to vector<8x128xf32>
    %2100 = arith.maximumf %2096, %2099 : vector<8x128xf32>
    %c15_2144 = arith.constant 15 : index
    %c4_2145 = arith.constant 4 : index
    %2101 = arith.index_cast %c0_i32 : i32 to index
    %c0_2146 = arith.constant 0 : index
    %c0_2147 = arith.constant 0 : index
    %2102 = vector.load %arg1[%c15_2144, %c4_2145, %2101, %c0_2146, %c0_2147] : memref<16x16x1x8x128xf32, #tpu.memory_space<vmem>>, vector<1x1x1x8x128xf32>
    %2103 = vector.shape_cast %2102 : vector<1x1x1x8x128xf32> to vector<8x128xf32>
    %2104 = arith.maximumf %2100, %2103 : vector<8x128xf32>
    %c15_2148 = arith.constant 15 : index
    %c5_2149 = arith.constant 5 : index
    %2105 = arith.index_cast %c0_i32 : i32 to index
    %c0_2150 = arith.constant 0 : index
    %c0_2151 = arith.constant 0 : index
    %2106 = vector.load %arg1[%c15_2148, %c5_2149, %2105, %c0_2150, %c0_2151] : memref<16x16x1x8x128xf32, #tpu.memory_space<vmem>>, vector<1x1x1x8x128xf32>
    %2107 = vector.shape_cast %2106 : vector<1x1x1x8x128xf32> to vector<8x128xf32>
    %2108 = arith.maximumf %2104, %2107 : vector<8x128xf32>
    %c7_2152 = arith.constant 7 : index
    %c2_2153 = arith.constant 2 : index
    %2109 = arith.index_cast %c0_i32 : i32 to index
    %c0_2154 = arith.constant 0 : index
    %c0_2155 = arith.constant 0 : index
    %2110 = vector.load %arg2[%c7_2152, %c2_2153, %2109, %c0_2154, %c0_2155] : memref<8x8x1x8x128xf32, #tpu.memory_space<vmem>>, vector<1x1x1x8x128xf32>
    %2111 = vector.shape_cast %2110 : vector<1x1x1x8x128xf32> to vector<8x128xf32>
    %2112 = vector.shape_cast %2108 : vector<8x128xf32> to vector<1x1x1x8x128xf32>
    tpu.vector_store %arg2[%c7_2152, %c2_2153, %2109, %c0_2154, %c0_2155], %2112 {strides = array<i32>} : memref<8x8x1x8x128xf32, #tpu.memory_space<vmem>>, vector<1x1x1x8x128xf32>,
    %c13_2156 = arith.constant 13 : index
    %c5_2157 = arith.constant 5 : index
    %2113 = arith.index_cast %c0_i32 : i32 to index
    %c0_2158 = arith.constant 0 : index
    %c0_2159 = arith.constant 0 : index
    %2114 = vector.load %arg1[%c13_2156, %c5_2157, %2113, %c0_2158, %c0_2159] : memref<16x16x1x8x128xf32, #tpu.memory_space<vmem>>, vector<1x1x1x8x128xf32>
    %2115 = vector.shape_cast %2114 : vector<1x1x1x8x128xf32> to vector<8x128xf32>
    %c13_2160 = arith.constant 13 : index
    %c6_2161 = arith.constant 6 : index
    %2116 = arith.index_cast %c0_i32 : i32 to index
    %c0_2162 = arith.constant 0 : index
    %c0_2163 = arith.constant 0 : index
    %2117 = vector.load %arg1[%c13_2160, %c6_2161, %2116, %c0_2162, %c0_2163] : memref<16x16x1x8x128xf32, #tpu.memory_space<vmem>>, vector<1x1x1x8x128xf32>
    %2118 = vector.shape_cast %2117 : vector<1x1x1x8x128xf32> to vector<8x128xf32>
    %2119 = arith.maximumf %2115, %2118 : vector<8x128xf32>
    %c13_2164 = arith.constant 13 : index
    %c7_2165 = arith.constant 7 : index
    %2120 = arith.index_cast %c0_i32 : i32 to index
    %c0_2166 = arith.constant 0 : index
    %c0_2167 = arith.constant 0 : index
    %2121 = vector.load %arg1[%c13_2164, %c7_2165, %2120, %c0_2166, %c0_2167] : memref<16x16x1x8x128xf32, #tpu.memory_space<vmem>>, vector<1x1x1x8x128xf32>
    %2122 = vector.shape_cast %2121 : vector<1x1x1x8x128xf32> to vector<8x128xf32>
    %2123 = arith.maximumf %2119, %2122 : vector<8x128xf32>
    %c14_2168 = arith.constant 14 : index
    %c5_2169 = arith.constant 5 : index
    %2124 = arith.index_cast %c0_i32 : i32 to index
    %c0_2170 = arith.constant 0 : index
    %c0_2171 = arith.constant 0 : index
    %2125 = vector.load %arg1[%c14_2168, %c5_2169, %2124, %c0_2170, %c0_2171] : memref<16x16x1x8x128xf32, #tpu.memory_space<vmem>>, vector<1x1x1x8x128xf32>
    %2126 = vector.shape_cast %2125 : vector<1x1x1x8x128xf32> to vector<8x128xf32>
    %2127 = arith.maximumf %2123, %2126 : vector<8x128xf32>
    %c14_2172 = arith.constant 14 : index
    %c6_2173 = arith.constant 6 : index
    %2128 = arith.index_cast %c0_i32 : i32 to index
    %c0_2174 = arith.constant 0 : index
    %c0_2175 = arith.constant 0 : index
    %2129 = vector.load %arg1[%c14_2172, %c6_2173, %2128, %c0_2174, %c0_2175] : memref<16x16x1x8x128xf32, #tpu.memory_space<vmem>>, vector<1x1x1x8x128xf32>
    %2130 = vector.shape_cast %2129 : vector<1x1x1x8x128xf32> to vector<8x128xf32>
    %2131 = arith.maximumf %2127, %2130 : vector<8x128xf32>
    %c14_2176 = arith.constant 14 : index
    %c7_2177 = arith.constant 7 : index
    %2132 = arith.index_cast %c0_i32 : i32 to index
    %c0_2178 = arith.constant 0 : index
    %c0_2179 = arith.constant 0 : index
    %2133 = vector.load %arg1[%c14_2176, %c7_2177, %2132, %c0_2178, %c0_2179] : memref<16x16x1x8x128xf32, #tpu.memory_space<vmem>>, vector<1x1x1x8x128xf32>
    %2134 = vector.shape_cast %2133 : vector<1x1x1x8x128xf32> to vector<8x128xf32>
    %2135 = arith.maximumf %2131, %2134 : vector<8x128xf32>
    %c15_2180 = arith.constant 15 : index
    %c5_2181 = arith.constant 5 : index
    %2136 = arith.index_cast %c0_i32 : i32 to index
    %c0_2182 = arith.constant 0 : index
    %c0_2183 = arith.constant 0 : index
    %2137 = vector.load %arg1[%c15_2180, %c5_2181, %2136, %c0_2182, %c0_2183] : memref<16x16x1x8x128xf32, #tpu.memory_space<vmem>>, vector<1x1x1x8x128xf32>
    %2138 = vector.shape_cast %2137 : vector<1x1x1x8x128xf32> to vector<8x128xf32>
    %2139 = arith.maximumf %2135, %2138 : vector<8x128xf32>
    %c15_2184 = arith.constant 15 : index
    %c6_2185 = arith.constant 6 : index
    %2140 = arith.index_cast %c0_i32 : i32 to index
    %c0_2186 = arith.constant 0 : index
    %c0_2187 = arith.constant 0 : index
    %2141 = vector.load %arg1[%c15_2184, %c6_2185, %2140, %c0_2186, %c0_2187] : memref<16x16x1x8x128xf32, #tpu.memory_space<vmem>>, vector<1x1x1x8x128xf32>
    %2142 = vector.shape_cast %2141 : vector<1x1x1x8x128xf32> to vector<8x128xf32>
    %2143 = arith.maximumf %2139, %2142 : vector<8x128xf32>
    %c15_2188 = arith.constant 15 : index
    %c7_2189 = arith.constant 7 : index
    %2144 = arith.index_cast %c0_i32 : i32 to index
    %c0_2190 = arith.constant 0 : index
    %c0_2191 = arith.constant 0 : index
    %2145 = vector.load %arg1[%c15_2188, %c7_2189, %2144, %c0_2190, %c0_2191] : memref<16x16x1x8x128xf32, #tpu.memory_space<vmem>>, vector<1x1x1x8x128xf32>
    %2146 = vector.shape_cast %2145 : vector<1x1x1x8x128xf32> to vector<8x128xf32>
    %2147 = arith.maximumf %2143, %2146 : vector<8x128xf32>
    %c7_2192 = arith.constant 7 : index
    %c3_2193 = arith.constant 3 : index
    %2148 = arith.index_cast %c0_i32 : i32 to index
    %c0_2194 = arith.constant 0 : index
    %c0_2195 = arith.constant 0 : index
    %2149 = vector.load %arg2[%c7_2192, %c3_2193, %2148, %c0_2194, %c0_2195] : memref<8x8x1x8x128xf32, #tpu.memory_space<vmem>>, vector<1x1x1x8x128xf32>
    %2150 = vector.shape_cast %2149 : vector<1x1x1x8x128xf32> to vector<8x128xf32>
    %2151 = vector.shape_cast %2147 : vector<8x128xf32> to vector<1x1x1x8x128xf32>
    tpu.vector_store %arg2[%c7_2192, %c3_2193, %2148, %c0_2194, %c0_2195], %2151 {strides = array<i32>} : memref<8x8x1x8x128xf32, #tpu.memory_space<vmem>>, vector<1x1x1x8x128xf32>,
    %c13_2196 = arith.constant 13 : index
    %c7_2197 = arith.constant 7 : index
    %2152 = arith.index_cast %c0_i32 : i32 to index
    %c0_2198 = arith.constant 0 : index
    %c0_2199 = arith.constant 0 : index
    %2153 = vector.load %arg1[%c13_2196, %c7_2197, %2152, %c0_2198, %c0_2199] : memref<16x16x1x8x128xf32, #tpu.memory_space<vmem>>, vector<1x1x1x8x128xf32>
    %2154 = vector.shape_cast %2153 : vector<1x1x1x8x128xf32> to vector<8x128xf32>
    %c13_2200 = arith.constant 13 : index
    %c8_2201 = arith.constant 8 : index
    %2155 = arith.index_cast %c0_i32 : i32 to index
    %c0_2202 = arith.constant 0 : index
    %c0_2203 = arith.constant 0 : index
    %2156 = vector.load %arg1[%c13_2200, %c8_2201, %2155, %c0_2202, %c0_2203] : memref<16x16x1x8x128xf32, #tpu.memory_space<vmem>>, vector<1x1x1x8x128xf32>
    %2157 = vector.shape_cast %2156 : vector<1x1x1x8x128xf32> to vector<8x128xf32>
    %2158 = arith.maximumf %2154, %2157 : vector<8x128xf32>
    %c13_2204 = arith.constant 13 : index
    %c9_2205 = arith.constant 9 : index
    %2159 = arith.index_cast %c0_i32 : i32 to index
    %c0_2206 = arith.constant 0 : index
    %c0_2207 = arith.constant 0 : index
    %2160 = vector.load %arg1[%c13_2204, %c9_2205, %2159, %c0_2206, %c0_2207] : memref<16x16x1x8x128xf32, #tpu.memory_space<vmem>>, vector<1x1x1x8x128xf32>
    %2161 = vector.shape_cast %2160 : vector<1x1x1x8x128xf32> to vector<8x128xf32>
    %2162 = arith.maximumf %2158, %2161 : vector<8x128xf32>
    %c14_2208 = arith.constant 14 : index
    %c7_2209 = arith.constant 7 : index
    %2163 = arith.index_cast %c0_i32 : i32 to index
    %c0_2210 = arith.constant 0 : index
    %c0_2211 = arith.constant 0 : index
    %2164 = vector.load %arg1[%c14_2208, %c7_2209, %2163, %c0_2210, %c0_2211] : memref<16x16x1x8x128xf32, #tpu.memory_space<vmem>>, vector<1x1x1x8x128xf32>
    %2165 = vector.shape_cast %2164 : vector<1x1x1x8x128xf32> to vector<8x128xf32>
    %2166 = arith.maximumf %2162, %2165 : vector<8x128xf32>
    %c14_2212 = arith.constant 14 : index
    %c8_2213 = arith.constant 8 : index
    %2167 = arith.index_cast %c0_i32 : i32 to index
    %c0_2214 = arith.constant 0 : index
    %c0_2215 = arith.constant 0 : index
    %2168 = vector.load %arg1[%c14_2212, %c8_2213, %2167, %c0_2214, %c0_2215] : memref<16x16x1x8x128xf32, #tpu.memory_space<vmem>>, vector<1x1x1x8x128xf32>
    %2169 = vector.shape_cast %2168 : vector<1x1x1x8x128xf32> to vector<8x128xf32>
    %2170 = arith.maximumf %2166, %2169 : vector<8x128xf32>
    %c14_2216 = arith.constant 14 : index
    %c9_2217 = arith.constant 9 : index
    %2171 = arith.index_cast %c0_i32 : i32 to index
    %c0_2218 = arith.constant 0 : index
    %c0_2219 = arith.constant 0 : index
    %2172 = vector.load %arg1[%c14_2216, %c9_2217, %2171, %c0_2218, %c0_2219] : memref<16x16x1x8x128xf32, #tpu.memory_space<vmem>>, vector<1x1x1x8x128xf32>
    %2173 = vector.shape_cast %2172 : vector<1x1x1x8x128xf32> to vector<8x128xf32>
    %2174 = arith.maximumf %2170, %2173 : vector<8x128xf32>
    %c15_2220 = arith.constant 15 : index
    %c7_2221 = arith.constant 7 : index
    %2175 = arith.index_cast %c0_i32 : i32 to index
    %c0_2222 = arith.constant 0 : index
    %c0_2223 = arith.constant 0 : index
    %2176 = vector.load %arg1[%c15_2220, %c7_2221, %2175, %c0_2222, %c0_2223] : memref<16x16x1x8x128xf32, #tpu.memory_space<vmem>>, vector<1x1x1x8x128xf32>
    %2177 = vector.shape_cast %2176 : vector<1x1x1x8x128xf32> to vector<8x128xf32>
    %2178 = arith.maximumf %2174, %2177 : vector<8x128xf32>
    %c15_2224 = arith.constant 15 : index
    %c8_2225 = arith.constant 8 : index
    %2179 = arith.index_cast %c0_i32 : i32 to index
    %c0_2226 = arith.constant 0 : index
    %c0_2227 = arith.constant 0 : index
    %2180 = vector.load %arg1[%c15_2224, %c8_2225, %2179, %c0_2226, %c0_2227] : memref<16x16x1x8x128xf32, #tpu.memory_space<vmem>>, vector<1x1x1x8x128xf32>
    %2181 = vector.shape_cast %2180 : vector<1x1x1x8x128xf32> to vector<8x128xf32>
    %2182 = arith.maximumf %2178, %2181 : vector<8x128xf32>
    %c15_2228 = arith.constant 15 : index
    %c9_2229 = arith.constant 9 : index
    %2183 = arith.index_cast %c0_i32 : i32 to index
    %c0_2230 = arith.constant 0 : index
    %c0_2231 = arith.constant 0 : index
    %2184 = vector.load %arg1[%c15_2228, %c9_2229, %2183, %c0_2230, %c0_2231] : memref<16x16x1x8x128xf32, #tpu.memory_space<vmem>>, vector<1x1x1x8x128xf32>
    %2185 = vector.shape_cast %2184 : vector<1x1x1x8x128xf32> to vector<8x128xf32>
    %2186 = arith.maximumf %2182, %2185 : vector<8x128xf32>
    %c7_2232 = arith.constant 7 : index
    %c4_2233 = arith.constant 4 : index
    %2187 = arith.index_cast %c0_i32 : i32 to index
    %c0_2234 = arith.constant 0 : index
    %c0_2235 = arith.constant 0 : index
    %2188 = vector.load %arg2[%c7_2232, %c4_2233, %2187, %c0_2234, %c0_2235] : memref<8x8x1x8x128xf32, #tpu.memory_space<vmem>>, vector<1x1x1x8x128xf32>
    %2189 = vector.shape_cast %2188 : vector<1x1x1x8x128xf32> to vector<8x128xf32>
    %2190 = vector.shape_cast %2186 : vector<8x128xf32> to vector<1x1x1x8x128xf32>
    tpu.vector_store %arg2[%c7_2232, %c4_2233, %2187, %c0_2234, %c0_2235], %2190 {strides = array<i32>} : memref<8x8x1x8x128xf32, #tpu.memory_space<vmem>>, vector<1x1x1x8x128xf32>,
    %c13_2236 = arith.constant 13 : index
    %c9_2237 = arith.constant 9 : index
    %2191 = arith.index_cast %c0_i32 : i32 to index
    %c0_2238 = arith.constant 0 : index
    %c0_2239 = arith.constant 0 : index
    %2192 = vector.load %arg1[%c13_2236, %c9_2237, %2191, %c0_2238, %c0_2239] : memref<16x16x1x8x128xf32, #tpu.memory_space<vmem>>, vector<1x1x1x8x128xf32>
    %2193 = vector.shape_cast %2192 : vector<1x1x1x8x128xf32> to vector<8x128xf32>
    %c13_2240 = arith.constant 13 : index
    %c10_2241 = arith.constant 10 : index
    %2194 = arith.index_cast %c0_i32 : i32 to index
    %c0_2242 = arith.constant 0 : index
    %c0_2243 = arith.constant 0 : index
    %2195 = vector.load %arg1[%c13_2240, %c10_2241, %2194, %c0_2242, %c0_2243] : memref<16x16x1x8x128xf32, #tpu.memory_space<vmem>>, vector<1x1x1x8x128xf32>
    %2196 = vector.shape_cast %2195 : vector<1x1x1x8x128xf32> to vector<8x128xf32>
    %2197 = arith.maximumf %2193, %2196 : vector<8x128xf32>
    %c13_2244 = arith.constant 13 : index
    %c11_2245 = arith.constant 11 : index
    %2198 = arith.index_cast %c0_i32 : i32 to index
    %c0_2246 = arith.constant 0 : index
    %c0_2247 = arith.constant 0 : index
    %2199 = vector.load %arg1[%c13_2244, %c11_2245, %2198, %c0_2246, %c0_2247] : memref<16x16x1x8x128xf32, #tpu.memory_space<vmem>>, vector<1x1x1x8x128xf32>
    %2200 = vector.shape_cast %2199 : vector<1x1x1x8x128xf32> to vector<8x128xf32>
    %2201 = arith.maximumf %2197, %2200 : vector<8x128xf32>
    %c14_2248 = arith.constant 14 : index
    %c9_2249 = arith.constant 9 : index
    %2202 = arith.index_cast %c0_i32 : i32 to index
    %c0_2250 = arith.constant 0 : index
    %c0_2251 = arith.constant 0 : index
    %2203 = vector.load %arg1[%c14_2248, %c9_2249, %2202, %c0_2250, %c0_2251] : memref<16x16x1x8x128xf32, #tpu.memory_space<vmem>>, vector<1x1x1x8x128xf32>
    %2204 = vector.shape_cast %2203 : vector<1x1x1x8x128xf32> to vector<8x128xf32>
    %2205 = arith.maximumf %2201, %2204 : vector<8x128xf32>
    %c14_2252 = arith.constant 14 : index
    %c10_2253 = arith.constant 10 : index
    %2206 = arith.index_cast %c0_i32 : i32 to index
    %c0_2254 = arith.constant 0 : index
    %c0_2255 = arith.constant 0 : index
    %2207 = vector.load %arg1[%c14_2252, %c10_2253, %2206, %c0_2254, %c0_2255] : memref<16x16x1x8x128xf32, #tpu.memory_space<vmem>>, vector<1x1x1x8x128xf32>
    %2208 = vector.shape_cast %2207 : vector<1x1x1x8x128xf32> to vector<8x128xf32>
    %2209 = arith.maximumf %2205, %2208 : vector<8x128xf32>
    %c14_2256 = arith.constant 14 : index
    %c11_2257 = arith.constant 11 : index
    %2210 = arith.index_cast %c0_i32 : i32 to index
    %c0_2258 = arith.constant 0 : index
    %c0_2259 = arith.constant 0 : index
    %2211 = vector.load %arg1[%c14_2256, %c11_2257, %2210, %c0_2258, %c0_2259] : memref<16x16x1x8x128xf32, #tpu.memory_space<vmem>>, vector<1x1x1x8x128xf32>
    %2212 = vector.shape_cast %2211 : vector<1x1x1x8x128xf32> to vector<8x128xf32>
    %2213 = arith.maximumf %2209, %2212 : vector<8x128xf32>
    %c15_2260 = arith.constant 15 : index
    %c9_2261 = arith.constant 9 : index
    %2214 = arith.index_cast %c0_i32 : i32 to index
    %c0_2262 = arith.constant 0 : index
    %c0_2263 = arith.constant 0 : index
    %2215 = vector.load %arg1[%c15_2260, %c9_2261, %2214, %c0_2262, %c0_2263] : memref<16x16x1x8x128xf32, #tpu.memory_space<vmem>>, vector<1x1x1x8x128xf32>
    %2216 = vector.shape_cast %2215 : vector<1x1x1x8x128xf32> to vector<8x128xf32>
    %2217 = arith.maximumf %2213, %2216 : vector<8x128xf32>
    %c15_2264 = arith.constant 15 : index
    %c10_2265 = arith.constant 10 : index
    %2218 = arith.index_cast %c0_i32 : i32 to index
    %c0_2266 = arith.constant 0 : index
    %c0_2267 = arith.constant 0 : index
    %2219 = vector.load %arg1[%c15_2264, %c10_2265, %2218, %c0_2266, %c0_2267] : memref<16x16x1x8x128xf32, #tpu.memory_space<vmem>>, vector<1x1x1x8x128xf32>
    %2220 = vector.shape_cast %2219 : vector<1x1x1x8x128xf32> to vector<8x128xf32>
    %2221 = arith.maximumf %2217, %2220 : vector<8x128xf32>
    %c15_2268 = arith.constant 15 : index
    %c11_2269 = arith.constant 11 : index
    %2222 = arith.index_cast %c0_i32 : i32 to index
    %c0_2270 = arith.constant 0 : index
    %c0_2271 = arith.constant 0 : index
    %2223 = vector.load %arg1[%c15_2268, %c11_2269, %2222, %c0_2270, %c0_2271] : memref<16x16x1x8x128xf32, #tpu.memory_space<vmem>>, vector<1x1x1x8x128xf32>
    %2224 = vector.shape_cast %2223 : vector<1x1x1x8x128xf32> to vector<8x128xf32>
    %2225 = arith.maximumf %2221, %2224 : vector<8x128xf32>
    %c7_2272 = arith.constant 7 : index
    %c5_2273 = arith.constant 5 : index
    %2226 = arith.index_cast %c0_i32 : i32 to index
    %c0_2274 = arith.constant 0 : index
    %c0_2275 = arith.constant 0 : index
    %2227 = vector.load %arg2[%c7_2272, %c5_2273, %2226, %c0_2274, %c0_2275] : memref<8x8x1x8x128xf32, #tpu.memory_space<vmem>>, vector<1x1x1x8x128xf32>
    %2228 = vector.shape_cast %2227 : vector<1x1x1x8x128xf32> to vector<8x128xf32>
    %2229 = vector.shape_cast %2225 : vector<8x128xf32> to vector<1x1x1x8x128xf32>
    tpu.vector_store %arg2[%c7_2272, %c5_2273, %2226, %c0_2274, %c0_2275], %2229 {strides = array<i32>} : memref<8x8x1x8x128xf32, #tpu.memory_space<vmem>>, vector<1x1x1x8x128xf32>,
    %c13_2276 = arith.constant 13 : index
    %c11_2277 = arith.constant 11 : index
    %2230 = arith.index_cast %c0_i32 : i32 to index
    %c0_2278 = arith.constant 0 : index
    %c0_2279 = arith.constant 0 : index
    %2231 = vector.load %arg1[%c13_2276, %c11_2277, %2230, %c0_2278, %c0_2279] : memref<16x16x1x8x128xf32, #tpu.memory_space<vmem>>, vector<1x1x1x8x128xf32>
    %2232 = vector.shape_cast %2231 : vector<1x1x1x8x128xf32> to vector<8x128xf32>
    %c13_2280 = arith.constant 13 : index
    %c12_2281 = arith.constant 12 : index
    %2233 = arith.index_cast %c0_i32 : i32 to index
    %c0_2282 = arith.constant 0 : index
    %c0_2283 = arith.constant 0 : index
    %2234 = vector.load %arg1[%c13_2280, %c12_2281, %2233, %c0_2282, %c0_2283] : memref<16x16x1x8x128xf32, #tpu.memory_space<vmem>>, vector<1x1x1x8x128xf32>
    %2235 = vector.shape_cast %2234 : vector<1x1x1x8x128xf32> to vector<8x128xf32>
    %2236 = arith.maximumf %2232, %2235 : vector<8x128xf32>
    %c13_2284 = arith.constant 13 : index
    %c13_2285 = arith.constant 13 : index
    %2237 = arith.index_cast %c0_i32 : i32 to index
    %c0_2286 = arith.constant 0 : index
    %c0_2287 = arith.constant 0 : index
    %2238 = vector.load %arg1[%c13_2284, %c13_2285, %2237, %c0_2286, %c0_2287] : memref<16x16x1x8x128xf32, #tpu.memory_space<vmem>>, vector<1x1x1x8x128xf32>
    %2239 = vector.shape_cast %2238 : vector<1x1x1x8x128xf32> to vector<8x128xf32>
    %2240 = arith.maximumf %2236, %2239 : vector<8x128xf32>
    %c14_2288 = arith.constant 14 : index
    %c11_2289 = arith.constant 11 : index
    %2241 = arith.index_cast %c0_i32 : i32 to index
    %c0_2290 = arith.constant 0 : index
    %c0_2291 = arith.constant 0 : index
    %2242 = vector.load %arg1[%c14_2288, %c11_2289, %2241, %c0_2290, %c0_2291] : memref<16x16x1x8x128xf32, #tpu.memory_space<vmem>>, vector<1x1x1x8x128xf32>
    %2243 = vector.shape_cast %2242 : vector<1x1x1x8x128xf32> to vector<8x128xf32>
    %2244 = arith.maximumf %2240, %2243 : vector<8x128xf32>
    %c14_2292 = arith.constant 14 : index
    %c12_2293 = arith.constant 12 : index
    %2245 = arith.index_cast %c0_i32 : i32 to index
    %c0_2294 = arith.constant 0 : index
    %c0_2295 = arith.constant 0 : index
    %2246 = vector.load %arg1[%c14_2292, %c12_2293, %2245, %c0_2294, %c0_2295] : memref<16x16x1x8x128xf32, #tpu.memory_space<vmem>>, vector<1x1x1x8x128xf32>
    %2247 = vector.shape_cast %2246 : vector<1x1x1x8x128xf32> to vector<8x128xf32>
    %2248 = arith.maximumf %2244, %2247 : vector<8x128xf32>
    %c14_2296 = arith.constant 14 : index
    %c13_2297 = arith.constant 13 : index
    %2249 = arith.index_cast %c0_i32 : i32 to index
    %c0_2298 = arith.constant 0 : index
    %c0_2299 = arith.constant 0 : index
    %2250 = vector.load %arg1[%c14_2296, %c13_2297, %2249, %c0_2298, %c0_2299] : memref<16x16x1x8x128xf32, #tpu.memory_space<vmem>>, vector<1x1x1x8x128xf32>
    %2251 = vector.shape_cast %2250 : vector<1x1x1x8x128xf32> to vector<8x128xf32>
    %2252 = arith.maximumf %2248, %2251 : vector<8x128xf32>
    %c15_2300 = arith.constant 15 : index
    %c11_2301 = arith.constant 11 : index
    %2253 = arith.index_cast %c0_i32 : i32 to index
    %c0_2302 = arith.constant 0 : index
    %c0_2303 = arith.constant 0 : index
    %2254 = vector.load %arg1[%c15_2300, %c11_2301, %2253, %c0_2302, %c0_2303] : memref<16x16x1x8x128xf32, #tpu.memory_space<vmem>>, vector<1x1x1x8x128xf32>
    %2255 = vector.shape_cast %2254 : vector<1x1x1x8x128xf32> to vector<8x128xf32>
    %2256 = arith.maximumf %2252, %2255 : vector<8x128xf32>
    %c15_2304 = arith.constant 15 : index
    %c12_2305 = arith.constant 12 : index
    %2257 = arith.index_cast %c0_i32 : i32 to index
    %c0_2306 = arith.constant 0 : index
    %c0_2307 = arith.constant 0 : index
    %2258 = vector.load %arg1[%c15_2304, %c12_2305, %2257, %c0_2306, %c0_2307] : memref<16x16x1x8x128xf32, #tpu.memory_space<vmem>>, vector<1x1x1x8x128xf32>
    %2259 = vector.shape_cast %2258 : vector<1x1x1x8x128xf32> to vector<8x128xf32>
    %2260 = arith.maximumf %2256, %2259 : vector<8x128xf32>
    %c15_2308 = arith.constant 15 : index
    %c13_2309 = arith.constant 13 : index
    %2261 = arith.index_cast %c0_i32 : i32 to index
    %c0_2310 = arith.constant 0 : index
    %c0_2311 = arith.constant 0 : index
    %2262 = vector.load %arg1[%c15_2308, %c13_2309, %2261, %c0_2310, %c0_2311] : memref<16x16x1x8x128xf32, #tpu.memory_space<vmem>>, vector<1x1x1x8x128xf32>
    %2263 = vector.shape_cast %2262 : vector<1x1x1x8x128xf32> to vector<8x128xf32>
    %2264 = arith.maximumf %2260, %2263 : vector<8x128xf32>
    %c7_2312 = arith.constant 7 : index
    %c6_2313 = arith.constant 6 : index
    %2265 = arith.index_cast %c0_i32 : i32 to index
    %c0_2314 = arith.constant 0 : index
    %c0_2315 = arith.constant 0 : index
    %2266 = vector.load %arg2[%c7_2312, %c6_2313, %2265, %c0_2314, %c0_2315] : memref<8x8x1x8x128xf32, #tpu.memory_space<vmem>>, vector<1x1x1x8x128xf32>
    %2267 = vector.shape_cast %2266 : vector<1x1x1x8x128xf32> to vector<8x128xf32>
    %2268 = vector.shape_cast %2264 : vector<8x128xf32> to vector<1x1x1x8x128xf32>
    tpu.vector_store %arg2[%c7_2312, %c6_2313, %2265, %c0_2314, %c0_2315], %2268 {strides = array<i32>} : memref<8x8x1x8x128xf32, #tpu.memory_space<vmem>>, vector<1x1x1x8x128xf32>,
    %c13_2316 = arith.constant 13 : index
    %c13_2317 = arith.constant 13 : index
    %2269 = arith.index_cast %c0_i32 : i32 to index
    %c0_2318 = arith.constant 0 : index
    %c0_2319 = arith.constant 0 : index
    %2270 = vector.load %arg1[%c13_2316, %c13_2317, %2269, %c0_2318, %c0_2319] : memref<16x16x1x8x128xf32, #tpu.memory_space<vmem>>, vector<1x1x1x8x128xf32>
    %2271 = vector.shape_cast %2270 : vector<1x1x1x8x128xf32> to vector<8x128xf32>
    %c13_2320 = arith.constant 13 : index
    %c14_2321 = arith.constant 14 : index
    %2272 = arith.index_cast %c0_i32 : i32 to index
    %c0_2322 = arith.constant 0 : index
    %c0_2323 = arith.constant 0 : index
    %2273 = vector.load %arg1[%c13_2320, %c14_2321, %2272, %c0_2322, %c0_2323] : memref<16x16x1x8x128xf32, #tpu.memory_space<vmem>>, vector<1x1x1x8x128xf32>
    %2274 = vector.shape_cast %2273 : vector<1x1x1x8x128xf32> to vector<8x128xf32>
    %2275 = arith.maximumf %2271, %2274 : vector<8x128xf32>
    %c13_2324 = arith.constant 13 : index
    %c15_2325 = arith.constant 15 : index
    %2276 = arith.index_cast %c0_i32 : i32 to index
    %c0_2326 = arith.constant 0 : index
    %c0_2327 = arith.constant 0 : index
    %2277 = vector.load %arg1[%c13_2324, %c15_2325, %2276, %c0_2326, %c0_2327] : memref<16x16x1x8x128xf32, #tpu.memory_space<vmem>>, vector<1x1x1x8x128xf32>
    %2278 = vector.shape_cast %2277 : vector<1x1x1x8x128xf32> to vector<8x128xf32>
    %2279 = arith.maximumf %2275, %2278 : vector<8x128xf32>
    %c14_2328 = arith.constant 14 : index
    %c13_2329 = arith.constant 13 : index
    %2280 = arith.index_cast %c0_i32 : i32 to index
    %c0_2330 = arith.constant 0 : index
    %c0_2331 = arith.constant 0 : index
    %2281 = vector.load %arg1[%c14_2328, %c13_2329, %2280, %c0_2330, %c0_2331] : memref<16x16x1x8x128xf32, #tpu.memory_space<vmem>>, vector<1x1x1x8x128xf32>
    %2282 = vector.shape_cast %2281 : vector<1x1x1x8x128xf32> to vector<8x128xf32>
    %2283 = arith.maximumf %2279, %2282 : vector<8x128xf32>
    %c14_2332 = arith.constant 14 : index
    %c14_2333 = arith.constant 14 : index
    %2284 = arith.index_cast %c0_i32 : i32 to index
    %c0_2334 = arith.constant 0 : index
    %c0_2335 = arith.constant 0 : index
    %2285 = vector.load %arg1[%c14_2332, %c14_2333, %2284, %c0_2334, %c0_2335] : memref<16x16x1x8x128xf32, #tpu.memory_space<vmem>>, vector<1x1x1x8x128xf32>
    %2286 = vector.shape_cast %2285 : vector<1x1x1x8x128xf32> to vector<8x128xf32>
    %2287 = arith.maximumf %2283, %2286 : vector<8x128xf32>
    %c14_2336 = arith.constant 14 : index
    %c15_2337 = arith.constant 15 : index
    %2288 = arith.index_cast %c0_i32 : i32 to index
    %c0_2338 = arith.constant 0 : index
    %c0_2339 = arith.constant 0 : index
    %2289 = vector.load %arg1[%c14_2336, %c15_2337, %2288, %c0_2338, %c0_2339] : memref<16x16x1x8x128xf32, #tpu.memory_space<vmem>>, vector<1x1x1x8x128xf32>
    %2290 = vector.shape_cast %2289 : vector<1x1x1x8x128xf32> to vector<8x128xf32>
    %2291 = arith.maximumf %2287, %2290 : vector<8x128xf32>
    %c15_2340 = arith.constant 15 : index
    %c13_2341 = arith.constant 13 : index
    %2292 = arith.index_cast %c0_i32 : i32 to index
    %c0_2342 = arith.constant 0 : index
    %c0_2343 = arith.constant 0 : index
    %2293 = vector.load %arg1[%c15_2340, %c13_2341, %2292, %c0_2342, %c0_2343] : memref<16x16x1x8x128xf32, #tpu.memory_space<vmem>>, vector<1x1x1x8x128xf32>
    %2294 = vector.shape_cast %2293 : vector<1x1x1x8x128xf32> to vector<8x128xf32>
    %2295 = arith.maximumf %2291, %2294 : vector<8x128xf32>
    %c15_2344 = arith.constant 15 : index
    %c14_2345 = arith.constant 14 : index
    %2296 = arith.index_cast %c0_i32 : i32 to index
    %c0_2346 = arith.constant 0 : index
    %c0_2347 = arith.constant 0 : index
    %2297 = vector.load %arg1[%c15_2344, %c14_2345, %2296, %c0_2346, %c0_2347] : memref<16x16x1x8x128xf32, #tpu.memory_space<vmem>>, vector<1x1x1x8x128xf32>
    %2298 = vector.shape_cast %2297 : vector<1x1x1x8x128xf32> to vector<8x128xf32>
    %2299 = arith.maximumf %2295, %2298 : vector<8x128xf32>
    %c15_2348 = arith.constant 15 : index
    %c15_2349 = arith.constant 15 : index
    %2300 = arith.index_cast %c0_i32 : i32 to index
    %c0_2350 = arith.constant 0 : index
    %c0_2351 = arith.constant 0 : index
    %2301 = vector.load %arg1[%c15_2348, %c15_2349, %2300, %c0_2350, %c0_2351] : memref<16x16x1x8x128xf32, #tpu.memory_space<vmem>>, vector<1x1x1x8x128xf32>
    %2302 = vector.shape_cast %2301 : vector<1x1x1x8x128xf32> to vector<8x128xf32>
    %2303 = arith.maximumf %2299, %2302 : vector<8x128xf32>
    %c7_2352 = arith.constant 7 : index
    %c7_2353 = arith.constant 7 : index
    %2304 = arith.index_cast %c0_i32 : i32 to index
    %c0_2354 = arith.constant 0 : index
    %c0_2355 = arith.constant 0 : index
    %2305 = vector.load %arg2[%c7_2352, %c7_2353, %2304, %c0_2354, %c0_2355] : memref<8x8x1x8x128xf32, #tpu.memory_space<vmem>>, vector<1x1x1x8x128xf32>
    %2306 = vector.shape_cast %2305 : vector<1x1x1x8x128xf32> to vector<8x128xf32>
    %2307 = vector.shape_cast %2303 : vector<8x128xf32> to vector<1x1x1x8x128xf32>
    tpu.vector_store %arg2[%c7_2352, %c7_2353, %2304, %c0_2354, %c0_2355], %2307 {strides = array<i32>} : memref<8x8x1x8x128xf32, #tpu.memory_space<vmem>>, vector<1x1x1x8x128xf32>,
    %c1_i32 = arith.constant 1 : i32
    return
  }
  func.func @transform_0(%arg0: i32) -> (i32, i32, i32, i32, i32) {
    %c0_i32 = arith.constant 0 : i32
    %c0_i32_0 = arith.constant 0 : i32
    %c0_i32_1 = arith.constant 0 : i32
    %c0_i32_2 = arith.constant 0 : i32
    %c0_i32_3 = arith.constant 0 : i32
    return %c0_i32, %c0_i32_0, %arg0, %c0_i32_1, %c0_i32_2 : i32, i32, i32, i32, i32
  }
  func.func @transform_1(%arg0: i32) -> (i32, i32, i32, i32, i32) {
    %c0_i32 = arith.constant 0 : i32
    %c0_i32_0 = arith.constant 0 : i32
    %c0_i32_1 = arith.constant 0 : i32
    %c0_i32_2 = arith.constant 0 : i32
    %c0_i32_3 = arith.constant 0 : i32
    return %c0_i32, %c0_i32_0, %arg0, %c0_i32_1, %c0_i32_2 : i32, i32, i32, i32, i32
  }
}

</mosaic_0001>

<llo_original>
// kernel: tpu_custom_call.1
$region0: #{tpu_custom_call.1}
  #allocation0 [shape = 'u32[]', space=smem, size = 0x4, offset = 0x4, fixed_abs, tag = 'smem constant byte address 0x4 - core index']
  #allocation1 [shape = 'u32[144,128]{1,0:T(1,128)}', space=vmem, size = 0x12000, scoped, tag = 'internal scratch']
  %s0 = inlined_call_operand.hbm [shape: f32[16,16,1,8,128], index: 0, kind: input, shape index: {}]
  %s1 = inlined_call_operand.hbm [shape: f32[8,8,1,8,128], index: 1, kind: output, shape index: {}]
  %s2 = sld [smem:[#allocation0]]
  $region18: #{tpu_custom_call.1} parent=0
    _
  %s4 = ssub.s32 1, %s2
  %s5 = scalar_select 0, %s4, %s2
  $region1: #{tpu_custom_call.1} parent=0
    #allocation2 [shape = 'u8[1048576]{0}', space=vmem, size = 0x100000, scoped, tag = 'input window, operand 0, single buffered']
    #allocation3 [shape = 's32[1]{0}', space=sflag, size = 0x4, scoped, tag = 'scoped memory for tpu_custom_call.1']
    #allocation4 [shape = 's32[1]{0}', space=sflag, size = 0x4, scoped, tag = 'scoped memory for tpu_custom_call.1']
    #allocation5 [shape = 'u8[262144]{0}', space=vmem, size = 0x40000, scoped, tag = 'output window, operand 0, single buffered']
    %6 = vsyncpa [#allocation3], 0
    %7 = vsyncpa [#allocation4], 0
    // Predicated region
    $region2: #{tpu_custom_call.1} parent=1 // pred_check
      _
    $region3: #{tpu_custom_call.1} parent=1 // pred_check_branch
      %9 = sbr.rel (0) target = $region5
    $region4: #{tpu_custom_call.1} parent=1 // pred_region
      %s11 = ssub.s32 32768, 32768
      %12 = vsyncadd [#allocation3], %s11
      %s13 = sshll.u32 [#allocation2], 4
      %s14 = int_to_ptr.vmem [resolvable:$true] %s13
      %19 = dma.hbm_to_vmem [thread:$0]  %s0, 32768, %s14, [#allocation3], 128, 128, 8
    $region5: #{tpu_custom_call.1} parent=1 // pred_fallthru
      _
    // Predicated region
    $region6: #{tpu_custom_call.1} parent=1 // pred_check
      _
    $region7: #{tpu_custom_call.1} parent=1 // pred_check_branch
      %21 = sbr.rel (0) target = $region9
    $region8: #{tpu_custom_call.1} parent=1 // pred_region
      %22 = dma.done [#allocation3], 32768
    $region9: #{tpu_custom_call.1} parent=1 // pred_fallthru
      _
    %v23 = vld [vmem:[#allocation2] sm:$0xff]
    %s24 = scalar_lea.vmem [#allocation2], 8
    %v25 = vld [vmem:[%s24] sm:$0xff]
    %v26 = vmax.f32 %v23, %v25
    %s27 = scalar_lea.vmem [#allocation2], 128
    %v28 = vld [vmem:[%s27] sm:$0xff]
    %v29 = vmax.f32 %v26, %v28
    %s30 = scalar_lea.vmem [#allocation2], 136
    %v31 = vld [vmem:[%s30] sm:$0xff]
    %v32 = vmax.f32 %v29, %v31
    %33 = vst [vmem:[#allocation5] sm:$0xff] %v32
    %v34 = vld [vmem:[%s24] sm:$0xff]
    %s35 = scalar_lea.vmem [#allocation2], 16
    %v36 = vld [vmem:[%s35] sm:$0xff]
    %v37 = vmax.f32 %v34, %v36
    %s38 = scalar_lea.vmem [#allocation2], 24
    %v39 = vld [vmem:[%s38] sm:$0xff]
    %v40 = vmax.f32 %v37, %v39
    %v41 = vld [vmem:[%s30] sm:$0xff]
    %v42 = vmax.f32 %v40, %v41
    %s43 = scalar_lea.vmem [#allocation2], 144
    %v44 = vld [vmem:[%s43] sm:$0xff]
    %v45 = vmax.f32 %v42, %v44
    %s46 = scalar_lea.vmem [#allocation2], 152
    %v47 = vld [vmem:[%s46] sm:$0xff]
    %v48 = vmax.f32 %v45, %v47
    %s49 = scalar_lea.vmem [#allocation5], 8
    %50 = vst [vmem:[%s49] sm:$0xff] %v48
    %v51 = vld [vmem:[%s38] sm:$0xff]
    %s52 = scalar_lea.vmem [#allocation2], 32
    %v53 = vld [vmem:[%s52] sm:$0xff]
    %v54 = vmax.f32 %v51, %v53
    %s55 = scalar_lea.vmem [#allocation2], 40
    %v56 = vld [vmem:[%s55] sm:$0xff]
    %v57 = vmax.f32 %v54, %v56
    %v58 = vld [vmem:[%s46] sm:$0xff]
    %v59 = vmax.f32 %v57, %v58
    %s60 = scalar_lea.vmem [#allocation2], 160
    %v61 = vld [vmem:[%s60] sm:$0xff]
    %v62 = vmax.f32 %v59, %v61
    %s63 = scalar_lea.vmem [#allocation2], 168
    %v64 = vld [vmem:[%s63] sm:$0xff]
    %v65 = vmax.f32 %v62, %v64
    %s66 = scalar_lea.vmem [#allocation5], 16
    %67 = vst [vmem:[%s66] sm:$0xff] %v65
    %v68 = vld [vmem:[%s55] sm:$0xff]
    %s69 = scalar_lea.vmem [#allocation2], 48
    %v70 = vld [vmem:[%s69] sm:$0xff]
    %v71 = vmax.f32 %v68, %v70
    %s72 = scalar_lea.vmem [#allocation2], 56
    %v73 = vld [vmem:[%s72] sm:$0xff]
    %v74 = vmax.f32 %v71, %v73
    %v75 = vld [vmem:[%s63] sm:$0xff]
    %v76 = vmax.f32 %v74, %v75
    %s77 = scalar_lea.vmem [#allocation2], 176
    %v78 = vld [vmem:[%s77] sm:$0xff]
    %v79 = vmax.f32 %v76, %v78
    %s80 = scalar_lea.vmem [#allocation2], 184
    %v81 = vld [vmem:[%s80] sm:$0xff]
    %v82 = vmax.f32 %v79, %v81
    %s83 = scalar_lea.vmem [#allocation5], 24
    %84 = vst [vmem:[%s83] sm:$0xff] %v82
    %v85 = vld [vmem:[%s72] sm:$0xff]
    %s86 = scalar_lea.vmem [#allocation2], 64
    %v87 = vld [vmem:[%s86] sm:$0xff]
    %v88 = vmax.f32 %v85, %v87
    %s89 = scalar_lea.vmem [#allocation2], 72
    %v90 = vld [vmem:[%s89] sm:$0xff]
    %v91 = vmax.f32 %v88, %v90
    %v92 = vld [vmem:[%s80] sm:$0xff]
    %v93 = vmax.f32 %v91, %v92
    %s94 = scalar_lea.vmem [#allocation2], 192
    %v95 = vld [vmem:[%s94] sm:$0xff]
    %v96 = vmax.f32 %v93, %v95
    %s97 = scalar_lea.vmem [#allocation2], 200
    %v98 = vld [vmem:[%s97] sm:$0xff]
    %v99 = vmax.f32 %v96, %v98
    %s100 = scalar_lea.vmem [#allocation5], 32
    %101 = vst [vmem:[%s100] sm:$0xff] %v99
    %v102 = vld [vmem:[%s89] sm:$0xff]
    %s103 = scalar_lea.vmem [#allocation2], 80
    %v104 = vld [vmem:[%s103] sm:$0xff]
    %v105 = vmax.f32 %v102, %v104
    %s106 = scalar_lea.vmem [#allocation2], 88
    %v107 = vld [vmem:[%s106] sm:$0xff]
    %v108 = vmax.f32 %v105, %v107
    %v109 = vld [vmem:[%s97] sm:$0xff]
    %v110 = vmax.f32 %v108, %v109
    %s111 = scalar_lea.vmem [#allocation2], 208
    %v112 = vld [vmem:[%s111] sm:$0xff]
    %v113 = vmax.f32 %v110, %v112
    %s114 = scalar_lea.vmem [#allocation2], 216
    %v115 = vld [vmem:[%s114] sm:$0xff]
    %v116 = vmax.f32 %v113, %v115
    %s117 = scalar_lea.vmem [#allocation5], 40
    %118 = vst [vmem:[%s117] sm:$0xff] %v116
    %v119 = vld [vmem:[%s106] sm:$0xff]
    %s120 = scalar_lea.vmem [#allocation2], 96
    %v121 = vld [vmem:[%s120] sm:$0xff]
    %v122 = vmax.f32 %v119, %v121
    %s123 = scalar_lea.vmem [#allocation2], 104
    %v124 = vld [vmem:[%s123] sm:$0xff]
    %v125 = vmax.f32 %v122, %v124
    %v126 = vld [vmem:[%s114] sm:$0xff]
    %v127 = vmax.f32 %v125, %v126
    %s128 = scalar_lea.vmem [#allocation2], 224
    %v129 = vld [vmem:[%s128] sm:$0xff]
    %v130 = vmax.f32 %v127, %v129
    %s131 = scalar_lea.vmem [#allocation2], 232
    %v132 = vld [vmem:[%s131] sm:$0xff]
    %v133 = vmax.f32 %v130, %v132
    %s134 = scalar_lea.vmem [#allocation5], 48
    %135 = vst [vmem:[%s134] sm:$0xff] %v133
    %v136 = vld [vmem:[%s123] sm:$0xff]
    %s137 = scalar_lea.vmem [#allocation2], 112
    %v138 = vld [vmem:[%s137] sm:$0xff]
    %v139 = vmax.f32 %v136, %v138
    %s140 = scalar_lea.vmem [#allocation2], 120
    %v141 = vld [vmem:[%s140] sm:$0xff]
    %v142 = vmax.f32 %v139, %v141
    %v143 = vld [vmem:[%s131] sm:$0xff]
    %v144 = vmax.f32 %v142, %v143
    %s145 = scalar_lea.vmem [#allocation2], 240
    %v146 = vld [vmem:[%s145] sm:$0xff]
    %v147 = vmax.f32 %v144, %v146
    %s148 = scalar_lea.vmem [#allocation2], 248
    %v149 = vld [vmem:[%s148] sm:$0xff]
    %v150 = vmax.f32 %v147, %v149
    %s151 = scalar_lea.vmem [#allocation5], 56
    %152 = vst [vmem:[%s151] sm:$0xff] %v150
    %v153 = vld [vmem:[%s27] sm:$0xff]
    %v154 = vld [vmem:[%s30] sm:$0xff]
    %v155 = vmax.f32 %v153, %v154
    %s156 = scalar_lea.vmem [#allocation2], 256
    %v157 = vld [vmem:[%s156] sm:$0xff]
    %v158 = vmax.f32 %v155, %v157
    %s159 = scalar_lea.vmem [#allocation2], 264
    %v160 = vld [vmem:[%s159] sm:$0xff]
    %v161 = vmax.f32 %v158, %v160
    %s162 = scalar_lea.vmem [#allocation2], 384
    %v163 = vld [vmem:[%s162] sm:$0xff]
    %v164 = vmax.f32 %v161, %v163
    %s165 = scalar_lea.vmem [#allocation2], 392
    %v166 = vld [vmem:[%s165] sm:$0xff]
    %v167 = vmax.f32 %v164, %v166
    %s168 = scalar_lea.vmem [#allocation5], 64
    %169 = vst [vmem:[%s168] sm:$0xff] %v167
    %v170 = vld [vmem:[%s30] sm:$0xff]
    %v171 = vld [vmem:[%s43] sm:$0xff]
    %v172 = vmax.f32 %v170, %v171
    %v173 = vld [vmem:[%s46] sm:$0xff]
    %v174 = vmax.f32 %v172, %v173
    %v175 = vld [vmem:[%s159] sm:$0xff]
    %v176 = vmax.f32 %v174, %v175
    %s177 = scalar_lea.vmem [#allocation2], 272
    %v178 = vld [vmem:[%s177] sm:$0xff]
    %v179 = vmax.f32 %v176, %v178
    %s180 = scalar_lea.vmem [#allocation2], 280
    %v181 = vld [vmem:[%s180] sm:$0xff]
    %v182 = vmax.f32 %v179, %v181
    %v183 = vld [vmem:[%s165] sm:$0xff]
    %v184 = vmax.f32 %v182, %v183
    %s185 = scalar_lea.vmem [#allocation2], 400
    %v186 = vld [vmem:[%s185] sm:$0xff]
    %v187 = vmax.f32 %v184, %v186
    %s188 = scalar_lea.vmem [#allocation2], 408
    %v189 = vld [vmem:[%s188] sm:$0xff]
    %v190 = vmax.f32 %v187, %v189
    %s191 = scalar_lea.vmem [#allocation5], 72
    %192 = vst [vmem:[%s191] sm:$0xff] %v190
    %v193 = vld [vmem:[%s46] sm:$0xff]
    %v194 = vld [vmem:[%s60] sm:$0xff]
    %v195 = vmax.f32 %v193, %v194
    %v196 = vld [vmem:[%s63] sm:$0xff]
    %v197 = vmax.f32 %v195, %v196
    %v198 = vld [vmem:[%s180] sm:$0xff]
    %v199 = vmax.f32 %v197, %v198
    %s200 = scalar_lea.vmem [#allocation2], 288
    %v201 = vld [vmem:[%s200] sm:$0xff]
    %v202 = vmax.f32 %v199, %v201
    %s203 = scalar_lea.vmem [#allocation2], 296
    %v204 = vld [vmem:[%s203] sm:$0xff]
    %v205 = vmax.f32 %v202, %v204
    %v206 = vld [vmem:[%s188] sm:$0xff]
    %v207 = vmax.f32 %v205, %v206
    %s208 = scalar_lea.vmem [#allocation2], 416
    %v209 = vld [vmem:[%s208] sm:$0xff]
    %v210 = vmax.f32 %v207, %v209
    %s211 = scalar_lea.vmem [#allocation2], 424
    %v212 = vld [vmem:[%s211] sm:$0xff]
    %v213 = vmax.f32 %v210, %v212
    %s214 = scalar_lea.vmem [#allocation5], 80
    %215 = vst [vmem:[%s214] sm:$0xff] %v213
    %v216 = vld [vmem:[%s63] sm:$0xff]
    %v217 = vld [vmem:[%s77] sm:$0xff]
    %v218 = vmax.f32 %v216, %v217
    %v219 = vld [vmem:[%s80] sm:$0xff]
    %v220 = vmax.f32 %v218, %v219
    %v221 = vld [vmem:[%s203] sm:$0xff]
    %v222 = vmax.f32 %v220, %v221
    %s223 = scalar_lea.vmem [#allocation2], 304
    %v224 = vld [vmem:[%s223] sm:$0xff]
    %v225 = vmax.f32 %v222, %v224
    %s226 = scalar_lea.vmem [#allocation2], 312
    %v227 = vld [vmem:[%s226] sm:$0xff]
    %v228 = vmax.f32 %v225, %v227
    %v229 = vld [vmem:[%s211] sm:$0xff]
    %v230 = vmax.f32 %v228, %v229
    %s231 = scalar_lea.vmem [#allocation2], 432
    %v232 = vld [vmem:[%s231] sm:$0xff]
    %v233 = vmax.f32 %v230, %v232
    %s234 = scalar_lea.vmem [#allocation2], 440
    %v235 = vld [vmem:[%s234] sm:$0xff]
    %v236 = vmax.f32 %v233, %v235
    %s237 = scalar_lea.vmem [#allocation5], 88
    %238 = vst [vmem:[%s237] sm:$0xff] %v236
    %v239 = vld [vmem:[%s80] sm:$0xff]
    %v240 = vld [vmem:[%s94] sm:$0xff]
    %v241 = vmax.f32 %v239, %v240
    %v242 = vld [vmem:[%s97] sm:$0xff]
    %v243 = vmax.f32 %v241, %v242
    %v244 = vld [vmem:[%s226] sm:$0xff]
    %v245 = vmax.f32 %v243, %v244
    %s246 = scalar_lea.vmem [#allocation2], 320
    %v247 = vld [vmem:[%s246] sm:$0xff]
    %v248 = vmax.f32 %v245, %v247
    %s249 = scalar_lea.vmem [#allocation2], 328
    %v250 = vld [vmem:[%s249] sm:$0xff]
    %v251 = vmax.f32 %v248, %v250
    %v252 = vld [vmem:[%s234] sm:$0xff]
    %v253 = vmax.f32 %v251, %v252
    %s254 = scalar_lea.vmem [#allocation2], 448
    %v255 = vld [vmem:[%s254] sm:$0xff]
    %v256 = vmax.f32 %v253, %v255
    %s257 = scalar_lea.vmem [#allocation2], 456
    %v258 = vld [vmem:[%s257] sm:$0xff]
    %v259 = vmax.f32 %v256, %v258
    %s260 = scalar_lea.vmem [#allocation5], 96
    %261 = vst [vmem:[%s260] sm:$0xff] %v259
    %v262 = vld [vmem:[%s97] sm:$0xff]
    %v263 = vld [vmem:[%s111] sm:$0xff]
    %v264 = vmax.f32 %v262, %v263
    %v265 = vld [vmem:[%s114] sm:$0xff]
    %v266 = vmax.f32 %v264, %v265
    %v267 = vld [vmem:[%s249] sm:$0xff]
    %v268 = vmax.f32 %v266, %v267
    %s269 = scalar_lea.vmem [#allocation2], 336
    %v270 = vld [vmem:[%s269] sm:$0xff]
    %v271 = vmax.f32 %v268, %v270
    %s272 = scalar_lea.vmem [#allocation2], 344
    %v273 = vld [vmem:[%s272] sm:$0xff]
    %v274 = vmax.f32 %v271, %v273
    %v275 = vld [vmem:[%s257] sm:$0xff]
    %v276 = vmax.f32 %v274, %v275
    %s277 = scalar_lea.vmem [#allocation2], 464
    %v278 = vld [vmem:[%s277] sm:$0xff]
    %v279 = vmax.f32 %v276, %v278
    %s280 = scalar_lea.vmem [#allocation2], 472
    %v281 = vld [vmem:[%s280] sm:$0xff]
    %v282 = vmax.f32 %v279, %v281
    %s283 = scalar_lea.vmem [#allocation5], 104
    %284 = vst [vmem:[%s283] sm:$0xff] %v282
    %v285 = vld [vmem:[%s114] sm:$0xff]
    %v286 = vld [vmem:[%s128] sm:$0xff]
    %v287 = vmax.f32 %v285, %v286
    %v288 = vld [vmem:[%s131] sm:$0xff]
    %v289 = vmax.f32 %v287, %v288
    %v290 = vld [vmem:[%s272] sm:$0xff]
    %v291 = vmax.f32 %v289, %v290
    %s292 = scalar_lea.vmem [#allocation2], 352
    %v293 = vld [vmem:[%s292] sm:$0xff]
    %v294 = vmax.f32 %v291, %v293
    %s295 = scalar_lea.vmem [#allocation2], 360
    %v296 = vld [vmem:[%s295] sm:$0xff]
    %v297 = vmax.f32 %v294, %v296
    %v298 = vld [vmem:[%s280] sm:$0xff]
    %v299 = vmax.f32 %v297, %v298
    %s300 = scalar_lea.vmem [#allocation2], 480
    %v301 = vld [vmem:[%s300] sm:$0xff]
    %v302 = vmax.f32 %v299, %v301
    %s303 = scalar_lea.vmem [#allocation2], 488
    %v304 = vld [vmem:[%s303] sm:$0xff]
    %v305 = vmax.f32 %v302, %v304
    %s306 = scalar_lea.vmem [#allocation5], 112
    %307 = vst [vmem:[%s306] sm:$0xff] %v305
    %v308 = vld [vmem:[%s131] sm:$0xff]
    %v309 = vld [vmem:[%s145] sm:$0xff]
    %v310 = vmax.f32 %v308, %v309
    %v311 = vld [vmem:[%s148] sm:$0xff]
    %v312 = vmax.f32 %v310, %v311
    %v313 = vld [vmem:[%s295] sm:$0xff]
    %v314 = vmax.f32 %v312, %v313
    %s315 = scalar_lea.vmem [#allocation2], 368
    %v316 = vld [vmem:[%s315] sm:$0xff]
    %v317 = vmax.f32 %v314, %v316
    %s318 = scalar_lea.vmem [#allocation2], 376
    %v319 = vld [vmem:[%s318] sm:$0xff]
    %v320 = vmax.f32 %v317, %v319
    %v321 = vld [vmem:[%s303] sm:$0xff]
    %v322 = vmax.f32 %v320, %v321
    %s323 = scalar_lea.vmem [#allocation2], 496
    %v324 = vld [vmem:[%s323] sm:$0xff]
    %v325 = vmax.f32 %v322, %v324
    %s326 = scalar_lea.vmem [#allocation2], 504
    %v327 = vld [vmem:[%s326] sm:$0xff]
    %v328 = vmax.f32 %v325, %v327
    %s329 = scalar_lea.vmem [#allocation5], 120
    %330 = vst [vmem:[%s329] sm:$0xff] %v328
    %v331 = vld [vmem:[%s162] sm:$0xff]
    %v332 = vld [vmem:[%s165] sm:$0xff]
    %v333 = vmax.f32 %v331, %v332
    %s334 = scalar_lea.vmem [#allocation2], 512
    %v335 = vld [vmem:[%s334] sm:$0xff]
    %v336 = vmax.f32 %v333, %v335
    %s337 = scalar_lea.vmem [#allocation2], 520
    %v338 = vld [vmem:[%s337] sm:$0xff]
    %v339 = vmax.f32 %v336, %v338
    %s340 = scalar_lea.vmem [#allocation2], 640
    %v341 = vld [vmem:[%s340] sm:$0xff]
    %v342 = vmax.f32 %v339, %v341
    %s343 = scalar_lea.vmem [#allocation2], 648
    %v344 = vld [vmem:[%s343] sm:$0xff]
    %v345 = vmax.f32 %v342, %v344
    %s346 = scalar_lea.vmem [#allocation5], 128
    %347 = vst [vmem:[%s346] sm:$0xff] %v345
    %v348 = vld [vmem:[%s165] sm:$0xff]
    %v349 = vld [vmem:[%s185] sm:$0xff]
    %v350 = vmax.f32 %v348, %v349
    %v351 = vld [vmem:[%s188] sm:$0xff]
    %v352 = vmax.f32 %v350, %v351
    %v353 = vld [vmem:[%s337] sm:$0xff]
    %v354 = vmax.f32 %v352, %v353
    %s355 = scalar_lea.vmem [#allocation2], 528
    %v356 = vld [vmem:[%s355] sm:$0xff]
    %v357 = vmax.f32 %v354, %v356
    %s358 = scalar_lea.vmem [#allocation2], 536
    %v359 = vld [vmem:[%s358] sm:$0xff]
    %v360 = vmax.f32 %v357, %v359
    %v361 = vld [vmem:[%s343] sm:$0xff]
    %v362 = vmax.f32 %v360, %v361
    %s363 = scalar_lea.vmem [#allocation2], 656
    %v364 = vld [vmem:[%s363] sm:$0xff]
    %v365 = vmax.f32 %v362, %v364
    %s366 = scalar_lea.vmem [#allocation2], 664
    %v367 = vld [vmem:[%s366] sm:$0xff]
    %v368 = vmax.f32 %v365, %v367
    %s369 = scalar_lea.vmem [#allocation5], 136
    %370 = vst [vmem:[%s369] sm:$0xff] %v368
    %v371 = vld [vmem:[%s188] sm:$0xff]
    %v372 = vld [vmem:[%s208] sm:$0xff]
    %v373 = vmax.f32 %v371, %v372
    %v374 = vld [vmem:[%s211] sm:$0xff]
    %v375 = vmax.f32 %v373, %v374
    %v376 = vld [vmem:[%s358] sm:$0xff]
    %v377 = vmax.f32 %v375, %v376
    %s378 = scalar_lea.vmem [#allocation2], 544
    %v379 = vld [vmem:[%s378] sm:$0xff]
    %v380 = vmax.f32 %v377, %v379
    %s381 = scalar_lea.vmem [#allocation2], 552
    %v382 = vld [vmem:[%s381] sm:$0xff]
    %v383 = vmax.f32 %v380, %v382
    %v384 = vld [vmem:[%s366] sm:$0xff]
    %v385 = vmax.f32 %v383, %v384
    %s386 = scalar_lea.vmem [#allocation2], 672
    %v387 = vld [vmem:[%s386] sm:$0xff]
    %v388 = vmax.f32 %v385, %v387
    %s389 = scalar_lea.vmem [#allocation2], 680
    %v390 = vld [vmem:[%s389] sm:$0xff]
    %v391 = vmax.f32 %v388, %v390
    %s392 = scalar_lea.vmem [#allocation5], 144
    %393 = vst [vmem:[%s392] sm:$0xff] %v391
    %v394 = vld [vmem:[%s211] sm:$0xff]
    %v395 = vld [vmem:[%s231] sm:$0xff]
    %v396 = vmax.f32 %v394, %v395
    %v397 = vld [vmem:[%s234] sm:$0xff]
    %v398 = vmax.f32 %v396, %v397
    %v399 = vld [vmem:[%s381] sm:$0xff]
    %v400 = vmax.f32 %v398, %v399
    %s401 = scalar_lea.vmem [#allocation2], 560
    %v402 = vld [vmem:[%s401] sm:$0xff]
    %v403 = vmax.f32 %v400, %v402
    %s404 = scalar_lea.vmem [#allocation2], 568
    %v405 = vld [vmem:[%s404] sm:$0xff]
    %v406 = vmax.f32 %v403, %v405
    %v407 = vld [vmem:[%s389] sm:$0xff]
    %v408 = vmax.f32 %v406, %v407
    %s409 = scalar_lea.vmem [#allocation2], 688
    %v410 = vld [vmem:[%s409] sm:$0xff]
    %v411 = vmax.f32 %v408, %v410
    %s412 = scalar_lea.vmem [#allocation2], 696
    %v413 = vld [vmem:[%s412] sm:$0xff]
    %v414 = vmax.f32 %v411, %v413
    %s415 = scalar_lea.vmem [#allocation5], 152
    %416 = vst [vmem:[%s415] sm:$0xff] %v414
    %v417 = vld [vmem:[%s234] sm:$0xff]
    %v418 = vld [vmem:[%s254] sm:$0xff]
    %v419 = vmax.f32 %v417, %v418
    %v420 = vld [vmem:[%s257] sm:$0xff]
    %v421 = vmax.f32 %v419, %v420
    %v422 = vld [vmem:[%s404] sm:$0xff]
    %v423 = vmax.f32 %v421, %v422
    %s424 = scalar_lea.vmem [#allocation2], 576
    %v425 = vld [vmem:[%s424] sm:$0xff]
    %v426 = vmax.f32 %v423, %v425
    %s427 = scalar_lea.vmem [#allocation2], 584
    %v428 = vld [vmem:[%s427] sm:$0xff]
    %v429 = vmax.f32 %v426, %v428
    %v430 = vld [vmem:[%s412] sm:$0xff]
    %v431 = vmax.f32 %v429, %v430
    %s432 = scalar_lea.vmem [#allocation2], 704
    %v433 = vld [vmem:[%s432] sm:$0xff]
    %v434 = vmax.f32 %v431, %v433
    %s435 = scalar_lea.vmem [#allocation2], 712
    %v436 = vld [vmem:[%s435] sm:$0xff]
    %v437 = vmax.f32 %v434, %v436
    %s438 = scalar_lea.vmem [#allocation5], 160
    %439 = vst [vmem:[%s438] sm:$0xff] %v437
    %v440 = vld [vmem:[%s257] sm:$0xff]
    %v441 = vld [vmem:[%s277] sm:$0xff]
    %v442 = vmax.f32 %v440, %v441
    %v443 = vld [vmem:[%s280] sm:$0xff]
    %v444 = vmax.f32 %v442, %v443
    %v445 = vld [vmem:[%s427] sm:$0xff]
    %v446 = vmax.f32 %v444, %v445
    %s447 = scalar_lea.vmem [#allocation2], 592
    %v448 = vld [vmem:[%s447] sm:$0xff]
    %v449 = vmax.f32 %v446, %v448
    %s450 = scalar_lea.vmem [#allocation2], 600
    %v451 = vld [vmem:[%s450] sm:$0xff]
    %v452 = vmax.f32 %v449, %v451
    %v453 = vld [vmem:[%s435] sm:$0xff]
    %v454 = vmax.f32 %v452, %v453
    %s455 = scalar_lea.vmem [#allocation2], 720
    %v456 = vld [vmem:[%s455] sm:$0xff]
    %v457 = vmax.f32 %v454, %v456
    %s458 = scalar_lea.vmem [#allocation2], 728
    %v459 = vld [vmem:[%s458] sm:$0xff]
    %v460 = vmax.f32 %v457, %v459
    %s461 = scalar_lea.vmem [#allocation5], 168
    %462 = vst [vmem:[%s461] sm:$0xff] %v460
    %v463 = vld [vmem:[%s280] sm:$0xff]
    %v464 = vld [vmem:[%s300] sm:$0xff]
    %v465 = vmax.f32 %v463, %v464
    %v466 = vld [vmem:[%s303] sm:$0xff]
    %v467 = vmax.f32 %v465, %v466
    %v468 = vld [vmem:[%s450] sm:$0xff]
    %v469 = vmax.f32 %v467, %v468
    %s470 = scalar_lea.vmem [#allocation2], 608
    %v471 = vld [vmem:[%s470] sm:$0xff]
    %v472 = vmax.f32 %v469, %v471
    %s473 = scalar_lea.vmem [#allocation2], 616
    %v474 = vld [vmem:[%s473] sm:$0xff]
    %v475 = vmax.f32 %v472, %v474
    %v476 = vld [vmem:[%s458] sm:$0xff]
    %v477 = vmax.f32 %v475, %v476
    %s478 = scalar_lea.vmem [#allocation2], 736
    %v479 = vld [vmem:[%s478] sm:$0xff]
    %v480 = vmax.f32 %v477, %v479
    %s481 = scalar_lea.vmem [#allocation2], 744
    %v482 = vld [vmem:[%s481] sm:$0xff]
    %v483 = vmax.f32 %v480, %v482
    %s484 = scalar_lea.vmem [#allocation5], 176
    %485 = vst [vmem:[%s484] sm:$0xff] %v483
    %v486 = vld [vmem:[%s303] sm:$0xff]
    %v487 = vld [vmem:[%s323] sm:$0xff]
    %v488 = vmax.f32 %v486, %v487
    %v489 = vld [vmem:[%s326] sm:$0xff]
    %v490 = vmax.f32 %v488, %v489
    %v491 = vld [vmem:[%s473] sm:$0xff]
    %v492 = vmax.f32 %v490, %v491
    %s493 = scalar_lea.vmem [#allocation2], 624
    %v494 = vld [vmem:[%s493] sm:$0xff]
    %v495 = vmax.f32 %v492, %v494
    %s496 = scalar_lea.vmem [#allocation2], 632
    %v497 = vld [vmem:[%s496] sm:$0xff]
    %v498 = vmax.f32 %v495, %v497
    %v499 = vld [vmem:[%s481] sm:$0xff]
    %v500 = vmax.f32 %v498, %v499
    %s501 = scalar_lea.vmem [#allocation2], 752
    %v502 = vld [vmem:[%s501] sm:$0xff]
    %v503 = vmax.f32 %v500, %v502
    %s504 = scalar_lea.vmem [#allocation2], 760
    %v505 = vld [vmem:[%s504] sm:$0xff]
    %v506 = vmax.f32 %v503, %v505
    %s507 = scalar_lea.vmem [#allocation5], 184
    %508 = vst [vmem:[%s507] sm:$0xff] %v506
    %v509 = vld [vmem:[%s340] sm:$0xff]
    %v510 = vld [vmem:[%s343] sm:$0xff]
    %v511 = vmax.f32 %v509, %v510
    %s512 = scalar_lea.vmem [#allocation2], 768
    %v513 = vld [vmem:[%s512] sm:$0xff]
    %v514 = vmax.f32 %v511, %v513
    %s515 = scalar_lea.vmem [#allocation2], 776
    %v516 = vld [vmem:[%s515] sm:$0xff]
    %v517 = vmax.f32 %v514, %v516
    %s518 = scalar_lea.vmem [#allocation2], 896
    %v519 = vld [vmem:[%s518] sm:$0xff]
    %v520 = vmax.f32 %v517, %v519
    %s521 = scalar_lea.vmem [#allocation2], 904
    %v522 = vld [vmem:[%s521] sm:$0xff]
    %v523 = vmax.f32 %v520, %v522
    %s524 = scalar_lea.vmem [#allocation5], 192
    %525 = vst [vmem:[%s524] sm:$0xff] %v523
    %v526 = vld [vmem:[%s343] sm:$0xff]
    %v527 = vld [vmem:[%s363] sm:$0xff]
    %v528 = vmax.f32 %v526, %v527
    %v529 = vld [vmem:[%s366] sm:$0xff]
    %v530 = vmax.f32 %v528, %v529
    %v531 = vld [vmem:[%s515] sm:$0xff]
    %v532 = vmax.f32 %v530, %v531
    %s533 = scalar_lea.vmem [#allocation2], 784
    %v534 = vld [vmem:[%s533] sm:$0xff]
    %v535 = vmax.f32 %v532, %v534
    %s536 = scalar_lea.vmem [#allocation2], 792
    %v537 = vld [vmem:[%s536] sm:$0xff]
    %v538 = vmax.f32 %v535, %v537
    %v539 = vld [vmem:[%s521] sm:$0xff]
    %v540 = vmax.f32 %v538, %v539
    %s541 = scalar_lea.vmem [#allocation2], 912
    %v542 = vld [vmem:[%s541] sm:$0xff]
    %v543 = vmax.f32 %v540, %v542
    %s544 = scalar_lea.vmem [#allocation2], 920
    %v545 = vld [vmem:[%s544] sm:$0xff]
    %v546 = vmax.f32 %v543, %v545
    %s547 = scalar_lea.vmem [#allocation5], 200
    %548 = vst [vmem:[%s547] sm:$0xff] %v546
    %v549 = vld [vmem:[%s366] sm:$0xff]
    %v550 = vld [vmem:[%s386] sm:$0xff]
    %v551 = vmax.f32 %v549, %v550
    %v552 = vld [vmem:[%s389] sm:$0xff]
    %v553 = vmax.f32 %v551, %v552
    %v554 = vld [vmem:[%s536] sm:$0xff]
    %v555 = vmax.f32 %v553, %v554
    %s556 = scalar_lea.vmem [#allocation2], 800
    %v557 = vld [vmem:[%s556] sm:$0xff]
    %v558 = vmax.f32 %v555, %v557
    %s559 = scalar_lea.vmem [#allocation2], 808
    %v560 = vld [vmem:[%s559] sm:$0xff]
    %v561 = vmax.f32 %v558, %v560
    %v562 = vld [vmem:[%s544] sm:$0xff]
    %v563 = vmax.f32 %v561, %v562
    %s564 = scalar_lea.vmem [#allocation2], 928
    %v565 = vld [vmem:[%s564] sm:$0xff]
    %v566 = vmax.f32 %v563, %v565
    %s567 = scalar_lea.vmem [#allocation2], 936
    %v568 = vld [vmem:[%s567] sm:$0xff]
    %v569 = vmax.f32 %v566, %v568
    %s570 = scalar_lea.vmem [#allocation5], 208
    %571 = vst [vmem:[%s570] sm:$0xff] %v569
    %v572 = vld [vmem:[%s389] sm:$0xff]
    %v573 = vld [vmem:[%s409] sm:$0xff]
    %v574 = vmax.f32 %v572, %v573
    %v575 = vld [vmem:[%s412] sm:$0xff]
    %v576 = vmax.f32 %v574, %v575
    %v577 = vld [vmem:[%s559] sm:$0xff]
    %v578 = vmax.f32 %v576, %v577
    %s579 = scalar_lea.vmem [#allocation2], 816
    %v580 = vld [vmem:[%s579] sm:$0xff]
    %v581 = vmax.f32 %v578, %v580
    %s582 = scalar_lea.vmem [#allocation2], 824
    %v583 = vld [vmem:[%s582] sm:$0xff]
    %v584 = vmax.f32 %v581, %v583
    %v585 = vld [vmem:[%s567] sm:$0xff]
    %v586 = vmax.f32 %v584, %v585
    %s587 = scalar_lea.vmem [#allocation2], 944
    %v588 = vld [vmem:[%s587] sm:$0xff]
    %v589 = vmax.f32 %v586, %v588
    %s590 = scalar_lea.vmem [#allocation2], 952
    %v591 = vld [vmem:[%s590] sm:$0xff]
    %v592 = vmax.f32 %v589, %v591
    %s593 = scalar_lea.vmem [#allocation5], 216
    %594 = vst [vmem:[%s593] sm:$0xff] %v592
    %v595 = vld [vmem:[%s412] sm:$0xff]
    %v596 = vld [vmem:[%s432] sm:$0xff]
    %v597 = vmax.f32 %v595, %v596
    %v598 = vld [vmem:[%s435] sm:$0xff]
    %v599 = vmax.f32 %v597, %v598
    %v600 = vld [vmem:[%s582] sm:$0xff]
    %v601 = vmax.f32 %v599, %v600
    %s602 = scalar_lea.vmem [#allocation2], 832
    %v603 = vld [vmem:[%s602] sm:$0xff]
    %v604 = vmax.f32 %v601, %v603
    %s605 = scalar_lea.vmem [#allocation2], 840
    %v606 = vld [vmem:[%s605] sm:$0xff]
    %v607 = vmax.f32 %v604, %v606
    %v608 = vld [vmem:[%s590] sm:$0xff]
    %v609 = vmax.f32 %v607, %v608
    %s610 = scalar_lea.vmem [#allocation2], 960
    %v611 = vld [vmem:[%s610] sm:$0xff]
    %v612 = vmax.f32 %v609, %v611
    %s613 = scalar_lea.vmem [#allocation2], 968
    %v614 = vld [vmem:[%s613] sm:$0xff]
    %v615 = vmax.f32 %v612, %v614
    %s616 = scalar_lea.vmem [#allocation5], 224
    %617 = vst [vmem:[%s616] sm:$0xff] %v615
    %v618 = vld [vmem:[%s435] sm:$0xff]
    %v619 = vld [vmem:[%s455] sm:$0xff]
    %v620 = vmax.f32 %v618, %v619
    %v621 = vld [vmem:[%s458] sm:$0xff]
    %v622 = vmax.f32 %v620, %v621
    %v623 = vld [vmem:[%s605] sm:$0xff]
    %v624 = vmax.f32 %v622, %v623
    %s625 = scalar_lea.vmem [#allocation2], 848
    %v626 = vld [vmem:[%s625] sm:$0xff]
    %v627 = vmax.f32 %v624, %v626
    %s628 = scalar_lea.vmem [#allocation2], 856
    %v629 = vld [vmem:[%s628] sm:$0xff]
    %v630 = vmax.f32 %v627, %v629
    %v631 = vld [vmem:[%s613] sm:$0xff]
    %v632 = vmax.f32 %v630, %v631
    %s633 = scalar_lea.vmem [#allocation2], 976
    %v634 = vld [vmem:[%s633] sm:$0xff]
    %v635 = vmax.f32 %v632, %v634
    %s636 = scalar_lea.vmem [#allocation2], 984
    %v637 = vld [vmem:[%s636] sm:$0xff]
    %v638 = vmax.f32 %v635, %v637
    %s639 = scalar_lea.vmem [#allocation5], 232
    %640 = vst [vmem:[%s639] sm:$0xff] %v638
    %v641 = vld [vmem:[%s458] sm:$0xff]
    %v642 = vld [vmem:[%s478] sm:$0xff]
    %v643 = vmax.f32 %v641, %v642
    %v644 = vld [vmem:[%s481] sm:$0xff]
    %v645 = vmax.f32 %v643, %v644
    %v646 = vld [vmem:[%s628] sm:$0xff]
    %v647 = vmax.f32 %v645, %v646
    %s648 = scalar_lea.vmem [#allocation2], 864
    %v649 = vld [vmem:[%s648] sm:$0xff]
    %v650 = vmax.f32 %v647, %v649
    %s651 = scalar_lea.vmem [#allocation2], 872
    %v652 = vld [vmem:[%s651] sm:$0xff]
    %v653 = vmax.f32 %v650, %v652
    %v654 = vld [vmem:[%s636] sm:$0xff]
    %v655 = vmax.f32 %v653, %v654
    %s656 = scalar_lea.vmem [#allocation2], 992
    %v657 = vld [vmem:[%s656] sm:$0xff]
    %v658 = vmax.f32 %v655, %v657
    %s659 = scalar_lea.vmem [#allocation2], 1000
    %v660 = vld [vmem:[%s659] sm:$0xff]
    %v661 = vmax.f32 %v658, %v660
    %s662 = scalar_lea.vmem [#allocation5], 240
    %663 = vst [vmem:[%s662] sm:$0xff] %v661
    %v664 = vld [vmem:[%s481] sm:$0xff]
    %v665 = vld [vmem:[%s501] sm:$0xff]
    %v666 = vmax.f32 %v664, %v665
    %v667 = vld [vmem:[%s504] sm:$0xff]
    %v668 = vmax.f32 %v666, %v667
    %v669 = vld [vmem:[%s651] sm:$0xff]
    %v670 = vmax.f32 %v668, %v669
    %s671 = scalar_lea.vmem [#allocation2], 880
    %v672 = vld [vmem:[%s671] sm:$0xff]
    %v673 = vmax.f32 %v670, %v672
    %s674 = scalar_lea.vmem [#allocation2], 888
    %v675 = vld [vmem:[%s674] sm:$0xff]
    %v676 = vmax.f32 %v673, %v675
    %v677 = vld [vmem:[%s659] sm:$0xff]
    %v678 = vmax.f32 %v676, %v677
    %s679 = scalar_lea.vmem [#allocation2], 1008
    %v680 = vld [vmem:[%s679] sm:$0xff]
    %v681 = vmax.f32 %v678, %v680
    %s682 = scalar_lea.vmem [#allocation2], 1016
    %v683 = vld [vmem:[%s682] sm:$0xff]
    %v684 = vmax.f32 %v681, %v683
    %s685 = scalar_lea.vmem [#allocation5], 248
    %686 = vst [vmem:[%s685] sm:$0xff] %v684
    %v687 = vld [vmem:[%s518] sm:$0xff]
    %v688 = vld [vmem:[%s521] sm:$0xff]
    %v689 = vmax.f32 %v687, %v688
    %s690 = scalar_lea.vmem [#allocation2], 1024
    %v691 = vld [vmem:[%s690] sm:$0xff]
    %v692 = vmax.f32 %v689, %v691
    %s693 = scalar_lea.vmem [#allocation2], 1032
    %v694 = vld [vmem:[%s693] sm:$0xff]
    %v695 = vmax.f32 %v692, %v694
    %s696 = scalar_lea.vmem [#allocation2], 1152
    %v697 = vld [vmem:[%s696] sm:$0xff]
    %v698 = vmax.f32 %v695, %v697
    %s699 = scalar_lea.vmem [#allocation2], 1160
    %v700 = vld [vmem:[%s699] sm:$0xff]
    %v701 = vmax.f32 %v698, %v700
    %s702 = scalar_lea.vmem [#allocation5], 256
    %703 = vst [vmem:[%s702] sm:$0xff] %v701
    %v704 = vld [vmem:[%s521] sm:$0xff]
    %v705 = vld [vmem:[%s541] sm:$0xff]
    %v706 = vmax.f32 %v704, %v705
    %v707 = vld [vmem:[%s544] sm:$0xff]
    %v708 = vmax.f32 %v706, %v707
    %v709 = vld [vmem:[%s693] sm:$0xff]
    %v710 = vmax.f32 %v708, %v709
    %s711 = scalar_lea.vmem [#allocation2], 1040
    %v712 = vld [vmem:[%s711] sm:$0xff]
    %v713 = vmax.f32 %v710, %v712
    %s714 = scalar_lea.vmem [#allocation2], 1048
    %v715 = vld [vmem:[%s714] sm:$0xff]
    %v716 = vmax.f32 %v713, %v715
    %v717 = vld [vmem:[%s699] sm:$0xff]
    %v718 = vmax.f32 %v716, %v717
    %s719 = scalar_lea.vmem [#allocation2], 1168
    %v720 = vld [vmem:[%s719] sm:$0xff]
    %v721 = vmax.f32 %v718, %v720
    %s722 = scalar_lea.vmem [#allocation2], 1176
    %v723 = vld [vmem:[%s722] sm:$0xff]
    %v724 = vmax.f32 %v721, %v723
    %s725 = scalar_lea.vmem [#allocation5], 264
    %726 = vst [vmem:[%s725] sm:$0xff] %v724
    %v727 = vld [vmem:[%s544] sm:$0xff]
    %v728 = vld [vmem:[%s564] sm:$0xff]
    %v729 = vmax.f32 %v727, %v728
    %v730 = vld [vmem:[%s567] sm:$0xff]
    %v731 = vmax.f32 %v729, %v730
    %v732 = vld [vmem:[%s714] sm:$0xff]
    %v733 = vmax.f32 %v731, %v732
    %s734 = scalar_lea.vmem [#allocation2], 1056
    %v735 = vld [vmem:[%s734] sm:$0xff]
    %v736 = vmax.f32 %v733, %v735
    %s737 = scalar_lea.vmem [#allocation2], 1064
    %v738 = vld [vmem:[%s737] sm:$0xff]
    %v739 = vmax.f32 %v736, %v738
    %v740 = vld [vmem:[%s722] sm:$0xff]
    %v741 = vmax.f32 %v739, %v740
    %s742 = scalar_lea.vmem [#allocation2], 1184
    %v743 = vld [vmem:[%s742] sm:$0xff]
    %v744 = vmax.f32 %v741, %v743
    %s745 = scalar_lea.vmem [#allocation2], 1192
    %v746 = vld [vmem:[%s745] sm:$0xff]
    %v747 = vmax.f32 %v744, %v746
    %s748 = scalar_lea.vmem [#allocation5], 272
    %749 = vst [vmem:[%s748] sm:$0xff] %v747
    %v750 = vld [vmem:[%s567] sm:$0xff]
    %v751 = vld [vmem:[%s587] sm:$0xff]
    %v752 = vmax.f32 %v750, %v751
    %v753 = vld [vmem:[%s590] sm:$0xff]
    %v754 = vmax.f32 %v752, %v753
    %v755 = vld [vmem:[%s737] sm:$0xff]
    %v756 = vmax.f32 %v754, %v755
    %s757 = scalar_lea.vmem [#allocation2], 1072
    %v758 = vld [vmem:[%s757] sm:$0xff]
    %v759 = vmax.f32 %v756, %v758
    %s760 = scalar_lea.vmem [#allocation2], 1080
    %v761 = vld [vmem:[%s760] sm:$0xff]
    %v762 = vmax.f32 %v759, %v761
    %v763 = vld [vmem:[%s745] sm:$0xff]
    %v764 = vmax.f32 %v762, %v763
    %s765 = scalar_lea.vmem [#allocation2], 1200
    %v766 = vld [vmem:[%s765] sm:$0xff]
    %v767 = vmax.f32 %v764, %v766
    %s768 = scalar_lea.vmem [#allocation2], 1208
    %v769 = vld [vmem:[%s768] sm:$0xff]
    %v770 = vmax.f32 %v767, %v769
    %s771 = scalar_lea.vmem [#allocation5], 280
    %772 = vst [vmem:[%s771] sm:$0xff] %v770
    %v773 = vld [vmem:[%s590] sm:$0xff]
    %v774 = vld [vmem:[%s610] sm:$0xff]
    %v775 = vmax.f32 %v773, %v774
    %v776 = vld [vmem:[%s613] sm:$0xff]
    %v777 = vmax.f32 %v775, %v776
    %v778 = vld [vmem:[%s760] sm:$0xff]
    %v779 = vmax.f32 %v777, %v778
    %s780 = scalar_lea.vmem [#allocation2], 1088
    %v781 = vld [vmem:[%s780] sm:$0xff]
    %v782 = vmax.f32 %v779, %v781
    %s783 = scalar_lea.vmem [#allocation2], 1096
    %v784 = vld [vmem:[%s783] sm:$0xff]
    %v785 = vmax.f32 %v782, %v784
    %v786 = vld [vmem:[%s768] sm:$0xff]
    %v787 = vmax.f32 %v785, %v786
    %s788 = scalar_lea.vmem [#allocation2], 1216
    %v789 = vld [vmem:[%s788] sm:$0xff]
    %v790 = vmax.f32 %v787, %v789
    %s791 = scalar_lea.vmem [#allocation2], 1224
    %v792 = vld [vmem:[%s791] sm:$0xff]
    %v793 = vmax.f32 %v790, %v792
    %s794 = scalar_lea.vmem [#allocation5], 288
    %795 = vst [vmem:[%s794] sm:$0xff] %v793
    %v796 = vld [vmem:[%s613] sm:$0xff]
    %v797 = vld [vmem:[%s633] sm:$0xff]
    %v798 = vmax.f32 %v796, %v797
    %v799 = vld [vmem:[%s636] sm:$0xff]
    %v800 = vmax.f32 %v798, %v799
    %v801 = vld [vmem:[%s783] sm:$0xff]
    %v802 = vmax.f32 %v800, %v801
    %s803 = scalar_lea.vmem [#allocation2], 1104
    %v804 = vld [vmem:[%s803] sm:$0xff]
    %v805 = vmax.f32 %v802, %v804
    %s806 = scalar_lea.vmem [#allocation2], 1112
    %v807 = vld [vmem:[%s806] sm:$0xff]
    %v808 = vmax.f32 %v805, %v807
    %v809 = vld [vmem:[%s791] sm:$0xff]
    %v810 = vmax.f32 %v808, %v809
    %s811 = scalar_lea.vmem [#allocation2], 1232
    %v812 = vld [vmem:[%s811] sm:$0xff]
    %v813 = vmax.f32 %v810, %v812
    %s814 = scalar_lea.vmem [#allocation2], 1240
    %v815 = vld [vmem:[%s814] sm:$0xff]
    %v816 = vmax.f32 %v813, %v815
    %s817 = scalar_lea.vmem [#allocation5], 296
    %818 = vst [vmem:[%s817] sm:$0xff] %v816
    %v819 = vld [vmem:[%s636] sm:$0xff]
    %v820 = vld [vmem:[%s656] sm:$0xff]
    %v821 = vmax.f32 %v819, %v820
    %v822 = vld [vmem:[%s659] sm:$0xff]
    %v823 = vmax.f32 %v821, %v822
    %v824 = vld [vmem:[%s806] sm:$0xff]
    %v825 = vmax.f32 %v823, %v824
    %s826 = scalar_lea.vmem [#allocation2], 1120
    %v827 = vld [vmem:[%s826] sm:$0xff]
    %v828 = vmax.f32 %v825, %v827
    %s829 = scalar_lea.vmem [#allocation2], 1128
    %v830 = vld [vmem:[%s829] sm:$0xff]
    %v831 = vmax.f32 %v828, %v830
    %v832 = vld [vmem:[%s814] sm:$0xff]
    %v833 = vmax.f32 %v831, %v832
    %s834 = scalar_lea.vmem [#allocation2], 1248
    %v835 = vld [vmem:[%s834] sm:$0xff]
    %v836 = vmax.f32 %v833, %v835
    %s837 = scalar_lea.vmem [#allocation2], 1256
    %v838 = vld [vmem:[%s837] sm:$0xff]
    %v839 = vmax.f32 %v836, %v838
    %s840 = scalar_lea.vmem [#allocation5], 304
    %841 = vst [vmem:[%s840] sm:$0xff] %v839
    %v842 = vld [vmem:[%s659] sm:$0xff]
    %v843 = vld [vmem:[%s679] sm:$0xff]
    %v844 = vmax.f32 %v842, %v843
    %v845 = vld [vmem:[%s682] sm:$0xff]
    %v846 = vmax.f32 %v844, %v845
    %v847 = vld [vmem:[%s829] sm:$0xff]
    %v848 = vmax.f32 %v846, %v847
    %s849 = scalar_lea.vmem [#allocation2], 1136
    %v850 = vld [vmem:[%s849] sm:$0xff]
    %v851 = vmax.f32 %v848, %v850
    %s852 = scalar_lea.vmem [#allocation2], 1144
    %v853 = vld [vmem:[%s852] sm:$0xff]
    %v854 = vmax.f32 %v851, %v853
    %v855 = vld [vmem:[%s837] sm:$0xff]
    %v856 = vmax.f32 %v854, %v855
    %s857 = scalar_lea.vmem [#allocation2], 1264
    %v858 = vld [vmem:[%s857] sm:$0xff]
    %v859 = vmax.f32 %v856, %v858
    %s860 = scalar_lea.vmem [#allocation2], 1272
    %v861 = vld [vmem:[%s860] sm:$0xff]
    %v862 = vmax.f32 %v859, %v861
    %s863 = scalar_lea.vmem [#allocation5], 312
    %864 = vst [vmem:[%s863] sm:$0xff] %v862
    %v865 = vld [vmem:[%s696] sm:$0xff]
    %v866 = vld [vmem:[%s699] sm:$0xff]
    %v867 = vmax.f32 %v865, %v866
    %s868 = scalar_lea.vmem [#allocation2], 1280
    %v869 = vld [vmem:[%s868] sm:$0xff]
    %v870 = vmax.f32 %v867, %v869
    %s871 = scalar_lea.vmem [#allocation2], 1288
    %v872 = vld [vmem:[%s871] sm:$0xff]
    %v873 = vmax.f32 %v870, %v872
    %s874 = scalar_lea.vmem [#allocation2], 1408
    %v875 = vld [vmem:[%s874] sm:$0xff]
    %v876 = vmax.f32 %v873, %v875
    %s877 = scalar_lea.vmem [#allocation2], 1416
    %v878 = vld [vmem:[%s877] sm:$0xff]
    %v879 = vmax.f32 %v876, %v878
    %s880 = scalar_lea.vmem [#allocation5], 320
    %881 = vst [vmem:[%s880] sm:$0xff] %v879
    %v882 = vld [vmem:[%s699] sm:$0xff]
    %v883 = vld [vmem:[%s719] sm:$0xff]
    %v884 = vmax.f32 %v882, %v883
    %v885 = vld [vmem:[%s722] sm:$0xff]
    %v886 = vmax.f32 %v884, %v885
    %v887 = vld [vmem:[%s871] sm:$0xff]
    %v888 = vmax.f32 %v886, %v887
    %s889 = scalar_lea.vmem [#allocation2], 1296
    %v890 = vld [vmem:[%s889] sm:$0xff]
    %v891 = vmax.f32 %v888, %v890
    %s892 = scalar_lea.vmem [#allocation2], 1304
    %v893 = vld [vmem:[%s892] sm:$0xff]
    %v894 = vmax.f32 %v891, %v893
    %v895 = vld [vmem:[%s877] sm:$0xff]
    %v896 = vmax.f32 %v894, %v895
    %s897 = scalar_lea.vmem [#allocation2], 1424
    %v898 = vld [vmem:[%s897] sm:$0xff]
    %v899 = vmax.f32 %v896, %v898
    %s900 = scalar_lea.vmem [#allocation2], 1432
    %v901 = vld [vmem:[%s900] sm:$0xff]
    %v902 = vmax.f32 %v899, %v901
    %s903 = scalar_lea.vmem [#allocation5], 328
    %904 = vst [vmem:[%s903] sm:$0xff] %v902
    %v905 = vld [vmem:[%s722] sm:$0xff]
    %v906 = vld [vmem:[%s742] sm:$0xff]
    %v907 = vmax.f32 %v905, %v906
    %v908 = vld [vmem:[%s745] sm:$0xff]
    %v909 = vmax.f32 %v907, %v908
    %v910 = vld [vmem:[%s892] sm:$0xff]
    %v911 = vmax.f32 %v909, %v910
    %s912 = scalar_lea.vmem [#allocation2], 1312
    %v913 = vld [vmem:[%s912] sm:$0xff]
    %v914 = vmax.f32 %v911, %v913
    %s915 = scalar_lea.vmem [#allocation2], 1320
    %v916 = vld [vmem:[%s915] sm:$0xff]
    %v917 = vmax.f32 %v914, %v916
    %v918 = vld [vmem:[%s900] sm:$0xff]
    %v919 = vmax.f32 %v917, %v918
    %s920 = scalar_lea.vmem [#allocation2], 1440
    %v921 = vld [vmem:[%s920] sm:$0xff]
    %v922 = vmax.f32 %v919, %v921
    %s923 = scalar_lea.vmem [#allocation2], 1448
    %v924 = vld [vmem:[%s923] sm:$0xff]
    %v925 = vmax.f32 %v922, %v924
    %s926 = scalar_lea.vmem [#allocation5], 336
    %927 = vst [vmem:[%s926] sm:$0xff] %v925
    %v928 = vld [vmem:[%s745] sm:$0xff]
    %v929 = vld [vmem:[%s765] sm:$0xff]
    %v930 = vmax.f32 %v928, %v929
    %v931 = vld [vmem:[%s768] sm:$0xff]
    %v932 = vmax.f32 %v930, %v931
    %v933 = vld [vmem:[%s915] sm:$0xff]
    %v934 = vmax.f32 %v932, %v933
    %s935 = scalar_lea.vmem [#allocation2], 1328
    %v936 = vld [vmem:[%s935] sm:$0xff]
    %v937 = vmax.f32 %v934, %v936
    %s938 = scalar_lea.vmem [#allocation2], 1336
    %v939 = vld [vmem:[%s938] sm:$0xff]
    %v940 = vmax.f32 %v937, %v939
    %v941 = vld [vmem:[%s923] sm:$0xff]
    %v942 = vmax.f32 %v940, %v941
    %s943 = scalar_lea.vmem [#allocation2], 1456
    %v944 = vld [vmem:[%s943] sm:$0xff]
    %v945 = vmax.f32 %v942, %v944
    %s946 = scalar_lea.vmem [#allocation2], 1464
    %v947 = vld [vmem:[%s946] sm:$0xff]
    %v948 = vmax.f32 %v945, %v947
    %s949 = scalar_lea.vmem [#allocation5], 344
    %950 = vst [vmem:[%s949] sm:$0xff] %v948
    %v951 = vld [vmem:[%s768] sm:$0xff]
    %v952 = vld [vmem:[%s788] sm:$0xff]
    %v953 = vmax.f32 %v951, %v952
    %v954 = vld [vmem:[%s791] sm:$0xff]
    %v955 = vmax.f32 %v953, %v954
    %v956 = vld [vmem:[%s938] sm:$0xff]
    %v957 = vmax.f32 %v955, %v956
    %s958 = scalar_lea.vmem [#allocation2], 1344
    %v959 = vld [vmem:[%s958] sm:$0xff]
    %v960 = vmax.f32 %v957, %v959
    %s961 = scalar_lea.vmem [#allocation2], 1352
    %v962 = vld [vmem:[%s961] sm:$0xff]
    %v963 = vmax.f32 %v960, %v962
    %v964 = vld [vmem:[%s946] sm:$0xff]
    %v965 = vmax.f32 %v963, %v964
    %s966 = scalar_lea.vmem [#allocation2], 1472
    %v967 = vld [vmem:[%s966] sm:$0xff]
    %v968 = vmax.f32 %v965, %v967
    %s969 = scalar_lea.vmem [#allocation2], 1480
    %v970 = vld [vmem:[%s969] sm:$0xff]
    %v971 = vmax.f32 %v968, %v970
    %s972 = scalar_lea.vmem [#allocation5], 352
    %973 = vst [vmem:[%s972] sm:$0xff] %v971
    %v974 = vld [vmem:[%s791] sm:$0xff]
    %v975 = vld [vmem:[%s811] sm:$0xff]
    %v976 = vmax.f32 %v974, %v975
    %v977 = vld [vmem:[%s814] sm:$0xff]
    %v978 = vmax.f32 %v976, %v977
    %v979 = vld [vmem:[%s961] sm:$0xff]
    %v980 = vmax.f32 %v978, %v979
    %s981 = scalar_lea.vmem [#allocation2], 1360
    %v982 = vld [vmem:[%s981] sm:$0xff]
    %v983 = vmax.f32 %v980, %v982
    %s984 = scalar_lea.vmem [#allocation2], 1368
    %v985 = vld [vmem:[%s984] sm:$0xff]
    %v986 = vmax.f32 %v983, %v985
    %v987 = vld [vmem:[%s969] sm:$0xff]
    %v988 = vmax.f32 %v986, %v987
    %s989 = scalar_lea.vmem [#allocation2], 1488
    %v990 = vld [vmem:[%s989] sm:$0xff]
    %v991 = vmax.f32 %v988, %v990
    %s992 = scalar_lea.vmem [#allocation2], 1496
    %v993 = vld [vmem:[%s992] sm:$0xff]
    %v994 = vmax.f32 %v991, %v993
    %s995 = scalar_lea.vmem [#allocation5], 360
    %996 = vst [vmem:[%s995] sm:$0xff] %v994
    %v997 = vld [vmem:[%s814] sm:$0xff]
    %v998 = vld [vmem:[%s834] sm:$0xff]
    %v999 = vmax.f32 %v997, %v998
    %v1000 = vld [vmem:[%s837] sm:$0xff]
    %v1001 = vmax.f32 %v999, %v1000
    %v1002 = vld [vmem:[%s984] sm:$0xff]
    %v1003 = vmax.f32 %v1001, %v1002
    %s1004 = scalar_lea.vmem [#allocation2], 1376
    %v1005 = vld [vmem:[%s1004] sm:$0xff]
    %v1006 = vmax.f32 %v1003, %v1005
    %s1007 = scalar_lea.vmem [#allocation2], 1384
    %v1008 = vld [vmem:[%s1007] sm:$0xff]
    %v1009 = vmax.f32 %v1006, %v1008
    %v1010 = vld [vmem:[%s992] sm:$0xff]
    %v1011 = vmax.f32 %v1009, %v1010
    %s1012 = scalar_lea.vmem [#allocation2], 1504
    %v1013 = vld [vmem:[%s1012] sm:$0xff]
    %v1014 = vmax.f32 %v1011, %v1013
    %s1015 = scalar_lea.vmem [#allocation2], 1512
    %v1016 = vld [vmem:[%s1015] sm:$0xff]
    %v1017 = vmax.f32 %v1014, %v1016
    %s1018 = scalar_lea.vmem [#allocation5], 368
    %1019 = vst [vmem:[%s1018] sm:$0xff] %v1017
    %v1020 = vld [vmem:[%s837] sm:$0xff]
    %v1021 = vld [vmem:[%s857] sm:$0xff]
    %v1022 = vmax.f32 %v1020, %v1021
    %v1023 = vld [vmem:[%s860] sm:$0xff]
    %v1024 = vmax.f32 %v1022, %v1023
    %v1025 = vld [vmem:[%s1007] sm:$0xff]
    %v1026 = vmax.f32 %v1024, %v1025
    %s1027 = scalar_lea.vmem [#allocation2], 1392
    %v1028 = vld [vmem:[%s1027] sm:$0xff]
    %v1029 = vmax.f32 %v1026, %v1028
    %s1030 = scalar_lea.vmem [#allocation2], 1400
    %v1031 = vld [vmem:[%s1030] sm:$0xff]
    %v1032 = vmax.f32 %v1029, %v1031
    %v1033 = vld [vmem:[%s1015] sm:$0xff]
    %v1034 = vmax.f32 %v1032, %v1033
    %s1035 = scalar_lea.vmem [#allocation2], 1520
    %v1036 = vld [vmem:[%s1035] sm:$0xff]
    %v1037 = vmax.f32 %v1034, %v1036
    %s1038 = scalar_lea.vmem [#allocation2], 1528
    %v1039 = vld [vmem:[%s1038] sm:$0xff]
    %v1040 = vmax.f32 %v1037, %v1039
    %s1041 = scalar_lea.vmem [#allocation5], 376
    %1042 = vst [vmem:[%s1041] sm:$0xff] %v1040
    %v1043 = vld [vmem:[%s874] sm:$0xff]
    %v1044 = vld [vmem:[%s877] sm:$0xff]
    %v1045 = vmax.f32 %v1043, %v1044
    %s1046 = scalar_lea.vmem [#allocation2], 1536
    %v1047 = vld [vmem:[%s1046] sm:$0xff]
    %v1048 = vmax.f32 %v1045, %v1047
    %s1049 = scalar_lea.vmem [#allocation2], 1544
    %v1050 = vld [vmem:[%s1049] sm:$0xff]
    %v1051 = vmax.f32 %v1048, %v1050
    %s1052 = scalar_lea.vmem [#allocation2], 1664
    %v1053 = vld [vmem:[%s1052] sm:$0xff]
    %v1054 = vmax.f32 %v1051, %v1053
    %s1055 = scalar_lea.vmem [#allocation2], 1672
    %v1056 = vld [vmem:[%s1055] sm:$0xff]
    %v1057 = vmax.f32 %v1054, %v1056
    %s1058 = scalar_lea.vmem [#allocation5], 384
    %1059 = vst [vmem:[%s1058] sm:$0xff] %v1057
    %v1060 = vld [vmem:[%s877] sm:$0xff]
    %v1061 = vld [vmem:[%s897] sm:$0xff]
    %v1062 = vmax.f32 %v1060, %v1061
    %v1063 = vld [vmem:[%s900] sm:$0xff]
    %v1064 = vmax.f32 %v1062, %v1063
    %v1065 = vld [vmem:[%s1049] sm:$0xff]
    %v1066 = vmax.f32 %v1064, %v1065
    %s1067 = scalar_lea.vmem [#allocation2], 1552
    %v1068 = vld [vmem:[%s1067] sm:$0xff]
    %v1069 = vmax.f32 %v1066, %v1068
    %s1070 = scalar_lea.vmem [#allocation2], 1560
    %v1071 = vld [vmem:[%s1070] sm:$0xff]
    %v1072 = vmax.f32 %v1069, %v1071
    %v1073 = vld [vmem:[%s1055] sm:$0xff]
    %v1074 = vmax.f32 %v1072, %v1073
    %s1075 = scalar_lea.vmem [#allocation2], 1680
    %v1076 = vld [vmem:[%s1075] sm:$0xff]
    %v1077 = vmax.f32 %v1074, %v1076
    %s1078 = scalar_lea.vmem [#allocation2], 1688
    %v1079 = vld [vmem:[%s1078] sm:$0xff]
    %v1080 = vmax.f32 %v1077, %v1079
    %s1081 = scalar_lea.vmem [#allocation5], 392
    %1082 = vst [vmem:[%s1081] sm:$0xff] %v1080
    %v1083 = vld [vmem:[%s900] sm:$0xff]
    %v1084 = vld [vmem:[%s920] sm:$0xff]
    %v1085 = vmax.f32 %v1083, %v1084
    %v1086 = vld [vmem:[%s923] sm:$0xff]
    %v1087 = vmax.f32 %v1085, %v1086
    %v1088 = vld [vmem:[%s1070] sm:$0xff]
    %v1089 = vmax.f32 %v1087, %v1088
    %s1090 = scalar_lea.vmem [#allocation2], 1568
    %v1091 = vld [vmem:[%s1090] sm:$0xff]
    %v1092 = vmax.f32 %v1089, %v1091
    %s1093 = scalar_lea.vmem [#allocation2], 1576
    %v1094 = vld [vmem:[%s1093] sm:$0xff]
    %v1095 = vmax.f32 %v1092, %v1094
    %v1096 = vld [vmem:[%s1078] sm:$0xff]
    %v1097 = vmax.f32 %v1095, %v1096
    %s1098 = scalar_lea.vmem [#allocation2], 1696
    %v1099 = vld [vmem:[%s1098] sm:$0xff]
    %v1100 = vmax.f32 %v1097, %v1099
    %s1101 = scalar_lea.vmem [#allocation2], 1704
    %v1102 = vld [vmem:[%s1101] sm:$0xff]
    %v1103 = vmax.f32 %v1100, %v1102
    %s1104 = scalar_lea.vmem [#allocation5], 400
    %1105 = vst [vmem:[%s1104] sm:$0xff] %v1103
    %v1106 = vld [vmem:[%s923] sm:$0xff]
    %v1107 = vld [vmem:[%s943] sm:$0xff]
    %v1108 = vmax.f32 %v1106, %v1107
    %v1109 = vld [vmem:[%s946] sm:$0xff]
    %v1110 = vmax.f32 %v1108, %v1109
    %v1111 = vld [vmem:[%s1093] sm:$0xff]
    %v1112 = vmax.f32 %v1110, %v1111
    %s1113 = scalar_lea.vmem [#allocation2], 1584
    %v1114 = vld [vmem:[%s1113] sm:$0xff]
    %v1115 = vmax.f32 %v1112, %v1114
    %s1116 = scalar_lea.vmem [#allocation2], 1592
    %v1117 = vld [vmem:[%s1116] sm:$0xff]
    %v1118 = vmax.f32 %v1115, %v1117
    %v1119 = vld [vmem:[%s1101] sm:$0xff]
    %v1120 = vmax.f32 %v1118, %v1119
    %s1121 = scalar_lea.vmem [#allocation2], 1712
    %v1122 = vld [vmem:[%s1121] sm:$0xff]
    %v1123 = vmax.f32 %v1120, %v1122
    %s1124 = scalar_lea.vmem [#allocation2], 1720
    %v1125 = vld [vmem:[%s1124] sm:$0xff]
    %v1126 = vmax.f32 %v1123, %v1125
    %s1127 = scalar_lea.vmem [#allocation5], 408
    %1128 = vst [vmem:[%s1127] sm:$0xff] %v1126
    %v1129 = vld [vmem:[%s946] sm:$0xff]
    %v1130 = vld [vmem:[%s966] sm:$0xff]
    %v1131 = vmax.f32 %v1129, %v1130
    %v1132 = vld [vmem:[%s969] sm:$0xff]
    %v1133 = vmax.f32 %v1131, %v1132
    %v1134 = vld [vmem:[%s1116] sm:$0xff]
    %v1135 = vmax.f32 %v1133, %v1134
    %s1136 = scalar_lea.vmem [#allocation2], 1600
    %v1137 = vld [vmem:[%s1136] sm:$0xff]
    %v1138 = vmax.f32 %v1135, %v1137
    %s1139 = scalar_lea.vmem [#allocation2], 1608
    %v1140 = vld [vmem:[%s1139] sm:$0xff]
    %v1141 = vmax.f32 %v1138, %v1140
    %v1142 = vld [vmem:[%s1124] sm:$0xff]
    %v1143 = vmax.f32 %v1141, %v1142
    %s1144 = scalar_lea.vmem [#allocation2], 1728
    %v1145 = vld [vmem:[%s1144] sm:$0xff]
    %v1146 = vmax.f32 %v1143, %v1145
    %s1147 = scalar_lea.vmem [#allocation2], 1736
    %v1148 = vld [vmem:[%s1147] sm:$0xff]
    %v1149 = vmax.f32 %v1146, %v1148
    %s1150 = scalar_lea.vmem [#allocation5], 416
    %1151 = vst [vmem:[%s1150] sm:$0xff] %v1149
    %v1152 = vld [vmem:[%s969] sm:$0xff]
    %v1153 = vld [vmem:[%s989] sm:$0xff]
    %v1154 = vmax.f32 %v1152, %v1153
    %v1155 = vld [vmem:[%s992] sm:$0xff]
    %v1156 = vmax.f32 %v1154, %v1155
    %v1157 = vld [vmem:[%s1139] sm:$0xff]
    %v1158 = vmax.f32 %v1156, %v1157
    %s1159 = scalar_lea.vmem [#allocation2], 1616
    %v1160 = vld [vmem:[%s1159] sm:$0xff]
    %v1161 = vmax.f32 %v1158, %v1160
    %s1162 = scalar_lea.vmem [#allocation2], 1624
    %v1163 = vld [vmem:[%s1162] sm:$0xff]
    %v1164 = vmax.f32 %v1161, %v1163
    %v1165 = vld [vmem:[%s1147] sm:$0xff]
    %v1166 = vmax.f32 %v1164, %v1165
    %s1167 = scalar_lea.vmem [#allocation2], 1744
    %v1168 = vld [vmem:[%s1167] sm:$0xff]
    %v1169 = vmax.f32 %v1166, %v1168
    %s1170 = scalar_lea.vmem [#allocation2], 1752
    %v1171 = vld [vmem:[%s1170] sm:$0xff]
    %v1172 = vmax.f32 %v1169, %v1171
    %s1173 = scalar_lea.vmem [#allocation5], 424
    %1174 = vst [vmem:[%s1173] sm:$0xff] %v1172
    %v1175 = vld [vmem:[%s992] sm:$0xff]
    %v1176 = vld [vmem:[%s1012] sm:$0xff]
    %v1177 = vmax.f32 %v1175, %v1176
    %v1178 = vld [vmem:[%s1015] sm:$0xff]
    %v1179 = vmax.f32 %v1177, %v1178
    %v1180 = vld [vmem:[%s1162] sm:$0xff]
    %v1181 = vmax.f32 %v1179, %v1180
    %s1182 = scalar_lea.vmem [#allocation2], 1632
    %v1183 = vld [vmem:[%s1182] sm:$0xff]
    %v1184 = vmax.f32 %v1181, %v1183
    %s1185 = scalar_lea.vmem [#allocation2], 1640
    %v1186 = vld [vmem:[%s1185] sm:$0xff]
    %v1187 = vmax.f32 %v1184, %v1186
    %v1188 = vld [vmem:[%s1170] sm:$0xff]
    %v1189 = vmax.f32 %v1187, %v1188
    %s1190 = scalar_lea.vmem [#allocation2], 1760
    %v1191 = vld [vmem:[%s1190] sm:$0xff]
    %v1192 = vmax.f32 %v1189, %v1191
    %s1193 = scalar_lea.vmem [#allocation2], 1768
    %v1194 = vld [vmem:[%s1193] sm:$0xff]
    %v1195 = vmax.f32 %v1192, %v1194
    %s1196 = scalar_lea.vmem [#allocation5], 432
    %1197 = vst [vmem:[%s1196] sm:$0xff] %v1195
    %v1198 = vld [vmem:[%s1015] sm:$0xff]
    %v1199 = vld [vmem:[%s1035] sm:$0xff]
    %v1200 = vmax.f32 %v1198, %v1199
    %v1201 = vld [vmem:[%s1038] sm:$0xff]
    %v1202 = vmax.f32 %v1200, %v1201
    %v1203 = vld [vmem:[%s1185] sm:$0xff]
    %v1204 = vmax.f32 %v1202, %v1203
    %s1205 = scalar_lea.vmem [#allocation2], 1648
    %v1206 = vld [vmem:[%s1205] sm:$0xff]
    %v1207 = vmax.f32 %v1204, %v1206
    %s1208 = scalar_lea.vmem [#allocation2], 1656
    %v1209 = vld [vmem:[%s1208] sm:$0xff]
    %v1210 = vmax.f32 %v1207, %v1209
    %v1211 = vld [vmem:[%s1193] sm:$0xff]
    %v1212 = vmax.f32 %v1210, %v1211
    %s1213 = scalar_lea.vmem [#allocation2], 1776
    %v1214 = vld [vmem:[%s1213] sm:$0xff]
    %v1215 = vmax.f32 %v1212, %v1214
    %s1216 = scalar_lea.vmem [#allocation2], 1784
    %v1217 = vld [vmem:[%s1216] sm:$0xff]
    %v1218 = vmax.f32 %v1215, %v1217
    %s1219 = scalar_lea.vmem [#allocation5], 440
    %1220 = vst [vmem:[%s1219] sm:$0xff] %v1218
    %v1221 = vld [vmem:[%s1052] sm:$0xff]
    %v1222 = vld [vmem:[%s1055] sm:$0xff]
    %v1223 = vmax.f32 %v1221, %v1222
    %s1224 = scalar_lea.vmem [#allocation2], 1792
    %v1225 = vld [vmem:[%s1224] sm:$0xff]
    %v1226 = vmax.f32 %v1223, %v1225
    %s1227 = scalar_lea.vmem [#allocation2], 1800
    %v1228 = vld [vmem:[%s1227] sm:$0xff]
    %v1229 = vmax.f32 %v1226, %v1228
    %s1230 = scalar_lea.vmem [#allocation2], 1920
    %v1231 = vld [vmem:[%s1230] sm:$0xff]
    %v1232 = vmax.f32 %v1229, %v1231
    %s1233 = scalar_lea.vmem [#allocation2], 1928
    %v1234 = vld [vmem:[%s1233] sm:$0xff]
    %v1235 = vmax.f32 %v1232, %v1234
    %s1236 = scalar_lea.vmem [#allocation5], 448
    %1237 = vst [vmem:[%s1236] sm:$0xff] %v1235
    %v1238 = vld [vmem:[%s1055] sm:$0xff]
    %v1239 = vld [vmem:[%s1075] sm:$0xff]
    %v1240 = vmax.f32 %v1238, %v1239
    %v1241 = vld [vmem:[%s1078] sm:$0xff]
    %v1242 = vmax.f32 %v1240, %v1241
    %v1243 = vld [vmem:[%s1227] sm:$0xff]
    %v1244 = vmax.f32 %v1242, %v1243
    %s1245 = scalar_lea.vmem [#allocation2], 1808
    %v1246 = vld [vmem:[%s1245] sm:$0xff]
    %v1247 = vmax.f32 %v1244, %v1246
    %s1248 = scalar_lea.vmem [#allocation2], 1816
    %v1249 = vld [vmem:[%s1248] sm:$0xff]
    %v1250 = vmax.f32 %v1247, %v1249
    %v1251 = vld [vmem:[%s1233] sm:$0xff]
    %v1252 = vmax.f32 %v1250, %v1251
    %s1253 = scalar_lea.vmem [#allocation2], 1936
    %v1254 = vld [vmem:[%s1253] sm:$0xff]
    %v1255 = vmax.f32 %v1252, %v1254
    %s1256 = scalar_lea.vmem [#allocation2], 1944
    %v1257 = vld [vmem:[%s1256] sm:$0xff]
    %v1258 = vmax.f32 %v1255, %v1257
    %s1259 = scalar_lea.vmem [#allocation5], 456
    %1260 = vst [vmem:[%s1259] sm:$0xff] %v1258
    %v1261 = vld [vmem:[%s1078] sm:$0xff]
    %v1262 = vld [vmem:[%s1098] sm:$0xff]
    %v1263 = vmax.f32 %v1261, %v1262
    %v1264 = vld [vmem:[%s1101] sm:$0xff]
    %v1265 = vmax.f32 %v1263, %v1264
    %v1266 = vld [vmem:[%s1248] sm:$0xff]
    %v1267 = vmax.f32 %v1265, %v1266
    %s1268 = scalar_lea.vmem [#allocation2], 1824
    %v1269 = vld [vmem:[%s1268] sm:$0xff]
    %v1270 = vmax.f32 %v1267, %v1269
    %s1271 = scalar_lea.vmem [#allocation2], 1832
    %v1272 = vld [vmem:[%s1271] sm:$0xff]
    %v1273 = vmax.f32 %v1270, %v1272
    %v1274 = vld [vmem:[%s1256] sm:$0xff]
    %v1275 = vmax.f32 %v1273, %v1274
    %s1276 = scalar_lea.vmem [#allocation2], 1952
    %v1277 = vld [vmem:[%s1276] sm:$0xff]
    %v1278 = vmax.f32 %v1275, %v1277
    %s1279 = scalar_lea.vmem [#allocation2], 1960
    %v1280 = vld [vmem:[%s1279] sm:$0xff]
    %v1281 = vmax.f32 %v1278, %v1280
    %s1282 = scalar_lea.vmem [#allocation5], 464
    %1283 = vst [vmem:[%s1282] sm:$0xff] %v1281
    %v1284 = vld [vmem:[%s1101] sm:$0xff]
    %v1285 = vld [vmem:[%s1121] sm:$0xff]
    %v1286 = vmax.f32 %v1284, %v1285
    %v1287 = vld [vmem:[%s1124] sm:$0xff]
    %v1288 = vmax.f32 %v1286, %v1287
    %v1289 = vld [vmem:[%s1271] sm:$0xff]
    %v1290 = vmax.f32 %v1288, %v1289
    %s1291 = scalar_lea.vmem [#allocation2], 1840
    %v1292 = vld [vmem:[%s1291] sm:$0xff]
    %v1293 = vmax.f32 %v1290, %v1292
    %s1294 = scalar_lea.vmem [#allocation2], 1848
    %v1295 = vld [vmem:[%s1294] sm:$0xff]
    %v1296 = vmax.f32 %v1293, %v1295
    %v1297 = vld [vmem:[%s1279] sm:$0xff]
    %v1298 = vmax.f32 %v1296, %v1297
    %s1299 = scalar_lea.vmem [#allocation2], 1968
    %v1300 = vld [vmem:[%s1299] sm:$0xff]
    %v1301 = vmax.f32 %v1298, %v1300
    %s1302 = scalar_lea.vmem [#allocation2], 1976
    %v1303 = vld [vmem:[%s1302] sm:$0xff]
    %v1304 = vmax.f32 %v1301, %v1303
    %s1305 = scalar_lea.vmem [#allocation5], 472
    %1306 = vst [vmem:[%s1305] sm:$0xff] %v1304
    %v1307 = vld [vmem:[%s1124] sm:$0xff]
    %v1308 = vld [vmem:[%s1144] sm:$0xff]
    %v1309 = vmax.f32 %v1307, %v1308
    %v1310 = vld [vmem:[%s1147] sm:$0xff]
    %v1311 = vmax.f32 %v1309, %v1310
    %v1312 = vld [vmem:[%s1294] sm:$0xff]
    %v1313 = vmax.f32 %v1311, %v1312
    %s1314 = scalar_lea.vmem [#allocation2], 1856
    %v1315 = vld [vmem:[%s1314] sm:$0xff]
    %v1316 = vmax.f32 %v1313, %v1315
    %s1317 = scalar_lea.vmem [#allocation2], 1864
    %v1318 = vld [vmem:[%s1317] sm:$0xff]
    %v1319 = vmax.f32 %v1316, %v1318
    %v1320 = vld [vmem:[%s1302] sm:$0xff]
    %v1321 = vmax.f32 %v1319, %v1320
    %s1322 = scalar_lea.vmem [#allocation2], 1984
    %v1323 = vld [vmem:[%s1322] sm:$0xff]
    %v1324 = vmax.f32 %v1321, %v1323
    %s1325 = scalar_lea.vmem [#allocation2], 1992
    %v1326 = vld [vmem:[%s1325] sm:$0xff]
    %v1327 = vmax.f32 %v1324, %v1326
    %s1328 = scalar_lea.vmem [#allocation5], 480
    %1329 = vst [vmem:[%s1328] sm:$0xff] %v1327
    %v1330 = vld [vmem:[%s1147] sm:$0xff]
    %v1331 = vld [vmem:[%s1167] sm:$0xff]
    %v1332 = vmax.f32 %v1330, %v1331
    %v1333 = vld [vmem:[%s1170] sm:$0xff]
    %v1334 = vmax.f32 %v1332, %v1333
    %v1335 = vld [vmem:[%s1317] sm:$0xff]
    %v1336 = vmax.f32 %v1334, %v1335
    %s1337 = scalar_lea.vmem [#allocation2], 1872
    %v1338 = vld [vmem:[%s1337] sm:$0xff]
    %v1339 = vmax.f32 %v1336, %v1338
    %s1340 = scalar_lea.vmem [#allocation2], 1880
    %v1341 = vld [vmem:[%s1340] sm:$0xff]
    %v1342 = vmax.f32 %v1339, %v1341
    %v1343 = vld [vmem:[%s1325] sm:$0xff]
    %v1344 = vmax.f32 %v1342, %v1343
    %s1345 = scalar_lea.vmem [#allocation2], 2000
    %v1346 = vld [vmem:[%s1345] sm:$0xff]
    %v1347 = vmax.f32 %v1344, %v1346
    %s1348 = scalar_lea.vmem [#allocation2], 2008
    %v1349 = vld [vmem:[%s1348] sm:$0xff]
    %v1350 = vmax.f32 %v1347, %v1349
    %s1351 = scalar_lea.vmem [#allocation5], 488
    %1352 = vst [vmem:[%s1351] sm:$0xff] %v1350
    %v1353 = vld [vmem:[%s1170] sm:$0xff]
    %v1354 = vld [vmem:[%s1190] sm:$0xff]
    %v1355 = vmax.f32 %v1353, %v1354
    %v1356 = vld [vmem:[%s1193] sm:$0xff]
    %v1357 = vmax.f32 %v1355, %v1356
    %v1358 = vld [vmem:[%s1340] sm:$0xff]
    %v1359 = vmax.f32 %v1357, %v1358
    %s1360 = scalar_lea.vmem [#allocation2], 1888
    %v1361 = vld [vmem:[%s1360] sm:$0xff]
    %v1362 = vmax.f32 %v1359, %v1361
    %s1363 = scalar_lea.vmem [#allocation2], 1896
    %v1364 = vld [vmem:[%s1363] sm:$0xff]
    %v1365 = vmax.f32 %v1362, %v1364
    %v1366 = vld [vmem:[%s1348] sm:$0xff]
    %v1367 = vmax.f32 %v1365, %v1366
    %s1368 = scalar_lea.vmem [#allocation2], 2016
    %v1369 = vld [vmem:[%s1368] sm:$0xff]
    %v1370 = vmax.f32 %v1367, %v1369
    %s1371 = scalar_lea.vmem [#allocation2], 2024
    %v1372 = vld [vmem:[%s1371] sm:$0xff]
    %v1373 = vmax.f32 %v1370, %v1372
    %s1374 = scalar_lea.vmem [#allocation5], 496
    %1375 = vst [vmem:[%s1374] sm:$0xff] %v1373
    %v1376 = vld [vmem:[%s1193] sm:$0xff]
    %v1377 = vld [vmem:[%s1213] sm:$0xff]
    %v1378 = vmax.f32 %v1376, %v1377
    %v1379 = vld [vmem:[%s1216] sm:$0xff]
    %v1380 = vmax.f32 %v1378, %v1379
    %v1381 = vld [vmem:[%s1363] sm:$0xff]
    %v1382 = vmax.f32 %v1380, %v1381
    %s1383 = scalar_lea.vmem [#allocation2], 1904
    %v1384 = vld [vmem:[%s1383] sm:$0xff]
    %v1385 = vmax.f32 %v1382, %v1384
    %s1386 = scalar_lea.vmem [#allocation2], 1912
    %v1387 = vld [vmem:[%s1386] sm:$0xff]
    %v1388 = vmax.f32 %v1385, %v1387
    %v1389 = vld [vmem:[%s1371] sm:$0xff]
    %v1390 = vmax.f32 %v1388, %v1389
    %s1391 = scalar_lea.vmem [#allocation2], 2032
    %v1392 = vld [vmem:[%s1391] sm:$0xff]
    %v1393 = vmax.f32 %v1390, %v1392
    %s1394 = scalar_lea.vmem [#allocation2], 2040
    %v1395 = vld [vmem:[%s1394] sm:$0xff]
    %v1396 = vmax.f32 %v1393, %v1395
    %s1397 = scalar_lea.vmem [#allocation5], 504
    %1398 = vst [vmem:[%s1397] sm:$0xff] %v1396
    // Predicated region
    $region10: #{tpu_custom_call.1} parent=1 // pred_check
      _
    $region11: #{tpu_custom_call.1} parent=1 // pred_check_branch
      %1400 = sbr.rel (0) target = $region13
    $region12: #{tpu_custom_call.1} parent=1 // pred_region
      %s1402 = ssub.s32 8192, 8192
      %1403 = vsyncadd [#allocation4], %s1402
      %s1404 = sshll.u32 [#allocation5], 4
      %s1405 = int_to_ptr.vmem [resolvable:$true] %s1404
      %1410 = dma.vmem_to_hbm [thread:$0]  %s1405, 8192, %s1, [#allocation4], 128, 128, 8
    $region13: #{tpu_custom_call.1} parent=1 // pred_fallthru
      _
    // Predicated region
    $region14: #{tpu_custom_call.1} parent=1 // pred_check
      _
    $region15: #{tpu_custom_call.1} parent=1 // pred_check_branch
      %1412 = sbr.rel (0) target = $region17
    $region16: #{tpu_custom_call.1} parent=1 // pred_region
      %1413 = dma.done [#allocation4], 8192
    $region17: #{tpu_custom_call.1} parent=1 // pred_fallthru
      _
    %1414 = vsyncpa [#allocation3], 1
    %1415 = vsyncpa [#allocation4], 1

</llo_original>
